<compile_context>
chip_gen: v7x
topology: tpu7x:2x2x1
jax: 0.10.0
libtpu: 0.0.40
codegen_flags: <defaults>
</compile_context>

<pallas_src>
import functools
import math

import jax
import jax.numpy as jnp
from jax.experimental import pallas as pl
from jax.experimental.pallas import tpu as pltpu

VMEM_LIMIT = 32 * 1024 * 1024  # explicit scoped-VMEM cap, safe on v5e/v6e/v7x

# ---------------------------------------------------------------------------
# Pallas kernels
# ---------------------------------------------------------------------------

def haar_high_kernel(x00_ref, x01_ref, x10_ref, x11_ref, o_ref):
    """Haar high-frequency subbands (LH, HL, HH) from the four stride-2 phases.

    Matches WavePool's 2x2 Haar convs (cross-correlation, entries +-0.5):
      LH = L^T H, HL = H^T L, HH = H^T H with L = [1,1]/sqrt2, H = [-1,1]/sqrt2.
    All three bands are written into one (3, rows, cols) bf16 output block.
    """
    x00 = x00_ref[...]
    x01 = x01_ref[...]
    x10 = x10_ref[...]
    x11 = x11_ref[...]
    o_ref[0] = (0.5 * (-x00 + x01 - x10 + x11)).astype(o_ref.dtype)  # LH
    o_ref[1] = (0.5 * (-x00 - x01 + x10 + x11)).astype(o_ref.dtype)  # HL
    o_ref[2] = (0.5 * (x00 - x01 - x10 + x11)).astype(o_ref.dtype)   # HH


def matmul_bias_act_kernel(x_ref, w_ref, b_ref, o_ref, *, negative_slope):
    """(tm, K) @ (K, N) + bias, optionally fused LeakyReLU.

    bf16 operands on the MXU with f32 accumulation; the bias/LeakyReLU epilogue
    stays in f32 (v5e has no bf16 VPU), single cast at the store.
    """
    acc = jnp.dot(x_ref[...], w_ref[...], preferred_element_type=jnp.float32)
    acc = acc + b_ref[...]
    if negative_slope is not None:
        acc = jnp.where(acc >= 0, acc, negative_slope * acc)
    o_ref[...] = acc.astype(o_ref.dtype)


def wgan_head_kernel(h_ref, w2_ref, b2_ref, lg_ref, ld_ref, *, batch):
    """Fused fc2 + WGAN means.

    fc2 is linear, so mean(h @ w2 + b2) == mean_rows(h) @ w2 + b2.  This folds the
    (2B,256)@(256,1) GEMM, -mean(d_fake) and mean(d_fake - d_real) into one tiny
    VPU kernel.  Rows [0:batch] of h are the fake branch, rows [batch:] the real.
    """
    h = h_ref[...].astype(jnp.float32)                  # (2B, FC1_OUT)
    w2 = w2_ref[...]                                    # (1, FC1_OUT) = fc2 weight^T
    hf = jnp.mean(h[:batch], axis=0, keepdims=True)     # (1, FC1_OUT)
    hr = jnp.mean(h[batch:], axis=0, keepdims=True)
    d_f = jnp.sum(hf * w2, axis=1, keepdims=True) + b2_ref[...]   # (1, 1)
    d_r = jnp.sum(hr * w2, axis=1, keepdims=True) + b2_ref[...]
    lg_ref[...] = -d_f               # loss_g = -mean(d_fake)
    ld_ref[...] = d_f - d_r          # loss_d = mean(d_fake - d_real)


# ---------------------------------------------------------------------------
# Pallas wrappers
# ---------------------------------------------------------------------------

def _pick_tile(m, candidates=(512, 256, 128)):
    """Largest tile giving >= 2 grid steps; falls back to the full extent."""
    for cand in candidates:
        if m % cand == 0 and m > cand:
            return cand
    return m


def matmul_bias_act(x, w, b, negative_slope=None, out_dtype=jnp.bfloat16):
    """x:(M,K) bf16 @ w:(K,N) bf16 + b:(N,) f32, fused LeakyReLU.  Tiled over M."""
    M, K = x.shape
    _, N = w.shape
    tm = _pick_tile(M)
    grid = (M // tm,)
    kernel = functools.partial(matmul_bias_act_kernel, negative_slope=negative_slope)
    return pl.pallas_call(
        kernel,
        out_shape=jax.ShapeDtypeStruct((M, N), out_dtype),
        grid=grid,
        in_specs=[
            pl.BlockSpec((tm, K), lambda i: (i, 0)),
            pl.BlockSpec((K, N), lambda i: (0, 0)),
            pl.BlockSpec((1, N), lambda i: (0, 0)),
        ],
        out_specs=pl.BlockSpec((tm, N), lambda i: (i, 0)),
        compiler_params=pltpu.CompilerParams(
            dimension_semantics=("parallel",), vmem_limit_bytes=VMEM_LIMIT),
    )(x, w, b.reshape(1, N))


def wavepool_high(x_nchw):
    """WavePool(3) high-frequency output for a stack of images.

    x: (N, C, H, W) f32 -> (N, 3*C, H//2, W//2) bf16, channels = [LH.., HL.., HH..].
    The stride-2 phase extraction / channel re-layout is XLA glue; the subband math
    for the whole stack runs in a single tiled Pallas kernel.
    """
    N, C, H, W = x_nchw.shape
    Hh, Wh = H // 2, W // 2
    R, Mc = N * C, Hh * Wh
    x00 = x_nchw[:, :, 0::2, 0::2].reshape(R, Mc)
    x01 = x_nchw[:, :, 0::2, 1::2].reshape(R, Mc)
    x10 = x_nchw[:, :, 1::2, 0::2].reshape(R, Mc)
    x11 = x_nchw[:, :, 1::2, 1::2].reshape(R, Mc)
    tc = _pick_tile(Mc)
    grid = (Mc // tc,)
    out = pl.pallas_call(
        haar_high_kernel,
        out_shape=jax.ShapeDtypeStruct((3, R, Mc), jnp.bfloat16),
        grid=grid,
        in_specs=[pl.BlockSpec((R, tc), lambda j: (0, j))] * 4,
        out_specs=pl.BlockSpec((3, R, tc), lambda j: (0, 0, j)),
        compiler_params=pltpu.CompilerParams(
            dimension_semantics=("parallel",), vmem_limit_bytes=VMEM_LIMIT),
    )(x00, x01, x10, x11)
    # (band, N*C, Hh*Wh) -> (N, 3*C, Hh, Wh)
    return out.reshape(3, N, C, Hh, Wh).transpose(1, 0, 2, 3, 4).reshape(N, 3 * C, Hh, Wh)


def wgan_head(h, w2t, b2):
    """h:(2B, FC1_OUT) -> (loss_g, loss_d) scalars via one fused Pallas kernel."""
    batch = h.shape[0] // 2
    lg, ld = pl.pallas_call(
        functools.partial(wgan_head_kernel, batch=batch),
        out_shape=[jax.ShapeDtypeStruct((1, 1), jnp.float32)] * 2,
        compiler_params=pltpu.CompilerParams(vmem_limit_bytes=VMEM_LIMIT),
    )(h, w2t, b2)
    return lg[0, 0], ld[0, 0]


# ---------------------------------------------------------------------------
# Discriminator (TTSR-style conv stack, small scale) built on the Pallas GEMM
# ---------------------------------------------------------------------------

# (cin, cout, stride) per 3x3 conv (padding=1), LeakyReLU(0.2) after each.
CONV_SPECS = [
    (18, 32, 1),
    (32, 32, 2),
    (32, 64, 1),
    (64, 64, 2),
    (64, 128, 1),
    (128, 128, 2),
]
FC1_OUT = 256
C_PAD = 128  # lane-dense conv output width (real channels zero-padded up to this)


def im2col(x_nhwc, ksize=3, stride=1, padding=1):
    """NHWC -> (B*Ho*Wo, ksize*ksize*C) bf16 patch matrix (layout glue, plain JAX)."""
    # TODO(synk): patch extraction stays XLA-level glue (bf16, one batched pass for
    # fake+real); fully fusing it into the conv GEMM kernel (9-tap accumulation over
    # an NHWC slab held in VMEM) is the remaining step for production image sizes.
    B, H, W, C = x_nhwc.shape
    xp = jnp.pad(x_nhwc, ((0, 0), (padding, padding), (padding, padding), (0, 0)))
    Ho = (H + 2 * padding - ksize) // stride + 1
    Wo = (W + 2 * padding - ksize) // stride + 1
    patches = []
    for di in range(ksize):
        for dj in range(ksize):
            patches.append(xp[:, di:di + stride * Ho:stride, dj:dj + stride * Wo:stride, :])
    p = jnp.stack(patches, axis=3)  # (B, Ho, Wo, k*k, C)
    return p.reshape(B * Ho * Wo, ksize * ksize * C), (B, Ho, Wo)


def init_discriminator_params(key, in_size):
    """Deterministic synthetic weights, stored lane-dense (cout padded to C_PAD).

    Padded output columns / padded input rows are zero, so the math is identical to
    the logical 32/64/128-channel stack; the last conv's cout is exactly C_PAD, so
    the FC flatten sees only real features.
    """
    convs = []
    s = in_size
    cin_eff = CONV_SPECS[0][0]          # layer 0 consumes the real 18-channel input
    for (cin, cout, stride) in CONV_SPECS:
        key, kw = jax.random.split(key)
        fan_in = 9 * cin
        w = jax.random.normal(kw, (9, cin, cout), jnp.float32) / math.sqrt(fan_in)
        w_pad = jnp.zeros((9, cin_eff, C_PAD), jnp.float32).at[:, :cin, :cout].set(w)
        w_pad = w_pad.reshape(9 * cin_eff, C_PAD).astype(jnp.bfloat16)
        b = jnp.zeros((C_PAD,), jnp.float32)
        convs.append((w_pad, b))
        s = (s + 2 - 3) // stride + 1
        cin_eff = C_PAD
    feat = C_PAD * s * s
    key, k1, k2 = jax.random.split(key, 3)
    w1 = (jax.random.normal(k1, (feat, FC1_OUT), jnp.float32) / math.sqrt(feat)
          ).astype(jnp.bfloat16)
    b1 = jnp.zeros((FC1_OUT,), jnp.float32)
    w2t = jax.random.normal(k2, (1, FC1_OUT), jnp.float32) / math.sqrt(FC1_OUT)
    b2 = jnp.zeros((1, 1), jnp.float32)
    return {"convs": convs, "fc1": (w1, b1), "fc2": (w2t, b2)}


def discriminator_features(x_nchw, params):
    """Conv/LeakyReLU stack + fc1 -> pre-fc2 features, shape (2B, FC1_OUT) bf16."""
    x = jnp.transpose(x_nchw, (0, 2, 3, 1))  # NHWC, bf16
    for (w, b), (_, _, stride) in zip(params["convs"], CONV_SPECS):
        cols, (Bc, Ho, Wo) = im2col(x, stride=stride)
        y = matmul_bias_act(cols, w, b, negative_slope=0.2)
        x = y.reshape(Bc, Ho, Wo, w.shape[1])
    Bc = x.shape[0]
    flat = jnp.transpose(x, (0, 3, 1, 2)).reshape(Bc, -1)   # PyTorch NCHW flatten
    w1, b1 = params["fc1"]
    return matmul_bias_act(flat, w1, b1, negative_slope=0.2)


# ---------------------------------------------------------------------------
# AdversarialLoss forward (WGAN_GP branch, generator loss returned)
# ---------------------------------------------------------------------------

def adversarial_loss_forward(fake, real, ref, params):
    """Returns (loss_g, loss_d).

    One wavepool pass over the stacked {fake, real, ref}; fake and real branches
    are batched through a single discriminator forward; loss_g reuses d_fake
    (bit-identical in forward value to re-running D on the detached fake).
    """
    B = fake.shape[0]
    hi = wavepool_high(jnp.concatenate([fake, real, ref], axis=0))   # (3B, 9, H/2, W/2)
    fake_hi, real_hi, ref_hi = hi[:B], hi[B:2 * B], hi[2 * B:]
    d_in = jnp.concatenate(
        [jnp.concatenate([fake_hi, ref_hi], axis=1),
         jnp.concatenate([real_hi, ref_hi], axis=1)], axis=0)        # (2B, 18, H/2, W/2)
    h = discriminator_features(d_in, params)                          # (2B, FC1_OUT)
    w2t, b2 = params["fc2"]
    loss_g, loss_d = wgan_head(h, w2t, b2)
    # TODO(synk): discriminator Adam update / loss_d.backward() / WGAN-GP gradient
    # penalty are training-time side effects with no forward-pass Pallas equivalent.
    return loss_g, loss_d


if __name__ == "__main__":
    key = jax.random.PRNGKey(0)
    kf, kr, kref, kp = jax.random.split(key, 4)

    # Small shapes: batch=2, RGB images 32x32 (wavelet -> 16x16, 18 channels to D).
    B, C, H, W = 2, 3, 32, 32
    fake = jax.random.normal(kf, (B, C, H, W), jnp.float32)
    real = jax.random.normal(kr, (B, C, H, W), jnp.float32)
    ref = jax.random.normal(kref, (B, C, H, W), jnp.float32)

    params = init_discriminator_params(kp, in_size=H // 2)

    fwd = jax.jit(adversarial_loss_forward)
    loss_g, loss_d = fwd(fake, real, ref, params)
    jax.block_until_ready((loss_g, loss_d))
    print("KERNEL_OK")
</pallas_src>

<mosaic_0001>
module attributes {stable_mosaic.version = 11 : i64} {
  func.func @haar_high_kernel(%arg0: i32, %arg1: memref<18x128xf32, #tpu.memory_space<vmem>>, %arg2: memref<18x128xf32, #tpu.memory_space<vmem>>, %arg3: memref<18x128xf32, #tpu.memory_space<vmem>>, %arg4: memref<18x128xf32, #tpu.memory_space<vmem>>, %arg5: memref<3x18x128xbf16, #tpu.memory_space<vmem>>) attributes {dimension_semantics = [#tpu.dimension_semantics<parallel>], iteration_bounds = array<i64: 2>, scalar_prefetch = 0 : i64, scratch_operands = 0 : i64, tpu.core_type = #tpu.core_type<tc>, window_params = [{transform_indices = @transform_0, window_bounds = array<i64: 18, 128>}, {transform_indices = @transform_1, window_bounds = array<i64: 18, 128>}, {transform_indices = @transform_2, window_bounds = array<i64: 18, 128>}, {transform_indices = @transform_3, window_bounds = array<i64: 18, 128>}, {transform_indices = @transform_4, window_bounds = array<i64: 3, 18, 128>}]} {
    %c0 = arith.constant 0 : index
    %c0_0 = arith.constant 0 : index
    %0 = vector.load %arg1[%c0, %c0_0] : memref<18x128xf32, #tpu.memory_space<vmem>>, vector<18x128xf32>
    %c0_1 = arith.constant 0 : index
    %c0_2 = arith.constant 0 : index
    %1 = vector.load %arg2[%c0_1, %c0_2] : memref<18x128xf32, #tpu.memory_space<vmem>>, vector<18x128xf32>
    %c0_3 = arith.constant 0 : index
    %c0_4 = arith.constant 0 : index
    %2 = vector.load %arg3[%c0_3, %c0_4] : memref<18x128xf32, #tpu.memory_space<vmem>>, vector<18x128xf32>
    %c0_5 = arith.constant 0 : index
    %c0_6 = arith.constant 0 : index
    %3 = vector.load %arg4[%c0_5, %c0_6] : memref<18x128xf32, #tpu.memory_space<vmem>>, vector<18x128xf32>
    %cst = arith.constant 0.000000e+00 : f32
    %4 = vector.broadcast %cst : f32 to vector<18x128xf32>
    %5 = arith.subf %4, %0 : vector<18x128xf32>
    %6 = arith.addf %5, %1 : vector<18x128xf32>
    %7 = arith.subf %6, %2 : vector<18x128xf32>
    %8 = arith.addf %7, %3 : vector<18x128xf32>
    %cst_7 = arith.constant 5.000000e-01 : f32
    %9 = vector.broadcast %cst_7 : f32 to vector<18x128xf32>
    %10 = arith.mulf %9, %8 : vector<18x128xf32>
    %11 = arith.truncf %10 : vector<18x128xf32> to vector<18x128xbf16>
    %c0_8 = arith.constant 0 : index
    %c0_9 = arith.constant 0 : index
    %c0_10 = arith.constant 0 : index
    %12 = vector.load %arg5[%c0_8, %c0_9, %c0_10] : memref<3x18x128xbf16, #tpu.memory_space<vmem>>, vector<1x18x128xbf16>
    %13 = vector.shape_cast %12 : vector<1x18x128xbf16> to vector<18x128xbf16>
    %14 = vector.shape_cast %11 : vector<18x128xbf16> to vector<1x18x128xbf16>
    tpu.vector_store %arg5[%c0_8, %c0_9, %c0_10], %14 {strides = array<i32>} : memref<3x18x128xbf16, #tpu.memory_space<vmem>>, vector<1x18x128xbf16>,
    %cst_11 = arith.constant 0.000000e+00 : f32
    %15 = vector.broadcast %cst_11 : f32 to vector<18x128xf32>
    %16 = arith.subf %15, %0 : vector<18x128xf32>
    %17 = arith.subf %16, %1 : vector<18x128xf32>
    %18 = arith.addf %17, %2 : vector<18x128xf32>
    %19 = arith.addf %18, %3 : vector<18x128xf32>
    %cst_12 = arith.constant 5.000000e-01 : f32
    %20 = vector.broadcast %cst_12 : f32 to vector<18x128xf32>
    %21 = arith.mulf %20, %19 : vector<18x128xf32>
    %22 = arith.truncf %21 : vector<18x128xf32> to vector<18x128xbf16>
    %c1 = arith.constant 1 : index
    %c0_13 = arith.constant 0 : index
    %c0_14 = arith.constant 0 : index
    %23 = vector.load %arg5[%c1, %c0_13, %c0_14] : memref<3x18x128xbf16, #tpu.memory_space<vmem>>, vector<1x18x128xbf16>
    %24 = vector.shape_cast %23 : vector<1x18x128xbf16> to vector<18x128xbf16>
    %25 = vector.shape_cast %22 : vector<18x128xbf16> to vector<1x18x128xbf16>
    tpu.vector_store %arg5[%c1, %c0_13, %c0_14], %25 {strides = array<i32>} : memref<3x18x128xbf16, #tpu.memory_space<vmem>>, vector<1x18x128xbf16>,
    %26 = arith.subf %0, %1 : vector<18x128xf32>
    %27 = arith.subf %26, %2 : vector<18x128xf32>
    %28 = arith.addf %27, %3 : vector<18x128xf32>
    %cst_15 = arith.constant 5.000000e-01 : f32
    %29 = vector.broadcast %cst_15 : f32 to vector<18x128xf32>
    %30 = arith.mulf %29, %28 : vector<18x128xf32>
    %31 = arith.truncf %30 : vector<18x128xf32> to vector<18x128xbf16>
    %c2 = arith.constant 2 : index
    %c0_16 = arith.constant 0 : index
    %c0_17 = arith.constant 0 : index
    %32 = vector.load %arg5[%c2, %c0_16, %c0_17] : memref<3x18x128xbf16, #tpu.memory_space<vmem>>, vector<1x18x128xbf16>
    %33 = vector.shape_cast %32 : vector<1x18x128xbf16> to vector<18x128xbf16>
    %34 = vector.shape_cast %31 : vector<18x128xbf16> to vector<1x18x128xbf16>
    tpu.vector_store %arg5[%c2, %c0_16, %c0_17], %34 {strides = array<i32>} : memref<3x18x128xbf16, #tpu.memory_space<vmem>>, vector<1x18x128xbf16>,
    return
  }
  func.func @transform_0(%arg0: i32) -> (i32, i32) {
    %c0_i32 = arith.constant 0 : i32
    %c0_i32_0 = arith.constant 0 : i32
    return %c0_i32, %arg0 : i32, i32
  }
  func.func @transform_1(%arg0: i32) -> (i32, i32) {
    %c0_i32 = arith.constant 0 : i32
    %c0_i32_0 = arith.constant 0 : i32
    return %c0_i32, %arg0 : i32, i32
  }
  func.func @transform_2(%arg0: i32) -> (i32, i32) {
    %c0_i32 = arith.constant 0 : i32
    %c0_i32_0 = arith.constant 0 : i32
    return %c0_i32, %arg0 : i32, i32
  }
  func.func @transform_3(%arg0: i32) -> (i32, i32) {
    %c0_i32 = arith.constant 0 : i32
    %c0_i32_0 = arith.constant 0 : i32
    return %c0_i32, %arg0 : i32, i32
  }
  func.func @transform_4(%arg0: i32) -> (i32, i32, i32) {
    %c0_i32 = arith.constant 0 : i32
    %c0_i32_0 = arith.constant 0 : i32
    %c0_i32_1 = arith.constant 0 : i32
    return %c0_i32, %c0_i32_0, %arg0 : i32, i32, i32
  }
}

module attributes {stable_mosaic.version = 11 : i64} {
  func.func @matmul_bias_act_kernel(%arg0: i32, %arg1: memref<512x162xbf16, #tpu.memory_space<vmem>>, %arg2: memref<162x128xbf16, #tpu.memory_space<vmem>>, %arg3: memref<1x128xf32, #tpu.memory_space<vmem>>, %arg4: memref<512x128xbf16, #tpu.memory_space<vmem>>) attributes {dimension_semantics = [#tpu.dimension_semantics<parallel>], iteration_bounds = array<i64: 2>, scalar_prefetch = 0 : i64, scratch_operands = 0 : i64, tpu.core_type = #tpu.core_type<tc>, window_params = [{transform_indices = @transform_0, window_bounds = array<i64: 512, 162>}, {pipeline_mode = #tpu.pipeline_mode<synchronous>, transform_indices = @transform_1, window_bounds = array<i64: 162, 128>}, {pipeline_mode = #tpu.pipeline_mode<synchronous>, transform_indices = @transform_2, window_bounds = array<i64: 1, 128>}, {transform_indices = @transform_3, window_bounds = array<i64: 512, 128>}]} {
    %c0 = arith.constant 0 : index
    %c0_0 = arith.constant 0 : index
    %0 = vector.load %arg1[%c0, %c0_0] : memref<512x162xbf16, #tpu.memory_space<vmem>>, vector<512x162xbf16>
    %c0_1 = arith.constant 0 : index
    %c0_2 = arith.constant 0 : index
    %1 = vector.load %arg2[%c0_1, %c0_2] : memref<162x128xbf16, #tpu.memory_space<vmem>>, vector<162x128xbf16>
    %cst = arith.constant dense<0.000000e+00> : vector<512x128xf32>
    %2 = tpu.matmul %0, %1, %cst {dimension_numbers = #tpu.dot_dimension_numbers<[1], [0], [0], [1], [0, 0, 1, 1], [], []>} : vector<512x162xbf16>, vector<162x128xbf16>, vector<512x128xf32> -> vector<512x128xf32>
    %c0_3 = arith.constant 0 : index
    %c0_4 = arith.constant 0 : index
    %3 = vector.load %arg3[%c0_3, %c0_4] : memref<1x128xf32, #tpu.memory_space<vmem>>, vector<1x128xf32>
    %4 = vector.broadcast %3 : vector<1x128xf32> to vector<512x128xf32>
    %5 = arith.addf %2, %4 : vector<512x128xf32>
    %cst_5 = arith.constant 0.000000e+00 : f32
    %6 = vector.broadcast %cst_5 : f32 to vector<512x128xf32>
    %7 = arith.cmpf oge, %5, %6 : vector<512x128xf32>
    %cst_6 = arith.constant 2.000000e-01 : f32
    %8 = vector.broadcast %cst_6 : f32 to vector<512x128xf32>
    %9 = arith.mulf %8, %5 : vector<512x128xf32>
    %10 = arith.select %7, %5, %9 : vector<512x128xi1>, vector<512x128xf32>
    %11 = arith.truncf %10 : vector<512x128xf32> to vector<512x128xbf16>
    %c0_7 = arith.constant 0 : index
    %c0_8 = arith.constant 0 : index
    %12 = vector.load %arg4[%c0_7, %c0_8] : memref<512x128xbf16, #tpu.memory_space<vmem>>, vector<512x128xbf16>
    tpu.vector_store %arg4[%c0_7, %c0_8], %11 {strides = array<i32>} : memref<512x128xbf16, #tpu.memory_space<vmem>>, vector<512x128xbf16>,
    return
  }
  func.func @transform_0(%arg0: i32) -> (i32, i32) {
    %c0_i32 = arith.constant 0 : i32
    %c0_i32_0 = arith.constant 0 : i32
    return %arg0, %c0_i32 : i32, i32
  }
  func.func @transform_1(%arg0: i32) -> (i32, i32) {
    %c0_i32 = arith.constant 0 : i32
    %c0_i32_0 = arith.constant 0 : i32
    %c0_i32_1 = arith.constant 0 : i32
    return %c0_i32, %c0_i32_0 : i32, i32
  }
  func.func @transform_2(%arg0: i32) -> (i32, i32) {
    %c0_i32 = arith.constant 0 : i32
    %c0_i32_0 = arith.constant 0 : i32
    %c0_i32_1 = arith.constant 0 : i32
    return %c0_i32, %c0_i32_0 : i32, i32
  }
  func.func @transform_3(%arg0: i32) -> (i32, i32) {
    %c0_i32 = arith.constant 0 : i32
    %c0_i32_0 = arith.constant 0 : i32
    return %arg0, %c0_i32 : i32, i32
  }
}

module attributes {stable_mosaic.version = 11 : i64} {
  func.func @matmul_bias_act_kernel(%arg0: i32, %arg1: memref<128x1152xbf16, #tpu.memory_space<vmem>>, %arg2: memref<1152x128xbf16, #tpu.memory_space<vmem>>, %arg3: memref<1x128xf32, #tpu.memory_space<vmem>>, %arg4: memref<128x128xbf16, #tpu.memory_space<vmem>>) attributes {dimension_semantics = [#tpu.dimension_semantics<parallel>], iteration_bounds = array<i64: 2>, scalar_prefetch = 0 : i64, scratch_operands = 0 : i64, tpu.core_type = #tpu.core_type<tc>, window_params = [{transform_indices = @transform_0, window_bounds = array<i64: 128, 1152>}, {pipeline_mode = #tpu.pipeline_mode<synchronous>, transform_indices = @transform_1, window_bounds = array<i64: 1152, 128>}, {pipeline_mode = #tpu.pipeline_mode<synchronous>, transform_indices = @transform_2, window_bounds = array<i64: 1, 128>}, {transform_indices = @transform_3, window_bounds = array<i64: 128, 128>}]} {
    %c0 = arith.constant 0 : index
    %c0_0 = arith.constant 0 : index
    %0 = vector.load %arg1[%c0, %c0_0] : memref<128x1152xbf16, #tpu.memory_space<vmem>>, vector<128x1152xbf16>
    %c0_1 = arith.constant 0 : index
    %c0_2 = arith.constant 0 : index
    %1 = vector.load %arg2[%c0_1, %c0_2] : memref<1152x128xbf16, #tpu.memory_space<vmem>>, vector<1152x128xbf16>
    %cst = arith.constant dense<0.000000e+00> : vector<128x128xf32>
    %2 = tpu.matmul %0, %1, %cst {dimension_numbers = #tpu.dot_dimension_numbers<[1], [0], [0], [1], [0, 0, 1, 1], [], []>} : vector<128x1152xbf16>, vector<1152x128xbf16>, vector<128x128xf32> -> vector<128x128xf32>
    %c0_3 = arith.constant 0 : index
    %c0_4 = arith.constant 0 : index
    %3 = vector.load %arg3[%c0_3, %c0_4] : memref<1x128xf32, #tpu.memory_space<vmem>>, vector<1x128xf32>
    %4 = vector.broadcast %3 : vector<1x128xf32> to vector<128x128xf32>
    %5 = arith.addf %2, %4 : vector<128x128xf32>
    %cst_5 = arith.constant 0.000000e+00 : f32
    %6 = vector.broadcast %cst_5 : f32 to vector<128x128xf32>
    %7 = arith.cmpf oge, %5, %6 : vector<128x128xf32>
    %cst_6 = arith.constant 2.000000e-01 : f32
    %8 = vector.broadcast %cst_6 : f32 to vector<128x128xf32>
    %9 = arith.mulf %8, %5 : vector<128x128xf32>
    %10 = arith.select %7, %5, %9 : vector<128x128xi1>, vector<128x128xf32>
    %11 = arith.truncf %10 : vector<128x128xf32> to vector<128x128xbf16>
    %c0_7 = arith.constant 0 : index
    %c0_8 = arith.constant 0 : index
    %12 = vector.load %arg4[%c0_7, %c0_8] : memref<128x128xbf16, #tpu.memory_space<vmem>>, vector<128x128xbf16>
    tpu.vector_store %arg4[%c0_7, %c0_8], %11 {strides = array<i32>} : memref<128x128xbf16, #tpu.memory_space<vmem>>, vector<128x128xbf16>,
    return
  }
  func.func @transform_0(%arg0: i32) -> (i32, i32) {
    %c0_i32 = arith.constant 0 : i32
    %c0_i32_0 = arith.constant 0 : i32
    return %arg0, %c0_i32 : i32, i32
  }
  func.func @transform_1(%arg0: i32) -> (i32, i32) {
    %c0_i32 = arith.constant 0 : i32
    %c0_i32_0 = arith.constant 0 : i32
    %c0_i32_1 = arith.constant 0 : i32
    return %c0_i32, %c0_i32_0 : i32, i32
  }
  func.func @transform_2(%arg0: i32) -> (i32, i32) {
    %c0_i32 = arith.constant 0 : i32
    %c0_i32_0 = arith.constant 0 : i32
    %c0_i32_1 = arith.constant 0 : i32
    return %c0_i32, %c0_i32_0 : i32, i32
  }
  func.func @transform_3(%arg0: i32) -> (i32, i32) {
    %c0_i32 = arith.constant 0 : i32
    %c0_i32_0 = arith.constant 0 : i32
    return %arg0, %c0_i32 : i32, i32
  }
}

module attributes {stable_mosaic.version = 11 : i64} {
  func.func @matmul_bias_act_kernel(%arg0: i32, %arg1: memref<64x1152xbf16, #tpu.memory_space<vmem>>, %arg2: memref<1152x128xbf16, #tpu.memory_space<vmem>>, %arg3: memref<1x128xf32, #tpu.memory_space<vmem>>, %arg4: memref<64x128xbf16, #tpu.memory_space<vmem>>) attributes {dimension_semantics = [#tpu.dimension_semantics<parallel>], iteration_bounds = array<i64: 1>, scalar_prefetch = 0 : i64, scratch_operands = 0 : i64, tpu.core_type = #tpu.core_type<tc>, window_params = [{transform_indices = @transform_0, window_bounds = array<i64: 64, 1152>}, {pipeline_mode = #tpu.pipeline_mode<synchronous>, transform_indices = @transform_1, window_bounds = array<i64: 1152, 128>}, {pipeline_mode = #tpu.pipeline_mode<synchronous>, transform_indices = @transform_2, window_bounds = array<i64: 1, 128>}, {transform_indices = @transform_3, window_bounds = array<i64: 64, 128>}]} {
    %c0 = arith.constant 0 : index
    %c0_0 = arith.constant 0 : index
    %0 = vector.load %arg1[%c0, %c0_0] : memref<64x1152xbf16, #tpu.memory_space<vmem>>, vector<64x1152xbf16>
    %c0_1 = arith.constant 0 : index
    %c0_2 = arith.constant 0 : index
    %1 = vector.load %arg2[%c0_1, %c0_2] : memref<1152x128xbf16, #tpu.memory_space<vmem>>, vector<1152x128xbf16>
    %cst = arith.constant dense<0.000000e+00> : vector<64x128xf32>
    %2 = tpu.matmul %0, %1, %cst {dimension_numbers = #tpu.dot_dimension_numbers<[1], [0], [0], [1], [0, 0, 1, 1], [], []>} : vector<64x1152xbf16>, vector<1152x128xbf16>, vector<64x128xf32> -> vector<64x128xf32>
    %c0_3 = arith.constant 0 : index
    %c0_4 = arith.constant 0 : index
    %3 = vector.load %arg3[%c0_3, %c0_4] : memref<1x128xf32, #tpu.memory_space<vmem>>, vector<1x128xf32>
    %4 = vector.broadcast %3 : vector<1x128xf32> to vector<64x128xf32>
    %5 = arith.addf %2, %4 : vector<64x128xf32>
    %cst_5 = arith.constant 0.000000e+00 : f32
    %6 = vector.broadcast %cst_5 : f32 to vector<64x128xf32>
    %7 = arith.cmpf oge, %5, %6 : vector<64x128xf32>
    %cst_6 = arith.constant 2.000000e-01 : f32
    %8 = vector.broadcast %cst_6 : f32 to vector<64x128xf32>
    %9 = arith.mulf %8, %5 : vector<64x128xf32>
    %10 = arith.select %7, %5, %9 : vector<64x128xi1>, vector<64x128xf32>
    %11 = arith.truncf %10 : vector<64x128xf32> to vector<64x128xbf16>
    %c0_7 = arith.constant 0 : index
    %c0_8 = arith.constant 0 : index
    %12 = vector.load %arg4[%c0_7, %c0_8] : memref<64x128xbf16, #tpu.memory_space<vmem>>, vector<64x128xbf16>
    tpu.vector_store %arg4[%c0_7, %c0_8], %11 {strides = array<i32>} : memref<64x128xbf16, #tpu.memory_space<vmem>>, vector<64x128xbf16>,
    return
  }
  func.func @transform_0(%arg0: i32) -> (i32, i32) {
    %c0_i32 = arith.constant 0 : i32
    %c0_i32_0 = arith.constant 0 : i32
    return %arg0, %c0_i32 : i32, i32
  }
  func.func @transform_1(%arg0: i32) -> (i32, i32) {
    %c0_i32 = arith.constant 0 : i32
    %c0_i32_0 = arith.constant 0 : i32
    %c0_i32_1 = arith.constant 0 : i32
    return %c0_i32, %c0_i32_0 : i32, i32
  }
  func.func @transform_2(%arg0: i32) -> (i32, i32) {
    %c0_i32 = arith.constant 0 : i32
    %c0_i32_0 = arith.constant 0 : i32
    %c0_i32_1 = arith.constant 0 : i32
    return %c0_i32, %c0_i32_0 : i32, i32
  }
  func.func @transform_3(%arg0: i32) -> (i32, i32) {
    %c0_i32 = arith.constant 0 : i32
    %c0_i32_0 = arith.constant 0 : i32
    return %arg0, %c0_i32 : i32, i32
  }
}

module attributes {stable_mosaic.version = 11 : i64} {
  func.func @matmul_bias_act_kernel(%arg0: i32, %arg1: memref<16x1152xbf16, #tpu.memory_space<vmem>>, %arg2: memref<1152x128xbf16, #tpu.memory_space<vmem>>, %arg3: memref<1x128xf32, #tpu.memory_space<vmem>>, %arg4: memref<16x128xbf16, #tpu.memory_space<vmem>>) attributes {dimension_semantics = [#tpu.dimension_semantics<parallel>], iteration_bounds = array<i64: 1>, scalar_prefetch = 0 : i64, scratch_operands = 0 : i64, tpu.core_type = #tpu.core_type<tc>, window_params = [{transform_indices = @transform_0, window_bounds = array<i64: 16, 1152>}, {pipeline_mode = #tpu.pipeline_mode<synchronous>, transform_indices = @transform_1, window_bounds = array<i64: 1152, 128>}, {pipeline_mode = #tpu.pipeline_mode<synchronous>, transform_indices = @transform_2, window_bounds = array<i64: 1, 128>}, {transform_indices = @transform_3, window_bounds = array<i64: 16, 128>}]} {
    %c0 = arith.constant 0 : index
    %c0_0 = arith.constant 0 : index
    %0 = vector.load %arg1[%c0, %c0_0] : memref<16x1152xbf16, #tpu.memory_space<vmem>>, vector<16x1152xbf16>
    %c0_1 = arith.constant 0 : index
    %c0_2 = arith.constant 0 : index
    %1 = vector.load %arg2[%c0_1, %c0_2] : memref<1152x128xbf16, #tpu.memory_space<vmem>>, vector<1152x128xbf16>
    %cst = arith.constant dense<0.000000e+00> : vector<16x128xf32>
    %2 = tpu.matmul %0, %1, %cst {dimension_numbers = #tpu.dot_dimension_numbers<[1], [0], [0], [1], [0, 0, 1, 1], [], []>} : vector<16x1152xbf16>, vector<1152x128xbf16>, vector<16x128xf32> -> vector<16x128xf32>
    %c0_3 = arith.constant 0 : index
    %c0_4 = arith.constant 0 : index
    %3 = vector.load %arg3[%c0_3, %c0_4] : memref<1x128xf32, #tpu.memory_space<vmem>>, vector<1x128xf32>
    %4 = vector.broadcast %3 : vector<1x128xf32> to vector<16x128xf32>
    %5 = arith.addf %2, %4 : vector<16x128xf32>
    %cst_5 = arith.constant 0.000000e+00 : f32
    %6 = vector.broadcast %cst_5 : f32 to vector<16x128xf32>
    %7 = arith.cmpf oge, %5, %6 : vector<16x128xf32>
    %cst_6 = arith.constant 2.000000e-01 : f32
    %8 = vector.broadcast %cst_6 : f32 to vector<16x128xf32>
    %9 = arith.mulf %8, %5 : vector<16x128xf32>
    %10 = arith.select %7, %5, %9 : vector<16x128xi1>, vector<16x128xf32>
    %11 = arith.truncf %10 : vector<16x128xf32> to vector<16x128xbf16>
    %c0_7 = arith.constant 0 : index
    %c0_8 = arith.constant 0 : index
    %12 = vector.load %arg4[%c0_7, %c0_8] : memref<16x128xbf16, #tpu.memory_space<vmem>>, vector<16x128xbf16>
    tpu.vector_store %arg4[%c0_7, %c0_8], %11 {strides = array<i32>} : memref<16x128xbf16, #tpu.memory_space<vmem>>, vector<16x128xbf16>,
    return
  }
  func.func @transform_0(%arg0: i32) -> (i32, i32) {
    %c0_i32 = arith.constant 0 : i32
    %c0_i32_0 = arith.constant 0 : i32
    return %arg0, %c0_i32 : i32, i32
  }
  func.func @transform_1(%arg0: i32) -> (i32, i32) {
    %c0_i32 = arith.constant 0 : i32
    %c0_i32_0 = arith.constant 0 : i32
    %c0_i32_1 = arith.constant 0 : i32
    return %c0_i32, %c0_i32_0 : i32, i32
  }
  func.func @transform_2(%arg0: i32) -> (i32, i32) {
    %c0_i32 = arith.constant 0 : i32
    %c0_i32_0 = arith.constant 0 : i32
    %c0_i32_1 = arith.constant 0 : i32
    return %c0_i32, %c0_i32_0 : i32, i32
  }
  func.func @transform_3(%arg0: i32) -> (i32, i32) {
    %c0_i32 = arith.constant 0 : i32
    %c0_i32_0 = arith.constant 0 : i32
    return %arg0, %c0_i32 : i32, i32
  }
}

module attributes {stable_mosaic.version = 11 : i64} {
  func.func @matmul_bias_act_kernel(%arg0: i32, %arg1: memref<4x512xbf16, #tpu.memory_space<vmem>>, %arg2: memref<512x256xbf16, #tpu.memory_space<vmem>>, %arg3: memref<1x256xf32, #tpu.memory_space<vmem>>, %arg4: memref<4x256xbf16, #tpu.memory_space<vmem>>) attributes {dimension_semantics = [#tpu.dimension_semantics<parallel>], iteration_bounds = array<i64: 1>, scalar_prefetch = 0 : i64, scratch_operands = 0 : i64, tpu.core_type = #tpu.core_type<tc>, window_params = [{transform_indices = @transform_0, window_bounds = array<i64: 4, 512>}, {pipeline_mode = #tpu.pipeline_mode<synchronous>, transform_indices = @transform_1, window_bounds = array<i64: 512, 256>}, {pipeline_mode = #tpu.pipeline_mode<synchronous>, transform_indices = @transform_2, window_bounds = array<i64: 1, 256>}, {transform_indices = @transform_3, window_bounds = array<i64: 4, 256>}]} {
    %c0 = arith.constant 0 : index
    %c0_0 = arith.constant 0 : index
    %0 = vector.load %arg1[%c0, %c0_0] : memref<4x512xbf16, #tpu.memory_space<vmem>>, vector<4x512xbf16>
    %c0_1 = arith.constant 0 : index
    %c0_2 = arith.constant 0 : index
    %1 = vector.load %arg2[%c0_1, %c0_2] : memref<512x256xbf16, #tpu.memory_space<vmem>>, vector<512x256xbf16>
    %cst = arith.constant dense<0.000000e+00> : vector<4x256xf32>
    %2 = tpu.matmul %0, %1, %cst {dimension_numbers = #tpu.dot_dimension_numbers<[1], [0], [0], [1], [0, 0, 1, 1], [], []>} : vector<4x512xbf16>, vector<512x256xbf16>, vector<4x256xf32> -> vector<4x256xf32>
    %c0_3 = arith.constant 0 : index
    %c0_4 = arith.constant 0 : index
    %3 = vector.load %arg3[%c0_3, %c0_4] : memref<1x256xf32, #tpu.memory_space<vmem>>, vector<1x256xf32>
    %4 = vector.broadcast %3 : vector<1x256xf32> to vector<4x256xf32>
    %5 = arith.addf %2, %4 : vector<4x256xf32>
    %cst_5 = arith.constant 0.000000e+00 : f32
    %6 = vector.broadcast %cst_5 : f32 to vector<4x256xf32>
    %7 = arith.cmpf oge, %5, %6 : vector<4x256xf32>
    %cst_6 = arith.constant 2.000000e-01 : f32
    %8 = vector.broadcast %cst_6 : f32 to vector<4x256xf32>
    %9 = arith.mulf %8, %5 : vector<4x256xf32>
    %10 = arith.select %7, %5, %9 : vector<4x256xi1>, vector<4x256xf32>
    %11 = arith.truncf %10 : vector<4x256xf32> to vector<4x256xbf16>
    %c0_7 = arith.constant 0 : index
    %c0_8 = arith.constant 0 : index
    %12 = vector.load %arg4[%c0_7, %c0_8] : memref<4x256xbf16, #tpu.memory_space<vmem>>, vector<4x256xbf16>
    tpu.vector_store %arg4[%c0_7, %c0_8], %11 {strides = array<i32>} : memref<4x256xbf16, #tpu.memory_space<vmem>>, vector<4x256xbf16>,
    return
  }
  func.func @transform_0(%arg0: i32) -> (i32, i32) {
    %c0_i32 = arith.constant 0 : i32
    %c0_i32_0 = arith.constant 0 : i32
    return %arg0, %c0_i32 : i32, i32
  }
  func.func @transform_1(%arg0: i32) -> (i32, i32) {
    %c0_i32 = arith.constant 0 : i32
    %c0_i32_0 = arith.constant 0 : i32
    %c0_i32_1 = arith.constant 0 : i32
    return %c0_i32, %c0_i32_0 : i32, i32
  }
  func.func @transform_2(%arg0: i32) -> (i32, i32) {
    %c0_i32 = arith.constant 0 : i32
    %c0_i32_0 = arith.constant 0 : i32
    %c0_i32_1 = arith.constant 0 : i32
    return %c0_i32, %c0_i32_0 : i32, i32
  }
  func.func @transform_3(%arg0: i32) -> (i32, i32) {
    %c0_i32 = arith.constant 0 : i32
    %c0_i32_0 = arith.constant 0 : i32
    return %arg0, %c0_i32 : i32, i32
  }
}

module attributes {stable_mosaic.version = 11 : i64} {
  func.func @wgan_head_kernel(%arg0: memref<4x256xbf16, #tpu.memory_space<vmem>>, %arg1: memref<1x256xf32, #tpu.memory_space<vmem>>, %arg2: memref<1x1xf32, #tpu.memory_space<vmem>>, %arg3: memref<1x1xf32, #tpu.memory_space<vmem>>, %arg4: memref<1x1xf32, #tpu.memory_space<vmem>>) attributes {dimension_semantics = [], scalar_prefetch = 0 : i64, scratch_operands = 0 : i64, tpu.core_type = #tpu.core_type<tc>} {
    %c0 = arith.constant 0 : index
    %c0_0 = arith.constant 0 : index
    %0 = vector.load %arg0[%c0, %c0_0] : memref<4x256xbf16, #tpu.memory_space<vmem>>, vector<4x256xbf16>
    %1 = arith.extf %0 : vector<4x256xbf16> to vector<4x256xf32>
    %c0_1 = arith.constant 0 : index
    %c0_2 = arith.constant 0 : index
    %2 = vector.load %arg1[%c0_1, %c0_2] : memref<1x256xf32, #tpu.memory_space<vmem>>, vector<1x256xf32>
    %3 = vector.extract_strided_slice %1 {offsets = [0, 0], sizes = [2, 256], strides = [1, 1]} : vector<4x256xf32> to vector<2x256xf32>
    %cst = arith.constant dense<0.000000e+00> : vector<256xf32>
    %4 = vector.multi_reduction <add>, %3, %cst [0] : vector<2x256xf32> to vector<256xf32>
    %5 = vector.shape_cast %4 : vector<256xf32> to vector<1x256xf32>
    %cst_3 = arith.constant 2.000000e+00 : f32
    %6 = vector.broadcast %cst_3 : f32 to vector<1x256xf32>
    %7 = arith.divf %5, %6 : vector<1x256xf32>
    %8 = vector.extract_strided_slice %1 {offsets = [2, 0], sizes = [2, 256], strides = [1, 1]} : vector<4x256xf32> to vector<2x256xf32>
    %cst_4 = arith.constant dense<0.000000e+00> : vector<256xf32>
    %9 = vector.multi_reduction <add>, %8, %cst_4 [0] : vector<2x256xf32> to vector<256xf32>
    %10 = vector.shape_cast %9 : vector<256xf32> to vector<1x256xf32>
    %cst_5 = arith.constant 2.000000e+00 : f32
    %11 = vector.broadcast %cst_5 : f32 to vector<1x256xf32>
    %12 = arith.divf %10, %11 : vector<1x256xf32>
    %13 = arith.mulf %7, %2 : vector<1x256xf32>
    %cst_6 = arith.constant dense<0.000000e+00> : vector<1xf32>
    %14 = vector.multi_reduction <add>, %13, %cst_6 [1] : vector<1x256xf32> to vector<1xf32>
    %15 = vector.shape_cast %14 : vector<1xf32> to vector<1x1xf32>
    %c0_7 = arith.constant 0 : index
    %c0_8 = arith.constant 0 : index
    %16 = vector.load %arg2[%c0_7, %c0_8] : memref<1x1xf32, #tpu.memory_space<vmem>>, vector<1x1xf32>
    %17 = arith.addf %15, %16 : vector<1x1xf32>
    %18 = arith.mulf %12, %2 : vector<1x256xf32>
    %cst_9 = arith.constant dense<0.000000e+00> : vector<1xf32>
    %19 = vector.multi_reduction <add>, %18, %cst_9 [1] : vector<1x256xf32> to vector<1xf32>
    %20 = vector.shape_cast %19 : vector<1xf32> to vector<1x1xf32>
    %c0_10 = arith.constant 0 : index
    %c0_11 = arith.constant 0 : index
    %21 = vector.load %arg2[%c0_10, %c0_11] : memref<1x1xf32, #tpu.memory_space<vmem>>, vector<1x1xf32>
    %22 = arith.addf %20, %21 : vector<1x1xf32>
    %cst_12 = arith.constant 0.000000e+00 : f32
    %23 = vector.broadcast %cst_12 : f32 to vector<1x1xf32>
    %24 = arith.subf %23, %17 : vector<1x1xf32>
    %c0_13 = arith.constant 0 : index
    %c0_14 = arith.constant 0 : index
    %25 = vector.load %arg3[%c0_13, %c0_14] : memref<1x1xf32, #tpu.memory_space<vmem>>, vector<1x1xf32>
    tpu.vector_store %arg3[%c0_13, %c0_14], %24 {strides = array<i32>} : memref<1x1xf32, #tpu.memory_space<vmem>>, vector<1x1xf32>,
    %26 = arith.subf %17, %22 : vector<1x1xf32>
    %c0_15 = arith.constant 0 : index
    %c0_16 = arith.constant 0 : index
    %27 = vector.load %arg4[%c0_15, %c0_16] : memref<1x1xf32, #tpu.memory_space<vmem>>, vector<1x1xf32>
    tpu.vector_store %arg4[%c0_15, %c0_16], %26 {strides = array<i32>} : memref<1x1xf32, #tpu.memory_space<vmem>>, vector<1x1xf32>,
    return
  }
}

</mosaic_0001>

<llo_original>
// kernel: adversarial_loss_forward.9
$region0: #{adversarial_loss_forward.9}
  #allocation0 [shape = 'u32[]', space=smem, size = 0x4, offset = 0x4, fixed_abs, tag = 'smem constant byte address 0x4 - core index']
  #allocation1 [shape = 'u32[144,128]{1,0:T(1,128)}', space=vmem, size = 0x12000, scoped, tag = 'internal scratch']
  %s0 = inlined_call_operand.vmem [shape: f32[18,256], index: 0, kind: input, shape index: {}]
  %s1 = inlined_call_operand.vmem [shape: f32[18,256], index: 1, kind: input, shape index: {}]
  %s2 = inlined_call_operand.vmem [shape: f32[18,256], index: 2, kind: input, shape index: {}]
  %s3 = inlined_call_operand.vmem [shape: f32[18,256], index: 3, kind: input, shape index: {}]
  %s4 = inlined_call_operand.vmem [shape: bf16[3,18,256], index: 4, kind: output, shape index: {}]
  %s5 = sld [smem:[#allocation0]]
  $region238: #{adversarial_loss_forward.9} parent=0
    _
  %s7 = ssub.s32 1, %s5
  %s8 = scalar_select 0, %s7, %s5
  $region1: #{adversarial_loss_forward.9} parent=0
    #allocation2 [shape = 'u8[24576]{0}', space=vmem, size = 0x6000, scoped, tag = 'input window, operand 0']
    #allocation3 [shape = 'u8[24576]{0}', space=vmem, size = 0x6000, scoped, tag = 'input window, operand 1']
    #allocation4 [shape = 'u8[24576]{0}', space=vmem, size = 0x6000, scoped, tag = 'input window, operand 2']
    #allocation5 [shape = 'u8[24576]{0}', space=vmem, size = 0x6000, scoped, tag = 'input window, operand 3']
    #allocation6 [shape = 'u8[36864]{0}', space=vmem, size = 0x9000, scoped, tag = 'output window, operand 0']
    loop: start=0, step=1, limit=4
    $region2: #{adversarial_loss_forward.9} parent=1 // loop_pre_header
      _
    $region3: #{adversarial_loss_forward.9} parent=1 // loop_header
      %s10 = sphi 0, %s14
      %p11 = scmp.ge.s32.totalorder %s10, 4
      %s20 = sphi 0, %s22
      %s23 = sphi 0, %s20
      %s24 = sphi 0, %s23
      %s40 = sphi 0, %s24
      %s46 = sphi 0, %s48
      %s49 = sphi 0, %s46
      %s50 = sphi 0, %s49
      %s66 = sphi 0, %s50
      %s72 = sphi 0, %s74
      %s75 = sphi 0, %s72
      %s76 = sphi 0, %s75
      %s92 = sphi 0, %s76
      %s98 = sphi 0, %s100
      %s101 = sphi 0, %s98
      %s102 = sphi 0, %s101
      %s118 = sphi 0, %s102
      %s124 = sphi 0, %s126
      %s127 = sphi 0, %s124
      %s128 = sphi 0, %s127
      %s144 = sphi 0, %s128
    $region4: #{adversarial_loss_forward.9} parent=1 // loop_header_branch
      %13 = sbr.rel (%p11) target = $region8
    $region5: #{adversarial_loss_forward.9} parent=1 // loop_body
      %s15 = ssub.s32 %s10, 1
      %s16 = ssub.s32 %s10, 2
      %s17 = sadd.s32 %s10, 1
      %s18 = ssub.s32 %s10, %s17
      %p19 = scmp.eq.s32.totalorder %s18, 0
      %s21 = sadd.s32 %s20, 1
      %s22 = scalar_select %p19, %s20, %s21
      %p25 = pneg %p19
      %p26 = scmp.eq.s32.totalorder %s10, 1
      %p27 = por %p25, %p26
      %p28 = scmp.ne.s32.totalorder %s20, %s23
      %p29 = scmp.eq.s32.totalorder %s10, 0
      %p30 = por %p28, %p29
      %p31 = scmp.ne.s32.totalorder %s20, %s23
      %p32 = scmp.eq.s32.totalorder %s15, 1
      %p33 = por %p31, %p32
      %p34 = scmp.ne.s32.totalorder %s23, %s24
      %p35 = scmp.eq.s32.totalorder %s15, 0
      %p36 = por %p34, %p35
      %p37 = scmp.ne.s32.totalorder %s23, %s24
      %p38 = scmp.eq.s32.totalorder %s16, 1
      %p39 = por %p37, %p38
      %p41 = scmp.ne.s32.totalorder %s24, %s40
      %p42 = scmp.eq.s32.totalorder %s16, 0
      %p43 = por %p41, %p42
      %s44 = ssub.s32 %s10, %s17
      %p45 = scmp.eq.s32.totalorder %s44, 0
      %s47 = sadd.s32 %s46, 1
      %s48 = scalar_select %p45, %s46, %s47
      %p51 = pneg %p45
      %p52 = scmp.eq.s32.totalorder %s10, 1
      %p53 = por %p51, %p52
      %p54 = scmp.ne.s32.totalorder %s46, %s49
      %p55 = scmp.eq.s32.totalorder %s10, 0
      %p56 = por %p54, %p55
      %p57 = scmp.ne.s32.totalorder %s46, %s49
      %p58 = scmp.eq.s32.totalorder %s15, 1
      %p59 = por %p57, %p58
      %p60 = scmp.ne.s32.totalorder %s49, %s50
      %p61 = scmp.eq.s32.totalorder %s15, 0
      %p62 = por %p60, %p61
      %p63 = scmp.ne.s32.totalorder %s49, %s50
      %p64 = scmp.eq.s32.totalorder %s16, 1
      %p65 = por %p63, %p64
      %p67 = scmp.ne.s32.totalorder %s50, %s66
      %p68 = scmp.eq.s32.totalorder %s16, 0
      %p69 = por %p67, %p68
      %s70 = ssub.s32 %s10, %s17
      %p71 = scmp.eq.s32.totalorder %s70, 0
      %s73 = sadd.s32 %s72, 1
      %s74 = scalar_select %p71, %s72, %s73
      %p77 = pneg %p71
      %p78 = scmp.eq.s32.totalorder %s10, 1
      %p79 = por %p77, %p78
      %p80 = scmp.ne.s32.totalorder %s72, %s75
      %p81 = scmp.eq.s32.totalorder %s10, 0
      %p82 = por %p80, %p81
      %p83 = scmp.ne.s32.totalorder %s72, %s75
      %p84 = scmp.eq.s32.totalorder %s15, 1
      %p85 = por %p83, %p84
      %p86 = scmp.ne.s32.totalorder %s75, %s76
      %p87 = scmp.eq.s32.totalorder %s15, 0
      %p88 = por %p86, %p87
      %p89 = scmp.ne.s32.totalorder %s75, %s76
      %p90 = scmp.eq.s32.totalorder %s16, 1
      %p91 = por %p89, %p90
      %p93 = scmp.ne.s32.totalorder %s76, %s92
      %p94 = scmp.eq.s32.totalorder %s16, 0
      %p95 = por %p93, %p94
      %s96 = ssub.s32 %s10, %s17
      %p97 = scmp.eq.s32.totalorder %s96, 0
      %s99 = sadd.s32 %s98, 1
      %s100 = scalar_select %p97, %s98, %s99
      %p103 = pneg %p97
      %p104 = scmp.eq.s32.totalorder %s10, 1
      %p105 = por %p103, %p104
      %p106 = scmp.ne.s32.totalorder %s98, %s101
      %p107 = scmp.eq.s32.totalorder %s10, 0
      %p108 = por %p106, %p107
      %p109 = scmp.ne.s32.totalorder %s98, %s101
      %p110 = scmp.eq.s32.totalorder %s15, 1
      %p111 = por %p109, %p110
      %p112 = scmp.ne.s32.totalorder %s101, %s102
      %p113 = scmp.eq.s32.totalorder %s15, 0
      %p114 = por %p112, %p113
      %p115 = scmp.ne.s32.totalorder %s101, %s102
      %p116 = scmp.eq.s32.totalorder %s16, 1
      %p117 = por %p115, %p116
      %p119 = scmp.ne.s32.totalorder %s102, %s118
      %p120 = scmp.eq.s32.totalorder %s16, 0
      %p121 = por %p119, %p120
      %s122 = ssub.s32 %s10, %s17
      %p123 = scmp.eq.s32.totalorder %s122, 0
      %s125 = sadd.s32 %s124, 1
      %s126 = scalar_select %p123, %s124, %s125
      %p129 = pneg %p123
      %p130 = scmp.eq.s32.totalorder %s10, 1
      %p131 = por %p129, %p130
      %p132 = scmp.ne.s32.totalorder %s124, %s127
      %p133 = scmp.eq.s32.totalorder %s10, 0
      %p134 = por %p132, %p133
      %p135 = scmp.ne.s32.totalorder %s124, %s127
      %p136 = scmp.eq.s32.totalorder %s15, 1
      %p137 = por %p135, %p136
      %p138 = scmp.ne.s32.totalorder %s127, %s128
      %p139 = scmp.eq.s32.totalorder %s15, 0
      %p140 = por %p138, %p139
      %p141 = scmp.ne.s32.totalorder %s127, %s128
      %p142 = scmp.eq.s32.totalorder %s16, 1
      %p143 = por %p141, %p142
      %p145 = scmp.ne.s32.totalorder %s128, %s144
      %p146 = scmp.eq.s32.totalorder %s16, 0
      %p147 = por %p145, %p146
      %p148 = scmp.le.s32.totalorder 1, %s10
      %p149 = scmp.lt.s32.totalorder %s10, 3
      %p150 = pnand %p148, %p149
      %p151 = pneg %p150
      // Predicated region
      $region9: #{adversarial_loss_forward.9} parent=5 // pred_check
        _
      $region10: #{adversarial_loss_forward.9} parent=5 // pred_check_branch
        %153 = sbr.rel (%p150) target = $region12
      $region11: #{adversarial_loss_forward.9} parent=5 // pred_region
        %s154 = ssub.s32 %s10, 1
      $region12: #{adversarial_loss_forward.9} parent=5 // pred_fallthru
        _
      %p155 = scmp.lt.s32.totalorder %s10, 2
      // Predicated region
      $region13: #{adversarial_loss_forward.9} parent=5 // pred_check
        %p156 = pneg %p155
      $region14: #{adversarial_loss_forward.9} parent=5 // pred_check_branch
        %158 = sbr.rel (%p156) target = $region16
      $region15: #{adversarial_loss_forward.9} parent=5 // pred_region
        // Predicated region
        $region17: #{adversarial_loss_forward.9} parent=15 // pred_check
          %p159 = pneg %p30
        $region18: #{adversarial_loss_forward.9} parent=15 // pred_check_branch
          %161 = sbr.rel (%p159) target = $region20
        $region19: #{adversarial_loss_forward.9} parent=15 // pred_region
          %s162 = sand.u32 %s20, 1
          %s163 = sand.u32 %s20, 1
          %s164 = smul.addr %s163, 24
          %s165 = scalar_lea.vmem [#allocation2], %s164
          %s166 = smul.addr %s10, 8
          %s167 = scalar_lea.vmem %s0, %s166
          // Predicated region
          $region21: #{adversarial_loss_forward.9} parent=19 // pred_check
            _
          $region22: #{adversarial_loss_forward.9} parent=19 // pred_check_branch
            %169 = sbr.rel (0) target = $region24
          $region23: #{adversarial_loss_forward.9} parent=19 // pred_region
            // Predicated region
            $region25: #{adversarial_loss_forward.9} parent=23 // pred_check
              _
            $region26: #{adversarial_loss_forward.9} parent=23 // pred_check_branch
              %171 = sbr.rel (0) target = $region28
            $region27: #{adversarial_loss_forward.9} parent=23 // pred_region
              // Predicated region
              $region40: #{adversarial_loss_forward.9} parent=27 // pred_check
                _
              $region41: #{adversarial_loss_forward.9} parent=27 // pred_check_branch
                %190 = sbr.rel (0) target = $region43
              $region42: #{adversarial_loss_forward.9} parent=27 // pred_region
                loop: start=0, step=1, limit=1
                $region44: #{adversarial_loss_forward.9} parent=42 // loop_pre_header
                  _
                $region45: #{adversarial_loss_forward.9} parent=42 // loop_header
                  %s192 = sphi 0, %s196
                  %p193 = scmp.ge.s32.totalorder %s192, 1
                  %s197 = sphi %s167, %s167
                  %s198 = sphi %s165, %s165
                $region46: #{adversarial_loss_forward.9} parent=42 // loop_header_branch
                  %195 = sbr.rel (%p193) target = $region50
                $region47: #{adversarial_loss_forward.9} parent=42 // loop_body
                  %v199 = vld [vmem:[%s197] sm:$0xff]
                  %200 = vst [vmem:[%s198] sm:$0xff] %v199
                  %v201 = vld [vmem:[%s197 + $0x10] sm:$0xff]
                  %202 = vst [vmem:[%s198 + $0x8] sm:$0xff] %v201
                  %v203 = vld [vmem:[%s197 + $0x20] sm:$0xff]
                  %204 = vst [vmem:[%s198 + $0x10] sm:$0xff] %v203
                $region48: #{adversarial_loss_forward.9} parent=42 // loop_footer
                  %s196 = sadd.s32 1, %s192
                $region49: #{adversarial_loss_forward.9} parent=42 // loop_footer_branch
                  %191 = sbr.rel target = $region45
                $region50: #{adversarial_loss_forward.9} parent=42 // loop_exit
                  _
              $region43: #{adversarial_loss_forward.9} parent=27 // pred_fallthru
                _
              // Predicated region
              $region51: #{adversarial_loss_forward.9} parent=27 // pred_check
                _
              $region52: #{adversarial_loss_forward.9} parent=27 // pred_check_branch
                %206 = sbr.rel target = $region54
              $region53: #{adversarial_loss_forward.9} parent=27 // pred_region
                _
              $region54: #{adversarial_loss_forward.9} parent=27 // pred_fallthru
                _
            $region28: #{adversarial_loss_forward.9} parent=23 // pred_fallthru
              _
            // Predicated region
            $region29: #{adversarial_loss_forward.9} parent=23 // pred_check
              _
            $region30: #{adversarial_loss_forward.9} parent=23 // pred_check_branch
              %173 = sbr.rel target = $region32
            $region31: #{adversarial_loss_forward.9} parent=23 // pred_region
              loop: start=0, step=1, limit=1
              $region33: #{adversarial_loss_forward.9} parent=31 // loop_pre_header
                _
              $region34: #{adversarial_loss_forward.9} parent=31 // loop_header
                %s176 = sphi 0, %s180
                %p177 = scmp.ge.s32.totalorder %s176, 1
                %s181 = sphi %s167, %s167
                %s182 = sphi %s165, %s165
              $region35: #{adversarial_loss_forward.9} parent=31 // loop_header_branch
                %179 = sbr.rel (%p177) target = $region39
              $region36: #{adversarial_loss_forward.9} parent=31 // loop_body
                %v183 = vld [vmem:[%s181] sm:$0xff]
                %184 = vst [vmem:[%s182] sm:$0xff] %v183
                %v185 = vld [vmem:[%s181 + $0x10] sm:$0xff]
                %186 = vst [vmem:[%s182 + $0x8] sm:$0xff] %v185
                %v187 = vld [vmem:[%s181 + $0x20] sm:$0xff]
                %188 = vst [vmem:[%s182 + $0x10] sm:$0xff] %v187
              $region37: #{adversarial_loss_forward.9} parent=31 // loop_footer
                %s180 = sadd.s32 1, %s176
              $region38: #{adversarial_loss_forward.9} parent=31 // loop_footer_branch
                %175 = sbr.rel target = $region34
              $region39: #{adversarial_loss_forward.9} parent=31 // loop_exit
                _
            $region32: #{adversarial_loss_forward.9} parent=23 // pred_fallthru
              _
          $region24: #{adversarial_loss_forward.9} parent=19 // pred_fallthru
            _
          %207 = vnop
        $region20: #{adversarial_loss_forward.9} parent=15 // pred_fallthru
          _
        // Predicated region
        $region55: #{adversarial_loss_forward.9} parent=15 // pred_check
          %p208 = pneg %p56
        $region56: #{adversarial_loss_forward.9} parent=15 // pred_check_branch
          %210 = sbr.rel (%p208) target = $region58
        $region57: #{adversarial_loss_forward.9} parent=15 // pred_region
          %s211 = sand.u32 %s46, 1
          %s212 = sand.u32 %s46, 1
          %s213 = smul.addr %s212, 24
          %s214 = scalar_lea.vmem [#allocation3], %s213
          %s215 = smul.addr %s10, 8
          %s216 = scalar_lea.vmem %s1, %s215
          // Predicated region
          $region59: #{adversarial_loss_forward.9} parent=57 // pred_check
            _
          $region60: #{adversarial_loss_forward.9} parent=57 // pred_check_branch
            %218 = sbr.rel (0) target = $region62
          $region61: #{adversarial_loss_forward.9} parent=57 // pred_region
            // Predicated region
            $region63: #{adversarial_loss_forward.9} parent=61 // pred_check
              _
            $region64: #{adversarial_loss_forward.9} parent=61 // pred_check_branch
              %220 = sbr.rel (0) target = $region66
            $region65: #{adversarial_loss_forward.9} parent=61 // pred_region
              // Predicated region
              $region78: #{adversarial_loss_forward.9} parent=65 // pred_check
                _
              $region79: #{adversarial_loss_forward.9} parent=65 // pred_check_branch
                %239 = sbr.rel (0) target = $region81
              $region80: #{adversarial_loss_forward.9} parent=65 // pred_region
                loop: start=0, step=1, limit=1
                $region82: #{adversarial_loss_forward.9} parent=80 // loop_pre_header
                  _
                $region83: #{adversarial_loss_forward.9} parent=80 // loop_header
                  %s241 = sphi 0, %s245
                  %p242 = scmp.ge.s32.totalorder %s241, 1
                  %s246 = sphi %s216, %s216
                  %s247 = sphi %s214, %s214
                $region84: #{adversarial_loss_forward.9} parent=80 // loop_header_branch
                  %244 = sbr.rel (%p242) target = $region88
                $region85: #{adversarial_loss_forward.9} parent=80 // loop_body
                  %v248 = vld [vmem:[%s246] sm:$0xff]
                  %249 = vst [vmem:[%s247] sm:$0xff] %v248
                  %v250 = vld [vmem:[%s246 + $0x10] sm:$0xff]
                  %251 = vst [vmem:[%s247 + $0x8] sm:$0xff] %v250
                  %v252 = vld [vmem:[%s246 + $0x20] sm:$0xff]
                  %253 = vst [vmem:[%s247 + $0x10] sm:$0xff] %v252
                $region86: #{adversarial_loss_forward.9} parent=80 // loop_footer
                  %s245 = sadd.s32 1, %s241
                $region87: #{adversarial_loss_forward.9} parent=80 // loop_footer_branch
                  %240 = sbr.rel target = $region83
                $region88: #{adversarial_loss_forward.9} parent=80 // loop_exit
                  _
              $region81: #{adversarial_loss_forward.9} parent=65 // pred_fallthru
                _
              // Predicated region
              $region89: #{adversarial_loss_forward.9} parent=65 // pred_check
                _
              $region90: #{adversarial_loss_forward.9} parent=65 // pred_check_branch
                %255 = sbr.rel target = $region92
              $region91: #{adversarial_loss_forward.9} parent=65 // pred_region
                _
              $region92: #{adversarial_loss_forward.9} parent=65 // pred_fallthru
                _
            $region66: #{adversarial_loss_forward.9} parent=61 // pred_fallthru
              _
            // Predicated region
            $region67: #{adversarial_loss_forward.9} parent=61 // pred_check
              _
            $region68: #{adversarial_loss_forward.9} parent=61 // pred_check_branch
              %222 = sbr.rel target = $region70
            $region69: #{adversarial_loss_forward.9} parent=61 // pred_region
              loop: start=0, step=1, limit=1
              $region71: #{adversarial_loss_forward.9} parent=69 // loop_pre_header
                _
              $region72: #{adversarial_loss_forward.9} parent=69 // loop_header
                %s225 = sphi 0, %s229
                %p226 = scmp.ge.s32.totalorder %s225, 1
                %s230 = sphi %s216, %s216
                %s231 = sphi %s214, %s214
              $region73: #{adversarial_loss_forward.9} parent=69 // loop_header_branch
                %228 = sbr.rel (%p226) target = $region77
              $region74: #{adversarial_loss_forward.9} parent=69 // loop_body
                %v232 = vld [vmem:[%s230] sm:$0xff]
                %233 = vst [vmem:[%s231] sm:$0xff] %v232
                %v234 = vld [vmem:[%s230 + $0x10] sm:$0xff]
                %235 = vst [vmem:[%s231 + $0x8] sm:$0xff] %v234
                %v236 = vld [vmem:[%s230 + $0x20] sm:$0xff]
                %237 = vst [vmem:[%s231 + $0x10] sm:$0xff] %v236
              $region75: #{adversarial_loss_forward.9} parent=69 // loop_footer
                %s229 = sadd.s32 1, %s225
              $region76: #{adversarial_loss_forward.9} parent=69 // loop_footer_branch
                %224 = sbr.rel target = $region72
              $region77: #{adversarial_loss_forward.9} parent=69 // loop_exit
                _
            $region70: #{adversarial_loss_forward.9} parent=61 // pred_fallthru
              _
          $region62: #{adversarial_loss_forward.9} parent=57 // pred_fallthru
            _
          %256 = vnop
        $region58: #{adversarial_loss_forward.9} parent=15 // pred_fallthru
          _
        // Predicated region
        $region93: #{adversarial_loss_forward.9} parent=15 // pred_check
          %p257 = pneg %p82
        $region94: #{adversarial_loss_forward.9} parent=15 // pred_check_branch
          %259 = sbr.rel (%p257) target = $region96
        $region95: #{adversarial_loss_forward.9} parent=15 // pred_region
          %s260 = sand.u32 %s72, 1
          %s261 = sand.u32 %s72, 1
          %s262 = smul.addr %s261, 24
          %s263 = scalar_lea.vmem [#allocation4], %s262
          %s264 = smul.addr %s10, 8
          %s265 = scalar_lea.vmem %s2, %s264
          // Predicated region
          $region97: #{adversarial_loss_forward.9} parent=95 // pred_check
            _
          $region98: #{adversarial_loss_forward.9} parent=95 // pred_check_branch
            %267 = sbr.rel (0) target = $region100
          $region99: #{adversarial_loss_forward.9} parent=95 // pred_region
            // Predicated region
            $region101: #{adversarial_loss_forward.9} parent=99 // pred_check
              _
            $region102: #{adversarial_loss_forward.9} parent=99 // pred_check_branch
              %269 = sbr.rel (0) target = $region104
            $region103: #{adversarial_loss_forward.9} parent=99 // pred_region
              // Predicated region
              $region116: #{adversarial_loss_forward.9} parent=103 // pred_check
                _
              $region117: #{adversarial_loss_forward.9} parent=103 // pred_check_branch
                %288 = sbr.rel (0) target = $region119
              $region118: #{adversarial_loss_forward.9} parent=103 // pred_region
                loop: start=0, step=1, limit=1
                $region120: #{adversarial_loss_forward.9} parent=118 // loop_pre_header
                  _
                $region121: #{adversarial_loss_forward.9} parent=118 // loop_header
                  %s290 = sphi 0, %s294
                  %p291 = scmp.ge.s32.totalorder %s290, 1
                  %s295 = sphi %s265, %s265
                  %s296 = sphi %s263, %s263
                $region122: #{adversarial_loss_forward.9} parent=118 // loop_header_branch
                  %293 = sbr.rel (%p291) target = $region126
                $region123: #{adversarial_loss_forward.9} parent=118 // loop_body
                  %v297 = vld [vmem:[%s295] sm:$0xff]
                  %298 = vst [vmem:[%s296] sm:$0xff] %v297
                  %v299 = vld [vmem:[%s295 + $0x10] sm:$0xff]
                  %300 = vst [vmem:[%s296 + $0x8] sm:$0xff] %v299
                  %v301 = vld [vmem:[%s295 + $0x20] sm:$0xff]
                  %302 = vst [vmem:[%s296 + $0x10] sm:$0xff] %v301
                $region124: #{adversarial_loss_forward.9} parent=118 // loop_footer
                  %s294 = sadd.s32 1, %s290
                $region125: #{adversarial_loss_forward.9} parent=118 // loop_footer_branch
                  %289 = sbr.rel target = $region121
                $region126: #{adversarial_loss_forward.9} parent=118 // loop_exit
                  _
              $region119: #{adversarial_loss_forward.9} parent=103 // pred_fallthru
                _
              // Predicated region
              $region127: #{adversarial_loss_forward.9} parent=103 // pred_check
                _
              $region128: #{adversarial_loss_forward.9} parent=103 // pred_check_branch
                %304 = sbr.rel target = $region130
              $region129: #{adversarial_loss_forward.9} parent=103 // pred_region
                _
              $region130: #{adversarial_loss_forward.9} parent=103 // pred_fallthru
                _
            $region104: #{adversarial_loss_forward.9} parent=99 // pred_fallthru
              _
            // Predicated region
            $region105: #{adversarial_loss_forward.9} parent=99 // pred_check
              _
            $region106: #{adversarial_loss_forward.9} parent=99 // pred_check_branch
              %271 = sbr.rel target = $region108
            $region107: #{adversarial_loss_forward.9} parent=99 // pred_region
              loop: start=0, step=1, limit=1
              $region109: #{adversarial_loss_forward.9} parent=107 // loop_pre_header
                _
              $region110: #{adversarial_loss_forward.9} parent=107 // loop_header
                %s274 = sphi 0, %s278
                %p275 = scmp.ge.s32.totalorder %s274, 1
                %s279 = sphi %s265, %s265
                %s280 = sphi %s263, %s263
              $region111: #{adversarial_loss_forward.9} parent=107 // loop_header_branch
                %277 = sbr.rel (%p275) target = $region115
              $region112: #{adversarial_loss_forward.9} parent=107 // loop_body
                %v281 = vld [vmem:[%s279] sm:$0xff]
                %282 = vst [vmem:[%s280] sm:$0xff] %v281
                %v283 = vld [vmem:[%s279 + $0x10] sm:$0xff]
                %284 = vst [vmem:[%s280 + $0x8] sm:$0xff] %v283
                %v285 = vld [vmem:[%s279 + $0x20] sm:$0xff]
                %286 = vst [vmem:[%s280 + $0x10] sm:$0xff] %v285
              $region113: #{adversarial_loss_forward.9} parent=107 // loop_footer
                %s278 = sadd.s32 1, %s274
              $region114: #{adversarial_loss_forward.9} parent=107 // loop_footer_branch
                %273 = sbr.rel target = $region110
              $region115: #{adversarial_loss_forward.9} parent=107 // loop_exit
                _
            $region108: #{adversarial_loss_forward.9} parent=99 // pred_fallthru
              _
          $region100: #{adversarial_loss_forward.9} parent=95 // pred_fallthru
            _
          %305 = vnop
        $region96: #{adversarial_loss_forward.9} parent=15 // pred_fallthru
          _
        // Predicated region
        $region131: #{adversarial_loss_forward.9} parent=15 // pred_check
          %p306 = pneg %p108
        $region132: #{adversarial_loss_forward.9} parent=15 // pred_check_branch
          %308 = sbr.rel (%p306) target = $region134
        $region133: #{adversarial_loss_forward.9} parent=15 // pred_region
          %s309 = sand.u32 %s98, 1
          %s310 = sand.u32 %s98, 1
          %s311 = smul.addr %s310, 24
          %s312 = scalar_lea.vmem [#allocation5], %s311
          %s313 = smul.addr %s10, 8
          %s314 = scalar_lea.vmem %s3, %s313
          // Predicated region
          $region135: #{adversarial_loss_forward.9} parent=133 // pred_check
            _
          $region136: #{adversarial_loss_forward.9} parent=133 // pred_check_branch
            %316 = sbr.rel (0) target = $region138
          $region137: #{adversarial_loss_forward.9} parent=133 // pred_region
            // Predicated region
            $region139: #{adversarial_loss_forward.9} parent=137 // pred_check
              _
            $region140: #{adversarial_loss_forward.9} parent=137 // pred_check_branch
              %318 = sbr.rel (0) target = $region142
            $region141: #{adversarial_loss_forward.9} parent=137 // pred_region
              // Predicated region
              $region154: #{adversarial_loss_forward.9} parent=141 // pred_check
                _
              $region155: #{adversarial_loss_forward.9} parent=141 // pred_check_branch
                %337 = sbr.rel (0) target = $region157
              $region156: #{adversarial_loss_forward.9} parent=141 // pred_region
                loop: start=0, step=1, limit=1
                $region158: #{adversarial_loss_forward.9} parent=156 // loop_pre_header
                  _
                $region159: #{adversarial_loss_forward.9} parent=156 // loop_header
                  %s339 = sphi 0, %s343
                  %p340 = scmp.ge.s32.totalorder %s339, 1
                  %s344 = sphi %s314, %s314
                  %s345 = sphi %s312, %s312
                $region160: #{adversarial_loss_forward.9} parent=156 // loop_header_branch
                  %342 = sbr.rel (%p340) target = $region164
                $region161: #{adversarial_loss_forward.9} parent=156 // loop_body
                  %v346 = vld [vmem:[%s344] sm:$0xff]
                  %347 = vst [vmem:[%s345] sm:$0xff] %v346
                  %v348 = vld [vmem:[%s344 + $0x10] sm:$0xff]
                  %349 = vst [vmem:[%s345 + $0x8] sm:$0xff] %v348
                  %v350 = vld [vmem:[%s344 + $0x20] sm:$0xff]
                  %351 = vst [vmem:[%s345 + $0x10] sm:$0xff] %v350
                $region162: #{adversarial_loss_forward.9} parent=156 // loop_footer
                  %s343 = sadd.s32 1, %s339
                $region163: #{adversarial_loss_forward.9} parent=156 // loop_footer_branch
                  %338 = sbr.rel target = $region159
                $region164: #{adversarial_loss_forward.9} parent=156 // loop_exit
                  _
              $region157: #{adversarial_loss_forward.9} parent=141 // pred_fallthru
                _
              // Predicated region
              $region165: #{adversarial_loss_forward.9} parent=141 // pred_check
                _
              $region166: #{adversarial_loss_forward.9} parent=141 // pred_check_branch
                %353 = sbr.rel target = $region168
              $region167: #{adversarial_loss_forward.9} parent=141 // pred_region
                _
              $region168: #{adversarial_loss_forward.9} parent=141 // pred_fallthru
                _
            $region142: #{adversarial_loss_forward.9} parent=137 // pred_fallthru
              _
            // Predicated region
            $region143: #{adversarial_loss_forward.9} parent=137 // pred_check
              _
            $region144: #{adversarial_loss_forward.9} parent=137 // pred_check_branch
              %320 = sbr.rel target = $region146
            $region145: #{adversarial_loss_forward.9} parent=137 // pred_region
              loop: start=0, step=1, limit=1
              $region147: #{adversarial_loss_forward.9} parent=145 // loop_pre_header
                _
              $region148: #{adversarial_loss_forward.9} parent=145 // loop_header
                %s323 = sphi 0, %s327
                %p324 = scmp.ge.s32.totalorder %s323, 1
                %s328 = sphi %s314, %s314
                %s329 = sphi %s312, %s312
              $region149: #{adversarial_loss_forward.9} parent=145 // loop_header_branch
                %326 = sbr.rel (%p324) target = $region153
              $region150: #{adversarial_loss_forward.9} parent=145 // loop_body
                %v330 = vld [vmem:[%s328] sm:$0xff]
                %331 = vst [vmem:[%s329] sm:$0xff] %v330
                %v332 = vld [vmem:[%s328 + $0x10] sm:$0xff]
                %333 = vst [vmem:[%s329 + $0x8] sm:$0xff] %v332
                %v334 = vld [vmem:[%s328 + $0x20] sm:$0xff]
                %335 = vst [vmem:[%s329 + $0x10] sm:$0xff] %v334
              $region151: #{adversarial_loss_forward.9} parent=145 // loop_footer
                %s327 = sadd.s32 1, %s323
              $region152: #{adversarial_loss_forward.9} parent=145 // loop_footer_branch
                %322 = sbr.rel target = $region148
              $region153: #{adversarial_loss_forward.9} parent=145 // loop_exit
                _
            $region146: #{adversarial_loss_forward.9} parent=137 // pred_fallthru
              _
          $region138: #{adversarial_loss_forward.9} parent=133 // pred_fallthru
            _
          %354 = vnop
        $region134: #{adversarial_loss_forward.9} parent=15 // pred_fallthru
          _
      $region16: #{adversarial_loss_forward.9} parent=5 // pred_fallthru
        _
      %p355 = scmp.le.s32.totalorder 1, %s10
      %p356 = scmp.lt.s32.totalorder %s10, 3
      %p357 = pnand %p355, %p356
      %p358 = pneg %p357
      // Predicated region
      $region169: #{adversarial_loss_forward.9} parent=5 // pred_check
        _
      $region170: #{adversarial_loss_forward.9} parent=5 // pred_check_branch
        %360 = sbr.rel (%p357) target = $region172
      $region171: #{adversarial_loss_forward.9} parent=5 // pred_region
        %s361 = ssub.s32 %s10, 1
        %s362 = sand.u32 %s23, 1
        %s363 = sand.u32 %s23, 1
        %s364 = smul.addr %s363, 24
        %s365 = scalar_lea.vmem [#allocation2], %s364
        // Predicated region
        $region173: #{adversarial_loss_forward.9} parent=171 // pred_check
          %p366 = pneg %p36
        $region174: #{adversarial_loss_forward.9} parent=171 // pred_check_branch
          %368 = sbr.rel (%p366) target = $region176
        $region175: #{adversarial_loss_forward.9} parent=171 // pred_region
          _
        $region176: #{adversarial_loss_forward.9} parent=171 // pred_fallthru
          _
        %s369 = sand.u32 %s49, 1
        %s370 = sand.u32 %s49, 1
        %s371 = smul.addr %s370, 24
        %s372 = scalar_lea.vmem [#allocation3], %s371
        // Predicated region
        $region177: #{adversarial_loss_forward.9} parent=171 // pred_check
          %p373 = pneg %p62
        $region178: #{adversarial_loss_forward.9} parent=171 // pred_check_branch
          %375 = sbr.rel (%p373) target = $region180
        $region179: #{adversarial_loss_forward.9} parent=171 // pred_region
          _
        $region180: #{adversarial_loss_forward.9} parent=171 // pred_fallthru
          _
        %s376 = sand.u32 %s75, 1
        %s377 = sand.u32 %s75, 1
        %s378 = smul.addr %s377, 24
        %s379 = scalar_lea.vmem [#allocation4], %s378
        // Predicated region
        $region181: #{adversarial_loss_forward.9} parent=171 // pred_check
          %p380 = pneg %p88
        $region182: #{adversarial_loss_forward.9} parent=171 // pred_check_branch
          %382 = sbr.rel (%p380) target = $region184
        $region183: #{adversarial_loss_forward.9} parent=171 // pred_region
          _
        $region184: #{adversarial_loss_forward.9} parent=171 // pred_fallthru
          _
        %s383 = sand.u32 %s101, 1
        %s384 = sand.u32 %s101, 1
        %s385 = smul.addr %s384, 24
        %s386 = scalar_lea.vmem [#allocation5], %s385
        // Predicated region
        $region185: #{adversarial_loss_forward.9} parent=171 // pred_check
          %p387 = pneg %p114
        $region186: #{adversarial_loss_forward.9} parent=171 // pred_check_branch
          %389 = sbr.rel (%p387) target = $region188
        $region187: #{adversarial_loss_forward.9} parent=171 // pred_region
          _
        $region188: #{adversarial_loss_forward.9} parent=171 // pred_fallthru
          _
        %s390 = sand.u32 %s23, 1
        %s391 = sand.u32 %s23, 1
        %s392 = smul.addr %s391, 24
        %s393 = scalar_lea.vmem [#allocation2], %s392
        %p394 = pneg %p36
        %p395 = pneg %p33
        %s396 = sand.u32 %s49, 1
        %s397 = sand.u32 %s49, 1
        %s398 = smul.addr %s397, 24
        %s399 = scalar_lea.vmem [#allocation3], %s398
        %p400 = pneg %p62
        %p401 = pneg %p59
        %s402 = sand.u32 %s75, 1
        %s403 = sand.u32 %s75, 1
        %s404 = smul.addr %s403, 24
        %s405 = scalar_lea.vmem [#allocation4], %s404
        %p406 = pneg %p88
        %p407 = pneg %p85
        %s408 = sand.u32 %s101, 1
        %s409 = sand.u32 %s101, 1
        %s410 = smul.addr %s409, 24
        %s411 = scalar_lea.vmem [#allocation5], %s410
        %p412 = pneg %p114
        %p413 = pneg %p111
        %p414 = pneg %p140
        %p415 = pneg %p137
        %s416 = sand.u32 %s127, 1
        %s417 = sand.u32 %s127, 1
        %s418 = smul.addr %s417, 36
        %s419 = scalar_lea.vmem [#allocation6], %s418
        %v420 = vld [vmem:[%s365] sm:$0xff]
        %v421 = vld [vmem:[%s365 + $0x8] sm:$0xff]
        %v422 = vld [vmem:[%s365 + $0x10] sm:$0x3]
        %v423 = vld [vmem:[%s372] sm:$0xff]
        %v424 = vld [vmem:[%s372 + $0x8] sm:$0xff]
        %v425 = vld [vmem:[%s372 + $0x10] sm:$0x3]
        %v426 = vld [vmem:[%s379] sm:$0xff]
        %v427 = vld [vmem:[%s379 + $0x8] sm:$0xff]
        %v428 = vld [vmem:[%s379 + $0x10] sm:$0x3]
        %v429 = vld [vmem:[%s386] sm:$0xff]
        %v430 = vld [vmem:[%s386 + $0x8] sm:$0xff]
        %v431 = vld [vmem:[%s386 + $0x10] sm:$0x3]
        %v432 = vsub.f32 0.0, %v420
        %v433 = vsub.f32 0.0, %v421
        %v434 = vsub.f32 0.0, %v422
        %v435 = vadd.f32 %v432, %v423
        %v436 = vadd.f32 %v433, %v424
        %v437 = vadd.f32 %v434, %v425
        %v438 = vsub.f32 %v435, %v426
        %v439 = vsub.f32 %v436, %v427
        %v440 = vsub.f32 %v437, %v428
        %v441 = vadd.f32 %v438, %v429
        %v442 = vadd.f32 %v439, %v430
        %v443 = vadd.f32 %v440, %v431
        %v444 = vmul.f32 %v441, 0.5
        %v445 = vmul.f32 %v442, 0.5
        %v446 = vmul.f32 %v443, 0.5
        %v447 = vpack.c.bf16 %v445, %v444
        %v448 = vpack.c.bf16 %v446, %v446
        %v451 = vunpack.c.l.b16 %v447
        %v452 = vunpack.c.h.b16 %v447
        %v453 = vunpack.c.l.b16 %v448
        %v454 = vpack.c.b16 %v451, %v451
        %v455 = vpack.c.b16 %v452, %v452
        %v456 = vpack.c.b16 %v453, %v453
        %460 = vst [vmem:[%s419] sm:$0xf] %v454
        %461 = vst [vmem:[%s419 + $0x4] sm:$0xf] %v455
        %462 = vst [vmem:[%s419 + $0x8] sm:$0x1] %v456
        %v463 = vsub.f32 %v432, %v423
        %v464 = vsub.f32 %v433, %v424
        %v465 = vsub.f32 %v434, %v425
        %v466 = vadd.f32 %v463, %v426
        %v467 = vadd.f32 %v464, %v427
        %v468 = vadd.f32 %v465, %v428
        %v469 = vadd.f32 %v466, %v429
        %v470 = vadd.f32 %v467, %v430
        %v471 = vadd.f32 %v468, %v431
        %v472 = vmul.f32 %v469, 0.5
        %v473 = vmul.f32 %v470, 0.5
        %v474 = vmul.f32 %v471, 0.5
        %v475 = vpack.c.bf16 %v473, %v472
        %v476 = vpack.c.bf16 %v474, %v474
        %v479 = vunpack.c.l.b16 %v475
        %v480 = vunpack.c.h.b16 %v475
        %v481 = vunpack.c.l.b16 %v476
        %v482 = vpack.c.b16 %v479, %v479
        %v483 = vpack.c.b16 %v480, %v480
        %v484 = vpack.c.b16 %v481, %v481
        %s488 = scalar_lea.vmem %s419, 12 [#allocation6]
        %489 = vst [vmem:[%s488] sm:$0xf] %v482
        %490 = vst [vmem:[%s488 + $0x4] sm:$0xf] %v483
        %491 = vst [vmem:[%s488 + $0x8] sm:$0x1] %v484
        %v492 = vsub.f32 %v420, %v423
        %v493 = vsub.f32 %v421, %v424
        %v494 = vsub.f32 %v422, %v425
        %v495 = vsub.f32 %v492, %v426
        %v496 = vsub.f32 %v493, %v427
        %v497 = vsub.f32 %v494, %v428
        %v498 = vadd.f32 %v495, %v429
        %v499 = vadd.f32 %v496, %v430
        %v500 = vadd.f32 %v497, %v431
        %v501 = vmul.f32 %v498, 0.5
        %v502 = vmul.f32 %v499, 0.5
        %v503 = vmul.f32 %v500, 0.5
        %v504 = vpack.c.bf16 %v502, %v501
        %v505 = vpack.c.bf16 %v503, %v503
        %v508 = vunpack.c.l.b16 %v504
        %v509 = vunpack.c.h.b16 %v504
        %v510 = vunpack.c.l.b16 %v505
        %v511 = vpack.c.b16 %v508, %v508
        %v512 = vpack.c.b16 %v509, %v509
        %v513 = vpack.c.b16 %v510, %v510
        %s517 = scalar_lea.vmem %s419, 24 [#allocation6]
        %518 = vst [vmem:[%s517] sm:$0xf] %v511
        %519 = vst [vmem:[%s517 + $0x4] sm:$0xf] %v512
        %520 = vst [vmem:[%s517 + $0x8] sm:$0x1] %v513
        %s521 = sand.u32 %s127, 1
        %s522 = sand.u32 %s127, 1
        %s523 = smul.addr %s522, 36
        %s524 = scalar_lea.vmem [#allocation6], %s523
        // Predicated region
        $region189: #{adversarial_loss_forward.9} parent=171 // pred_check
          %p525 = pneg %p137
        $region190: #{adversarial_loss_forward.9} parent=171 // pred_check_branch
          %527 = sbr.rel (%p525) target = $region192
        $region191: #{adversarial_loss_forward.9} parent=171 // pred_region
          %s528 = smul.addr %s15, 4
          %s529 = scalar_lea.vmem %s4, %s528
          // Predicated region
          $region193: #{adversarial_loss_forward.9} parent=191 // pred_check
            _
          $region194: #{adversarial_loss_forward.9} parent=191 // pred_check_branch
            %531 = sbr.rel (0) target = $region196
          $region195: #{adversarial_loss_forward.9} parent=191 // pred_region
            // Predicated region
            $region197: #{adversarial_loss_forward.9} parent=195 // pred_check
              _
            $region198: #{adversarial_loss_forward.9} parent=195 // pred_check_branch
              %533 = sbr.rel target = $region200
            $region199: #{adversarial_loss_forward.9} parent=195 // pred_region
              // Predicated region
              $region212: #{adversarial_loss_forward.9} parent=199 // pred_check
                _
              $region213: #{adversarial_loss_forward.9} parent=199 // pred_check_branch
                %564 = sbr.rel (0) target = $region215
              $region214: #{adversarial_loss_forward.9} parent=199 // pred_region
                loop: start=0, step=1, limit=1
                $region216: #{adversarial_loss_forward.9} parent=214 // loop_pre_header
                  _
                $region217: #{adversarial_loss_forward.9} parent=214 // loop_header
                  %s566 = sphi 0, %s570
                  %p567 = scmp.ge.s32.totalorder %s566, 1
                  %s571 = sphi %s524, %s524
                  %s572 = sphi %s529, %s529
                $region218: #{adversarial_loss_forward.9} parent=214 // loop_header_branch
                  %569 = sbr.rel (%p567) target = $region222
                $region219: #{adversarial_loss_forward.9} parent=214 // loop_body
                  _
                $region220: #{adversarial_loss_forward.9} parent=214 // loop_footer
                  %s570 = sadd.s32 1, %s566
                $region221: #{adversarial_loss_forward.9} parent=214 // loop_footer_branch
                  %565 = sbr.rel target = $region217
                $region222: #{adversarial_loss_forward.9} parent=214 // loop_exit
                  _
                loop: start=0, step=1, limit=1
                $region223: #{adversarial_loss_forward.9} parent=214 // loop_pre_header
                  _
                $region224: #{adversarial_loss_forward.9} parent=214 // loop_header
                  %s575 = sphi 0, %s579
                  %p576 = scmp.ge.s32.totalorder %s575, 1
                  %s580 = sphi %s524, %s524
                  %s581 = sphi %s529, %s529
                $region225: #{adversarial_loss_forward.9} parent=214 // loop_header_branch
                  %578 = sbr.rel (%p576) target = $region229
                $region226: #{adversarial_loss_forward.9} parent=214 // loop_body
                  %v582 = vld [vmem:[%s580] sm:$0xf]
                  %583 = vst [vmem:[%s581] sm:$0xf] %v582
                  %v584 = vld [vmem:[%s580 + $0x4] sm:$0xf]
                  %585 = vst [vmem:[%s581 + $0x8] sm:$0xf] %v584
                  %v586 = vld [vmem:[%s580 + $0x8] sm:$0xf]
                  %587 = vst [vmem:[%s581 + $0x10] sm:$0xf] %v586
                  %v588 = vld [vmem:[%s580 + $0xc] sm:$0xf]
                  %589 = vst [vmem:[%s581 + $0x18] sm:$0xf] %v588
                  %v590 = vld [vmem:[%s580 + $0x10] sm:$0xf]
                  %591 = vst [vmem:[%s581 + $0x20] sm:$0xf] %v590
                  %v592 = vld [vmem:[%s580 + $0x14] sm:$0xf]
                  %593 = vst [vmem:[%s581 + $0x28] sm:$0xf] %v592
                  %v594 = vld [vmem:[%s580 + $0x18] sm:$0xf]
                  %595 = vst [vmem:[%s581 + $0x30] sm:$0xf] %v594
                  %v596 = vld [vmem:[%s580 + $0x1c] sm:$0xf]
                  %597 = vst [vmem:[%s581 + $0x38] sm:$0xf] %v596
                  %v598 = vld [vmem:[%s580 + $0x20] sm:$0xf]
                  %599 = vst [vmem:[%s581 + $0x40] sm:$0xf] %v598
                $region227: #{adversarial_loss_forward.9} parent=214 // loop_footer
                  %s579 = sadd.s32 1, %s575
                $region228: #{adversarial_loss_forward.9} parent=214 // loop_footer_branch
                  %574 = sbr.rel target = $region224
                $region229: #{adversarial_loss_forward.9} parent=214 // loop_exit
                  _
              $region215: #{adversarial_loss_forward.9} parent=199 // pred_fallthru
                _
            $region200: #{adversarial_loss_forward.9} parent=195 // pred_fallthru
              _
            // Predicated region
            $region201: #{adversarial_loss_forward.9} parent=195 // pred_check
              _
            $region202: #{adversarial_loss_forward.9} parent=195 // pred_check_branch
              %535 = sbr.rel (0) target = $region204
            $region203: #{adversarial_loss_forward.9} parent=195 // pred_region
              loop: start=0, step=1, limit=1
              $region205: #{adversarial_loss_forward.9} parent=203 // loop_pre_header
                _
              $region206: #{adversarial_loss_forward.9} parent=203 // loop_header
                %s538 = sphi 0, %s542
                %p539 = scmp.ge.s32.totalorder %s538, 1
                %s543 = sphi %s524, %s524
                %s544 = sphi %s529, %s529
              $region207: #{adversarial_loss_forward.9} parent=203 // loop_header_branch
                %541 = sbr.rel (%p539) target = $region211
              $region208: #{adversarial_loss_forward.9} parent=203 // loop_body
                %v545 = vld [vmem:[%s543] sm:$0xf]
                %546 = vst [vmem:[%s544] sm:$0xf] %v545
                %v547 = vld [vmem:[%s543 + $0x4] sm:$0xf]
                %548 = vst [vmem:[%s544 + $0x8] sm:$0xf] %v547
                %v549 = vld [vmem:[%s543 + $0x8] sm:$0xf]
                %550 = vst [vmem:[%s544 + $0x10] sm:$0xf] %v549
                %v551 = vld [vmem:[%s543 + $0xc] sm:$0xf]
                %552 = vst [vmem:[%s544 + $0x18] sm:$0xf] %v551
                %v553 = vld [vmem:[%s543 + $0x10] sm:$0xf]
                %554 = vst [vmem:[%s544 + $0x20] sm:$0xf] %v553
                %v555 = vld [vmem:[%s543 + $0x14] sm:$0xf]
                %556 = vst [vmem:[%s544 + $0x28] sm:$0xf] %v555
                %v557 = vld [vmem:[%s543 + $0x18] sm:$0xf]
                %558 = vst [vmem:[%s544 + $0x30] sm:$0xf] %v557
                %v559 = vld [vmem:[%s543 + $0x1c] sm:$0xf]
                %560 = vst [vmem:[%s544 + $0x38] sm:$0xf] %v559
                %v561 = vld [vmem:[%s543 + $0x20] sm:$0xf]
                %562 = vst [vmem:[%s544 + $0x40] sm:$0xf] %v561
              $region209: #{adversarial_loss_forward.9} parent=203 // loop_footer
                %s542 = sadd.s32 1, %s538
              $region210: #{adversarial_loss_forward.9} parent=203 // loop_footer_branch
                %537 = sbr.rel target = $region206
              $region211: #{adversarial_loss_forward.9} parent=203 // loop_exit
                _
            $region204: #{adversarial_loss_forward.9} parent=195 // pred_fallthru
              _
          $region196: #{adversarial_loss_forward.9} parent=191 // pred_fallthru
            _
          %600 = vnop
        $region192: #{adversarial_loss_forward.9} parent=171 // pred_fallthru
          _
      $region172: #{adversarial_loss_forward.9} parent=5 // pred_fallthru
        _
      %p601 = scmp.le.s32.totalorder 2, %s10
      // Predicated region
      $region230: #{adversarial_loss_forward.9} parent=5 // pred_check
        %p602 = pneg %p601
      $region231: #{adversarial_loss_forward.9} parent=5 // pred_check_branch
        %604 = sbr.rel (%p602) target = $region233
      $region232: #{adversarial_loss_forward.9} parent=5 // pred_region
        %s605 = ssub.s32 %s10, 2
        // Predicated region
        $region234: #{adversarial_loss_forward.9} parent=232 // pred_check
          %p606 = pneg %p143
        $region235: #{adversarial_loss_forward.9} parent=232 // pred_check_branch
          %608 = sbr.rel (%p606) target = $region237
        $region236: #{adversarial_loss_forward.9} parent=232 // pred_region
          %s609 = sand.u32 %s128, 1
          %s610 = sand.u32 %s128, 1
          %s611 = smul.addr %s610, 36
          %s612 = scalar_lea.vmem [#allocation6], %s611
        $region237: #{adversarial_loss_forward.9} parent=232 // pred_fallthru
          _
      $region233: #{adversarial_loss_forward.9} parent=5 // pred_fallthru
        _
    $region6: #{adversarial_loss_forward.9} parent=1 // loop_footer
      %s14 = sadd.s32 1, %s10
    $region7: #{adversarial_loss_forward.9} parent=1 // loop_footer_branch
      %9 = sbr.rel target = $region3
    $region8: #{adversarial_loss_forward.9} parent=1 // loop_exit
      _

// kernel: adversarial_loss_forward.10
$region0: #{adversarial_loss_forward.10}
  #allocation0 [shape = 'u32[]', space=smem, size = 0x4, offset = 0x4, fixed_abs, tag = 'smem constant byte address 0x4 - core index']
  #allocation1 [shape = 'u32[144,128]{1,0:T(1,128)}', space=vmem, size = 0x12000, scoped, tag = 'internal scratch']
  %s0 = inlined_call_operand.vmem [shape: bf16[1024,162], index: 0, kind: input, shape index: {}]
  %s1 = inlined_call_operand.vmem [shape: bf16[162,128], index: 1, kind: input, shape index: {}]
  %s2 = inlined_call_operand.vmem [shape: f32[1,128], index: 2, kind: input, shape index: {}]
  %s3 = inlined_call_operand.vmem [shape: bf16[1024,128], index: 3, kind: output, shape index: {}]
  %s4 = sld [smem:[#allocation0]]
  $region45: #{adversarial_loss_forward.10} parent=0
    _
  %s6 = ssub.s32 1, %s4
  %s7 = scalar_select 0, %s6, %s4
  loop: start=0, step=1, limit=4
  $region2: #{adversarial_loss_forward.10} parent=0 // loop_pre_header
    _
  $region3: #{adversarial_loss_forward.10} parent=0 // loop_header
    %s9 = sphi 0, %s13
    %p10 = scmp.ge.s32.totalorder %s9, 4
    %s19 = sphi 0, %s21
    %s22 = sphi 0, %s19
    %s23 = sphi 0, %s22
    %s39 = sphi 0, %s23
    %s43 = sphi 0, %s43
    %s45 = sphi 0, %s43
    %s46 = sphi 0, %s45
    %s60 = sphi 0, %s46
    %s64 = sphi 0, %s64
    %s66 = sphi 0, %s64
    %s67 = sphi 0, %s66
    %s81 = sphi 0, %s67
    %s87 = sphi 0, %s89
    %s90 = sphi 0, %s87
    %s91 = sphi 0, %s90
    %s107 = sphi 0, %s91
  $region4: #{adversarial_loss_forward.10} parent=0 // loop_header_branch
    %12 = sbr.rel (%p10) target = $region8
  $region5: #{adversarial_loss_forward.10} parent=0 // loop_body
    %s14 = ssub.s32 %s9, 1
    %s15 = ssub.s32 %s9, 2
    %s16 = sadd.s32 %s9, 1
    %s17 = ssub.s32 %s9, %s16
    %p18 = scmp.eq.s32.totalorder %s17, 0
    %s20 = sadd.s32 %s19, 1
    %s21 = scalar_select %p18, %s19, %s20
    %p24 = pneg %p18
    %p25 = scmp.eq.s32.totalorder %s9, 1
    %p26 = por %p24, %p25
    %p27 = scmp.ne.s32.totalorder %s19, %s22
    %p28 = scmp.eq.s32.totalorder %s9, 0
    %p29 = por %p27, %p28
    %p30 = scmp.ne.s32.totalorder %s19, %s22
    %p31 = scmp.eq.s32.totalorder %s14, 1
    %p32 = por %p30, %p31
    %p33 = scmp.ne.s32.totalorder %s22, %s23
    %p34 = scmp.eq.s32.totalorder %s14, 0
    %p35 = por %p33, %p34
    %p36 = scmp.ne.s32.totalorder %s22, %s23
    %p37 = scmp.eq.s32.totalorder %s15, 1
    %p38 = por %p36, %p37
    %p40 = scmp.ne.s32.totalorder %s23, %s39
    %p41 = scmp.eq.s32.totalorder %s15, 0
    %p42 = por %p40, %p41
    %s44 = sadd.s32 %s43, 1
    %p47 = scmp.eq.s32.totalorder %s9, 1
    %p48 = scmp.ne.s32.totalorder %s43, %s45
    %p49 = scmp.eq.s32.totalorder %s9, 0
    %p50 = por %p48, %p49
    %p51 = scmp.ne.s32.totalorder %s43, %s45
    %p52 = scmp.eq.s32.totalorder %s14, 1
    %p53 = por %p51, %p52
    %p54 = scmp.ne.s32.totalorder %s45, %s46
    %p55 = scmp.eq.s32.totalorder %s14, 0
    %p56 = por %p54, %p55
    %p57 = scmp.ne.s32.totalorder %s45, %s46
    %p58 = scmp.eq.s32.totalorder %s15, 1
    %p59 = por %p57, %p58
    %p61 = scmp.ne.s32.totalorder %s46, %s60
    %p62 = scmp.eq.s32.totalorder %s15, 0
    %p63 = por %p61, %p62
    %s65 = sadd.s32 %s64, 1
    %p68 = scmp.eq.s32.totalorder %s9, 1
    %p69 = scmp.ne.s32.totalorder %s64, %s66
    %p70 = scmp.eq.s32.totalorder %s9, 0
    %p71 = por %p69, %p70
    %p72 = scmp.ne.s32.totalorder %s64, %s66
    %p73 = scmp.eq.s32.totalorder %s14, 1
    %p74 = por %p72, %p73
    %p75 = scmp.ne.s32.totalorder %s66, %s67
    %p76 = scmp.eq.s32.totalorder %s14, 0
    %p77 = por %p75, %p76
    %p78 = scmp.ne.s32.totalorder %s66, %s67
    %p79 = scmp.eq.s32.totalorder %s15, 1
    %p80 = por %p78, %p79
    %p82 = scmp.ne.s32.totalorder %s67, %s81
    %p83 = scmp.eq.s32.totalorder %s15, 0
    %p84 = por %p82, %p83
    %s85 = ssub.s32 %s9, %s16
    %p86 = scmp.eq.s32.totalorder %s85, 0
    %s88 = sadd.s32 %s87, 1
    %s89 = scalar_select %p86, %s87, %s88
    %p92 = pneg %p86
    %p93 = scmp.eq.s32.totalorder %s9, 1
    %p94 = por %p92, %p93
    %p95 = scmp.ne.s32.totalorder %s87, %s90
    %p96 = scmp.eq.s32.totalorder %s9, 0
    %p97 = por %p95, %p96
    %p98 = scmp.ne.s32.totalorder %s87, %s90
    %p99 = scmp.eq.s32.totalorder %s14, 1
    %p100 = por %p98, %p99
    %p101 = scmp.ne.s32.totalorder %s90, %s91
    %p102 = scmp.eq.s32.totalorder %s14, 0
    %p103 = por %p101, %p102
    %p104 = scmp.ne.s32.totalorder %s90, %s91
    %p105 = scmp.eq.s32.totalorder %s15, 1
    %p106 = por %p104, %p105
    %p108 = scmp.ne.s32.totalorder %s91, %s107
    %p109 = scmp.eq.s32.totalorder %s15, 0
    %p110 = por %p108, %p109
    %p111 = scmp.le.s32.totalorder 1, %s9
    %p112 = scmp.lt.s32.totalorder %s9, 3
    %p113 = pnand %p111, %p112
    %p114 = pneg %p113
    // Predicated region
    $region9: #{adversarial_loss_forward.10} parent=5 // pred_check
      _
    $region10: #{adversarial_loss_forward.10} parent=5 // pred_check_branch
      %116 = sbr.rel (%p113) target = $region12
    $region11: #{adversarial_loss_forward.10} parent=5 // pred_region
      %s117 = ssub.s32 %s9, 1
      // Predicated region
      $region13: #{adversarial_loss_forward.10} parent=11 // pred_check
        %p118 = pneg %p56
      $region14: #{adversarial_loss_forward.10} parent=11 // pred_check_branch
        %120 = sbr.rel (%p118) target = $region16
      $region15: #{adversarial_loss_forward.10} parent=11 // pred_region
        _
      $region16: #{adversarial_loss_forward.10} parent=11 // pred_fallthru
        _
      // Predicated region
      $region17: #{adversarial_loss_forward.10} parent=11 // pred_check
        %p121 = pneg %p77
      $region18: #{adversarial_loss_forward.10} parent=11 // pred_check_branch
        %123 = sbr.rel (%p121) target = $region20
      $region19: #{adversarial_loss_forward.10} parent=11 // pred_region
        _
      $region20: #{adversarial_loss_forward.10} parent=11 // pred_fallthru
        _
    $region12: #{adversarial_loss_forward.10} parent=5 // pred_fallthru
      _
    %p124 = scmp.lt.s32.totalorder %s9, 2
    // Predicated region
    $region21: #{adversarial_loss_forward.10} parent=5 // pred_check
      %p125 = pneg %p124
    $region22: #{adversarial_loss_forward.10} parent=5 // pred_check_branch
      %127 = sbr.rel (%p125) target = $region24
    $region23: #{adversarial_loss_forward.10} parent=5 // pred_region
      // Predicated region
      $region25: #{adversarial_loss_forward.10} parent=23 // pred_check
        %p128 = pneg %p29
      $region26: #{adversarial_loss_forward.10} parent=23 // pred_check_branch
        %130 = sbr.rel (%p128) target = $region28
      $region27: #{adversarial_loss_forward.10} parent=23 // pred_region
        %s131 = smul.u32 64, %s9
        %p132 = scmp.lt.s32.totalorder %s131, 127
        %s133 = scalar_select %p132, %s131, 127
        %s134 = smul.addr %s133, 2
        %s135 = smul.addr %s134, 4
        %s136 = scalar_lea.vmem %s0, %s135
        %s137 = smul.u32 64, %s9
      $region28: #{adversarial_loss_forward.10} parent=23 // pred_fallthru
        _
    $region24: #{adversarial_loss_forward.10} parent=5 // pred_fallthru
      _
    %p138 = scmp.le.s32.totalorder 1, %s9
    %p139 = scmp.lt.s32.totalorder %s9, 3
    %p140 = pnand %p138, %p139
    %p141 = pneg %p140
    // Predicated region
    $region29: #{adversarial_loss_forward.10} parent=5 // pred_check
      _
    $region30: #{adversarial_loss_forward.10} parent=5 // pred_check_branch
      %143 = sbr.rel (%p140) target = $region32
    $region31: #{adversarial_loss_forward.10} parent=5 // pred_region
      %s144 = ssub.s32 %s9, 1
      %s145 = smul.u32 64, %s14
      %p146 = scmp.lt.s32.totalorder %s145, 127
      %s147 = scalar_select %p146, %s145, 127
      %s148 = smul.addr %s147, 2
      %s149 = smul.addr %s148, 4
      %s150 = scalar_lea.vmem %s0, %s149
      %p151 = pneg %p35
      %p152 = pneg %p32
      %p153 = pneg %p56
      %p154 = pneg %p53
      %p155 = pneg %p77
      %p156 = pneg %p74
      %p157 = pneg %p103
      %p158 = pneg %p100
      %s159 = smul.u32 64, %s14
      %p160 = scmp.lt.s32.totalorder %s159, 127
      %s161 = scalar_select %p160, %s159, 127
      %s162 = smul.addr %s161, 4
      %s163 = scalar_lea.vmem %s3, %s162
      %s164 = smul.u32 64, %s14
      %p165 = scmp.lt.s32.totalorder %s164, 127
      %s166 = scalar_select %p165, %s164, 127
      %s167 = smul.addr %s166, 2
      %s168 = smul.addr %s167, 4
      %s169 = scalar_lea.vmem %s0, %s168
      %s170 = smul.u32 64, %s14
      %s171 = smul.u32 64, %s14
      %p172 = scmp.lt.s32.totalorder %s171, 127
      %s173 = scalar_select %p172, %s171, 127
      %s174 = smul.addr %s173, 4
      %s175 = scalar_lea.vmem %s3, %s174
      %s176 = smul.u32 64, %s14
      %v178 = vld [vmem:[%s169] sm:$0xff]
      %v179 = vld [vmem:[%s169 + $0x8] sm:$0xff]
      %v180 = vld [vmem:[%s169 + $0x10] sm:$0xff]
      %v181 = vld [vmem:[%s169 + $0x18] sm:$0xff]
      %v182 = vld [vmem:[%s169 + $0x20] sm:$0xff]
      %v183 = vld [vmem:[%s169 + $0x28] sm:$0xff]
      %v184 = vld [vmem:[%s169 + $0x30] sm:$0xff]
      %v185 = vld [vmem:[%s169 + $0x38] sm:$0xff]
      %v186 = vld [vmem:[%s169 + $0x40] sm:$0xff]
      %v187 = vld [vmem:[%s169 + $0x48] sm:$0xff]
      %v188 = vld [vmem:[%s169 + $0x50] sm:$0xff]
      %v189 = vld [vmem:[%s169 + $0x58] sm:$0xff]
      %v190 = vld [vmem:[%s169 + $0x60] sm:$0xff]
      %v191 = vld [vmem:[%s169 + $0x68] sm:$0xff]
      %v192 = vld [vmem:[%s169 + $0x70] sm:$0xff]
      %v193 = vld [vmem:[%s169 + $0x78] sm:$0xff]
      %v194 = vld [vmem:[%s169 + $0x80] sm:$0xff]
      %v195 = vld [vmem:[%s169 + $0x88] sm:$0xff]
      %v196 = vld [vmem:[%s169 + $0x90] sm:$0xff]
      %v197 = vld [vmem:[%s169 + $0x98] sm:$0xff]
      %v198 = vld [vmem:[%s169 + $0xa0] sm:$0xff]
      %v199 = vld [vmem:[%s169 + $0xa8] sm:$0xff]
      %v200 = vld [vmem:[%s169 + $0xb0] sm:$0xff]
      %v201 = vld [vmem:[%s169 + $0xb8] sm:$0xff]
      %v202 = vld [vmem:[%s169 + $0xc0] sm:$0xff]
      %v203 = vld [vmem:[%s169 + $0xc8] sm:$0xff]
      %v204 = vld [vmem:[%s169 + $0xd0] sm:$0xff]
      %v205 = vld [vmem:[%s169 + $0xd8] sm:$0xff]
      %v206 = vld [vmem:[%s169 + $0xe0] sm:$0xff]
      %v207 = vld [vmem:[%s169 + $0xe8] sm:$0xff]
      %v208 = vld [vmem:[%s169 + $0xf0] sm:$0xff]
      %v209 = vld [vmem:[%s169 + $0xf8] sm:$0xff]
      %v210 = vld [vmem:[%s169 + $0x100] sm:$0xff]
      %v211 = vld [vmem:[%s169 + $0x108] sm:$0xff]
      %v212 = vld [vmem:[%s169 + $0x110] sm:$0xff]
      %v213 = vld [vmem:[%s169 + $0x118] sm:$0xff]
      %v214 = vld [vmem:[%s169 + $0x120] sm:$0xff]
      %v215 = vld [vmem:[%s169 + $0x128] sm:$0xff]
      %v216 = vld [vmem:[%s169 + $0x130] sm:$0xff]
      %v217 = vld [vmem:[%s169 + $0x138] sm:$0xff]
      %v218 = vld [vmem:[%s169 + $0x140] sm:$0xff]
      %v219 = vld [vmem:[%s169 + $0x148] sm:$0xff]
      %v220 = vld [vmem:[%s169 + $0x150] sm:$0xff]
      %v221 = vld [vmem:[%s169 + $0x158] sm:$0xff]
      %v222 = vld [vmem:[%s169 + $0x160] sm:$0xff]
      %v223 = vld [vmem:[%s169 + $0x168] sm:$0xff]
      %v224 = vld [vmem:[%s169 + $0x170] sm:$0xff]
      %v225 = vld [vmem:[%s169 + $0x178] sm:$0xff]
      %v226 = vld [vmem:[%s169 + $0x180] sm:$0xff]
      %v227 = vld [vmem:[%s169 + $0x188] sm:$0xff]
      %v228 = vld [vmem:[%s169 + $0x190] sm:$0xff]
      %v229 = vld [vmem:[%s169 + $0x198] sm:$0xff]
      %v230 = vld [vmem:[%s169 + $0x1a0] sm:$0xff]
      %v231 = vld [vmem:[%s169 + $0x1a8] sm:$0xff]
      %v232 = vld [vmem:[%s169 + $0x1b0] sm:$0xff]
      %v233 = vld [vmem:[%s169 + $0x1b8] sm:$0xff]
      %v234 = vld [vmem:[%s169 + $0x1c0] sm:$0xff]
      %v235 = vld [vmem:[%s169 + $0x1c8] sm:$0xff]
      %v236 = vld [vmem:[%s169 + $0x1d0] sm:$0xff]
      %v237 = vld [vmem:[%s169 + $0x1d8] sm:$0xff]
      %v238 = vld [vmem:[%s169 + $0x1e0] sm:$0xff]
      %v239 = vld [vmem:[%s169 + $0x1e8] sm:$0xff]
      %v240 = vld [vmem:[%s169 + $0x1f0] sm:$0xff]
      %v241 = vld [vmem:[%s169 + $0x1f8] sm:$0xff]
      %v242 = vld [vmem:[%s1] sm:$0xf]
      %v243 = vld [vmem:[%s1 + $0x4] sm:$0xf]
      %v244 = vld [vmem:[%s1 + $0x8] sm:$0xf]
      %v245 = vld [vmem:[%s1 + $0xc] sm:$0xf]
      %v246 = vld [vmem:[%s1 + $0x10] sm:$0xf]
      %v247 = vld [vmem:[%s1 + $0x14] sm:$0xf]
      %v248 = vld [vmem:[%s1 + $0x18] sm:$0xf]
      %v249 = vld [vmem:[%s1 + $0x1c] sm:$0xf]
      %v250 = vld [vmem:[%s1 + $0x20] sm:$0xf]
      %v251 = vld [vmem:[%s1 + $0x24] sm:$0xf]
      %v252 = vld [vmem:[%s1 + $0x28] sm:$0xf]
      %v253 = vld [vmem:[%s1 + $0x2c] sm:$0xf]
      %v254 = vld [vmem:[%s1 + $0x30] sm:$0xf]
      %v255 = vld [vmem:[%s1 + $0x34] sm:$0xf]
      %v256 = vld [vmem:[%s1 + $0x38] sm:$0xf]
      %v257 = vld [vmem:[%s1 + $0x3c] sm:$0xf]
      %v258 = vld [vmem:[%s1 + $0x40] sm:$0xf]
      %v259 = vld [vmem:[%s1 + $0x44] sm:$0xf]
      %v260 = vld [vmem:[%s1 + $0x48] sm:$0xf]
      %v261 = vld [vmem:[%s1 + $0x4c] sm:$0xf]
      %v262 = vld [vmem:[%s1 + $0x50] sm:$0x1]
      %v263 = vld [vmem:[%s2] sm:$0x1]
      %v265 = vlaneseq
      %v266 = vshrl.u32 %v265, 7
      %v267 = vsub.s32 0, %v266
      %v268 = vrot.slane %v263, %v267
      %v334 = vunpack.c.l.b16 %v178
      %v335 = vunpack.c.h.b16 %v178
      %v336 = vunpack.c.l.b16 %v179
      %v337 = vunpack.c.h.b16 %v179
      %v338 = vunpack.c.l.b16 %v180
      %v339 = vunpack.c.h.b16 %v180
      %v340 = vunpack.c.l.b16 %v181
      %v341 = vunpack.c.h.b16 %v181
      %v342 = vunpack.c.l.b16 %v182
      %v343 = vunpack.c.h.b16 %v182
      %v344 = vunpack.c.l.b16 %v183
      %v345 = vunpack.c.h.b16 %v183
      %v346 = vunpack.c.l.b16 %v184
      %v347 = vunpack.c.h.b16 %v184
      %v348 = vunpack.c.l.b16 %v185
      %v349 = vunpack.c.h.b16 %v185
      %v350 = vunpack.c.l.b16 %v186
      %v351 = vunpack.c.h.b16 %v186
      %v352 = vunpack.c.l.b16 %v187
      %v353 = vunpack.c.h.b16 %v187
      %v354 = vunpack.c.l.b16 %v188
      %v355 = vunpack.c.h.b16 %v188
      %v356 = vunpack.c.l.b16 %v189
      %v357 = vunpack.c.h.b16 %v189
      %v358 = vunpack.c.l.b16 %v190
      %v359 = vunpack.c.h.b16 %v190
      %v360 = vunpack.c.l.b16 %v191
      %v361 = vunpack.c.h.b16 %v191
      %v362 = vunpack.c.l.b16 %v192
      %v363 = vunpack.c.h.b16 %v192
      %v364 = vunpack.c.l.b16 %v193
      %v365 = vunpack.c.h.b16 %v193
      %v366 = vunpack.c.l.b16 %v194
      %v367 = vunpack.c.h.b16 %v194
      %v368 = vunpack.c.l.b16 %v195
      %v369 = vunpack.c.h.b16 %v195
      %v370 = vunpack.c.l.b16 %v196
      %v371 = vunpack.c.h.b16 %v196
      %v372 = vunpack.c.l.b16 %v197
      %v373 = vunpack.c.h.b16 %v197
      %v374 = vunpack.c.l.b16 %v198
      %v375 = vunpack.c.h.b16 %v198
      %v376 = vunpack.c.l.b16 %v199
      %v377 = vunpack.c.h.b16 %v199
      %v378 = vunpack.c.l.b16 %v200
      %v379 = vunpack.c.h.b16 %v200
      %v380 = vunpack.c.l.b16 %v201
      %v381 = vunpack.c.h.b16 %v201
      %v382 = vunpack.c.l.b16 %v202
      %v383 = vunpack.c.h.b16 %v202
      %v384 = vunpack.c.l.b16 %v203
      %v385 = vunpack.c.h.b16 %v203
      %v386 = vunpack.c.l.b16 %v204
      %v387 = vunpack.c.h.b16 %v204
      %v388 = vunpack.c.l.b16 %v205
      %v389 = vunpack.c.h.b16 %v205
      %v390 = vunpack.c.l.b16 %v206
      %v391 = vunpack.c.h.b16 %v206
      %v392 = vunpack.c.l.b16 %v207
      %v393 = vunpack.c.h.b16 %v207
      %v394 = vunpack.c.l.b16 %v208
      %v395 = vunpack.c.h.b16 %v208
      %v396 = vunpack.c.l.b16 %v209
      %v397 = vunpack.c.h.b16 %v209
      %v398 = vunpack.c.l.b16 %v210
      %v399 = vunpack.c.h.b16 %v210
      %v400 = vunpack.c.l.b16 %v211
      %v401 = vunpack.c.h.b16 %v211
      %v402 = vunpack.c.l.b16 %v212
      %v403 = vunpack.c.h.b16 %v212
      %v404 = vunpack.c.l.b16 %v213
      %v405 = vunpack.c.h.b16 %v213
      %v406 = vunpack.c.l.b16 %v214
      %v407 = vunpack.c.h.b16 %v214
      %v408 = vunpack.c.l.b16 %v215
      %v409 = vunpack.c.h.b16 %v215
      %v410 = vunpack.c.l.b16 %v216
      %v411 = vunpack.c.h.b16 %v216
      %v412 = vunpack.c.l.b16 %v217
      %v413 = vunpack.c.h.b16 %v217
      %v414 = vunpack.c.l.b16 %v218
      %v415 = vunpack.c.h.b16 %v218
      %v416 = vunpack.c.l.b16 %v219
      %v417 = vunpack.c.h.b16 %v219
      %v418 = vunpack.c.l.b16 %v220
      %v419 = vunpack.c.h.b16 %v220
      %v420 = vunpack.c.l.b16 %v221
      %v421 = vunpack.c.h.b16 %v221
      %v422 = vunpack.c.l.b16 %v222
      %v423 = vunpack.c.h.b16 %v222
      %v424 = vunpack.c.l.b16 %v223
      %v425 = vunpack.c.h.b16 %v223
      %v426 = vunpack.c.l.b16 %v224
      %v427 = vunpack.c.h.b16 %v224
      %v428 = vunpack.c.l.b16 %v225
      %v429 = vunpack.c.h.b16 %v225
      %v430 = vunpack.c.l.b16 %v226
      %v431 = vunpack.c.h.b16 %v226
      %v432 = vunpack.c.l.b16 %v227
      %v433 = vunpack.c.h.b16 %v227
      %v434 = vunpack.c.l.b16 %v228
      %v435 = vunpack.c.h.b16 %v228
      %v436 = vunpack.c.l.b16 %v229
      %v437 = vunpack.c.h.b16 %v229
      %v438 = vunpack.c.l.b16 %v230
      %v439 = vunpack.c.h.b16 %v230
      %v440 = vunpack.c.l.b16 %v231
      %v441 = vunpack.c.h.b16 %v231
      %v442 = vunpack.c.l.b16 %v232
      %v443 = vunpack.c.h.b16 %v232
      %v444 = vunpack.c.l.b16 %v233
      %v445 = vunpack.c.h.b16 %v233
      %v446 = vunpack.c.l.b16 %v234
      %v447 = vunpack.c.h.b16 %v234
      %v448 = vunpack.c.l.b16 %v235
      %v449 = vunpack.c.h.b16 %v235
      %v450 = vunpack.c.l.b16 %v236
      %v451 = vunpack.c.h.b16 %v236
      %v452 = vunpack.c.l.b16 %v237
      %v453 = vunpack.c.h.b16 %v237
      %v454 = vunpack.c.l.b16 %v238
      %v455 = vunpack.c.h.b16 %v238
      %v456 = vunpack.c.l.b16 %v239
      %v457 = vunpack.c.h.b16 %v239
      %v458 = vunpack.c.l.b16 %v240
      %v459 = vunpack.c.h.b16 %v240
      %v460 = vunpack.c.l.b16 %v241
      %v461 = vunpack.c.h.b16 %v241
      %v462 = vpack.c.b16 %v336, %v334
      %v463 = vpack.c.b16 %v337, %v335
      %v464 = vpack.c.b16 %v340, %v338
      %v465 = vpack.c.b16 %v341, %v339
      %v466 = vpack.c.b16 %v344, %v342
      %v467 = vpack.c.b16 %v345, %v343
      %v468 = vpack.c.b16 %v348, %v346
      %v469 = vpack.c.b16 %v349, %v347
      %v470 = vpack.c.b16 %v352, %v350
      %v471 = vpack.c.b16 %v353, %v351
      %v472 = vpack.c.b16 %v356, %v354
      %v473 = vpack.c.b16 %v357, %v355
      %v474 = vpack.c.b16 %v360, %v358
      %v475 = vpack.c.b16 %v361, %v359
      %v476 = vpack.c.b16 %v364, %v362
      %v477 = vpack.c.b16 %v365, %v363
      %v478 = vpack.c.b16 %v368, %v366
      %v479 = vpack.c.b16 %v369, %v367
      %v480 = vpack.c.b16 %v372, %v370
      %v481 = vpack.c.b16 %v373, %v371
      %v482 = vpack.c.b16 %v376, %v374
      %v483 = vpack.c.b16 %v377, %v375
      %v484 = vpack.c.b16 %v380, %v378
      %v485 = vpack.c.b16 %v381, %v379
      %v486 = vpack.c.b16 %v384, %v382
      %v487 = vpack.c.b16 %v385, %v383
      %v488 = vpack.c.b16 %v388, %v386
      %v489 = vpack.c.b16 %v389, %v387
      %v490 = vpack.c.b16 %v392, %v390
      %v491 = vpack.c.b16 %v393, %v391
      %v492 = vpack.c.b16 %v396, %v394
      %v493 = vpack.c.b16 %v397, %v395
      %v494 = vpack.c.b16 %v400, %v398
      %v495 = vpack.c.b16 %v401, %v399
      %v496 = vpack.c.b16 %v404, %v402
      %v497 = vpack.c.b16 %v405, %v403
      %v498 = vpack.c.b16 %v408, %v406
      %v499 = vpack.c.b16 %v409, %v407
      %v500 = vpack.c.b16 %v412, %v410
      %v501 = vpack.c.b16 %v413, %v411
      %v502 = vpack.c.b16 %v416, %v414
      %v503 = vpack.c.b16 %v417, %v415
      %v504 = vpack.c.b16 %v420, %v418
      %v505 = vpack.c.b16 %v421, %v419
      %v506 = vpack.c.b16 %v424, %v422
      %v507 = vpack.c.b16 %v425, %v423
      %v508 = vpack.c.b16 %v428, %v426
      %v509 = vpack.c.b16 %v429, %v427
      %v510 = vpack.c.b16 %v432, %v430
      %v511 = vpack.c.b16 %v433, %v431
      %v512 = vpack.c.b16 %v436, %v434
      %v513 = vpack.c.b16 %v437, %v435
      %v514 = vpack.c.b16 %v440, %v438
      %v515 = vpack.c.b16 %v441, %v439
      %v516 = vpack.c.b16 %v444, %v442
      %v517 = vpack.c.b16 %v445, %v443
      %v518 = vpack.c.b16 %v448, %v446
      %v519 = vpack.c.b16 %v449, %v447
      %v520 = vpack.c.b16 %v452, %v450
      %v521 = vpack.c.b16 %v453, %v451
      %v522 = vpack.c.b16 %v456, %v454
      %v523 = vpack.c.b16 %v457, %v455
      %v524 = vpack.c.b16 %v460, %v458
      %v525 = vpack.c.b16 %v461, %v459
      %v579 = vunpack.c.l.b16 %v242
      %v580 = vunpack.c.l.b16 %v243
      %v581 = vunpack.c.l.b16 %v244
      %v582 = vunpack.c.l.b16 %v245
      %v583 = vunpack.c.l.b16 %v246
      %v584 = vunpack.c.l.b16 %v247
      %v585 = vunpack.c.l.b16 %v248
      %v586 = vunpack.c.l.b16 %v249
      %v587 = vunpack.c.l.b16 %v250
      %v588 = vunpack.c.l.b16 %v251
      %v589 = vunpack.c.l.b16 %v252
      %v590 = vunpack.c.l.b16 %v253
      %v591 = vunpack.c.l.b16 %v254
      %v592 = vunpack.c.l.b16 %v255
      %v593 = vunpack.c.l.b16 %v256
      %v594 = vunpack.c.l.b16 %v257
      %v595 = vunpack.c.l.b16 %v258
      %v596 = vunpack.c.l.b16 %v259
      %v597 = vunpack.c.l.b16 %v260
      %v598 = vunpack.c.l.b16 %v261
      %v599 = vunpack.c.l.b16 %v262
      %v600 = vpack.c.b16 %v580, %v579
      %v601 = vpack.c.b16 %v582, %v581
      %v602 = vpack.c.b16 %v584, %v583
      %v603 = vpack.c.b16 %v586, %v585
      %v604 = vpack.c.b16 %v588, %v587
      %v605 = vpack.c.b16 %v590, %v589
      %v606 = vpack.c.b16 %v592, %v591
      %v607 = vpack.c.b16 %v594, %v593
      %v608 = vpack.c.b16 %v596, %v595
      %v609 = vpack.c.b16 %v598, %v597
      %v610 = vpack.c.b16 %v599, %v599
      %vm621 = vcmask 277504
      %v623 = vsel %vm621, %v463, 0
      %v626 = vsel %vm621, %v465, 0
      %v629 = vsel %vm621, %v467, 0
      %v632 = vsel %vm621, %v469, 0
      %v635 = vsel %vm621, %v471, 0
      %v638 = vsel %vm621, %v473, 0
      %v641 = vsel %vm621, %v475, 0
      %v644 = vsel %vm621, %v477, 0
      %v647 = vsel %vm621, %v479, 0
      %v650 = vsel %vm621, %v481, 0
      %v653 = vsel %vm621, %v483, 0
      %v656 = vsel %vm621, %v485, 0
      %v659 = vsel %vm621, %v487, 0
      %v662 = vsel %vm621, %v489, 0
      %v665 = vsel %vm621, %v491, 0
      %v668 = vsel %vm621, %v493, 0
      %v671 = vsel %vm621, %v495, 0
      %v674 = vsel %vm621, %v497, 0
      %v677 = vsel %vm621, %v499, 0
      %v680 = vsel %vm621, %v501, 0
      %v683 = vsel %vm621, %v503, 0
      %v686 = vsel %vm621, %v505, 0
      %v689 = vsel %vm621, %v507, 0
      %v692 = vsel %vm621, %v509, 0
      %v695 = vsel %vm621, %v511, 0
      %v698 = vsel %vm621, %v513, 0
      %v701 = vsel %vm621, %v515, 0
      %v704 = vsel %vm621, %v517, 0
      %v707 = vsel %vm621, %v519, 0
      %v710 = vsel %vm621, %v521, 0
      %v713 = vsel %vm621, %v523, 0
      %v716 = vsel %vm621, %v525, 0
      %vm718 = vcmask 1040384
      %v720 = vsel %vm718, %v610, 0
      %722 = vmatprep.subr.bf16.mxu0 0
      %723 = vmatpush1.bf16.msra.mxu0 %v600
      %724 = vmatprep.subr.bf16.mxu0 0
      %725 = vmatpush1.bf16.msra.mxu0 %v601
      %726 = vmatprep.subr.bf16.mxu0 0
      %727 = vmatpush1.bf16.msra.mxu0 %v602
      %728 = vmatprep.subr.bf16.mxu0 0
      %729 = vmatpush1.bf16.msra.mxu0 %v603
      %730 = vmatprep.subr.bf16.mxu0 0
      %731 = vmatpush1.bf16.msra.mxu0 %v604
      %732 = vmatprep.subr.bf16.mxu0 0
      %733 = vmatpush1.bf16.msra.mxu0 %v605
      %734 = vmatprep.subr.bf16.mxu0 0
      %735 = vmatpush1.bf16.msra.mxu0 %v606
      %736 = vmatprep.subr.bf16.mxu0 0
      %737 = vmatpush1.bf16.msra.mxu0 %v607
      %738 = vmatprep.subr.bf16.mxu0 0
      %739 = vmatpush1.bf16.msra.mxu0 %v608
      %740 = vmatprep.subr.bf16.mxu0 0
      %741 = vmatpush1.bf16.msra.mxu0 %v609
      %742 = vmatprep.subr.bf16.mxu0 0
      %743 = vmatpush1.bf16.msra.mxu0 %v720
      %744 = vmatprep.subr.bf16.mxu0 0
      %745 = vmatpush1.bf16.msra.mxu0 0
      %746 = vmatprep.subr.bf16.mxu0 0
      %747 = vmatpush1.bf16.msra.mxu0 0
      %748 = vmatprep.subr.bf16.mxu0 0
      %749 = vmatpush1.bf16.msra.mxu0 0
      %750 = vmatprep.subr.bf16.mxu0 0
      %751 = vmatpush1.bf16.msra.mxu0 0
      %752 = vmatprep.subr.bf16.mxu0 0
      %753 = vmatpush1.bf16.msra.mxu0 0
      %754 = vmatprep.mubr.bf16.mxu0 %v623
      %755 = vmatmul.mubr.bf16.gmra.mrb[0].mxu0 %v462
      %v756 = vpop.f32.mrb[0].mxu0
      %v757 = vadd.f32 %v268, %v756
      %v758 = vpop.f32.mrb[0].mxu0
      %v759 = vpop.f32.mrb[0].mxu0
      %v760 = vadd.f32 %v268, %v759
      %v761 = vpop.f32.mrb[0].mxu0
      %762 = vmatprep.mubr.bf16.mxu0 %v626
      %763 = vmatmul.mubr.bf16.gmra.mrb[0].mxu0 %v464
      %v764 = vpop.f32.mrb[0].mxu0
      %v765 = vadd.f32 %v268, %v764
      %v766 = vpop.f32.mrb[0].mxu0
      %v767 = vpop.f32.mrb[0].mxu0
      %v768 = vadd.f32 %v268, %v767
      %v769 = vpop.f32.mrb[0].mxu0
      %770 = vmatprep.mubr.bf16.mxu0 %v629
      %771 = vmatmul.mubr.bf16.gmra.mrb[0].mxu0 %v466
      %v772 = vpop.f32.mrb[0].mxu0
      %v773 = vadd.f32 %v268, %v772
      %v774 = vpop.f32.mrb[0].mxu0
      %v775 = vpop.f32.mrb[0].mxu0
      %v776 = vadd.f32 %v268, %v775
      %v777 = vpop.f32.mrb[0].mxu0
      %778 = vmatprep.mubr.bf16.mxu0 %v632
      %779 = vmatmul.mubr.bf16.gmra.mrb[0].mxu0 %v468
      %v780 = vpop.f32.mrb[0].mxu0
      %v781 = vadd.f32 %v268, %v780
      %v782 = vpop.f32.mrb[0].mxu0
      %v783 = vpop.f32.mrb[0].mxu0
      %v784 = vadd.f32 %v268, %v783
      %v785 = vpop.f32.mrb[0].mxu0
      %786 = vmatprep.mubr.bf16.mxu0 %v635
      %787 = vmatmul.mubr.bf16.gmra.mrb[0].mxu0 %v470
      %v788 = vpop.f32.mrb[0].mxu0
      %v789 = vadd.f32 %v268, %v788
      %v790 = vpop.f32.mrb[0].mxu0
      %v791 = vpop.f32.mrb[0].mxu0
      %v792 = vadd.f32 %v268, %v791
      %v793 = vpop.f32.mrb[0].mxu0
      %794 = vmatprep.mubr.bf16.mxu0 %v638
      %795 = vmatmul.mubr.bf16.gmra.mrb[0].mxu0 %v472
      %v796 = vpop.f32.mrb[0].mxu0
      %v797 = vadd.f32 %v268, %v796
      %v798 = vpop.f32.mrb[0].mxu0
      %v799 = vpop.f32.mrb[0].mxu0
      %v800 = vadd.f32 %v268, %v799
      %v801 = vpop.f32.mrb[0].mxu0
      %802 = vmatprep.mubr.bf16.mxu0 %v641
      %803 = vmatmul.mubr.bf16.gmra.mrb[0].mxu0 %v474
      %v804 = vpop.f32.mrb[0].mxu0
      %v805 = vadd.f32 %v268, %v804
      %v806 = vpop.f32.mrb[0].mxu0
      %v807 = vpop.f32.mrb[0].mxu0
      %v808 = vadd.f32 %v268, %v807
      %v809 = vpop.f32.mrb[0].mxu0
      %810 = vmatprep.mubr.bf16.mxu0 %v644
      %811 = vmatmul.mubr.bf16.gmra.mrb[0].mxu0 %v476
      %v812 = vpop.f32.mrb[0].mxu0
      %v813 = vadd.f32 %v268, %v812
      %v814 = vpop.f32.mrb[0].mxu0
      %v815 = vpop.f32.mrb[0].mxu0
      %v816 = vadd.f32 %v268, %v815
      %v817 = vpop.f32.mrb[0].mxu0
      %818 = vmatprep.mubr.bf16.mxu0 %v647
      %819 = vmatmul.mubr.bf16.gmra.mrb[0].mxu0 %v478
      %v820 = vpop.f32.mrb[0].mxu0
      %v821 = vadd.f32 %v268, %v820
      %v822 = vpop.f32.mrb[0].mxu0
      %v823 = vpop.f32.mrb[0].mxu0
      %v824 = vadd.f32 %v268, %v823
      %v825 = vpop.f32.mrb[0].mxu0
      %826 = vmatprep.mubr.bf16.mxu0 %v650
      %827 = vmatmul.mubr.bf16.gmra.mrb[0].mxu0 %v480
      %v828 = vpop.f32.mrb[0].mxu0
      %v829 = vadd.f32 %v268, %v828
      %v830 = vpop.f32.mrb[0].mxu0
      %v831 = vpop.f32.mrb[0].mxu0
      %v832 = vadd.f32 %v268, %v831
      %v833 = vpop.f32.mrb[0].mxu0
      %834 = vmatprep.mubr.bf16.mxu0 %v653
      %835 = vmatmul.mubr.bf16.gmra.mrb[0].mxu0 %v482
      %v836 = vpop.f32.mrb[0].mxu0
      %v837 = vadd.f32 %v268, %v836
      %v838 = vpop.f32.mrb[0].mxu0
      %v839 = vpop.f32.mrb[0].mxu0
      %v840 = vadd.f32 %v268, %v839
      %v841 = vpop.f32.mrb[0].mxu0
      %842 = vmatprep.mubr.bf16.mxu0 %v656
      %843 = vmatmul.mubr.bf16.gmra.mrb[0].mxu0 %v484
      %v844 = vpop.f32.mrb[0].mxu0
      %v845 = vadd.f32 %v268, %v844
      %v846 = vpop.f32.mrb[0].mxu0
      %v847 = vpop.f32.mrb[0].mxu0
      %v848 = vadd.f32 %v268, %v847
      %v849 = vpop.f32.mrb[0].mxu0
      %850 = vmatprep.mubr.bf16.mxu0 %v659
      %851 = vmatmul.mubr.bf16.gmra.mrb[0].mxu0 %v486
      %v852 = vpop.f32.mrb[0].mxu0
      %v853 = vadd.f32 %v268, %v852
      %v854 = vpop.f32.mrb[0].mxu0
      %v855 = vpop.f32.mrb[0].mxu0
      %v856 = vadd.f32 %v268, %v855
      %v857 = vpop.f32.mrb[0].mxu0
      %858 = vmatprep.mubr.bf16.mxu0 %v662
      %859 = vmatmul.mubr.bf16.gmra.mrb[0].mxu0 %v488
      %v860 = vpop.f32.mrb[0].mxu0
      %v861 = vadd.f32 %v268, %v860
      %v862 = vpop.f32.mrb[0].mxu0
      %v863 = vpop.f32.mrb[0].mxu0
      %v864 = vadd.f32 %v268, %v863
      %v865 = vpop.f32.mrb[0].mxu0
      %866 = vmatprep.mubr.bf16.mxu0 %v665
      %867 = vmatmul.mubr.bf16.gmra.mrb[0].mxu0 %v490
      %v868 = vpop.f32.mrb[0].mxu0
      %v869 = vadd.f32 %v268, %v868
      %v870 = vpop.f32.mrb[0].mxu0
      %v871 = vpop.f32.mrb[0].mxu0
      %v872 = vadd.f32 %v268, %v871
      %v873 = vpop.f32.mrb[0].mxu0
      %874 = vmatprep.mubr.bf16.mxu0 %v668
      %875 = vmatmul.mubr.bf16.gmra.mrb[0].mxu0 %v492
      %v876 = vpop.f32.mrb[0].mxu0
      %v877 = vadd.f32 %v268, %v876
      %v878 = vpop.f32.mrb[0].mxu0
      %v879 = vpop.f32.mrb[0].mxu0
      %v880 = vadd.f32 %v268, %v879
      %v881 = vpop.f32.mrb[0].mxu0
      %882 = vmatprep.mubr.bf16.mxu0 %v671
      %883 = vmatmul.mubr.bf16.gmra.mrb[0].mxu0 %v494
      %v884 = vpop.f32.mrb[0].mxu0
      %v885 = vadd.f32 %v268, %v884
      %v886 = vpop.f32.mrb[0].mxu0
      %v887 = vpop.f32.mrb[0].mxu0
      %v888 = vadd.f32 %v268, %v887
      %v889 = vpop.f32.mrb[0].mxu0
      %890 = vmatprep.mubr.bf16.mxu0 %v674
      %891 = vmatmul.mubr.bf16.gmra.mrb[0].mxu0 %v496
      %v892 = vpop.f32.mrb[0].mxu0
      %v893 = vadd.f32 %v268, %v892
      %v894 = vpop.f32.mrb[0].mxu0
      %v895 = vpop.f32.mrb[0].mxu0
      %v896 = vadd.f32 %v268, %v895
      %v897 = vpop.f32.mrb[0].mxu0
      %898 = vmatprep.mubr.bf16.mxu0 %v677
      %899 = vmatmul.mubr.bf16.gmra.mrb[0].mxu0 %v498
      %v900 = vpop.f32.mrb[0].mxu0
      %v901 = vadd.f32 %v268, %v900
      %v902 = vpop.f32.mrb[0].mxu0
      %v903 = vpop.f32.mrb[0].mxu0
      %v904 = vadd.f32 %v268, %v903
      %v905 = vpop.f32.mrb[0].mxu0
      %906 = vmatprep.mubr.bf16.mxu0 %v680
      %907 = vmatmul.mubr.bf16.gmra.mrb[0].mxu0 %v500
      %v908 = vpop.f32.mrb[0].mxu0
      %v909 = vadd.f32 %v268, %v908
      %v910 = vpop.f32.mrb[0].mxu0
      %v911 = vpop.f32.mrb[0].mxu0
      %v912 = vadd.f32 %v268, %v911
      %v913 = vpop.f32.mrb[0].mxu0
      %914 = vmatprep.mubr.bf16.mxu0 %v683
      %915 = vmatmul.mubr.bf16.gmra.mrb[0].mxu0 %v502
      %v916 = vpop.f32.mrb[0].mxu0
      %v917 = vadd.f32 %v268, %v916
      %v918 = vpop.f32.mrb[0].mxu0
      %v919 = vpop.f32.mrb[0].mxu0
      %v920 = vadd.f32 %v268, %v919
      %v921 = vpop.f32.mrb[0].mxu0
      %922 = vmatprep.mubr.bf16.mxu0 %v686
      %923 = vmatmul.mubr.bf16.gmra.mrb[0].mxu0 %v504
      %v924 = vpop.f32.mrb[0].mxu0
      %v925 = vadd.f32 %v268, %v924
      %v926 = vpop.f32.mrb[0].mxu0
      %v927 = vpop.f32.mrb[0].mxu0
      %v928 = vadd.f32 %v268, %v927
      %v929 = vpop.f32.mrb[0].mxu0
      %930 = vmatprep.mubr.bf16.mxu0 %v689
      %931 = vmatmul.mubr.bf16.gmra.mrb[0].mxu0 %v506
      %v932 = vpop.f32.mrb[0].mxu0
      %v933 = vadd.f32 %v268, %v932
      %v934 = vpop.f32.mrb[0].mxu0
      %v935 = vpop.f32.mrb[0].mxu0
      %v936 = vadd.f32 %v268, %v935
      %v937 = vpop.f32.mrb[0].mxu0
      %938 = vmatprep.mubr.bf16.mxu0 %v692
      %939 = vmatmul.mubr.bf16.gmra.mrb[0].mxu0 %v508
      %v940 = vpop.f32.mrb[0].mxu0
      %v941 = vadd.f32 %v268, %v940
      %v942 = vpop.f32.mrb[0].mxu0
      %v943 = vpop.f32.mrb[0].mxu0
      %v944 = vadd.f32 %v268, %v943
      %v945 = vpop.f32.mrb[0].mxu0
      %946 = vmatprep.mubr.bf16.mxu0 %v695
      %947 = vmatmul.mubr.bf16.gmra.mrb[0].mxu0 %v510
      %v948 = vpop.f32.mrb[0].mxu0
      %v949 = vadd.f32 %v268, %v948
      %v950 = vpop.f32.mrb[0].mxu0
      %v951 = vpop.f32.mrb[0].mxu0
      %v952 = vadd.f32 %v268, %v951
      %v953 = vpop.f32.mrb[0].mxu0
      %954 = vmatprep.mubr.bf16.mxu0 %v698
      %955 = vmatmul.mubr.bf16.gmra.mrb[0].mxu0 %v512
      %v956 = vpop.f32.mrb[0].mxu0
      %v957 = vadd.f32 %v268, %v956
      %v958 = vpop.f32.mrb[0].mxu0
      %v959 = vpop.f32.mrb[0].mxu0
      %v960 = vadd.f32 %v268, %v959
      %v961 = vpop.f32.mrb[0].mxu0
      %962 = vmatprep.mubr.bf16.mxu0 %v701
      %963 = vmatmul.mubr.bf16.gmra.mrb[0].mxu0 %v514
      %v964 = vpop.f32.mrb[0].mxu0
      %v965 = vadd.f32 %v268, %v964
      %v966 = vpop.f32.mrb[0].mxu0
      %v967 = vpop.f32.mrb[0].mxu0
      %v968 = vadd.f32 %v268, %v967
      %v969 = vpop.f32.mrb[0].mxu0
      %970 = vmatprep.mubr.bf16.mxu0 %v704
      %971 = vmatmul.mubr.bf16.gmra.mrb[0].mxu0 %v516
      %v972 = vpop.f32.mrb[0].mxu0
      %v973 = vadd.f32 %v268, %v972
      %v974 = vpop.f32.mrb[0].mxu0
      %v975 = vpop.f32.mrb[0].mxu0
      %v976 = vadd.f32 %v268, %v975
      %v977 = vpop.f32.mrb[0].mxu0
      %978 = vmatprep.mubr.bf16.mxu0 %v707
      %979 = vmatmul.mubr.bf16.gmra.mrb[0].mxu0 %v518
      %v980 = vpop.f32.mrb[0].mxu0
      %v981 = vadd.f32 %v268, %v980
      %v982 = vpop.f32.mrb[0].mxu0
      %v983 = vpop.f32.mrb[0].mxu0
      %v984 = vadd.f32 %v268, %v983
      %v985 = vpop.f32.mrb[0].mxu0
      %986 = vmatprep.mubr.bf16.mxu0 %v710
      %987 = vmatmul.mubr.bf16.gmra.mrb[0].mxu0 %v520
      %v988 = vpop.f32.mrb[0].mxu0
      %v989 = vadd.f32 %v268, %v988
      %v990 = vpop.f32.mrb[0].mxu0
      %v991 = vpop.f32.mrb[0].mxu0
      %v992 = vadd.f32 %v268, %v991
      %v993 = vpop.f32.mrb[0].mxu0
      %994 = vmatprep.mubr.bf16.mxu0 %v713
      %995 = vmatmul.mubr.bf16.gmra.mrb[0].mxu0 %v522
      %v996 = vpop.f32.mrb[0].mxu0
      %v997 = vadd.f32 %v268, %v996
      %v998 = vpop.f32.mrb[0].mxu0
      %v999 = vpop.f32.mrb[0].mxu0
      %v1000 = vadd.f32 %v268, %v999
      %v1001 = vpop.f32.mrb[0].mxu0
      %1002 = vmatprep.mubr.bf16.mxu0 %v716
      %1003 = vmatmul.mubr.bf16.gmra.mrb[0].mxu0 %v524
      %v1004 = vpop.f32.mrb[0].mxu0
      %v1005 = vadd.f32 %v268, %v1004
      %v1006 = vpop.f32.mrb[0].mxu0
      %v1007 = vpop.f32.mrb[0].mxu0
      %v1008 = vadd.f32 %v268, %v1007
      %v1009 = vpop.f32.mrb[0].mxu0
      %1010 = vdwg.mxu0
      %vm1011 = vcmp.ge.f32.partialorder %v757, 0.0
      %vm1012 = vcmp.ge.f32.partialorder %v760, 0.0
      %vm1013 = vcmp.ge.f32.partialorder %v765, 0.0
      %vm1014 = vcmp.ge.f32.partialorder %v768, 0.0
      %vm1015 = vcmp.ge.f32.partialorder %v773, 0.0
      %vm1016 = vcmp.ge.f32.partialorder %v776, 0.0
      %vm1017 = vcmp.ge.f32.partialorder %v781, 0.0
      %vm1018 = vcmp.ge.f32.partialorder %v784, 0.0
      %vm1019 = vcmp.ge.f32.partialorder %v789, 0.0
      %vm1020 = vcmp.ge.f32.partialorder %v792, 0.0
      %vm1021 = vcmp.ge.f32.partialorder %v797, 0.0
      %vm1022 = vcmp.ge.f32.partialorder %v800, 0.0
      %vm1023 = vcmp.ge.f32.partialorder %v805, 0.0
      %vm1024 = vcmp.ge.f32.partialorder %v808, 0.0
      %vm1025 = vcmp.ge.f32.partialorder %v813, 0.0
      %vm1026 = vcmp.ge.f32.partialorder %v816, 0.0
      %vm1027 = vcmp.ge.f32.partialorder %v821, 0.0
      %vm1028 = vcmp.ge.f32.partialorder %v824, 0.0
      %vm1029 = vcmp.ge.f32.partialorder %v829, 0.0
      %vm1030 = vcmp.ge.f32.partialorder %v832, 0.0
      %vm1031 = vcmp.ge.f32.partialorder %v837, 0.0
      %vm1032 = vcmp.ge.f32.partialorder %v840, 0.0
      %vm1033 = vcmp.ge.f32.partialorder %v845, 0.0
      %vm1034 = vcmp.ge.f32.partialorder %v848, 0.0
      %vm1035 = vcmp.ge.f32.partialorder %v853, 0.0
      %vm1036 = vcmp.ge.f32.partialorder %v856, 0.0
      %vm1037 = vcmp.ge.f32.partialorder %v861, 0.0
      %vm1038 = vcmp.ge.f32.partialorder %v864, 0.0
      %vm1039 = vcmp.ge.f32.partialorder %v869, 0.0
      %vm1040 = vcmp.ge.f32.partialorder %v872, 0.0
      %vm1041 = vcmp.ge.f32.partialorder %v877, 0.0
      %vm1042 = vcmp.ge.f32.partialorder %v880, 0.0
      %vm1043 = vcmp.ge.f32.partialorder %v885, 0.0
      %vm1044 = vcmp.ge.f32.partialorder %v888, 0.0
      %vm1045 = vcmp.ge.f32.partialorder %v893, 0.0
      %vm1046 = vcmp.ge.f32.partialorder %v896, 0.0
      %vm1047 = vcmp.ge.f32.partialorder %v901, 0.0
      %vm1048 = vcmp.ge.f32.partialorder %v904, 0.0
      %vm1049 = vcmp.ge.f32.partialorder %v909, 0.0
      %vm1050 = vcmp.ge.f32.partialorder %v912, 0.0
      %vm1051 = vcmp.ge.f32.partialorder %v917, 0.0
      %vm1052 = vcmp.ge.f32.partialorder %v920, 0.0
      %vm1053 = vcmp.ge.f32.partialorder %v925, 0.0
      %vm1054 = vcmp.ge.f32.partialorder %v928, 0.0
      %vm1055 = vcmp.ge.f32.partialorder %v933, 0.0
      %vm1056 = vcmp.ge.f32.partialorder %v936, 0.0
      %vm1057 = vcmp.ge.f32.partialorder %v941, 0.0
      %vm1058 = vcmp.ge.f32.partialorder %v944, 0.0
      %vm1059 = vcmp.ge.f32.partialorder %v949, 0.0
      %vm1060 = vcmp.ge.f32.partialorder %v952, 0.0
      %vm1061 = vcmp.ge.f32.partialorder %v957, 0.0
      %vm1062 = vcmp.ge.f32.partialorder %v960, 0.0
      %vm1063 = vcmp.ge.f32.partialorder %v965, 0.0
      %vm1064 = vcmp.ge.f32.partialorder %v968, 0.0
      %vm1065 = vcmp.ge.f32.partialorder %v973, 0.0
      %vm1066 = vcmp.ge.f32.partialorder %v976, 0.0
      %vm1067 = vcmp.ge.f32.partialorder %v981, 0.0
      %vm1068 = vcmp.ge.f32.partialorder %v984, 0.0
      %vm1069 = vcmp.ge.f32.partialorder %v989, 0.0
      %vm1070 = vcmp.ge.f32.partialorder %v992, 0.0
      %vm1071 = vcmp.ge.f32.partialorder %v997, 0.0
      %vm1072 = vcmp.ge.f32.partialorder %v1000, 0.0
      %vm1073 = vcmp.ge.f32.partialorder %v1005, 0.0
      %vm1074 = vcmp.ge.f32.partialorder %v1008, 0.0
      %v1075 = vmul.f32 %v757, 0.2
      %v1076 = vmul.f32 %v760, 0.2
      %v1077 = vmul.f32 %v765, 0.2
      %v1078 = vmul.f32 %v768, 0.2
      %v1079 = vmul.f32 %v773, 0.2
      %v1080 = vmul.f32 %v776, 0.2
      %v1081 = vmul.f32 %v781, 0.2
      %v1082 = vmul.f32 %v784, 0.2
      %v1083 = vmul.f32 %v789, 0.2
      %v1084 = vmul.f32 %v792, 0.2
      %v1085 = vmul.f32 %v797, 0.2
      %v1086 = vmul.f32 %v800, 0.2
      %v1087 = vmul.f32 %v805, 0.2
      %v1088 = vmul.f32 %v808, 0.2
      %v1089 = vmul.f32 %v813, 0.2
      %v1090 = vmul.f32 %v816, 0.2
      %v1091 = vmul.f32 %v821, 0.2
      %v1092 = vmul.f32 %v824, 0.2
      %v1093 = vmul.f32 %v829, 0.2
      %v1094 = vmul.f32 %v832, 0.2
      %v1095 = vmul.f32 %v837, 0.2
      %v1096 = vmul.f32 %v840, 0.2
      %v1097 = vmul.f32 %v845, 0.2
      %v1098 = vmul.f32 %v848, 0.2
      %v1099 = vmul.f32 %v853, 0.2
      %v1100 = vmul.f32 %v856, 0.2
      %v1101 = vmul.f32 %v861, 0.2
      %v1102 = vmul.f32 %v864, 0.2
      %v1103 = vmul.f32 %v869, 0.2
      %v1104 = vmul.f32 %v872, 0.2
      %v1105 = vmul.f32 %v877, 0.2
      %v1106 = vmul.f32 %v880, 0.2
      %v1107 = vmul.f32 %v885, 0.2
      %v1108 = vmul.f32 %v888, 0.2
      %v1109 = vmul.f32 %v893, 0.2
      %v1110 = vmul.f32 %v896, 0.2
      %v1111 = vmul.f32 %v901, 0.2
      %v1112 = vmul.f32 %v904, 0.2
      %v1113 = vmul.f32 %v909, 0.2
      %v1114 = vmul.f32 %v912, 0.2
      %v1115 = vmul.f32 %v917, 0.2
      %v1116 = vmul.f32 %v920, 0.2
      %v1117 = vmul.f32 %v925, 0.2
      %v1118 = vmul.f32 %v928, 0.2
      %v1119 = vmul.f32 %v933, 0.2
      %v1120 = vmul.f32 %v936, 0.2
      %v1121 = vmul.f32 %v941, 0.2
      %v1122 = vmul.f32 %v944, 0.2
      %v1123 = vmul.f32 %v949, 0.2
      %v1124 = vmul.f32 %v952, 0.2
      %v1125 = vmul.f32 %v957, 0.2
      %v1126 = vmul.f32 %v960, 0.2
      %v1127 = vmul.f32 %v965, 0.2
      %v1128 = vmul.f32 %v968, 0.2
      %v1129 = vmul.f32 %v973, 0.2
      %v1130 = vmul.f32 %v976, 0.2
      %v1131 = vmul.f32 %v981, 0.2
      %v1132 = vmul.f32 %v984, 0.2
      %v1133 = vmul.f32 %v989, 0.2
      %v1134 = vmul.f32 %v992, 0.2
      %v1135 = vmul.f32 %v997, 0.2
      %v1136 = vmul.f32 %v1000, 0.2
      %v1137 = vmul.f32 %v1005, 0.2
      %v1138 = vmul.f32 %v1008, 0.2
      %v1139 = vsel %vm1011, %v757, %v1075
      %v1140 = vsel %vm1012, %v760, %v1076
      %v1141 = vsel %vm1013, %v765, %v1077
      %v1142 = vsel %vm1014, %v768, %v1078
      %v1143 = vsel %vm1015, %v773, %v1079
      %v1144 = vsel %vm1016, %v776, %v1080
      %v1145 = vsel %vm1017, %v781, %v1081
      %v1146 = vsel %vm1018, %v784, %v1082
      %v1147 = vsel %vm1019, %v789, %v1083
      %v1148 = vsel %vm1020, %v792, %v1084
      %v1149 = vsel %vm1021, %v797, %v1085
      %v1150 = vsel %vm1022, %v800, %v1086
      %v1151 = vsel %vm1023, %v805, %v1087
      %v1152 = vsel %vm1024, %v808, %v1088
      %v1153 = vsel %vm1025, %v813, %v1089
      %v1154 = vsel %vm1026, %v816, %v1090
      %v1155 = vsel %vm1027, %v821, %v1091
      %v1156 = vsel %vm1028, %v824, %v1092
      %v1157 = vsel %vm1029, %v829, %v1093
      %v1158 = vsel %vm1030, %v832, %v1094
      %v1159 = vsel %vm1031, %v837, %v1095
      %v1160 = vsel %vm1032, %v840, %v1096
      %v1161 = vsel %vm1033, %v845, %v1097
      %v1162 = vsel %vm1034, %v848, %v1098
      %v1163 = vsel %vm1035, %v853, %v1099
      %v1164 = vsel %vm1036, %v856, %v1100
      %v1165 = vsel %vm1037, %v861, %v1101
      %v1166 = vsel %vm1038, %v864, %v1102
      %v1167 = vsel %vm1039, %v869, %v1103
      %v1168 = vsel %vm1040, %v872, %v1104
      %v1169 = vsel %vm1041, %v877, %v1105
      %v1170 = vsel %vm1042, %v880, %v1106
      %v1171 = vsel %vm1043, %v885, %v1107
      %v1172 = vsel %vm1044, %v888, %v1108
      %v1173 = vsel %vm1045, %v893, %v1109
      %v1174 = vsel %vm1046, %v896, %v1110
      %v1175 = vsel %vm1047, %v901, %v1111
      %v1176 = vsel %vm1048, %v904, %v1112
      %v1177 = vsel %vm1049, %v909, %v1113
      %v1178 = vsel %vm1050, %v912, %v1114
      %v1179 = vsel %vm1051, %v917, %v1115
      %v1180 = vsel %vm1052, %v920, %v1116
      %v1181 = vsel %vm1053, %v925, %v1117
      %v1182 = vsel %vm1054, %v928, %v1118
      %v1183 = vsel %vm1055, %v933, %v1119
      %v1184 = vsel %vm1056, %v936, %v1120
      %v1185 = vsel %vm1057, %v941, %v1121
      %v1186 = vsel %vm1058, %v944, %v1122
      %v1187 = vsel %vm1059, %v949, %v1123
      %v1188 = vsel %vm1060, %v952, %v1124
      %v1189 = vsel %vm1061, %v957, %v1125
      %v1190 = vsel %vm1062, %v960, %v1126
      %v1191 = vsel %vm1063, %v965, %v1127
      %v1192 = vsel %vm1064, %v968, %v1128
      %v1193 = vsel %vm1065, %v973, %v1129
      %v1194 = vsel %vm1066, %v976, %v1130
      %v1195 = vsel %vm1067, %v981, %v1131
      %v1196 = vsel %vm1068, %v984, %v1132
      %v1197 = vsel %vm1069, %v989, %v1133
      %v1198 = vsel %vm1070, %v992, %v1134
      %v1199 = vsel %vm1071, %v997, %v1135
      %v1200 = vsel %vm1072, %v1000, %v1136
      %v1201 = vsel %vm1073, %v1005, %v1137
      %v1202 = vsel %vm1074, %v1008, %v1138
      %v1203 = vpack.c.bf16 %v1140, %v1139
      %v1204 = vpack.c.bf16 %v1142, %v1141
      %v1205 = vpack.c.bf16 %v1144, %v1143
      %v1206 = vpack.c.bf16 %v1146, %v1145
      %v1207 = vpack.c.bf16 %v1148, %v1147
      %v1208 = vpack.c.bf16 %v1150, %v1149
      %v1209 = vpack.c.bf16 %v1152, %v1151
      %v1210 = vpack.c.bf16 %v1154, %v1153
      %v1211 = vpack.c.bf16 %v1156, %v1155
      %v1212 = vpack.c.bf16 %v1158, %v1157
      %v1213 = vpack.c.bf16 %v1160, %v1159
      %v1214 = vpack.c.bf16 %v1162, %v1161
      %v1215 = vpack.c.bf16 %v1164, %v1163
      %v1216 = vpack.c.bf16 %v1166, %v1165
      %v1217 = vpack.c.bf16 %v1168, %v1167
      %v1218 = vpack.c.bf16 %v1170, %v1169
      %v1219 = vpack.c.bf16 %v1172, %v1171
      %v1220 = vpack.c.bf16 %v1174, %v1173
      %v1221 = vpack.c.bf16 %v1176, %v1175
      %v1222 = vpack.c.bf16 %v1178, %v1177
      %v1223 = vpack.c.bf16 %v1180, %v1179
      %v1224 = vpack.c.bf16 %v1182, %v1181
      %v1225 = vpack.c.bf16 %v1184, %v1183
      %v1226 = vpack.c.bf16 %v1186, %v1185
      %v1227 = vpack.c.bf16 %v1188, %v1187
      %v1228 = vpack.c.bf16 %v1190, %v1189
      %v1229 = vpack.c.bf16 %v1192, %v1191
      %v1230 = vpack.c.bf16 %v1194, %v1193
      %v1231 = vpack.c.bf16 %v1196, %v1195
      %v1232 = vpack.c.bf16 %v1198, %v1197
      %v1233 = vpack.c.bf16 %v1200, %v1199
      %v1234 = vpack.c.bf16 %v1202, %v1201
      %v1267 = vunpack.c.l.b16 %v1203
      %v1268 = vunpack.c.h.b16 %v1203
      %v1269 = vunpack.c.l.b16 %v1204
      %v1270 = vunpack.c.h.b16 %v1204
      %v1271 = vunpack.c.l.b16 %v1205
      %v1272 = vunpack.c.h.b16 %v1205
      %v1273 = vunpack.c.l.b16 %v1206
      %v1274 = vunpack.c.h.b16 %v1206
      %v1275 = vunpack.c.l.b16 %v1207
      %v1276 = vunpack.c.h.b16 %v1207
      %v1277 = vunpack.c.l.b16 %v1208
      %v1278 = vunpack.c.h.b16 %v1208
      %v1279 = vunpack.c.l.b16 %v1209
      %v1280 = vunpack.c.h.b16 %v1209
      %v1281 = vunpack.c.l.b16 %v1210
      %v1282 = vunpack.c.h.b16 %v1210
      %v1283 = vunpack.c.l.b16 %v1211
      %v1284 = vunpack.c.h.b16 %v1211
      %v1285 = vunpack.c.l.b16 %v1212
      %v1286 = vunpack.c.h.b16 %v1212
      %v1287 = vunpack.c.l.b16 %v1213
      %v1288 = vunpack.c.h.b16 %v1213
      %v1289 = vunpack.c.l.b16 %v1214
      %v1290 = vunpack.c.h.b16 %v1214
      %v1291 = vunpack.c.l.b16 %v1215
      %v1292 = vunpack.c.h.b16 %v1215
      %v1293 = vunpack.c.l.b16 %v1216
      %v1294 = vunpack.c.h.b16 %v1216
      %v1295 = vunpack.c.l.b16 %v1217
      %v1296 = vunpack.c.h.b16 %v1217
      %v1297 = vunpack.c.l.b16 %v1218
      %v1298 = vunpack.c.h.b16 %v1218
      %v1299 = vunpack.c.l.b16 %v1219
      %v1300 = vunpack.c.h.b16 %v1219
      %v1301 = vunpack.c.l.b16 %v1220
      %v1302 = vunpack.c.h.b16 %v1220
      %v1303 = vunpack.c.l.b16 %v1221
      %v1304 = vunpack.c.h.b16 %v1221
      %v1305 = vunpack.c.l.b16 %v1222
      %v1306 = vunpack.c.h.b16 %v1222
      %v1307 = vunpack.c.l.b16 %v1223
      %v1308 = vunpack.c.h.b16 %v1223
      %v1309 = vunpack.c.l.b16 %v1224
      %v1310 = vunpack.c.h.b16 %v1224
      %v1311 = vunpack.c.l.b16 %v1225
      %v1312 = vunpack.c.h.b16 %v1225
      %v1313 = vunpack.c.l.b16 %v1226
      %v1314 = vunpack.c.h.b16 %v1226
      %v1315 = vunpack.c.l.b16 %v1227
      %v1316 = vunpack.c.h.b16 %v1227
      %v1317 = vunpack.c.l.b16 %v1228
      %v1318 = vunpack.c.h.b16 %v1228
      %v1319 = vunpack.c.l.b16 %v1229
      %v1320 = vunpack.c.h.b16 %v1229
      %v1321 = vunpack.c.l.b16 %v1230
      %v1322 = vunpack.c.h.b16 %v1230
      %v1323 = vunpack.c.l.b16 %v1231
      %v1324 = vunpack.c.h.b16 %v1231
      %v1325 = vunpack.c.l.b16 %v1232
      %v1326 = vunpack.c.h.b16 %v1232
      %v1327 = vunpack.c.l.b16 %v1233
      %v1328 = vunpack.c.h.b16 %v1233
      %v1329 = vunpack.c.l.b16 %v1234
      %v1330 = vunpack.c.h.b16 %v1234
      %v1331 = vpack.c.b16 %v1267, %v1267
      %v1332 = vpack.c.b16 %v1268, %v1268
      %v1333 = vpack.c.b16 %v1269, %v1269
      %v1334 = vpack.c.b16 %v1270, %v1270
      %v1335 = vpack.c.b16 %v1271, %v1271
      %v1336 = vpack.c.b16 %v1272, %v1272
      %v1337 = vpack.c.b16 %v1273, %v1273
      %v1338 = vpack.c.b16 %v1274, %v1274
      %v1339 = vpack.c.b16 %v1275, %v1275
      %v1340 = vpack.c.b16 %v1276, %v1276
      %v1341 = vpack.c.b16 %v1277, %v1277
      %v1342 = vpack.c.b16 %v1278, %v1278
      %v1343 = vpack.c.b16 %v1279, %v1279
      %v1344 = vpack.c.b16 %v1280, %v1280
      %v1345 = vpack.c.b16 %v1281, %v1281
      %v1346 = vpack.c.b16 %v1282, %v1282
      %v1347 = vpack.c.b16 %v1283, %v1283
      %v1348 = vpack.c.b16 %v1284, %v1284
      %v1349 = vpack.c.b16 %v1285, %v1285
      %v1350 = vpack.c.b16 %v1286, %v1286
      %v1351 = vpack.c.b16 %v1287, %v1287
      %v1352 = vpack.c.b16 %v1288, %v1288
      %v1353 = vpack.c.b16 %v1289, %v1289
      %v1354 = vpack.c.b16 %v1290, %v1290
      %v1355 = vpack.c.b16 %v1291, %v1291
      %v1356 = vpack.c.b16 %v1292, %v1292
      %v1357 = vpack.c.b16 %v1293, %v1293
      %v1358 = vpack.c.b16 %v1294, %v1294
      %v1359 = vpack.c.b16 %v1295, %v1295
      %v1360 = vpack.c.b16 %v1296, %v1296
      %v1361 = vpack.c.b16 %v1297, %v1297
      %v1362 = vpack.c.b16 %v1298, %v1298
      %v1363 = vpack.c.b16 %v1299, %v1299
      %v1364 = vpack.c.b16 %v1300, %v1300
      %v1365 = vpack.c.b16 %v1301, %v1301
      %v1366 = vpack.c.b16 %v1302, %v1302
      %v1367 = vpack.c.b16 %v1303, %v1303
      %v1368 = vpack.c.b16 %v1304, %v1304
      %v1369 = vpack.c.b16 %v1305, %v1305
      %v1370 = vpack.c.b16 %v1306, %v1306
      %v1371 = vpack.c.b16 %v1307, %v1307
      %v1372 = vpack.c.b16 %v1308, %v1308
      %v1373 = vpack.c.b16 %v1309, %v1309
      %v1374 = vpack.c.b16 %v1310, %v1310
      %v1375 = vpack.c.b16 %v1311, %v1311
      %v1376 = vpack.c.b16 %v1312, %v1312
      %v1377 = vpack.c.b16 %v1313, %v1313
      %v1378 = vpack.c.b16 %v1314, %v1314
      %v1379 = vpack.c.b16 %v1315, %v1315
      %v1380 = vpack.c.b16 %v1316, %v1316
      %v1381 = vpack.c.b16 %v1317, %v1317
      %v1382 = vpack.c.b16 %v1318, %v1318
      %v1383 = vpack.c.b16 %v1319, %v1319
      %v1384 = vpack.c.b16 %v1320, %v1320
      %v1385 = vpack.c.b16 %v1321, %v1321
      %v1386 = vpack.c.b16 %v1322, %v1322
      %v1387 = vpack.c.b16 %v1323, %v1323
      %v1388 = vpack.c.b16 %v1324, %v1324
      %v1389 = vpack.c.b16 %v1325, %v1325
      %v1390 = vpack.c.b16 %v1326, %v1326
      %v1391 = vpack.c.b16 %v1327, %v1327
      %v1392 = vpack.c.b16 %v1328, %v1328
      %v1393 = vpack.c.b16 %v1329, %v1329
      %v1394 = vpack.c.b16 %v1330, %v1330
      %1459 = vst [vmem:[%s175] sm:$0xf] %v1331
      %1460 = vst [vmem:[%s175 + $0x4] sm:$0xf] %v1332
      %1461 = vst [vmem:[%s175 + $0x8] sm:$0xf] %v1333
      %1462 = vst [vmem:[%s175 + $0xc] sm:$0xf] %v1334
      %1463 = vst [vmem:[%s175 + $0x10] sm:$0xf] %v1335
      %1464 = vst [vmem:[%s175 + $0x14] sm:$0xf] %v1336
      %1465 = vst [vmem:[%s175 + $0x18] sm:$0xf] %v1337
      %1466 = vst [vmem:[%s175 + $0x1c] sm:$0xf] %v1338
      %1467 = vst [vmem:[%s175 + $0x20] sm:$0xf] %v1339
      %1468 = vst [vmem:[%s175 + $0x24] sm:$0xf] %v1340
      %1469 = vst [vmem:[%s175 + $0x28] sm:$0xf] %v1341
      %1470 = vst [vmem:[%s175 + $0x2c] sm:$0xf] %v1342
      %1471 = vst [vmem:[%s175 + $0x30] sm:$0xf] %v1343
      %1472 = vst [vmem:[%s175 + $0x34] sm:$0xf] %v1344
      %1473 = vst [vmem:[%s175 + $0x38] sm:$0xf] %v1345
      %1474 = vst [vmem:[%s175 + $0x3c] sm:$0xf] %v1346
      %1475 = vst [vmem:[%s175 + $0x40] sm:$0xf] %v1347
      %1476 = vst [vmem:[%s175 + $0x44] sm:$0xf] %v1348
      %1477 = vst [vmem:[%s175 + $0x48] sm:$0xf] %v1349
      %1478 = vst [vmem:[%s175 + $0x4c] sm:$0xf] %v1350
      %1479 = vst [vmem:[%s175 + $0x50] sm:$0xf] %v1351
      %1480 = vst [vmem:[%s175 + $0x54] sm:$0xf] %v1352
      %1481 = vst [vmem:[%s175 + $0x58] sm:$0xf] %v1353
      %1482 = vst [vmem:[%s175 + $0x5c] sm:$0xf] %v1354
      %1483 = vst [vmem:[%s175 + $0x60] sm:$0xf] %v1355
      %1484 = vst [vmem:[%s175 + $0x64] sm:$0xf] %v1356
      %1485 = vst [vmem:[%s175 + $0x68] sm:$0xf] %v1357
      %1486 = vst [vmem:[%s175 + $0x6c] sm:$0xf] %v1358
      %1487 = vst [vmem:[%s175 + $0x70] sm:$0xf] %v1359
      %1488 = vst [vmem:[%s175 + $0x74] sm:$0xf] %v1360
      %1489 = vst [vmem:[%s175 + $0x78] sm:$0xf] %v1361
      %1490 = vst [vmem:[%s175 + $0x7c] sm:$0xf] %v1362
      %1491 = vst [vmem:[%s175 + $0x80] sm:$0xf] %v1363
      %1492 = vst [vmem:[%s175 + $0x84] sm:$0xf] %v1364
      %1493 = vst [vmem:[%s175 + $0x88] sm:$0xf] %v1365
      %1494 = vst [vmem:[%s175 + $0x8c] sm:$0xf] %v1366
      %1495 = vst [vmem:[%s175 + $0x90] sm:$0xf] %v1367
      %1496 = vst [vmem:[%s175 + $0x94] sm:$0xf] %v1368
      %1497 = vst [vmem:[%s175 + $0x98] sm:$0xf] %v1369
      %1498 = vst [vmem:[%s175 + $0x9c] sm:$0xf] %v1370
      %1499 = vst [vmem:[%s175 + $0xa0] sm:$0xf] %v1371
      %1500 = vst [vmem:[%s175 + $0xa4] sm:$0xf] %v1372
      %1501 = vst [vmem:[%s175 + $0xa8] sm:$0xf] %v1373
      %1502 = vst [vmem:[%s175 + $0xac] sm:$0xf] %v1374
      %1503 = vst [vmem:[%s175 + $0xb0] sm:$0xf] %v1375
      %1504 = vst [vmem:[%s175 + $0xb4] sm:$0xf] %v1376
      %1505 = vst [vmem:[%s175 + $0xb8] sm:$0xf] %v1377
      %1506 = vst [vmem:[%s175 + $0xbc] sm:$0xf] %v1378
      %1507 = vst [vmem:[%s175 + $0xc0] sm:$0xf] %v1379
      %1508 = vst [vmem:[%s175 + $0xc4] sm:$0xf] %v1380
      %1509 = vst [vmem:[%s175 + $0xc8] sm:$0xf] %v1381
      %1510 = vst [vmem:[%s175 + $0xcc] sm:$0xf] %v1382
      %1511 = vst [vmem:[%s175 + $0xd0] sm:$0xf] %v1383
      %1512 = vst [vmem:[%s175 + $0xd4] sm:$0xf] %v1384
      %1513 = vst [vmem:[%s175 + $0xd8] sm:$0xf] %v1385
      %1514 = vst [vmem:[%s175 + $0xdc] sm:$0xf] %v1386
      %1515 = vst [vmem:[%s175 + $0xe0] sm:$0xf] %v1387
      %1516 = vst [vmem:[%s175 + $0xe4] sm:$0xf] %v1388
      %1517 = vst [vmem:[%s175 + $0xe8] sm:$0xf] %v1389
      %1518 = vst [vmem:[%s175 + $0xec] sm:$0xf] %v1390
      %1519 = vst [vmem:[%s175 + $0xf0] sm:$0xf] %v1391
      %1520 = vst [vmem:[%s175 + $0xf4] sm:$0xf] %v1392
      %1521 = vst [vmem:[%s175 + $0xf8] sm:$0xf] %v1393
      %1522 = vst [vmem:[%s175 + $0xfc] sm:$0xf] %v1394
      %s1523 = smul.u32 64, %s14
      %p1524 = scmp.lt.s32.totalorder %s1523, 127
      %s1525 = scalar_select %p1524, %s1523, 127
      %s1526 = smul.addr %s1525, 4
      %s1527 = scalar_lea.vmem %s3, %s1526
      // Predicated region
      $region33: #{adversarial_loss_forward.10} parent=31 // pred_check
        %p1528 = pneg %p100
      $region34: #{adversarial_loss_forward.10} parent=31 // pred_check_branch
        %1530 = sbr.rel (%p1528) target = $region36
      $region35: #{adversarial_loss_forward.10} parent=31 // pred_region
        %s1531 = smul.u32 64, %s14
      $region36: #{adversarial_loss_forward.10} parent=31 // pred_fallthru
        _
    $region32: #{adversarial_loss_forward.10} parent=5 // pred_fallthru
      _
    %p1532 = scmp.le.s32.totalorder 2, %s9
    // Predicated region
    $region37: #{adversarial_loss_forward.10} parent=5 // pred_check
      %p1533 = pneg %p1532
    $region38: #{adversarial_loss_forward.10} parent=5 // pred_check_branch
      %1535 = sbr.rel (%p1533) target = $region40
    $region39: #{adversarial_loss_forward.10} parent=5 // pred_region
      %s1536 = ssub.s32 %s9, 2
      // Predicated region
      $region41: #{adversarial_loss_forward.10} parent=39 // pred_check
        %p1537 = pneg %p106
      $region42: #{adversarial_loss_forward.10} parent=39 // pred_check_branch
        %1539 = sbr.rel (%p1537) target = $region44
      $region43: #{adversarial_loss_forward.10} parent=39 // pred_region
        %s1540 = smul.u32 64, %s15
        %p1541 = scmp.lt.s32.totalorder %s1540, 127
        %s1542 = scalar_select %p1541, %s1540, 127
        %s1543 = smul.addr %s1542, 4
        %s1544 = scalar_lea.vmem %s3, %s1543
      $region44: #{adversarial_loss_forward.10} parent=39 // pred_fallthru
        _
    $region40: #{adversarial_loss_forward.10} parent=5 // pred_fallthru
      _
  $region6: #{adversarial_loss_forward.10} parent=0 // loop_footer
    %s13 = sadd.s32 1, %s9
  $region7: #{adversarial_loss_forward.10} parent=0 // loop_footer_branch
    %8 = sbr.rel target = $region3
  $region8: #{adversarial_loss_forward.10} parent=0 // loop_exit
    _

// kernel: adversarial_loss_forward.11
$region0: #{adversarial_loss_forward.11}
  #allocation0 [shape = 'u32[]', space=smem, size = 0x4, offset = 0x4, fixed_abs, tag = 'smem constant byte address 0x4 - core index']
  #allocation1 [shape = 'u32[144,128]{1,0:T(1,128)}', space=vmem, size = 0x12000, scoped, tag = 'internal scratch']
  %s0 = inlined_call_operand.vmem [shape: bf16[256,1152], index: 0, kind: input, shape index: {}]
  %s1 = inlined_call_operand.vmem [shape: bf16[1152,128], index: 1, kind: input, shape index: {}]
  %s2 = inlined_call_operand.vmem [shape: f32[1,128], index: 2, kind: input, shape index: {}]
  %s3 = inlined_call_operand.vmem [shape: bf16[256,128], index: 3, kind: output, shape index: {}]
  %s4 = sld [smem:[#allocation0]]
  $region45: #{adversarial_loss_forward.11} parent=0
    _
  %s6 = ssub.s32 1, %s4
  %s7 = scalar_select 0, %s6, %s4
  loop: start=0, step=1, limit=4
  $region2: #{adversarial_loss_forward.11} parent=0 // loop_pre_header
    _
  $region3: #{adversarial_loss_forward.11} parent=0 // loop_header
    %s9 = sphi 0, %s13
    %p10 = scmp.ge.s32.totalorder %s9, 4
    %s19 = sphi 0, %s21
    %s22 = sphi 0, %s19
    %s23 = sphi 0, %s22
    %s39 = sphi 0, %s23
    %s43 = sphi 0, %s43
    %s45 = sphi 0, %s43
    %s46 = sphi 0, %s45
    %s60 = sphi 0, %s46
    %s64 = sphi 0, %s64
    %s66 = sphi 0, %s64
    %s67 = sphi 0, %s66
    %s81 = sphi 0, %s67
    %s87 = sphi 0, %s89
    %s90 = sphi 0, %s87
    %s91 = sphi 0, %s90
    %s107 = sphi 0, %s91
  $region4: #{adversarial_loss_forward.11} parent=0 // loop_header_branch
    %12 = sbr.rel (%p10) target = $region8
  $region5: #{adversarial_loss_forward.11} parent=0 // loop_body
    %s14 = ssub.s32 %s9, 1
    %s15 = ssub.s32 %s9, 2
    %s16 = sadd.s32 %s9, 1
    %s17 = ssub.s32 %s9, %s16
    %p18 = scmp.eq.s32.totalorder %s17, 0
    %s20 = sadd.s32 %s19, 1
    %s21 = scalar_select %p18, %s19, %s20
    %p24 = pneg %p18
    %p25 = scmp.eq.s32.totalorder %s9, 1
    %p26 = por %p24, %p25
    %p27 = scmp.ne.s32.totalorder %s19, %s22
    %p28 = scmp.eq.s32.totalorder %s9, 0
    %p29 = por %p27, %p28
    %p30 = scmp.ne.s32.totalorder %s19, %s22
    %p31 = scmp.eq.s32.totalorder %s14, 1
    %p32 = por %p30, %p31
    %p33 = scmp.ne.s32.totalorder %s22, %s23
    %p34 = scmp.eq.s32.totalorder %s14, 0
    %p35 = por %p33, %p34
    %p36 = scmp.ne.s32.totalorder %s22, %s23
    %p37 = scmp.eq.s32.totalorder %s15, 1
    %p38 = por %p36, %p37
    %p40 = scmp.ne.s32.totalorder %s23, %s39
    %p41 = scmp.eq.s32.totalorder %s15, 0
    %p42 = por %p40, %p41
    %s44 = sadd.s32 %s43, 1
    %p47 = scmp.eq.s32.totalorder %s9, 1
    %p48 = scmp.ne.s32.totalorder %s43, %s45
    %p49 = scmp.eq.s32.totalorder %s9, 0
    %p50 = por %p48, %p49
    %p51 = scmp.ne.s32.totalorder %s43, %s45
    %p52 = scmp.eq.s32.totalorder %s14, 1
    %p53 = por %p51, %p52
    %p54 = scmp.ne.s32.totalorder %s45, %s46
    %p55 = scmp.eq.s32.totalorder %s14, 0
    %p56 = por %p54, %p55
    %p57 = scmp.ne.s32.totalorder %s45, %s46
    %p58 = scmp.eq.s32.totalorder %s15, 1
    %p59 = por %p57, %p58
    %p61 = scmp.ne.s32.totalorder %s46, %s60
    %p62 = scmp.eq.s32.totalorder %s15, 0
    %p63 = por %p61, %p62
    %s65 = sadd.s32 %s64, 1
    %p68 = scmp.eq.s32.totalorder %s9, 1
    %p69 = scmp.ne.s32.totalorder %s64, %s66
    %p70 = scmp.eq.s32.totalorder %s9, 0
    %p71 = por %p69, %p70
    %p72 = scmp.ne.s32.totalorder %s64, %s66
    %p73 = scmp.eq.s32.totalorder %s14, 1
    %p74 = por %p72, %p73
    %p75 = scmp.ne.s32.totalorder %s66, %s67
    %p76 = scmp.eq.s32.totalorder %s14, 0
    %p77 = por %p75, %p76
    %p78 = scmp.ne.s32.totalorder %s66, %s67
    %p79 = scmp.eq.s32.totalorder %s15, 1
    %p80 = por %p78, %p79
    %p82 = scmp.ne.s32.totalorder %s67, %s81
    %p83 = scmp.eq.s32.totalorder %s15, 0
    %p84 = por %p82, %p83
    %s85 = ssub.s32 %s9, %s16
    %p86 = scmp.eq.s32.totalorder %s85, 0
    %s88 = sadd.s32 %s87, 1
    %s89 = scalar_select %p86, %s87, %s88
    %p92 = pneg %p86
    %p93 = scmp.eq.s32.totalorder %s9, 1
    %p94 = por %p92, %p93
    %p95 = scmp.ne.s32.totalorder %s87, %s90
    %p96 = scmp.eq.s32.totalorder %s9, 0
    %p97 = por %p95, %p96
    %p98 = scmp.ne.s32.totalorder %s87, %s90
    %p99 = scmp.eq.s32.totalorder %s14, 1
    %p100 = por %p98, %p99
    %p101 = scmp.ne.s32.totalorder %s90, %s91
    %p102 = scmp.eq.s32.totalorder %s14, 0
    %p103 = por %p101, %p102
    %p104 = scmp.ne.s32.totalorder %s90, %s91
    %p105 = scmp.eq.s32.totalorder %s15, 1
    %p106 = por %p104, %p105
    %p108 = scmp.ne.s32.totalorder %s91, %s107
    %p109 = scmp.eq.s32.totalorder %s15, 0
    %p110 = por %p108, %p109
    %p111 = scmp.le.s32.totalorder 1, %s9
    %p112 = scmp.lt.s32.totalorder %s9, 3
    %p113 = pnand %p111, %p112
    %p114 = pneg %p113
    // Predicated region
    $region9: #{adversarial_loss_forward.11} parent=5 // pred_check
      _
    $region10: #{adversarial_loss_forward.11} parent=5 // pred_check_branch
      %116 = sbr.rel (%p113) target = $region12
    $region11: #{adversarial_loss_forward.11} parent=5 // pred_region
      %s117 = ssub.s32 %s9, 1
      // Predicated region
      $region13: #{adversarial_loss_forward.11} parent=11 // pred_check
        %p118 = pneg %p56
      $region14: #{adversarial_loss_forward.11} parent=11 // pred_check_branch
        %120 = sbr.rel (%p118) target = $region16
      $region15: #{adversarial_loss_forward.11} parent=11 // pred_region
        _
      $region16: #{adversarial_loss_forward.11} parent=11 // pred_fallthru
        _
      // Predicated region
      $region17: #{adversarial_loss_forward.11} parent=11 // pred_check
        %p121 = pneg %p77
      $region18: #{adversarial_loss_forward.11} parent=11 // pred_check_branch
        %123 = sbr.rel (%p121) target = $region20
      $region19: #{adversarial_loss_forward.11} parent=11 // pred_region
        _
      $region20: #{adversarial_loss_forward.11} parent=11 // pred_fallthru
        _
    $region12: #{adversarial_loss_forward.11} parent=5 // pred_fallthru
      _
    %p124 = scmp.lt.s32.totalorder %s9, 2
    // Predicated region
    $region21: #{adversarial_loss_forward.11} parent=5 // pred_check
      %p125 = pneg %p124
    $region22: #{adversarial_loss_forward.11} parent=5 // pred_check_branch
      %127 = sbr.rel (%p125) target = $region24
    $region23: #{adversarial_loss_forward.11} parent=5 // pred_region
      // Predicated region
      $region25: #{adversarial_loss_forward.11} parent=23 // pred_check
        %p128 = pneg %p29
      $region26: #{adversarial_loss_forward.11} parent=23 // pred_check_branch
        %130 = sbr.rel (%p128) target = $region28
      $region27: #{adversarial_loss_forward.11} parent=23 // pred_region
        %s131 = smul.u32 16, %s9
        %p132 = scmp.lt.s32.totalorder %s131, 31
        %s133 = scalar_select %p132, %s131, 31
        %s134 = smul.addr %s133, 9
        %s135 = smul.addr %s134, 4
        %s136 = scalar_lea.vmem %s0, %s135
        %s137 = smul.u32 16, %s9
      $region28: #{adversarial_loss_forward.11} parent=23 // pred_fallthru
        _
    $region24: #{adversarial_loss_forward.11} parent=5 // pred_fallthru
      _
    %p138 = scmp.le.s32.totalorder 1, %s9
    %p139 = scmp.lt.s32.totalorder %s9, 3
    %p140 = pnand %p138, %p139
    %p141 = pneg %p140
    // Predicated region
    $region29: #{adversarial_loss_forward.11} parent=5 // pred_check
      _
    $region30: #{adversarial_loss_forward.11} parent=5 // pred_check_branch
      %143 = sbr.rel (%p140) target = $region32
    $region31: #{adversarial_loss_forward.11} parent=5 // pred_region
      %s144 = ssub.s32 %s9, 1
      %s145 = smul.u32 16, %s14
      %p146 = scmp.lt.s32.totalorder %s145, 31
      %s147 = scalar_select %p146, %s145, 31
      %s148 = smul.addr %s147, 9
      %s149 = smul.addr %s148, 4
      %s150 = scalar_lea.vmem %s0, %s149
      %p151 = pneg %p35
      %p152 = pneg %p32
      %p153 = pneg %p56
      %p154 = pneg %p53
      %p155 = pneg %p77
      %p156 = pneg %p74
      %p157 = pneg %p103
      %p158 = pneg %p100
      %s159 = smul.u32 16, %s14
      %p160 = scmp.lt.s32.totalorder %s159, 31
      %s161 = scalar_select %p160, %s159, 31
      %s162 = smul.addr %s161, 4
      %s163 = scalar_lea.vmem %s3, %s162
      %s164 = smul.u32 16, %s14
      %p165 = scmp.lt.s32.totalorder %s164, 31
      %s166 = scalar_select %p165, %s164, 31
      %s167 = smul.addr %s166, 9
      %s168 = smul.addr %s167, 4
      %s169 = scalar_lea.vmem %s0, %s168
      %s170 = smul.u32 16, %s14
      %s171 = smul.u32 16, %s14
      %p172 = scmp.lt.s32.totalorder %s171, 31
      %s173 = scalar_select %p172, %s171, 31
      %s174 = smul.addr %s173, 4
      %s175 = scalar_lea.vmem %s3, %s174
      %s176 = smul.u32 16, %s14
      %v178 = vld [vmem:[%s169] sm:$0xff]
      %v179 = vld [vmem:[%s169 + $0x8] sm:$0xff]
      %v180 = vld [vmem:[%s169 + $0x10] sm:$0xff]
      %v181 = vld [vmem:[%s169 + $0x18] sm:$0xff]
      %v182 = vld [vmem:[%s169 + $0x20] sm:$0xf]
      %v183 = vld [vmem:[%s169 + $0x24] sm:$0xff]
      %v184 = vld [vmem:[%s169 + $0x2c] sm:$0xff]
      %v185 = vld [vmem:[%s169 + $0x34] sm:$0xff]
      %v186 = vld [vmem:[%s169 + $0x3c] sm:$0xff]
      %v187 = vld [vmem:[%s169 + $0x44] sm:$0xf]
      %v188 = vld [vmem:[%s169 + $0x48] sm:$0xff]
      %v189 = vld [vmem:[%s169 + $0x50] sm:$0xff]
      %v190 = vld [vmem:[%s169 + $0x58] sm:$0xff]
      %v191 = vld [vmem:[%s169 + $0x60] sm:$0xff]
      %v192 = vld [vmem:[%s169 + $0x68] sm:$0xf]
      %v193 = vld [vmem:[%s169 + $0x6c] sm:$0xff]
      %v194 = vld [vmem:[%s169 + $0x74] sm:$0xff]
      %v195 = vld [vmem:[%s169 + $0x7c] sm:$0xff]
      %v196 = vld [vmem:[%s169 + $0x84] sm:$0xff]
      %v197 = vld [vmem:[%s169 + $0x8c] sm:$0xf]
      %v198 = vld [vmem:[%s169 + $0x90] sm:$0xff]
      %v199 = vld [vmem:[%s169 + $0x98] sm:$0xff]
      %v200 = vld [vmem:[%s169 + $0xa0] sm:$0xff]
      %v201 = vld [vmem:[%s169 + $0xa8] sm:$0xff]
      %v202 = vld [vmem:[%s169 + $0xb0] sm:$0xf]
      %v203 = vld [vmem:[%s169 + $0xb4] sm:$0xff]
      %v204 = vld [vmem:[%s169 + $0xbc] sm:$0xff]
      %v205 = vld [vmem:[%s169 + $0xc4] sm:$0xff]
      %v206 = vld [vmem:[%s169 + $0xcc] sm:$0xff]
      %v207 = vld [vmem:[%s169 + $0xd4] sm:$0xf]
      %v208 = vld [vmem:[%s169 + $0xd8] sm:$0xff]
      %v209 = vld [vmem:[%s169 + $0xe0] sm:$0xff]
      %v210 = vld [vmem:[%s169 + $0xe8] sm:$0xff]
      %v211 = vld [vmem:[%s169 + $0xf0] sm:$0xff]
      %v212 = vld [vmem:[%s169 + $0xf8] sm:$0xf]
      %v213 = vld [vmem:[%s169 + $0xfc] sm:$0xff]
      %v214 = vld [vmem:[%s169 + $0x104] sm:$0xff]
      %v215 = vld [vmem:[%s169 + $0x10c] sm:$0xff]
      %v216 = vld [vmem:[%s169 + $0x114] sm:$0xff]
      %v217 = vld [vmem:[%s169 + $0x11c] sm:$0xf]
      %v218 = vld [vmem:[%s169 + $0x120] sm:$0xff]
      %v219 = vld [vmem:[%s169 + $0x128] sm:$0xff]
      %v220 = vld [vmem:[%s169 + $0x130] sm:$0xff]
      %v221 = vld [vmem:[%s169 + $0x138] sm:$0xff]
      %v222 = vld [vmem:[%s169 + $0x140] sm:$0xf]
      %v223 = vld [vmem:[%s169 + $0x144] sm:$0xff]
      %v224 = vld [vmem:[%s169 + $0x14c] sm:$0xff]
      %v225 = vld [vmem:[%s169 + $0x154] sm:$0xff]
      %v226 = vld [vmem:[%s169 + $0x15c] sm:$0xff]
      %v227 = vld [vmem:[%s169 + $0x164] sm:$0xf]
      %v228 = vld [vmem:[%s169 + $0x168] sm:$0xff]
      %v229 = vld [vmem:[%s169 + $0x170] sm:$0xff]
      %v230 = vld [vmem:[%s169 + $0x178] sm:$0xff]
      %v231 = vld [vmem:[%s169 + $0x180] sm:$0xff]
      %v232 = vld [vmem:[%s169 + $0x188] sm:$0xf]
      %v233 = vld [vmem:[%s169 + $0x18c] sm:$0xff]
      %v234 = vld [vmem:[%s169 + $0x194] sm:$0xff]
      %v235 = vld [vmem:[%s169 + $0x19c] sm:$0xff]
      %v236 = vld [vmem:[%s169 + $0x1a4] sm:$0xff]
      %v237 = vld [vmem:[%s169 + $0x1ac] sm:$0xf]
      %v238 = vld [vmem:[%s169 + $0x1b0] sm:$0xff]
      %v239 = vld [vmem:[%s169 + $0x1b8] sm:$0xff]
      %v240 = vld [vmem:[%s169 + $0x1c0] sm:$0xff]
      %v241 = vld [vmem:[%s169 + $0x1c8] sm:$0xff]
      %v242 = vld [vmem:[%s169 + $0x1d0] sm:$0xf]
      %v243 = vld [vmem:[%s169 + $0x1d4] sm:$0xff]
      %v244 = vld [vmem:[%s169 + $0x1dc] sm:$0xff]
      %v245 = vld [vmem:[%s169 + $0x1e4] sm:$0xff]
      %v246 = vld [vmem:[%s169 + $0x1ec] sm:$0xff]
      %v247 = vld [vmem:[%s169 + $0x1f4] sm:$0xf]
      %v248 = vld [vmem:[%s169 + $0x1f8] sm:$0xff]
      %v249 = vld [vmem:[%s169 + $0x200] sm:$0xff]
      %v250 = vld [vmem:[%s169 + $0x208] sm:$0xff]
      %v251 = vld [vmem:[%s169 + $0x210] sm:$0xff]
      %v252 = vld [vmem:[%s169 + $0x218] sm:$0xf]
      %v253 = vld [vmem:[%s169 + $0x21c] sm:$0xff]
      %v254 = vld [vmem:[%s169 + $0x224] sm:$0xff]
      %v255 = vld [vmem:[%s169 + $0x22c] sm:$0xff]
      %v256 = vld [vmem:[%s169 + $0x234] sm:$0xff]
      %v257 = vld [vmem:[%s169 + $0x23c] sm:$0xf]
      %v258 = vld [vmem:[%s1] sm:$0xf]
      %v259 = vld [vmem:[%s1 + $0x4] sm:$0xf]
      %v260 = vld [vmem:[%s1 + $0x8] sm:$0xf]
      %v261 = vld [vmem:[%s1 + $0xc] sm:$0xf]
      %v262 = vld [vmem:[%s1 + $0x10] sm:$0xf]
      %v263 = vld [vmem:[%s1 + $0x14] sm:$0xf]
      %v264 = vld [vmem:[%s1 + $0x18] sm:$0xf]
      %v265 = vld [vmem:[%s1 + $0x1c] sm:$0xf]
      %v266 = vld [vmem:[%s1 + $0x20] sm:$0xf]
      %v267 = vld [vmem:[%s1 + $0x24] sm:$0xf]
      %v268 = vld [vmem:[%s1 + $0x28] sm:$0xf]
      %v269 = vld [vmem:[%s1 + $0x2c] sm:$0xf]
      %v270 = vld [vmem:[%s1 + $0x30] sm:$0xf]
      %v271 = vld [vmem:[%s1 + $0x34] sm:$0xf]
      %v272 = vld [vmem:[%s1 + $0x38] sm:$0xf]
      %v273 = vld [vmem:[%s1 + $0x3c] sm:$0xf]
      %v274 = vld [vmem:[%s1 + $0x40] sm:$0xf]
      %v275 = vld [vmem:[%s1 + $0x44] sm:$0xf]
      %v276 = vld [vmem:[%s1 + $0x48] sm:$0xf]
      %v277 = vld [vmem:[%s1 + $0x4c] sm:$0xf]
      %v278 = vld [vmem:[%s1 + $0x50] sm:$0xf]
      %v279 = vld [vmem:[%s1 + $0x54] sm:$0xf]
      %v280 = vld [vmem:[%s1 + $0x58] sm:$0xf]
      %v281 = vld [vmem:[%s1 + $0x5c] sm:$0xf]
      %v282 = vld [vmem:[%s1 + $0x60] sm:$0xf]
      %v283 = vld [vmem:[%s1 + $0x64] sm:$0xf]
      %v284 = vld [vmem:[%s1 + $0x68] sm:$0xf]
      %v285 = vld [vmem:[%s1 + $0x6c] sm:$0xf]
      %v286 = vld [vmem:[%s1 + $0x70] sm:$0xf]
      %v287 = vld [vmem:[%s1 + $0x74] sm:$0xf]
      %v288 = vld [vmem:[%s1 + $0x78] sm:$0xf]
      %v289 = vld [vmem:[%s1 + $0x7c] sm:$0xf]
      %v290 = vld [vmem:[%s1 + $0x80] sm:$0xf]
      %v291 = vld [vmem:[%s1 + $0x84] sm:$0xf]
      %v292 = vld [vmem:[%s1 + $0x88] sm:$0xf]
      %v293 = vld [vmem:[%s1 + $0x8c] sm:$0xf]
      %v294 = vld [vmem:[%s1 + $0x90] sm:$0xf]
      %v295 = vld [vmem:[%s1 + $0x94] sm:$0xf]
      %v296 = vld [vmem:[%s1 + $0x98] sm:$0xf]
      %v297 = vld [vmem:[%s1 + $0x9c] sm:$0xf]
      %v298 = vld [vmem:[%s1 + $0xa0] sm:$0xf]
      %v299 = vld [vmem:[%s1 + $0xa4] sm:$0xf]
      %v300 = vld [vmem:[%s1 + $0xa8] sm:$0xf]
      %v301 = vld [vmem:[%s1 + $0xac] sm:$0xf]
      %v302 = vld [vmem:[%s1 + $0xb0] sm:$0xf]
      %v303 = vld [vmem:[%s1 + $0xb4] sm:$0xf]
      %v304 = vld [vmem:[%s1 + $0xb8] sm:$0xf]
      %v305 = vld [vmem:[%s1 + $0xbc] sm:$0xf]
      %v306 = vld [vmem:[%s1 + $0xc0] sm:$0xf]
      %v307 = vld [vmem:[%s1 + $0xc4] sm:$0xf]
      %v308 = vld [vmem:[%s1 + $0xc8] sm:$0xf]
      %v309 = vld [vmem:[%s1 + $0xcc] sm:$0xf]
      %v310 = vld [vmem:[%s1 + $0xd0] sm:$0xf]
      %v311 = vld [vmem:[%s1 + $0xd4] sm:$0xf]
      %v312 = vld [vmem:[%s1 + $0xd8] sm:$0xf]
      %v313 = vld [vmem:[%s1 + $0xdc] sm:$0xf]
      %v314 = vld [vmem:[%s1 + $0xe0] sm:$0xf]
      %v315 = vld [vmem:[%s1 + $0xe4] sm:$0xf]
      %v316 = vld [vmem:[%s1 + $0xe8] sm:$0xf]
      %v317 = vld [vmem:[%s1 + $0xec] sm:$0xf]
      %v318 = vld [vmem:[%s1 + $0xf0] sm:$0xf]
      %v319 = vld [vmem:[%s1 + $0xf4] sm:$0xf]
      %v320 = vld [vmem:[%s1 + $0xf8] sm:$0xf]
      %v321 = vld [vmem:[%s1 + $0xfc] sm:$0xf]
      %v322 = vld [vmem:[%s1 + $0x100] sm:$0xf]
      %v323 = vld [vmem:[%s1 + $0x104] sm:$0xf]
      %v324 = vld [vmem:[%s1 + $0x108] sm:$0xf]
      %v325 = vld [vmem:[%s1 + $0x10c] sm:$0xf]
      %v326 = vld [vmem:[%s1 + $0x110] sm:$0xf]
      %v327 = vld [vmem:[%s1 + $0x114] sm:$0xf]
      %v328 = vld [vmem:[%s1 + $0x118] sm:$0xf]
      %v329 = vld [vmem:[%s1 + $0x11c] sm:$0xf]
      %v330 = vld [vmem:[%s1 + $0x120] sm:$0xf]
      %v331 = vld [vmem:[%s1 + $0x124] sm:$0xf]
      %v332 = vld [vmem:[%s1 + $0x128] sm:$0xf]
      %v333 = vld [vmem:[%s1 + $0x12c] sm:$0xf]
      %v334 = vld [vmem:[%s1 + $0x130] sm:$0xf]
      %v335 = vld [vmem:[%s1 + $0x134] sm:$0xf]
      %v336 = vld [vmem:[%s1 + $0x138] sm:$0xf]
      %v337 = vld [vmem:[%s1 + $0x13c] sm:$0xf]
      %v338 = vld [vmem:[%s1 + $0x140] sm:$0xf]
      %v339 = vld [vmem:[%s1 + $0x144] sm:$0xf]
      %v340 = vld [vmem:[%s1 + $0x148] sm:$0xf]
      %v341 = vld [vmem:[%s1 + $0x14c] sm:$0xf]
      %v342 = vld [vmem:[%s1 + $0x150] sm:$0xf]
      %v343 = vld [vmem:[%s1 + $0x154] sm:$0xf]
      %v344 = vld [vmem:[%s1 + $0x158] sm:$0xf]
      %v345 = vld [vmem:[%s1 + $0x15c] sm:$0xf]
      %v346 = vld [vmem:[%s1 + $0x160] sm:$0xf]
      %v347 = vld [vmem:[%s1 + $0x164] sm:$0xf]
      %v348 = vld [vmem:[%s1 + $0x168] sm:$0xf]
      %v349 = vld [vmem:[%s1 + $0x16c] sm:$0xf]
      %v350 = vld [vmem:[%s1 + $0x170] sm:$0xf]
      %v351 = vld [vmem:[%s1 + $0x174] sm:$0xf]
      %v352 = vld [vmem:[%s1 + $0x178] sm:$0xf]
      %v353 = vld [vmem:[%s1 + $0x17c] sm:$0xf]
      %v354 = vld [vmem:[%s1 + $0x180] sm:$0xf]
      %v355 = vld [vmem:[%s1 + $0x184] sm:$0xf]
      %v356 = vld [vmem:[%s1 + $0x188] sm:$0xf]
      %v357 = vld [vmem:[%s1 + $0x18c] sm:$0xf]
      %v358 = vld [vmem:[%s1 + $0x190] sm:$0xf]
      %v359 = vld [vmem:[%s1 + $0x194] sm:$0xf]
      %v360 = vld [vmem:[%s1 + $0x198] sm:$0xf]
      %v361 = vld [vmem:[%s1 + $0x19c] sm:$0xf]
      %v362 = vld [vmem:[%s1 + $0x1a0] sm:$0xf]
      %v363 = vld [vmem:[%s1 + $0x1a4] sm:$0xf]
      %v364 = vld [vmem:[%s1 + $0x1a8] sm:$0xf]
      %v365 = vld [vmem:[%s1 + $0x1ac] sm:$0xf]
      %v366 = vld [vmem:[%s1 + $0x1b0] sm:$0xf]
      %v367 = vld [vmem:[%s1 + $0x1b4] sm:$0xf]
      %v368 = vld [vmem:[%s1 + $0x1b8] sm:$0xf]
      %v369 = vld [vmem:[%s1 + $0x1bc] sm:$0xf]
      %v370 = vld [vmem:[%s1 + $0x1c0] sm:$0xf]
      %v371 = vld [vmem:[%s1 + $0x1c4] sm:$0xf]
      %v372 = vld [vmem:[%s1 + $0x1c8] sm:$0xf]
      %v373 = vld [vmem:[%s1 + $0x1cc] sm:$0xf]
      %v374 = vld [vmem:[%s1 + $0x1d0] sm:$0xf]
      %v375 = vld [vmem:[%s1 + $0x1d4] sm:$0xf]
      %v376 = vld [vmem:[%s1 + $0x1d8] sm:$0xf]
      %v377 = vld [vmem:[%s1 + $0x1dc] sm:$0xf]
      %v378 = vld [vmem:[%s1 + $0x1e0] sm:$0xf]
      %v379 = vld [vmem:[%s1 + $0x1e4] sm:$0xf]
      %v380 = vld [vmem:[%s1 + $0x1e8] sm:$0xf]
      %v381 = vld [vmem:[%s1 + $0x1ec] sm:$0xf]
      %v382 = vld [vmem:[%s1 + $0x1f0] sm:$0xf]
      %v383 = vld [vmem:[%s1 + $0x1f4] sm:$0xf]
      %v384 = vld [vmem:[%s1 + $0x1f8] sm:$0xf]
      %v385 = vld [vmem:[%s1 + $0x1fc] sm:$0xf]
      %v386 = vld [vmem:[%s1 + $0x200] sm:$0xf]
      %v387 = vld [vmem:[%s1 + $0x204] sm:$0xf]
      %v388 = vld [vmem:[%s1 + $0x208] sm:$0xf]
      %v389 = vld [vmem:[%s1 + $0x20c] sm:$0xf]
      %v390 = vld [vmem:[%s1 + $0x210] sm:$0xf]
      %v391 = vld [vmem:[%s1 + $0x214] sm:$0xf]
      %v392 = vld [vmem:[%s1 + $0x218] sm:$0xf]
      %v393 = vld [vmem:[%s1 + $0x21c] sm:$0xf]
      %v394 = vld [vmem:[%s1 + $0x220] sm:$0xf]
      %v395 = vld [vmem:[%s1 + $0x224] sm:$0xf]
      %v396 = vld [vmem:[%s1 + $0x228] sm:$0xf]
      %v397 = vld [vmem:[%s1 + $0x22c] sm:$0xf]
      %v398 = vld [vmem:[%s1 + $0x230] sm:$0xf]
      %v399 = vld [vmem:[%s1 + $0x234] sm:$0xf]
      %v400 = vld [vmem:[%s1 + $0x238] sm:$0xf]
      %v401 = vld [vmem:[%s1 + $0x23c] sm:$0xf]
      %v402 = vld [vmem:[%s2] sm:$0x1]
      %v404 = vlaneseq
      %v405 = vshrl.u32 %v404, 7
      %v406 = vsub.s32 0, %v405
      %v407 = vrot.slane %v402, %v406
      %v489 = vunpack.c.l.b16 %v178
      %v490 = vunpack.c.h.b16 %v178
      %v491 = vunpack.c.l.b16 %v179
      %v492 = vunpack.c.h.b16 %v179
      %v493 = vunpack.c.l.b16 %v180
      %v494 = vunpack.c.h.b16 %v180
      %v495 = vunpack.c.l.b16 %v181
      %v496 = vunpack.c.h.b16 %v181
      %v497 = vunpack.c.l.b16 %v182
      %v498 = vunpack.c.l.b16 %v183
      %v499 = vunpack.c.h.b16 %v183
      %v500 = vunpack.c.l.b16 %v184
      %v501 = vunpack.c.h.b16 %v184
      %v502 = vunpack.c.l.b16 %v185
      %v503 = vunpack.c.h.b16 %v185
      %v504 = vunpack.c.l.b16 %v186
      %v505 = vunpack.c.h.b16 %v186
      %v506 = vunpack.c.l.b16 %v187
      %v507 = vunpack.c.l.b16 %v188
      %v508 = vunpack.c.h.b16 %v188
      %v509 = vunpack.c.l.b16 %v189
      %v510 = vunpack.c.h.b16 %v189
      %v511 = vunpack.c.l.b16 %v190
      %v512 = vunpack.c.h.b16 %v190
      %v513 = vunpack.c.l.b16 %v191
      %v514 = vunpack.c.h.b16 %v191
      %v515 = vunpack.c.l.b16 %v192
      %v516 = vunpack.c.l.b16 %v193
      %v517 = vunpack.c.h.b16 %v193
      %v518 = vunpack.c.l.b16 %v194
      %v519 = vunpack.c.h.b16 %v194
      %v520 = vunpack.c.l.b16 %v195
      %v521 = vunpack.c.h.b16 %v195
      %v522 = vunpack.c.l.b16 %v196
      %v523 = vunpack.c.h.b16 %v196
      %v524 = vunpack.c.l.b16 %v197
      %v525 = vunpack.c.l.b16 %v198
      %v526 = vunpack.c.h.b16 %v198
      %v527 = vunpack.c.l.b16 %v199
      %v528 = vunpack.c.h.b16 %v199
      %v529 = vunpack.c.l.b16 %v200
      %v530 = vunpack.c.h.b16 %v200
      %v531 = vunpack.c.l.b16 %v201
      %v532 = vunpack.c.h.b16 %v201
      %v533 = vunpack.c.l.b16 %v202
      %v534 = vunpack.c.l.b16 %v203
      %v535 = vunpack.c.h.b16 %v203
      %v536 = vunpack.c.l.b16 %v204
      %v537 = vunpack.c.h.b16 %v204
      %v538 = vunpack.c.l.b16 %v205
      %v539 = vunpack.c.h.b16 %v205
      %v540 = vunpack.c.l.b16 %v206
      %v541 = vunpack.c.h.b16 %v206
      %v542 = vunpack.c.l.b16 %v207
      %v543 = vunpack.c.l.b16 %v208
      %v544 = vunpack.c.h.b16 %v208
      %v545 = vunpack.c.l.b16 %v209
      %v546 = vunpack.c.h.b16 %v209
      %v547 = vunpack.c.l.b16 %v210
      %v548 = vunpack.c.h.b16 %v210
      %v549 = vunpack.c.l.b16 %v211
      %v550 = vunpack.c.h.b16 %v211
      %v551 = vunpack.c.l.b16 %v212
      %v552 = vunpack.c.l.b16 %v213
      %v553 = vunpack.c.h.b16 %v213
      %v554 = vunpack.c.l.b16 %v214
      %v555 = vunpack.c.h.b16 %v214
      %v556 = vunpack.c.l.b16 %v215
      %v557 = vunpack.c.h.b16 %v215
      %v558 = vunpack.c.l.b16 %v216
      %v559 = vunpack.c.h.b16 %v216
      %v560 = vunpack.c.l.b16 %v217
      %v561 = vunpack.c.l.b16 %v218
      %v562 = vunpack.c.h.b16 %v218
      %v563 = vunpack.c.l.b16 %v219
      %v564 = vunpack.c.h.b16 %v219
      %v565 = vunpack.c.l.b16 %v220
      %v566 = vunpack.c.h.b16 %v220
      %v567 = vunpack.c.l.b16 %v221
      %v568 = vunpack.c.h.b16 %v221
      %v569 = vunpack.c.l.b16 %v222
      %v570 = vunpack.c.l.b16 %v223
      %v571 = vunpack.c.h.b16 %v223
      %v572 = vunpack.c.l.b16 %v224
      %v573 = vunpack.c.h.b16 %v224
      %v574 = vunpack.c.l.b16 %v225
      %v575 = vunpack.c.h.b16 %v225
      %v576 = vunpack.c.l.b16 %v226
      %v577 = vunpack.c.h.b16 %v226
      %v578 = vunpack.c.l.b16 %v227
      %v579 = vunpack.c.l.b16 %v228
      %v580 = vunpack.c.h.b16 %v228
      %v581 = vunpack.c.l.b16 %v229
      %v582 = vunpack.c.h.b16 %v229
      %v583 = vunpack.c.l.b16 %v230
      %v584 = vunpack.c.h.b16 %v230
      %v585 = vunpack.c.l.b16 %v231
      %v586 = vunpack.c.h.b16 %v231
      %v587 = vunpack.c.l.b16 %v232
      %v588 = vunpack.c.l.b16 %v233
      %v589 = vunpack.c.h.b16 %v233
      %v590 = vunpack.c.l.b16 %v234
      %v591 = vunpack.c.h.b16 %v234
      %v592 = vunpack.c.l.b16 %v235
      %v593 = vunpack.c.h.b16 %v235
      %v594 = vunpack.c.l.b16 %v236
      %v595 = vunpack.c.h.b16 %v236
      %v596 = vunpack.c.l.b16 %v237
      %v597 = vunpack.c.l.b16 %v238
      %v598 = vunpack.c.h.b16 %v238
      %v599 = vunpack.c.l.b16 %v239
      %v600 = vunpack.c.h.b16 %v239
      %v601 = vunpack.c.l.b16 %v240
      %v602 = vunpack.c.h.b16 %v240
      %v603 = vunpack.c.l.b16 %v241
      %v604 = vunpack.c.h.b16 %v241
      %v605 = vunpack.c.l.b16 %v242
      %v606 = vunpack.c.l.b16 %v243
      %v607 = vunpack.c.h.b16 %v243
      %v608 = vunpack.c.l.b16 %v244
      %v609 = vunpack.c.h.b16 %v244
      %v610 = vunpack.c.l.b16 %v245
      %v611 = vunpack.c.h.b16 %v245
      %v612 = vunpack.c.l.b16 %v246
      %v613 = vunpack.c.h.b16 %v246
      %v614 = vunpack.c.l.b16 %v247
      %v615 = vunpack.c.l.b16 %v248
      %v616 = vunpack.c.h.b16 %v248
      %v617 = vunpack.c.l.b16 %v249
      %v618 = vunpack.c.h.b16 %v249
      %v619 = vunpack.c.l.b16 %v250
      %v620 = vunpack.c.h.b16 %v250
      %v621 = vunpack.c.l.b16 %v251
      %v622 = vunpack.c.h.b16 %v251
      %v623 = vunpack.c.l.b16 %v252
      %v624 = vunpack.c.l.b16 %v253
      %v625 = vunpack.c.h.b16 %v253
      %v626 = vunpack.c.l.b16 %v254
      %v627 = vunpack.c.h.b16 %v254
      %v628 = vunpack.c.l.b16 %v255
      %v629 = vunpack.c.h.b16 %v255
      %v630 = vunpack.c.l.b16 %v256
      %v631 = vunpack.c.h.b16 %v256
      %v632 = vunpack.c.l.b16 %v257
      %v633 = vpack.c.b16 %v498, %v489
      %v634 = vpack.c.b16 %v499, %v490
      %v635 = vpack.c.b16 %v500, %v491
      %v636 = vpack.c.b16 %v501, %v492
      %v637 = vpack.c.b16 %v502, %v493
      %v638 = vpack.c.b16 %v503, %v494
      %v639 = vpack.c.b16 %v504, %v495
      %v640 = vpack.c.b16 %v505, %v496
      %v641 = vpack.c.b16 %v506, %v497
      %v642 = vpack.c.b16 %v516, %v507
      %v643 = vpack.c.b16 %v517, %v508
      %v644 = vpack.c.b16 %v518, %v509
      %v645 = vpack.c.b16 %v519, %v510
      %v646 = vpack.c.b16 %v520, %v511
      %v647 = vpack.c.b16 %v521, %v512
      %v648 = vpack.c.b16 %v522, %v513
      %v649 = vpack.c.b16 %v523, %v514
      %v650 = vpack.c.b16 %v524, %v515
      %v651 = vpack.c.b16 %v534, %v525
      %v652 = vpack.c.b16 %v535, %v526
      %v653 = vpack.c.b16 %v536, %v527
      %v654 = vpack.c.b16 %v537, %v528
      %v655 = vpack.c.b16 %v538, %v529
      %v656 = vpack.c.b16 %v539, %v530
      %v657 = vpack.c.b16 %v540, %v531
      %v658 = vpack.c.b16 %v541, %v532
      %v659 = vpack.c.b16 %v542, %v533
      %v660 = vpack.c.b16 %v552, %v543
      %v661 = vpack.c.b16 %v553, %v544
      %v662 = vpack.c.b16 %v554, %v545
      %v663 = vpack.c.b16 %v555, %v546
      %v664 = vpack.c.b16 %v556, %v547
      %v665 = vpack.c.b16 %v557, %v548
      %v666 = vpack.c.b16 %v558, %v549
      %v667 = vpack.c.b16 %v559, %v550
      %v668 = vpack.c.b16 %v560, %v551
      %v669 = vpack.c.b16 %v570, %v561
      %v670 = vpack.c.b16 %v571, %v562
      %v671 = vpack.c.b16 %v572, %v563
      %v672 = vpack.c.b16 %v573, %v564
      %v673 = vpack.c.b16 %v574, %v565
      %v674 = vpack.c.b16 %v575, %v566
      %v675 = vpack.c.b16 %v576, %v567
      %v676 = vpack.c.b16 %v577, %v568
      %v677 = vpack.c.b16 %v578, %v569
      %v678 = vpack.c.b16 %v588, %v579
      %v679 = vpack.c.b16 %v589, %v580
      %v680 = vpack.c.b16 %v590, %v581
      %v681 = vpack.c.b16 %v591, %v582
      %v682 = vpack.c.b16 %v592, %v583
      %v683 = vpack.c.b16 %v593, %v584
      %v684 = vpack.c.b16 %v594, %v585
      %v685 = vpack.c.b16 %v595, %v586
      %v686 = vpack.c.b16 %v596, %v587
      %v687 = vpack.c.b16 %v606, %v597
      %v688 = vpack.c.b16 %v607, %v598
      %v689 = vpack.c.b16 %v608, %v599
      %v690 = vpack.c.b16 %v609, %v600
      %v691 = vpack.c.b16 %v610, %v601
      %v692 = vpack.c.b16 %v611, %v602
      %v693 = vpack.c.b16 %v612, %v603
      %v694 = vpack.c.b16 %v613, %v604
      %v695 = vpack.c.b16 %v614, %v605
      %v696 = vpack.c.b16 %v624, %v615
      %v697 = vpack.c.b16 %v625, %v616
      %v698 = vpack.c.b16 %v626, %v617
      %v699 = vpack.c.b16 %v627, %v618
      %v700 = vpack.c.b16 %v628, %v619
      %v701 = vpack.c.b16 %v629, %v620
      %v702 = vpack.c.b16 %v630, %v621
      %v703 = vpack.c.b16 %v631, %v622
      %v704 = vpack.c.b16 %v632, %v623
      %v921 = vunpack.c.l.b16 %v258
      %v922 = vunpack.c.l.b16 %v259
      %v923 = vunpack.c.l.b16 %v260
      %v924 = vunpack.c.l.b16 %v261
      %v925 = vunpack.c.l.b16 %v262
      %v926 = vunpack.c.l.b16 %v263
      %v927 = vunpack.c.l.b16 %v264
      %v928 = vunpack.c.l.b16 %v265
      %v929 = vunpack.c.l.b16 %v266
      %v930 = vunpack.c.l.b16 %v267
      %v931 = vunpack.c.l.b16 %v268
      %v932 = vunpack.c.l.b16 %v269
      %v933 = vunpack.c.l.b16 %v270
      %v934 = vunpack.c.l.b16 %v271
      %v935 = vunpack.c.l.b16 %v272
      %v936 = vunpack.c.l.b16 %v273
      %v937 = vunpack.c.l.b16 %v274
      %v938 = vunpack.c.l.b16 %v275
      %v939 = vunpack.c.l.b16 %v276
      %v940 = vunpack.c.l.b16 %v277
      %v941 = vunpack.c.l.b16 %v278
      %v942 = vunpack.c.l.b16 %v279
      %v943 = vunpack.c.l.b16 %v280
      %v944 = vunpack.c.l.b16 %v281
      %v945 = vunpack.c.l.b16 %v282
      %v946 = vunpack.c.l.b16 %v283
      %v947 = vunpack.c.l.b16 %v284
      %v948 = vunpack.c.l.b16 %v285
      %v949 = vunpack.c.l.b16 %v286
      %v950 = vunpack.c.l.b16 %v287
      %v951 = vunpack.c.l.b16 %v288
      %v952 = vunpack.c.l.b16 %v289
      %v953 = vunpack.c.l.b16 %v290
      %v954 = vunpack.c.l.b16 %v291
      %v955 = vunpack.c.l.b16 %v292
      %v956 = vunpack.c.l.b16 %v293
      %v957 = vunpack.c.l.b16 %v294
      %v958 = vunpack.c.l.b16 %v295
      %v959 = vunpack.c.l.b16 %v296
      %v960 = vunpack.c.l.b16 %v297
      %v961 = vunpack.c.l.b16 %v298
      %v962 = vunpack.c.l.b16 %v299
      %v963 = vunpack.c.l.b16 %v300
      %v964 = vunpack.c.l.b16 %v301
      %v965 = vunpack.c.l.b16 %v302
      %v966 = vunpack.c.l.b16 %v303
      %v967 = vunpack.c.l.b16 %v304
      %v968 = vunpack.c.l.b16 %v305
      %v969 = vunpack.c.l.b16 %v306
      %v970 = vunpack.c.l.b16 %v307
      %v971 = vunpack.c.l.b16 %v308
      %v972 = vunpack.c.l.b16 %v309
      %v973 = vunpack.c.l.b16 %v310
      %v974 = vunpack.c.l.b16 %v311
      %v975 = vunpack.c.l.b16 %v312
      %v976 = vunpack.c.l.b16 %v313
      %v977 = vunpack.c.l.b16 %v314
      %v978 = vunpack.c.l.b16 %v315
      %v979 = vunpack.c.l.b16 %v316
      %v980 = vunpack.c.l.b16 %v317
      %v981 = vunpack.c.l.b16 %v318
      %v982 = vunpack.c.l.b16 %v319
      %v983 = vunpack.c.l.b16 %v320
      %v984 = vunpack.c.l.b16 %v321
      %v985 = vunpack.c.l.b16 %v322
      %v986 = vunpack.c.l.b16 %v323
      %v987 = vunpack.c.l.b16 %v324
      %v988 = vunpack.c.l.b16 %v325
      %v989 = vunpack.c.l.b16 %v326
      %v990 = vunpack.c.l.b16 %v327
      %v991 = vunpack.c.l.b16 %v328
      %v992 = vunpack.c.l.b16 %v329
      %v993 = vunpack.c.l.b16 %v330
      %v994 = vunpack.c.l.b16 %v331
      %v995 = vunpack.c.l.b16 %v332
      %v996 = vunpack.c.l.b16 %v333
      %v997 = vunpack.c.l.b16 %v334
      %v998 = vunpack.c.l.b16 %v335
      %v999 = vunpack.c.l.b16 %v336
      %v1000 = vunpack.c.l.b16 %v337
      %v1001 = vunpack.c.l.b16 %v338
      %v1002 = vunpack.c.l.b16 %v339
      %v1003 = vunpack.c.l.b16 %v340
      %v1004 = vunpack.c.l.b16 %v341
      %v1005 = vunpack.c.l.b16 %v342
      %v1006 = vunpack.c.l.b16 %v343
      %v1007 = vunpack.c.l.b16 %v344
      %v1008 = vunpack.c.l.b16 %v345
      %v1009 = vunpack.c.l.b16 %v346
      %v1010 = vunpack.c.l.b16 %v347
      %v1011 = vunpack.c.l.b16 %v348
      %v1012 = vunpack.c.l.b16 %v349
      %v1013 = vunpack.c.l.b16 %v350
      %v1014 = vunpack.c.l.b16 %v351
      %v1015 = vunpack.c.l.b16 %v352
      %v1016 = vunpack.c.l.b16 %v353
      %v1017 = vunpack.c.l.b16 %v354
      %v1018 = vunpack.c.l.b16 %v355
      %v1019 = vunpack.c.l.b16 %v356
      %v1020 = vunpack.c.l.b16 %v357
      %v1021 = vunpack.c.l.b16 %v358
      %v1022 = vunpack.c.l.b16 %v359
      %v1023 = vunpack.c.l.b16 %v360
      %v1024 = vunpack.c.l.b16 %v361
      %v1025 = vunpack.c.l.b16 %v362
      %v1026 = vunpack.c.l.b16 %v363
      %v1027 = vunpack.c.l.b16 %v364
      %v1028 = vunpack.c.l.b16 %v365
      %v1029 = vunpack.c.l.b16 %v366
      %v1030 = vunpack.c.l.b16 %v367
      %v1031 = vunpack.c.l.b16 %v368
      %v1032 = vunpack.c.l.b16 %v369
      %v1033 = vunpack.c.l.b16 %v370
      %v1034 = vunpack.c.l.b16 %v371
      %v1035 = vunpack.c.l.b16 %v372
      %v1036 = vunpack.c.l.b16 %v373
      %v1037 = vunpack.c.l.b16 %v374
      %v1038 = vunpack.c.l.b16 %v375
      %v1039 = vunpack.c.l.b16 %v376
      %v1040 = vunpack.c.l.b16 %v377
      %v1041 = vunpack.c.l.b16 %v378
      %v1042 = vunpack.c.l.b16 %v379
      %v1043 = vunpack.c.l.b16 %v380
      %v1044 = vunpack.c.l.b16 %v381
      %v1045 = vunpack.c.l.b16 %v382
      %v1046 = vunpack.c.l.b16 %v383
      %v1047 = vunpack.c.l.b16 %v384
      %v1048 = vunpack.c.l.b16 %v385
      %v1049 = vunpack.c.l.b16 %v386
      %v1050 = vunpack.c.l.b16 %v387
      %v1051 = vunpack.c.l.b16 %v388
      %v1052 = vunpack.c.l.b16 %v389
      %v1053 = vunpack.c.l.b16 %v390
      %v1054 = vunpack.c.l.b16 %v391
      %v1055 = vunpack.c.l.b16 %v392
      %v1056 = vunpack.c.l.b16 %v393
      %v1057 = vunpack.c.l.b16 %v394
      %v1058 = vunpack.c.l.b16 %v395
      %v1059 = vunpack.c.l.b16 %v396
      %v1060 = vunpack.c.l.b16 %v397
      %v1061 = vunpack.c.l.b16 %v398
      %v1062 = vunpack.c.l.b16 %v399
      %v1063 = vunpack.c.l.b16 %v400
      %v1064 = vunpack.c.l.b16 %v401
      %v1065 = vpack.c.b16 %v922, %v921
      %v1066 = vpack.c.b16 %v924, %v923
      %v1067 = vpack.c.b16 %v926, %v925
      %v1068 = vpack.c.b16 %v928, %v927
      %v1069 = vpack.c.b16 %v930, %v929
      %v1070 = vpack.c.b16 %v932, %v931
      %v1071 = vpack.c.b16 %v934, %v933
      %v1072 = vpack.c.b16 %v936, %v935
      %v1073 = vpack.c.b16 %v938, %v937
      %v1074 = vpack.c.b16 %v940, %v939
      %v1075 = vpack.c.b16 %v942, %v941
      %v1076 = vpack.c.b16 %v944, %v943
      %v1077 = vpack.c.b16 %v946, %v945
      %v1078 = vpack.c.b16 %v948, %v947
      %v1079 = vpack.c.b16 %v950, %v949
      %v1080 = vpack.c.b16 %v952, %v951
      %v1081 = vpack.c.b16 %v954, %v953
      %v1082 = vpack.c.b16 %v956, %v955
      %v1083 = vpack.c.b16 %v958, %v957
      %v1084 = vpack.c.b16 %v960, %v959
      %v1085 = vpack.c.b16 %v962, %v961
      %v1086 = vpack.c.b16 %v964, %v963
      %v1087 = vpack.c.b16 %v966, %v965
      %v1088 = vpack.c.b16 %v968, %v967
      %v1089 = vpack.c.b16 %v970, %v969
      %v1090 = vpack.c.b16 %v972, %v971
      %v1091 = vpack.c.b16 %v974, %v973
      %v1092 = vpack.c.b16 %v976, %v975
      %v1093 = vpack.c.b16 %v978, %v977
      %v1094 = vpack.c.b16 %v980, %v979
      %v1095 = vpack.c.b16 %v982, %v981
      %v1096 = vpack.c.b16 %v984, %v983
      %v1097 = vpack.c.b16 %v986, %v985
      %v1098 = vpack.c.b16 %v988, %v987
      %v1099 = vpack.c.b16 %v990, %v989
      %v1100 = vpack.c.b16 %v992, %v991
      %v1101 = vpack.c.b16 %v994, %v993
      %v1102 = vpack.c.b16 %v996, %v995
      %v1103 = vpack.c.b16 %v998, %v997
      %v1104 = vpack.c.b16 %v1000, %v999
      %v1105 = vpack.c.b16 %v1002, %v1001
      %v1106 = vpack.c.b16 %v1004, %v1003
      %v1107 = vpack.c.b16 %v1006, %v1005
      %v1108 = vpack.c.b16 %v1008, %v1007
      %v1109 = vpack.c.b16 %v1010, %v1009
      %v1110 = vpack.c.b16 %v1012, %v1011
      %v1111 = vpack.c.b16 %v1014, %v1013
      %v1112 = vpack.c.b16 %v1016, %v1015
      %v1113 = vpack.c.b16 %v1018, %v1017
      %v1114 = vpack.c.b16 %v1020, %v1019
      %v1115 = vpack.c.b16 %v1022, %v1021
      %v1116 = vpack.c.b16 %v1024, %v1023
      %v1117 = vpack.c.b16 %v1026, %v1025
      %v1118 = vpack.c.b16 %v1028, %v1027
      %v1119 = vpack.c.b16 %v1030, %v1029
      %v1120 = vpack.c.b16 %v1032, %v1031
      %v1121 = vpack.c.b16 %v1034, %v1033
      %v1122 = vpack.c.b16 %v1036, %v1035
      %v1123 = vpack.c.b16 %v1038, %v1037
      %v1124 = vpack.c.b16 %v1040, %v1039
      %v1125 = vpack.c.b16 %v1042, %v1041
      %v1126 = vpack.c.b16 %v1044, %v1043
      %v1127 = vpack.c.b16 %v1046, %v1045
      %v1128 = vpack.c.b16 %v1048, %v1047
      %v1129 = vpack.c.b16 %v1050, %v1049
      %v1130 = vpack.c.b16 %v1052, %v1051
      %v1131 = vpack.c.b16 %v1054, %v1053
      %v1132 = vpack.c.b16 %v1056, %v1055
      %v1133 = vpack.c.b16 %v1058, %v1057
      %v1134 = vpack.c.b16 %v1060, %v1059
      %v1135 = vpack.c.b16 %v1062, %v1061
      %v1136 = vpack.c.b16 %v1064, %v1063
      %1209 = vmatprep.subr.bf16.mxu0 0
      %1210 = vmatpush1.bf16.msra.mxu0 %v1065
      %1211 = vmatprep.subr.bf16.mxu0 0
      %1212 = vmatpush1.bf16.msra.mxu0 %v1066
      %1213 = vmatprep.subr.bf16.mxu0 0
      %1214 = vmatpush1.bf16.msra.mxu0 %v1067
      %1215 = vmatprep.subr.bf16.mxu0 0
      %1216 = vmatpush1.bf16.msra.mxu0 %v1068
      %1217 = vmatprep.subr.bf16.mxu0 0
      %1218 = vmatpush1.bf16.msra.mxu0 %v1069
      %1219 = vmatprep.subr.bf16.mxu0 0
      %1220 = vmatpush1.bf16.msra.mxu0 %v1070
      %1221 = vmatprep.subr.bf16.mxu0 0
      %1222 = vmatpush1.bf16.msra.mxu0 %v1071
      %1223 = vmatprep.subr.bf16.mxu0 0
      %1224 = vmatpush1.bf16.msra.mxu0 %v1072
      %1225 = vmatprep.subr.bf16.mxu0 0
      %1226 = vmatpush1.bf16.msra.mxu0 %v1073
      %1227 = vmatprep.subr.bf16.mxu0 0
      %1228 = vmatpush1.bf16.msra.mxu0 %v1074
      %1229 = vmatprep.subr.bf16.mxu0 0
      %1230 = vmatpush1.bf16.msra.mxu0 %v1075
      %1231 = vmatprep.subr.bf16.mxu0 0
      %1232 = vmatpush1.bf16.msra.mxu0 %v1076
      %1233 = vmatprep.subr.bf16.mxu0 0
      %1234 = vmatpush1.bf16.msra.mxu0 %v1077
      %1235 = vmatprep.subr.bf16.mxu0 0
      %1236 = vmatpush1.bf16.msra.mxu0 %v1078
      %1237 = vmatprep.subr.bf16.mxu0 0
      %1238 = vmatpush1.bf16.msra.mxu0 %v1079
      %1239 = vmatprep.subr.bf16.mxu0 0
      %1240 = vmatpush1.bf16.msra.mxu0 %v1080
      %1241 = vmatprep.mubr.bf16.mxu0 %v634
      %1242 = vmatmul.mubr.bf16.gmra.mrb[0].mxu0 %v633
      %v1243 = vpop.f32.mrb[0].mxu0
      %v1244 = vadd.f32 %v407, %v1243
      %v1245 = vpop.f32.mrb[0].mxu0
      %v1246 = vpop.f32.mrb[0].mxu0
      %v1247 = vadd.f32 %v407, %v1246
      %v1248 = vpop.f32.mrb[0].mxu0
      %1249 = vmatprep.mubr.bf16.mxu0 %v643
      %1250 = vmatmul.mubr.bf16.gmra.mrb[0].mxu0 %v642
      %v1251 = vpop.f32.mrb[0].mxu0
      %v1252 = vadd.f32 %v407, %v1251
      %v1253 = vpop.f32.mrb[0].mxu0
      %v1254 = vpop.f32.mrb[0].mxu0
      %v1255 = vadd.f32 %v407, %v1254
      %v1256 = vpop.f32.mrb[0].mxu0
      %1257 = vmatprep.mubr.bf16.mxu0 %v652
      %1258 = vmatmul.mubr.bf16.gmra.mrb[0].mxu0 %v651
      %v1259 = vpop.f32.mrb[0].mxu0
      %v1260 = vadd.f32 %v407, %v1259
      %v1261 = vpop.f32.mrb[0].mxu0
      %v1262 = vpop.f32.mrb[0].mxu0
      %v1263 = vadd.f32 %v407, %v1262
      %v1264 = vpop.f32.mrb[0].mxu0
      %1265 = vmatprep.mubr.bf16.mxu0 %v661
      %1266 = vmatmul.mubr.bf16.gmra.mrb[0].mxu0 %v660
      %v1267 = vpop.f32.mrb[0].mxu0
      %v1268 = vadd.f32 %v407, %v1267
      %v1269 = vpop.f32.mrb[0].mxu0
      %v1270 = vpop.f32.mrb[0].mxu0
      %v1271 = vadd.f32 %v407, %v1270
      %v1272 = vpop.f32.mrb[0].mxu0
      %1273 = vmatprep.mubr.bf16.mxu0 %v670
      %1274 = vmatmul.mubr.bf16.gmra.mrb[0].mxu0 %v669
      %v1275 = vpop.f32.mrb[0].mxu0
      %v1276 = vadd.f32 %v407, %v1275
      %v1277 = vpop.f32.mrb[0].mxu0
      %v1278 = vpop.f32.mrb[0].mxu0
      %v1279 = vadd.f32 %v407, %v1278
      %v1280 = vpop.f32.mrb[0].mxu0
      %1281 = vmatprep.mubr.bf16.mxu0 %v679
      %1282 = vmatmul.mubr.bf16.gmra.mrb[0].mxu0 %v678
      %v1283 = vpop.f32.mrb[0].mxu0
      %v1284 = vadd.f32 %v407, %v1283
      %v1285 = vpop.f32.mrb[0].mxu0
      %v1286 = vpop.f32.mrb[0].mxu0
      %v1287 = vadd.f32 %v407, %v1286
      %v1288 = vpop.f32.mrb[0].mxu0
      %1289 = vmatprep.mubr.bf16.mxu0 %v688
      %1290 = vmatmul.mubr.bf16.gmra.mrb[0].mxu0 %v687
      %v1291 = vpop.f32.mrb[0].mxu0
      %v1292 = vadd.f32 %v407, %v1291
      %v1293 = vpop.f32.mrb[0].mxu0
      %v1294 = vpop.f32.mrb[0].mxu0
      %v1295 = vadd.f32 %v407, %v1294
      %v1296 = vpop.f32.mrb[0].mxu0
      %1297 = vmatprep.mubr.bf16.mxu0 %v697
      %1298 = vmatmul.mubr.bf16.gmra.mrb[0].mxu0 %v696
      %v1299 = vpop.f32.mrb[0].mxu0
      %v1300 = vadd.f32 %v407, %v1299
      %v1301 = vpop.f32.mrb[0].mxu0
      %v1302 = vpop.f32.mrb[0].mxu0
      %v1303 = vadd.f32 %v407, %v1302
      %v1304 = vpop.f32.mrb[0].mxu0
      %1305 = vdwg.mxu0
      %1306 = vmatprep.subr.bf16.mxu0 0
      %1307 = vmatpush1.bf16.msra.mxu0 %v1081
      %1308 = vmatprep.subr.bf16.mxu0 0
      %1309 = vmatpush1.bf16.msra.mxu0 %v1082
      %1310 = vmatprep.subr.bf16.mxu0 0
      %1311 = vmatpush1.bf16.msra.mxu0 %v1083
      %1312 = vmatprep.subr.bf16.mxu0 0
      %1313 = vmatpush1.bf16.msra.mxu0 %v1084
      %1314 = vmatprep.subr.bf16.mxu0 0
      %1315 = vmatpush1.bf16.msra.mxu0 %v1085
      %1316 = vmatprep.subr.bf16.mxu0 0
      %1317 = vmatpush1.bf16.msra.mxu0 %v1086
      %1318 = vmatprep.subr.bf16.mxu0 0
      %1319 = vmatpush1.bf16.msra.mxu0 %v1087
      %1320 = vmatprep.subr.bf16.mxu0 0
      %1321 = vmatpush1.bf16.msra.mxu0 %v1088
      %1322 = vmatprep.subr.bf16.mxu0 0
      %1323 = vmatpush1.bf16.msra.mxu0 %v1089
      %1324 = vmatprep.subr.bf16.mxu0 0
      %1325 = vmatpush1.bf16.msra.mxu0 %v1090
      %1326 = vmatprep.subr.bf16.mxu0 0
      %1327 = vmatpush1.bf16.msra.mxu0 %v1091
      %1328 = vmatprep.subr.bf16.mxu0 0
      %1329 = vmatpush1.bf16.msra.mxu0 %v1092
      %1330 = vmatprep.subr.bf16.mxu0 0
      %1331 = vmatpush1.bf16.msra.mxu0 %v1093
      %1332 = vmatprep.subr.bf16.mxu0 0
      %1333 = vmatpush1.bf16.msra.mxu0 %v1094
      %1334 = vmatprep.subr.bf16.mxu0 0
      %1335 = vmatpush1.bf16.msra.mxu0 %v1095
      %1336 = vmatprep.subr.bf16.mxu0 0
      %1337 = vmatpush1.bf16.msra.mxu0 %v1096
      %1338 = vmatprep.mubr.bf16.mxu0 %v636
      %1339 = vmatmul.mubr.bf16.gmra.mrb[0].mxu0 %v635
      %v1340 = vpop.f32.mrb[0].mxu0
      %v1341 = vadd.f32 %v1244, %v1340
      %v1342 = vpop.f32.mrb[0].mxu0
      %v1343 = vpop.f32.mrb[0].mxu0
      %v1344 = vadd.f32 %v1247, %v1343
      %v1345 = vpop.f32.mrb[0].mxu0
      %1346 = vmatprep.mubr.bf16.mxu0 %v645
      %1347 = vmatmul.mubr.bf16.gmra.mrb[0].mxu0 %v644
      %v1348 = vpop.f32.mrb[0].mxu0
      %v1349 = vadd.f32 %v1252, %v1348
      %v1350 = vpop.f32.mrb[0].mxu0
      %v1351 = vpop.f32.mrb[0].mxu0
      %v1352 = vadd.f32 %v1255, %v1351
      %v1353 = vpop.f32.mrb[0].mxu0
      %1354 = vmatprep.mubr.bf16.mxu0 %v654
      %1355 = vmatmul.mubr.bf16.gmra.mrb[0].mxu0 %v653
      %v1356 = vpop.f32.mrb[0].mxu0
      %v1357 = vadd.f32 %v1260, %v1356
      %v1358 = vpop.f32.mrb[0].mxu0
      %v1359 = vpop.f32.mrb[0].mxu0
      %v1360 = vadd.f32 %v1263, %v1359
      %v1361 = vpop.f32.mrb[0].mxu0
      %1362 = vmatprep.mubr.bf16.mxu0 %v663
      %1363 = vmatmul.mubr.bf16.gmra.mrb[0].mxu0 %v662
      %v1364 = vpop.f32.mrb[0].mxu0
      %v1365 = vadd.f32 %v1268, %v1364
      %v1366 = vpop.f32.mrb[0].mxu0
      %v1367 = vpop.f32.mrb[0].mxu0
      %v1368 = vadd.f32 %v1271, %v1367
      %v1369 = vpop.f32.mrb[0].mxu0
      %1370 = vmatprep.mubr.bf16.mxu0 %v672
      %1371 = vmatmul.mubr.bf16.gmra.mrb[0].mxu0 %v671
      %v1372 = vpop.f32.mrb[0].mxu0
      %v1373 = vadd.f32 %v1276, %v1372
      %v1374 = vpop.f32.mrb[0].mxu0
      %v1375 = vpop.f32.mrb[0].mxu0
      %v1376 = vadd.f32 %v1279, %v1375
      %v1377 = vpop.f32.mrb[0].mxu0
      %1378 = vmatprep.mubr.bf16.mxu0 %v681
      %1379 = vmatmul.mubr.bf16.gmra.mrb[0].mxu0 %v680
      %v1380 = vpop.f32.mrb[0].mxu0
      %v1381 = vadd.f32 %v1284, %v1380
      %v1382 = vpop.f32.mrb[0].mxu0
      %v1383 = vpop.f32.mrb[0].mxu0
      %v1384 = vadd.f32 %v1287, %v1383
      %v1385 = vpop.f32.mrb[0].mxu0
      %1386 = vmatprep.mubr.bf16.mxu0 %v690
      %1387 = vmatmul.mubr.bf16.gmra.mrb[0].mxu0 %v689
      %v1388 = vpop.f32.mrb[0].mxu0
      %v1389 = vadd.f32 %v1292, %v1388
      %v1390 = vpop.f32.mrb[0].mxu0
      %v1391 = vpop.f32.mrb[0].mxu0
      %v1392 = vadd.f32 %v1295, %v1391
      %v1393 = vpop.f32.mrb[0].mxu0
      %1394 = vmatprep.mubr.bf16.mxu0 %v699
      %1395 = vmatmul.mubr.bf16.gmra.mrb[0].mxu0 %v698
      %v1396 = vpop.f32.mrb[0].mxu0
      %v1397 = vadd.f32 %v1300, %v1396
      %v1398 = vpop.f32.mrb[0].mxu0
      %v1399 = vpop.f32.mrb[0].mxu0
      %v1400 = vadd.f32 %v1303, %v1399
      %v1401 = vpop.f32.mrb[0].mxu0
      %1402 = vdwg.mxu0
      %1403 = vmatprep.subr.bf16.mxu0 0
      %1404 = vmatpush1.bf16.msra.mxu0 %v1097
      %1405 = vmatprep.subr.bf16.mxu0 0
      %1406 = vmatpush1.bf16.msra.mxu0 %v1098
      %1407 = vmatprep.subr.bf16.mxu0 0
      %1408 = vmatpush1.bf16.msra.mxu0 %v1099
      %1409 = vmatprep.subr.bf16.mxu0 0
      %1410 = vmatpush1.bf16.msra.mxu0 %v1100
      %1411 = vmatprep.subr.bf16.mxu0 0
      %1412 = vmatpush1.bf16.msra.mxu0 %v1101
      %1413 = vmatprep.subr.bf16.mxu0 0
      %1414 = vmatpush1.bf16.msra.mxu0 %v1102
      %1415 = vmatprep.subr.bf16.mxu0 0
      %1416 = vmatpush1.bf16.msra.mxu0 %v1103
      %1417 = vmatprep.subr.bf16.mxu0 0
      %1418 = vmatpush1.bf16.msra.mxu0 %v1104
      %1419 = vmatprep.subr.bf16.mxu0 0
      %1420 = vmatpush1.bf16.msra.mxu0 %v1105
      %1421 = vmatprep.subr.bf16.mxu0 0
      %1422 = vmatpush1.bf16.msra.mxu0 %v1106
      %1423 = vmatprep.subr.bf16.mxu0 0
      %1424 = vmatpush1.bf16.msra.mxu0 %v1107
      %1425 = vmatprep.subr.bf16.mxu0 0
      %1426 = vmatpush1.bf16.msra.mxu0 %v1108
      %1427 = vmatprep.subr.bf16.mxu0 0
      %1428 = vmatpush1.bf16.msra.mxu0 %v1109
      %1429 = vmatprep.subr.bf16.mxu0 0
      %1430 = vmatpush1.bf16.msra.mxu0 %v1110
      %1431 = vmatprep.subr.bf16.mxu0 0
      %1432 = vmatpush1.bf16.msra.mxu0 %v1111
      %1433 = vmatprep.subr.bf16.mxu0 0
      %1434 = vmatpush1.bf16.msra.mxu0 %v1112
      %1435 = vmatprep.mubr.bf16.mxu0 %v638
      %1436 = vmatmul.mubr.bf16.gmra.mrb[0].mxu0 %v637
      %v1437 = vpop.f32.mrb[0].mxu0
      %v1438 = vadd.f32 %v1341, %v1437
      %v1439 = vpop.f32.mrb[0].mxu0
      %v1440 = vpop.f32.mrb[0].mxu0
      %v1441 = vadd.f32 %v1344, %v1440
      %v1442 = vpop.f32.mrb[0].mxu0
      %1443 = vmatprep.mubr.bf16.mxu0 %v647
      %1444 = vmatmul.mubr.bf16.gmra.mrb[0].mxu0 %v646
      %v1445 = vpop.f32.mrb[0].mxu0
      %v1446 = vadd.f32 %v1349, %v1445
      %v1447 = vpop.f32.mrb[0].mxu0
      %v1448 = vpop.f32.mrb[0].mxu0
      %v1449 = vadd.f32 %v1352, %v1448
      %v1450 = vpop.f32.mrb[0].mxu0
      %1451 = vmatprep.mubr.bf16.mxu0 %v656
      %1452 = vmatmul.mubr.bf16.gmra.mrb[0].mxu0 %v655
      %v1453 = vpop.f32.mrb[0].mxu0
      %v1454 = vadd.f32 %v1357, %v1453
      %v1455 = vpop.f32.mrb[0].mxu0
      %v1456 = vpop.f32.mrb[0].mxu0
      %v1457 = vadd.f32 %v1360, %v1456
      %v1458 = vpop.f32.mrb[0].mxu0
      %1459 = vmatprep.mubr.bf16.mxu0 %v665
      %1460 = vmatmul.mubr.bf16.gmra.mrb[0].mxu0 %v664
      %v1461 = vpop.f32.mrb[0].mxu0
      %v1462 = vadd.f32 %v1365, %v1461
      %v1463 = vpop.f32.mrb[0].mxu0
      %v1464 = vpop.f32.mrb[0].mxu0
      %v1465 = vadd.f32 %v1368, %v1464
      %v1466 = vpop.f32.mrb[0].mxu0
      %1467 = vmatprep.mubr.bf16.mxu0 %v674
      %1468 = vmatmul.mubr.bf16.gmra.mrb[0].mxu0 %v673
      %v1469 = vpop.f32.mrb[0].mxu0
      %v1470 = vadd.f32 %v1373, %v1469
      %v1471 = vpop.f32.mrb[0].mxu0
      %v1472 = vpop.f32.mrb[0].mxu0
      %v1473 = vadd.f32 %v1376, %v1472
      %v1474 = vpop.f32.mrb[0].mxu0
      %1475 = vmatprep.mubr.bf16.mxu0 %v683
      %1476 = vmatmul.mubr.bf16.gmra.mrb[0].mxu0 %v682
      %v1477 = vpop.f32.mrb[0].mxu0
      %v1478 = vadd.f32 %v1381, %v1477
      %v1479 = vpop.f32.mrb[0].mxu0
      %v1480 = vpop.f32.mrb[0].mxu0
      %v1481 = vadd.f32 %v1384, %v1480
      %v1482 = vpop.f32.mrb[0].mxu0
      %1483 = vmatprep.mubr.bf16.mxu0 %v692
      %1484 = vmatmul.mubr.bf16.gmra.mrb[0].mxu0 %v691
      %v1485 = vpop.f32.mrb[0].mxu0
      %v1486 = vadd.f32 %v1389, %v1485
      %v1487 = vpop.f32.mrb[0].mxu0
      %v1488 = vpop.f32.mrb[0].mxu0
      %v1489 = vadd.f32 %v1392, %v1488
      %v1490 = vpop.f32.mrb[0].mxu0
      %1491 = vmatprep.mubr.bf16.mxu0 %v701
      %1492 = vmatmul.mubr.bf16.gmra.mrb[0].mxu0 %v700
      %v1493 = vpop.f32.mrb[0].mxu0
      %v1494 = vadd.f32 %v1397, %v1493
      %v1495 = vpop.f32.mrb[0].mxu0
      %v1496 = vpop.f32.mrb[0].mxu0
      %v1497 = vadd.f32 %v1400, %v1496
      %v1498 = vpop.f32.mrb[0].mxu0
      %1499 = vdwg.mxu0
      %1500 = vmatprep.subr.bf16.mxu0 0
      %1501 = vmatpush1.bf16.msra.mxu0 %v1113
      %1502 = vmatprep.subr.bf16.mxu0 0
      %1503 = vmatpush1.bf16.msra.mxu0 %v1114
      %1504 = vmatprep.subr.bf16.mxu0 0
      %1505 = vmatpush1.bf16.msra.mxu0 %v1115
      %1506 = vmatprep.subr.bf16.mxu0 0
      %1507 = vmatpush1.bf16.msra.mxu0 %v1116
      %1508 = vmatprep.subr.bf16.mxu0 0
      %1509 = vmatpush1.bf16.msra.mxu0 %v1117
      %1510 = vmatprep.subr.bf16.mxu0 0
      %1511 = vmatpush1.bf16.msra.mxu0 %v1118
      %1512 = vmatprep.subr.bf16.mxu0 0
      %1513 = vmatpush1.bf16.msra.mxu0 %v1119
      %1514 = vmatprep.subr.bf16.mxu0 0
      %1515 = vmatpush1.bf16.msra.mxu0 %v1120
      %1516 = vmatprep.subr.bf16.mxu0 0
      %1517 = vmatpush1.bf16.msra.mxu0 %v1121
      %1518 = vmatprep.subr.bf16.mxu0 0
      %1519 = vmatpush1.bf16.msra.mxu0 %v1122
      %1520 = vmatprep.subr.bf16.mxu0 0
      %1521 = vmatpush1.bf16.msra.mxu0 %v1123
      %1522 = vmatprep.subr.bf16.mxu0 0
      %1523 = vmatpush1.bf16.msra.mxu0 %v1124
      %1524 = vmatprep.subr.bf16.mxu0 0
      %1525 = vmatpush1.bf16.msra.mxu0 %v1125
      %1526 = vmatprep.subr.bf16.mxu0 0
      %1527 = vmatpush1.bf16.msra.mxu0 %v1126
      %1528 = vmatprep.subr.bf16.mxu0 0
      %1529 = vmatpush1.bf16.msra.mxu0 %v1127
      %1530 = vmatprep.subr.bf16.mxu0 0
      %1531 = vmatpush1.bf16.msra.mxu0 %v1128
      %1532 = vmatprep.mubr.bf16.mxu0 %v640
      %1533 = vmatmul.mubr.bf16.gmra.mrb[0].mxu0 %v639
      %v1534 = vpop.f32.mrb[0].mxu0
      %v1535 = vadd.f32 %v1438, %v1534
      %v1536 = vpop.f32.mrb[0].mxu0
      %v1537 = vpop.f32.mrb[0].mxu0
      %v1538 = vadd.f32 %v1441, %v1537
      %v1539 = vpop.f32.mrb[0].mxu0
      %1540 = vmatprep.mubr.bf16.mxu0 %v649
      %1541 = vmatmul.mubr.bf16.gmra.mrb[0].mxu0 %v648
      %v1542 = vpop.f32.mrb[0].mxu0
      %v1543 = vadd.f32 %v1446, %v1542
      %v1544 = vpop.f32.mrb[0].mxu0
      %v1545 = vpop.f32.mrb[0].mxu0
      %v1546 = vadd.f32 %v1449, %v1545
      %v1547 = vpop.f32.mrb[0].mxu0
      %1548 = vmatprep.mubr.bf16.mxu0 %v658
      %1549 = vmatmul.mubr.bf16.gmra.mrb[0].mxu0 %v657
      %v1550 = vpop.f32.mrb[0].mxu0
      %v1551 = vadd.f32 %v1454, %v1550
      %v1552 = vpop.f32.mrb[0].mxu0
      %v1553 = vpop.f32.mrb[0].mxu0
      %v1554 = vadd.f32 %v1457, %v1553
      %v1555 = vpop.f32.mrb[0].mxu0
      %1556 = vmatprep.mubr.bf16.mxu0 %v667
      %1557 = vmatmul.mubr.bf16.gmra.mrb[0].mxu0 %v666
      %v1558 = vpop.f32.mrb[0].mxu0
      %v1559 = vadd.f32 %v1462, %v1558
      %v1560 = vpop.f32.mrb[0].mxu0
      %v1561 = vpop.f32.mrb[0].mxu0
      %v1562 = vadd.f32 %v1465, %v1561
      %v1563 = vpop.f32.mrb[0].mxu0
      %1564 = vmatprep.mubr.bf16.mxu0 %v676
      %1565 = vmatmul.mubr.bf16.gmra.mrb[0].mxu0 %v675
      %v1566 = vpop.f32.mrb[0].mxu0
      %v1567 = vadd.f32 %v1470, %v1566
      %v1568 = vpop.f32.mrb[0].mxu0
      %v1569 = vpop.f32.mrb[0].mxu0
      %v1570 = vadd.f32 %v1473, %v1569
      %v1571 = vpop.f32.mrb[0].mxu0
      %1572 = vmatprep.mubr.bf16.mxu0 %v685
      %1573 = vmatmul.mubr.bf16.gmra.mrb[0].mxu0 %v684
      %v1574 = vpop.f32.mrb[0].mxu0
      %v1575 = vadd.f32 %v1478, %v1574
      %v1576 = vpop.f32.mrb[0].mxu0
      %v1577 = vpop.f32.mrb[0].mxu0
      %v1578 = vadd.f32 %v1481, %v1577
      %v1579 = vpop.f32.mrb[0].mxu0
      %1580 = vmatprep.mubr.bf16.mxu0 %v694
      %1581 = vmatmul.mubr.bf16.gmra.mrb[0].mxu0 %v693
      %v1582 = vpop.f32.mrb[0].mxu0
      %v1583 = vadd.f32 %v1486, %v1582
      %v1584 = vpop.f32.mrb[0].mxu0
      %v1585 = vpop.f32.mrb[0].mxu0
      %v1586 = vadd.f32 %v1489, %v1585
      %v1587 = vpop.f32.mrb[0].mxu0
      %1588 = vmatprep.mubr.bf16.mxu0 %v703
      %1589 = vmatmul.mubr.bf16.gmra.mrb[0].mxu0 %v702
      %v1590 = vpop.f32.mrb[0].mxu0
      %v1591 = vadd.f32 %v1494, %v1590
      %v1592 = vpop.f32.mrb[0].mxu0
      %v1593 = vpop.f32.mrb[0].mxu0
      %v1594 = vadd.f32 %v1497, %v1593
      %v1595 = vpop.f32.mrb[0].mxu0
      %1596 = vdwg.mxu0
      %1597 = vmatprep.subr.bf16.mxu0 0
      %1598 = vmatpush1.bf16.msra.mxu0 %v1129
      %1599 = vmatprep.subr.bf16.mxu0 0
      %1600 = vmatpush1.bf16.msra.mxu0 %v1130
      %1601 = vmatprep.subr.bf16.mxu0 0
      %1602 = vmatpush1.bf16.msra.mxu0 %v1131
      %1603 = vmatprep.subr.bf16.mxu0 0
      %1604 = vmatpush1.bf16.msra.mxu0 %v1132
      %1605 = vmatprep.subr.bf16.mxu0 0
      %1606 = vmatpush1.bf16.msra.mxu0 %v1133
      %1607 = vmatprep.subr.bf16.mxu0 0
      %1608 = vmatpush1.bf16.msra.mxu0 %v1134
      %1609 = vmatprep.subr.bf16.mxu0 0
      %1610 = vmatpush1.bf16.msra.mxu0 %v1135
      %1611 = vmatprep.subr.bf16.mxu0 0
      %1612 = vmatpush1.bf16.msra.mxu0 %v1136
      %1613 = vmatprep.subr.bf16.mxu0 0
      %1614 = vmatpush1.bf16.msra.mxu0 0
      %1615 = vmatprep.subr.bf16.mxu0 0
      %1616 = vmatpush1.bf16.msra.mxu0 0
      %1617 = vmatprep.subr.bf16.mxu0 0
      %1618 = vmatpush1.bf16.msra.mxu0 0
      %1619 = vmatprep.subr.bf16.mxu0 0
      %1620 = vmatpush1.bf16.msra.mxu0 0
      %1621 = vmatprep.subr.bf16.mxu0 0
      %1622 = vmatpush1.bf16.msra.mxu0 0
      %1623 = vmatprep.subr.bf16.mxu0 0
      %1624 = vmatpush1.bf16.msra.mxu0 0
      %1625 = vmatprep.subr.bf16.mxu0 0
      %1626 = vmatpush1.bf16.msra.mxu0 0
      %1627 = vmatprep.subr.bf16.mxu0 0
      %1628 = vmatpush1.bf16.msra.mxu0 0
      %1629 = vmatprep.mubr.bf16.mxu0 0
      %1630 = vmatmul.mubr.bf16.gmra.mrb[0].mxu0 %v641
      %v1631 = vpop.f32.mrb[0].mxu0
      %v1632 = vadd.f32 %v1535, %v1631
      %v1633 = vpop.f32.mrb[0].mxu0
      %v1634 = vpop.f32.mrb[0].mxu0
      %v1635 = vadd.f32 %v1538, %v1634
      %v1636 = vpop.f32.mrb[0].mxu0
      %1637 = vmatprep.mubr.bf16.mxu0 0
      %1638 = vmatmul.mubr.bf16.gmra.mrb[0].mxu0 %v650
      %v1639 = vpop.f32.mrb[0].mxu0
      %v1640 = vadd.f32 %v1543, %v1639
      %v1641 = vpop.f32.mrb[0].mxu0
      %v1642 = vpop.f32.mrb[0].mxu0
      %v1643 = vadd.f32 %v1546, %v1642
      %v1644 = vpop.f32.mrb[0].mxu0
      %1645 = vmatprep.mubr.bf16.mxu0 0
      %1646 = vmatmul.mubr.bf16.gmra.mrb[0].mxu0 %v659
      %v1647 = vpop.f32.mrb[0].mxu0
      %v1648 = vadd.f32 %v1551, %v1647
      %v1649 = vpop.f32.mrb[0].mxu0
      %v1650 = vpop.f32.mrb[0].mxu0
      %v1651 = vadd.f32 %v1554, %v1650
      %v1652 = vpop.f32.mrb[0].mxu0
      %1653 = vmatprep.mubr.bf16.mxu0 0
      %1654 = vmatmul.mubr.bf16.gmra.mrb[0].mxu0 %v668
      %v1655 = vpop.f32.mrb[0].mxu0
      %v1656 = vadd.f32 %v1559, %v1655
      %v1657 = vpop.f32.mrb[0].mxu0
      %v1658 = vpop.f32.mrb[0].mxu0
      %v1659 = vadd.f32 %v1562, %v1658
      %v1660 = vpop.f32.mrb[0].mxu0
      %1661 = vmatprep.mubr.bf16.mxu0 0
      %1662 = vmatmul.mubr.bf16.gmra.mrb[0].mxu0 %v677
      %v1663 = vpop.f32.mrb[0].mxu0
      %v1664 = vadd.f32 %v1567, %v1663
      %v1665 = vpop.f32.mrb[0].mxu0
      %v1666 = vpop.f32.mrb[0].mxu0
      %v1667 = vadd.f32 %v1570, %v1666
      %v1668 = vpop.f32.mrb[0].mxu0
      %1669 = vmatprep.mubr.bf16.mxu0 0
      %1670 = vmatmul.mubr.bf16.gmra.mrb[0].mxu0 %v686
      %v1671 = vpop.f32.mrb[0].mxu0
      %v1672 = vadd.f32 %v1575, %v1671
      %v1673 = vpop.f32.mrb[0].mxu0
      %v1674 = vpop.f32.mrb[0].mxu0
      %v1675 = vadd.f32 %v1578, %v1674
      %v1676 = vpop.f32.mrb[0].mxu0
      %1677 = vmatprep.mubr.bf16.mxu0 0
      %1678 = vmatmul.mubr.bf16.gmra.mrb[0].mxu0 %v695
      %v1679 = vpop.f32.mrb[0].mxu0
      %v1680 = vadd.f32 %v1583, %v1679
      %v1681 = vpop.f32.mrb[0].mxu0
      %v1682 = vpop.f32.mrb[0].mxu0
      %v1683 = vadd.f32 %v1586, %v1682
      %v1684 = vpop.f32.mrb[0].mxu0
      %1685 = vmatprep.mubr.bf16.mxu0 0
      %1686 = vmatmul.mubr.bf16.gmra.mrb[0].mxu0 %v704
      %v1687 = vpop.f32.mrb[0].mxu0
      %v1688 = vadd.f32 %v1591, %v1687
      %v1689 = vpop.f32.mrb[0].mxu0
      %v1690 = vpop.f32.mrb[0].mxu0
      %v1691 = vadd.f32 %v1594, %v1690
      %v1692 = vpop.f32.mrb[0].mxu0
      %1693 = vdwg.mxu0
      %vm1694 = vcmp.ge.f32.partialorder %v1632, 0.0
      %vm1695 = vcmp.ge.f32.partialorder %v1635, 0.0
      %vm1696 = vcmp.ge.f32.partialorder %v1640, 0.0
      %vm1697 = vcmp.ge.f32.partialorder %v1643, 0.0
      %vm1698 = vcmp.ge.f32.partialorder %v1648, 0.0
      %vm1699 = vcmp.ge.f32.partialorder %v1651, 0.0
      %vm1700 = vcmp.ge.f32.partialorder %v1656, 0.0
      %vm1701 = vcmp.ge.f32.partialorder %v1659, 0.0
      %vm1702 = vcmp.ge.f32.partialorder %v1664, 0.0
      %vm1703 = vcmp.ge.f32.partialorder %v1667, 0.0
      %vm1704 = vcmp.ge.f32.partialorder %v1672, 0.0
      %vm1705 = vcmp.ge.f32.partialorder %v1675, 0.0
      %vm1706 = vcmp.ge.f32.partialorder %v1680, 0.0
      %vm1707 = vcmp.ge.f32.partialorder %v1683, 0.0
      %vm1708 = vcmp.ge.f32.partialorder %v1688, 0.0
      %vm1709 = vcmp.ge.f32.partialorder %v1691, 0.0
      %v1710 = vmul.f32 %v1632, 0.2
      %v1711 = vmul.f32 %v1635, 0.2
      %v1712 = vmul.f32 %v1640, 0.2
      %v1713 = vmul.f32 %v1643, 0.2
      %v1714 = vmul.f32 %v1648, 0.2
      %v1715 = vmul.f32 %v1651, 0.2
      %v1716 = vmul.f32 %v1656, 0.2
      %v1717 = vmul.f32 %v1659, 0.2
      %v1718 = vmul.f32 %v1664, 0.2
      %v1719 = vmul.f32 %v1667, 0.2
      %v1720 = vmul.f32 %v1672, 0.2
      %v1721 = vmul.f32 %v1675, 0.2
      %v1722 = vmul.f32 %v1680, 0.2
      %v1723 = vmul.f32 %v1683, 0.2
      %v1724 = vmul.f32 %v1688, 0.2
      %v1725 = vmul.f32 %v1691, 0.2
      %v1726 = vsel %vm1694, %v1632, %v1710
      %v1727 = vsel %vm1695, %v1635, %v1711
      %v1728 = vsel %vm1696, %v1640, %v1712
      %v1729 = vsel %vm1697, %v1643, %v1713
      %v1730 = vsel %vm1698, %v1648, %v1714
      %v1731 = vsel %vm1699, %v1651, %v1715
      %v1732 = vsel %vm1700, %v1656, %v1716
      %v1733 = vsel %vm1701, %v1659, %v1717
      %v1734 = vsel %vm1702, %v1664, %v1718
      %v1735 = vsel %vm1703, %v1667, %v1719
      %v1736 = vsel %vm1704, %v1672, %v1720
      %v1737 = vsel %vm1705, %v1675, %v1721
      %v1738 = vsel %vm1706, %v1680, %v1722
      %v1739 = vsel %vm1707, %v1683, %v1723
      %v1740 = vsel %vm1708, %v1688, %v1724
      %v1741 = vsel %vm1709, %v1691, %v1725
      %v1742 = vpack.c.bf16 %v1727, %v1726
      %v1743 = vpack.c.bf16 %v1729, %v1728
      %v1744 = vpack.c.bf16 %v1731, %v1730
      %v1745 = vpack.c.bf16 %v1733, %v1732
      %v1746 = vpack.c.bf16 %v1735, %v1734
      %v1747 = vpack.c.bf16 %v1737, %v1736
      %v1748 = vpack.c.bf16 %v1739, %v1738
      %v1749 = vpack.c.bf16 %v1741, %v1740
      %v1758 = vunpack.c.l.b16 %v1742
      %v1759 = vunpack.c.h.b16 %v1742
      %v1760 = vunpack.c.l.b16 %v1743
      %v1761 = vunpack.c.h.b16 %v1743
      %v1762 = vunpack.c.l.b16 %v1744
      %v1763 = vunpack.c.h.b16 %v1744
      %v1764 = vunpack.c.l.b16 %v1745
      %v1765 = vunpack.c.h.b16 %v1745
      %v1766 = vunpack.c.l.b16 %v1746
      %v1767 = vunpack.c.h.b16 %v1746
      %v1768 = vunpack.c.l.b16 %v1747
      %v1769 = vunpack.c.h.b16 %v1747
      %v1770 = vunpack.c.l.b16 %v1748
      %v1771 = vunpack.c.h.b16 %v1748
      %v1772 = vunpack.c.l.b16 %v1749
      %v1773 = vunpack.c.h.b16 %v1749
      %v1774 = vpack.c.b16 %v1758, %v1758
      %v1775 = vpack.c.b16 %v1759, %v1759
      %v1776 = vpack.c.b16 %v1760, %v1760
      %v1777 = vpack.c.b16 %v1761, %v1761
      %v1778 = vpack.c.b16 %v1762, %v1762
      %v1779 = vpack.c.b16 %v1763, %v1763
      %v1780 = vpack.c.b16 %v1764, %v1764
      %v1781 = vpack.c.b16 %v1765, %v1765
      %v1782 = vpack.c.b16 %v1766, %v1766
      %v1783 = vpack.c.b16 %v1767, %v1767
      %v1784 = vpack.c.b16 %v1768, %v1768
      %v1785 = vpack.c.b16 %v1769, %v1769
      %v1786 = vpack.c.b16 %v1770, %v1770
      %v1787 = vpack.c.b16 %v1771, %v1771
      %v1788 = vpack.c.b16 %v1772, %v1772
      %v1789 = vpack.c.b16 %v1773, %v1773
      %1806 = vst [vmem:[%s175] sm:$0xf] %v1774
      %1807 = vst [vmem:[%s175 + $0x4] sm:$0xf] %v1775
      %1808 = vst [vmem:[%s175 + $0x8] sm:$0xf] %v1776
      %1809 = vst [vmem:[%s175 + $0xc] sm:$0xf] %v1777
      %1810 = vst [vmem:[%s175 + $0x10] sm:$0xf] %v1778
      %1811 = vst [vmem:[%s175 + $0x14] sm:$0xf] %v1779
      %1812 = vst [vmem:[%s175 + $0x18] sm:$0xf] %v1780
      %1813 = vst [vmem:[%s175 + $0x1c] sm:$0xf] %v1781
      %1814 = vst [vmem:[%s175 + $0x20] sm:$0xf] %v1782
      %1815 = vst [vmem:[%s175 + $0x24] sm:$0xf] %v1783
      %1816 = vst [vmem:[%s175 + $0x28] sm:$0xf] %v1784
      %1817 = vst [vmem:[%s175 + $0x2c] sm:$0xf] %v1785
      %1818 = vst [vmem:[%s175 + $0x30] sm:$0xf] %v1786
      %1819 = vst [vmem:[%s175 + $0x34] sm:$0xf] %v1787
      %1820 = vst [vmem:[%s175 + $0x38] sm:$0xf] %v1788
      %1821 = vst [vmem:[%s175 + $0x3c] sm:$0xf] %v1789
      %s1822 = smul.u32 16, %s14
      %p1823 = scmp.lt.s32.totalorder %s1822, 31
      %s1824 = scalar_select %p1823, %s1822, 31
      %s1825 = smul.addr %s1824, 4
      %s1826 = scalar_lea.vmem %s3, %s1825
      // Predicated region
      $region33: #{adversarial_loss_forward.11} parent=31 // pred_check
        %p1827 = pneg %p100
      $region34: #{adversarial_loss_forward.11} parent=31 // pred_check_branch
        %1829 = sbr.rel (%p1827) target = $region36
      $region35: #{adversarial_loss_forward.11} parent=31 // pred_region
        %s1830 = smul.u32 16, %s14
      $region36: #{adversarial_loss_forward.11} parent=31 // pred_fallthru
        _
    $region32: #{adversarial_loss_forward.11} parent=5 // pred_fallthru
      _
    %p1831 = scmp.le.s32.totalorder 2, %s9
    // Predicated region
    $region37: #{adversarial_loss_forward.11} parent=5 // pred_check
      %p1832 = pneg %p1831
    $region38: #{adversarial_loss_forward.11} parent=5 // pred_check_branch
      %1834 = sbr.rel (%p1832) target = $region40
    $region39: #{adversarial_loss_forward.11} parent=5 // pred_region
      %s1835 = ssub.s32 %s9, 2
      // Predicated region
      $region41: #{adversarial_loss_forward.11} parent=39 // pred_check
        %p1836 = pneg %p106
      $region42: #{adversarial_loss_forward.11} parent=39 // pred_check_branch
        %1838 = sbr.rel (%p1836) target = $region44
      $region43: #{adversarial_loss_forward.11} parent=39 // pred_region
        %s1839 = smul.u32 16, %s15
        %p1840 = scmp.lt.s32.totalorder %s1839, 31
        %s1841 = scalar_select %p1840, %s1839, 31
        %s1842 = smul.addr %s1841, 4
        %s1843 = scalar_lea.vmem %s3, %s1842
      $region44: #{adversarial_loss_forward.11} parent=39 // pred_fallthru
        _
    $region40: #{adversarial_loss_forward.11} parent=5 // pred_fallthru
      _
  $region6: #{adversarial_loss_forward.11} parent=0 // loop_footer
    %s13 = sadd.s32 1, %s9
  $region7: #{adversarial_loss_forward.11} parent=0 // loop_footer_branch
    %8 = sbr.rel target = $region3
  $region8: #{adversarial_loss_forward.11} parent=0 // loop_exit
    _

// kernel: adversarial_loss_forward.13
$region0: #{adversarial_loss_forward.13}
  #allocation0 [shape = 'u32[]', space=smem, size = 0x4, offset = 0x4, fixed_abs, tag = 'smem constant byte address 0x4 - core index']
  #allocation1 [shape = 'u32[144,128]{1,0:T(1,128)}', space=vmem, size = 0x12000, scoped, tag = 'internal scratch']
  %s0 = inlined_call_operand.vmem [shape: bf16[64,1152], index: 0, kind: input, shape index: {}]
  %s1 = inlined_call_operand.vmem [shape: bf16[1152,128], index: 1, kind: input, shape index: {}]
  %s2 = inlined_call_operand.vmem [shape: f32[1,128], index: 2, kind: input, shape index: {}]
  %s3 = inlined_call_operand.vmem [shape: bf16[64,128], index: 3, kind: output, shape index: {}]
  %s4 = sld [smem:[#allocation0]]
  $region22: #{adversarial_loss_forward.13} parent=0
    _
  %s6 = ssub.s32 1, %s4
  %s7 = scalar_select 0, %s6, %s4
  // Predicated region
  $region2: #{adversarial_loss_forward.13} parent=0 // pred_check
    _
  $region3: #{adversarial_loss_forward.13} parent=0 // pred_check_branch
    %9 = sbr.rel (0) target = $region5
  $region4: #{adversarial_loss_forward.13} parent=0 // pred_region
    _
  $region5: #{adversarial_loss_forward.13} parent=0 // pred_fallthru
    _
  // Predicated region
  $region6: #{adversarial_loss_forward.13} parent=0 // pred_check
    _
  $region7: #{adversarial_loss_forward.13} parent=0 // pred_check_branch
    %11 = sbr.rel (0) target = $region9
  $region8: #{adversarial_loss_forward.13} parent=0 // pred_region
    _
  $region9: #{adversarial_loss_forward.13} parent=0 // pred_fallthru
    _
  // Predicated region
  $region10: #{adversarial_loss_forward.13} parent=0 // pred_check
    _
  $region11: #{adversarial_loss_forward.13} parent=0 // pred_check_branch
    %13 = sbr.rel (0) target = $region13
  $region12: #{adversarial_loss_forward.13} parent=0 // pred_region
    _
  $region13: #{adversarial_loss_forward.13} parent=0 // pred_fallthru
    _
  %v15 = vld [vmem:[%s0] sm:$0xff]
  %v16 = vld [vmem:[%s0 + $0x8] sm:$0xff]
  %v17 = vld [vmem:[%s0 + $0x10] sm:$0xff]
  %v18 = vld [vmem:[%s0 + $0x18] sm:$0xff]
  %v19 = vld [vmem:[%s0 + $0x20] sm:$0xf]
  %v20 = vld [vmem:[%s0 + $0x24] sm:$0xff]
  %v21 = vld [vmem:[%s0 + $0x2c] sm:$0xff]
  %v22 = vld [vmem:[%s0 + $0x34] sm:$0xff]
  %v23 = vld [vmem:[%s0 + $0x3c] sm:$0xff]
  %v24 = vld [vmem:[%s0 + $0x44] sm:$0xf]
  %v25 = vld [vmem:[%s0 + $0x48] sm:$0xff]
  %v26 = vld [vmem:[%s0 + $0x50] sm:$0xff]
  %v27 = vld [vmem:[%s0 + $0x58] sm:$0xff]
  %v28 = vld [vmem:[%s0 + $0x60] sm:$0xff]
  %v29 = vld [vmem:[%s0 + $0x68] sm:$0xf]
  %v30 = vld [vmem:[%s0 + $0x6c] sm:$0xff]
  %v31 = vld [vmem:[%s0 + $0x74] sm:$0xff]
  %v32 = vld [vmem:[%s0 + $0x7c] sm:$0xff]
  %v33 = vld [vmem:[%s0 + $0x84] sm:$0xff]
  %v34 = vld [vmem:[%s0 + $0x8c] sm:$0xf]
  %v35 = vld [vmem:[%s0 + $0x90] sm:$0xff]
  %v36 = vld [vmem:[%s0 + $0x98] sm:$0xff]
  %v37 = vld [vmem:[%s0 + $0xa0] sm:$0xff]
  %v38 = vld [vmem:[%s0 + $0xa8] sm:$0xff]
  %v39 = vld [vmem:[%s0 + $0xb0] sm:$0xf]
  %v40 = vld [vmem:[%s0 + $0xb4] sm:$0xff]
  %v41 = vld [vmem:[%s0 + $0xbc] sm:$0xff]
  %v42 = vld [vmem:[%s0 + $0xc4] sm:$0xff]
  %v43 = vld [vmem:[%s0 + $0xcc] sm:$0xff]
  %v44 = vld [vmem:[%s0 + $0xd4] sm:$0xf]
  %v45 = vld [vmem:[%s0 + $0xd8] sm:$0xff]
  %v46 = vld [vmem:[%s0 + $0xe0] sm:$0xff]
  %v47 = vld [vmem:[%s0 + $0xe8] sm:$0xff]
  %v48 = vld [vmem:[%s0 + $0xf0] sm:$0xff]
  %v49 = vld [vmem:[%s0 + $0xf8] sm:$0xf]
  %v50 = vld [vmem:[%s0 + $0xfc] sm:$0xff]
  %v51 = vld [vmem:[%s0 + $0x104] sm:$0xff]
  %v52 = vld [vmem:[%s0 + $0x10c] sm:$0xff]
  %v53 = vld [vmem:[%s0 + $0x114] sm:$0xff]
  %v54 = vld [vmem:[%s0 + $0x11c] sm:$0xf]
  %v55 = vld [vmem:[%s1] sm:$0xf]
  %v56 = vld [vmem:[%s1 + $0x4] sm:$0xf]
  %v57 = vld [vmem:[%s1 + $0x8] sm:$0xf]
  %v58 = vld [vmem:[%s1 + $0xc] sm:$0xf]
  %v59 = vld [vmem:[%s1 + $0x10] sm:$0xf]
  %v60 = vld [vmem:[%s1 + $0x14] sm:$0xf]
  %v61 = vld [vmem:[%s1 + $0x18] sm:$0xf]
  %v62 = vld [vmem:[%s1 + $0x1c] sm:$0xf]
  %v63 = vld [vmem:[%s1 + $0x20] sm:$0xf]
  %v64 = vld [vmem:[%s1 + $0x24] sm:$0xf]
  %v65 = vld [vmem:[%s1 + $0x28] sm:$0xf]
  %v66 = vld [vmem:[%s1 + $0x2c] sm:$0xf]
  %v67 = vld [vmem:[%s1 + $0x30] sm:$0xf]
  %v68 = vld [vmem:[%s1 + $0x34] sm:$0xf]
  %v69 = vld [vmem:[%s1 + $0x38] sm:$0xf]
  %v70 = vld [vmem:[%s1 + $0x3c] sm:$0xf]
  %v71 = vld [vmem:[%s1 + $0x40] sm:$0xf]
  %v72 = vld [vmem:[%s1 + $0x44] sm:$0xf]
  %v73 = vld [vmem:[%s1 + $0x48] sm:$0xf]
  %v74 = vld [vmem:[%s1 + $0x4c] sm:$0xf]
  %v75 = vld [vmem:[%s1 + $0x50] sm:$0xf]
  %v76 = vld [vmem:[%s1 + $0x54] sm:$0xf]
  %v77 = vld [vmem:[%s1 + $0x58] sm:$0xf]
  %v78 = vld [vmem:[%s1 + $0x5c] sm:$0xf]
  %v79 = vld [vmem:[%s1 + $0x60] sm:$0xf]
  %v80 = vld [vmem:[%s1 + $0x64] sm:$0xf]
  %v81 = vld [vmem:[%s1 + $0x68] sm:$0xf]
  %v82 = vld [vmem:[%s1 + $0x6c] sm:$0xf]
  %v83 = vld [vmem:[%s1 + $0x70] sm:$0xf]
  %v84 = vld [vmem:[%s1 + $0x74] sm:$0xf]
  %v85 = vld [vmem:[%s1 + $0x78] sm:$0xf]
  %v86 = vld [vmem:[%s1 + $0x7c] sm:$0xf]
  %v87 = vld [vmem:[%s1 + $0x80] sm:$0xf]
  %v88 = vld [vmem:[%s1 + $0x84] sm:$0xf]
  %v89 = vld [vmem:[%s1 + $0x88] sm:$0xf]
  %v90 = vld [vmem:[%s1 + $0x8c] sm:$0xf]
  %v91 = vld [vmem:[%s1 + $0x90] sm:$0xf]
  %v92 = vld [vmem:[%s1 + $0x94] sm:$0xf]
  %v93 = vld [vmem:[%s1 + $0x98] sm:$0xf]
  %v94 = vld [vmem:[%s1 + $0x9c] sm:$0xf]
  %v95 = vld [vmem:[%s1 + $0xa0] sm:$0xf]
  %v96 = vld [vmem:[%s1 + $0xa4] sm:$0xf]
  %v97 = vld [vmem:[%s1 + $0xa8] sm:$0xf]
  %v98 = vld [vmem:[%s1 + $0xac] sm:$0xf]
  %v99 = vld [vmem:[%s1 + $0xb0] sm:$0xf]
  %v100 = vld [vmem:[%s1 + $0xb4] sm:$0xf]
  %v101 = vld [vmem:[%s1 + $0xb8] sm:$0xf]
  %v102 = vld [vmem:[%s1 + $0xbc] sm:$0xf]
  %v103 = vld [vmem:[%s1 + $0xc0] sm:$0xf]
  %v104 = vld [vmem:[%s1 + $0xc4] sm:$0xf]
  %v105 = vld [vmem:[%s1 + $0xc8] sm:$0xf]
  %v106 = vld [vmem:[%s1 + $0xcc] sm:$0xf]
  %v107 = vld [vmem:[%s1 + $0xd0] sm:$0xf]
  %v108 = vld [vmem:[%s1 + $0xd4] sm:$0xf]
  %v109 = vld [vmem:[%s1 + $0xd8] sm:$0xf]
  %v110 = vld [vmem:[%s1 + $0xdc] sm:$0xf]
  %v111 = vld [vmem:[%s1 + $0xe0] sm:$0xf]
  %v112 = vld [vmem:[%s1 + $0xe4] sm:$0xf]
  %v113 = vld [vmem:[%s1 + $0xe8] sm:$0xf]
  %v114 = vld [vmem:[%s1 + $0xec] sm:$0xf]
  %v115 = vld [vmem:[%s1 + $0xf0] sm:$0xf]
  %v116 = vld [vmem:[%s1 + $0xf4] sm:$0xf]
  %v117 = vld [vmem:[%s1 + $0xf8] sm:$0xf]
  %v118 = vld [vmem:[%s1 + $0xfc] sm:$0xf]
  %v119 = vld [vmem:[%s1 + $0x100] sm:$0xf]
  %v120 = vld [vmem:[%s1 + $0x104] sm:$0xf]
  %v121 = vld [vmem:[%s1 + $0x108] sm:$0xf]
  %v122 = vld [vmem:[%s1 + $0x10c] sm:$0xf]
  %v123 = vld [vmem:[%s1 + $0x110] sm:$0xf]
  %v124 = vld [vmem:[%s1 + $0x114] sm:$0xf]
  %v125 = vld [vmem:[%s1 + $0x118] sm:$0xf]
  %v126 = vld [vmem:[%s1 + $0x11c] sm:$0xf]
  %v127 = vld [vmem:[%s1 + $0x120] sm:$0xf]
  %v128 = vld [vmem:[%s1 + $0x124] sm:$0xf]
  %v129 = vld [vmem:[%s1 + $0x128] sm:$0xf]
  %v130 = vld [vmem:[%s1 + $0x12c] sm:$0xf]
  %v131 = vld [vmem:[%s1 + $0x130] sm:$0xf]
  %v132 = vld [vmem:[%s1 + $0x134] sm:$0xf]
  %v133 = vld [vmem:[%s1 + $0x138] sm:$0xf]
  %v134 = vld [vmem:[%s1 + $0x13c] sm:$0xf]
  %v135 = vld [vmem:[%s1 + $0x140] sm:$0xf]
  %v136 = vld [vmem:[%s1 + $0x144] sm:$0xf]
  %v137 = vld [vmem:[%s1 + $0x148] sm:$0xf]
  %v138 = vld [vmem:[%s1 + $0x14c] sm:$0xf]
  %v139 = vld [vmem:[%s1 + $0x150] sm:$0xf]
  %v140 = vld [vmem:[%s1 + $0x154] sm:$0xf]
  %v141 = vld [vmem:[%s1 + $0x158] sm:$0xf]
  %v142 = vld [vmem:[%s1 + $0x15c] sm:$0xf]
  %v143 = vld [vmem:[%s1 + $0x160] sm:$0xf]
  %v144 = vld [vmem:[%s1 + $0x164] sm:$0xf]
  %v145 = vld [vmem:[%s1 + $0x168] sm:$0xf]
  %v146 = vld [vmem:[%s1 + $0x16c] sm:$0xf]
  %v147 = vld [vmem:[%s1 + $0x170] sm:$0xf]
  %v148 = vld [vmem:[%s1 + $0x174] sm:$0xf]
  %v149 = vld [vmem:[%s1 + $0x178] sm:$0xf]
  %v150 = vld [vmem:[%s1 + $0x17c] sm:$0xf]
  %v151 = vld [vmem:[%s1 + $0x180] sm:$0xf]
  %v152 = vld [vmem:[%s1 + $0x184] sm:$0xf]
  %v153 = vld [vmem:[%s1 + $0x188] sm:$0xf]
  %v154 = vld [vmem:[%s1 + $0x18c] sm:$0xf]
  %v155 = vld [vmem:[%s1 + $0x190] sm:$0xf]
  %v156 = vld [vmem:[%s1 + $0x194] sm:$0xf]
  %v157 = vld [vmem:[%s1 + $0x198] sm:$0xf]
  %v158 = vld [vmem:[%s1 + $0x19c] sm:$0xf]
  %v159 = vld [vmem:[%s1 + $0x1a0] sm:$0xf]
  %v160 = vld [vmem:[%s1 + $0x1a4] sm:$0xf]
  %v161 = vld [vmem:[%s1 + $0x1a8] sm:$0xf]
  %v162 = vld [vmem:[%s1 + $0x1ac] sm:$0xf]
  %v163 = vld [vmem:[%s1 + $0x1b0] sm:$0xf]
  %v164 = vld [vmem:[%s1 + $0x1b4] sm:$0xf]
  %v165 = vld [vmem:[%s1 + $0x1b8] sm:$0xf]
  %v166 = vld [vmem:[%s1 + $0x1bc] sm:$0xf]
  %v167 = vld [vmem:[%s1 + $0x1c0] sm:$0xf]
  %v168 = vld [vmem:[%s1 + $0x1c4] sm:$0xf]
  %v169 = vld [vmem:[%s1 + $0x1c8] sm:$0xf]
  %v170 = vld [vmem:[%s1 + $0x1cc] sm:$0xf]
  %v171 = vld [vmem:[%s1 + $0x1d0] sm:$0xf]
  %v172 = vld [vmem:[%s1 + $0x1d4] sm:$0xf]
  %v173 = vld [vmem:[%s1 + $0x1d8] sm:$0xf]
  %v174 = vld [vmem:[%s1 + $0x1dc] sm:$0xf]
  %v175 = vld [vmem:[%s1 + $0x1e0] sm:$0xf]
  %v176 = vld [vmem:[%s1 + $0x1e4] sm:$0xf]
  %v177 = vld [vmem:[%s1 + $0x1e8] sm:$0xf]
  %v178 = vld [vmem:[%s1 + $0x1ec] sm:$0xf]
  %v179 = vld [vmem:[%s1 + $0x1f0] sm:$0xf]
  %v180 = vld [vmem:[%s1 + $0x1f4] sm:$0xf]
  %v181 = vld [vmem:[%s1 + $0x1f8] sm:$0xf]
  %v182 = vld [vmem:[%s1 + $0x1fc] sm:$0xf]
  %v183 = vld [vmem:[%s1 + $0x200] sm:$0xf]
  %v184 = vld [vmem:[%s1 + $0x204] sm:$0xf]
  %v185 = vld [vmem:[%s1 + $0x208] sm:$0xf]
  %v186 = vld [vmem:[%s1 + $0x20c] sm:$0xf]
  %v187 = vld [vmem:[%s1 + $0x210] sm:$0xf]
  %v188 = vld [vmem:[%s1 + $0x214] sm:$0xf]
  %v189 = vld [vmem:[%s1 + $0x218] sm:$0xf]
  %v190 = vld [vmem:[%s1 + $0x21c] sm:$0xf]
  %v191 = vld [vmem:[%s1 + $0x220] sm:$0xf]
  %v192 = vld [vmem:[%s1 + $0x224] sm:$0xf]
  %v193 = vld [vmem:[%s1 + $0x228] sm:$0xf]
  %v194 = vld [vmem:[%s1 + $0x22c] sm:$0xf]
  %v195 = vld [vmem:[%s1 + $0x230] sm:$0xf]
  %v196 = vld [vmem:[%s1 + $0x234] sm:$0xf]
  %v197 = vld [vmem:[%s1 + $0x238] sm:$0xf]
  %v198 = vld [vmem:[%s1 + $0x23c] sm:$0xf]
  %v199 = vld [vmem:[%s2] sm:$0x1]
  %v201 = vlaneseq
  %v202 = vshrl.u32 %v201, 7
  %v203 = vsub.s32 0, %v202
  %v204 = vrot.slane %v199, %v203
  %v246 = vunpack.c.l.b16 %v15
  %v247 = vunpack.c.h.b16 %v15
  %v248 = vunpack.c.l.b16 %v16
  %v249 = vunpack.c.h.b16 %v16
  %v250 = vunpack.c.l.b16 %v17
  %v251 = vunpack.c.h.b16 %v17
  %v252 = vunpack.c.l.b16 %v18
  %v253 = vunpack.c.h.b16 %v18
  %v254 = vunpack.c.l.b16 %v19
  %v255 = vunpack.c.l.b16 %v20
  %v256 = vunpack.c.h.b16 %v20
  %v257 = vunpack.c.l.b16 %v21
  %v258 = vunpack.c.h.b16 %v21
  %v259 = vunpack.c.l.b16 %v22
  %v260 = vunpack.c.h.b16 %v22
  %v261 = vunpack.c.l.b16 %v23
  %v262 = vunpack.c.h.b16 %v23
  %v263 = vunpack.c.l.b16 %v24
  %v264 = vunpack.c.l.b16 %v25
  %v265 = vunpack.c.h.b16 %v25
  %v266 = vunpack.c.l.b16 %v26
  %v267 = vunpack.c.h.b16 %v26
  %v268 = vunpack.c.l.b16 %v27
  %v269 = vunpack.c.h.b16 %v27
  %v270 = vunpack.c.l.b16 %v28
  %v271 = vunpack.c.h.b16 %v28
  %v272 = vunpack.c.l.b16 %v29
  %v273 = vunpack.c.l.b16 %v30
  %v274 = vunpack.c.h.b16 %v30
  %v275 = vunpack.c.l.b16 %v31
  %v276 = vunpack.c.h.b16 %v31
  %v277 = vunpack.c.l.b16 %v32
  %v278 = vunpack.c.h.b16 %v32
  %v279 = vunpack.c.l.b16 %v33
  %v280 = vunpack.c.h.b16 %v33
  %v281 = vunpack.c.l.b16 %v34
  %v282 = vunpack.c.l.b16 %v35
  %v283 = vunpack.c.h.b16 %v35
  %v284 = vunpack.c.l.b16 %v36
  %v285 = vunpack.c.h.b16 %v36
  %v286 = vunpack.c.l.b16 %v37
  %v287 = vunpack.c.h.b16 %v37
  %v288 = vunpack.c.l.b16 %v38
  %v289 = vunpack.c.h.b16 %v38
  %v290 = vunpack.c.l.b16 %v39
  %v291 = vunpack.c.l.b16 %v40
  %v292 = vunpack.c.h.b16 %v40
  %v293 = vunpack.c.l.b16 %v41
  %v294 = vunpack.c.h.b16 %v41
  %v295 = vunpack.c.l.b16 %v42
  %v296 = vunpack.c.h.b16 %v42
  %v297 = vunpack.c.l.b16 %v43
  %v298 = vunpack.c.h.b16 %v43
  %v299 = vunpack.c.l.b16 %v44
  %v300 = vunpack.c.l.b16 %v45
  %v301 = vunpack.c.h.b16 %v45
  %v302 = vunpack.c.l.b16 %v46
  %v303 = vunpack.c.h.b16 %v46
  %v304 = vunpack.c.l.b16 %v47
  %v305 = vunpack.c.h.b16 %v47
  %v306 = vunpack.c.l.b16 %v48
  %v307 = vunpack.c.h.b16 %v48
  %v308 = vunpack.c.l.b16 %v49
  %v309 = vunpack.c.l.b16 %v50
  %v310 = vunpack.c.h.b16 %v50
  %v311 = vunpack.c.l.b16 %v51
  %v312 = vunpack.c.h.b16 %v51
  %v313 = vunpack.c.l.b16 %v52
  %v314 = vunpack.c.h.b16 %v52
  %v315 = vunpack.c.l.b16 %v53
  %v316 = vunpack.c.h.b16 %v53
  %v317 = vunpack.c.l.b16 %v54
  %v318 = vpack.c.b16 %v255, %v246
  %v319 = vpack.c.b16 %v256, %v247
  %v320 = vpack.c.b16 %v257, %v248
  %v321 = vpack.c.b16 %v258, %v249
  %v322 = vpack.c.b16 %v259, %v250
  %v323 = vpack.c.b16 %v260, %v251
  %v324 = vpack.c.b16 %v261, %v252
  %v325 = vpack.c.b16 %v262, %v253
  %v326 = vpack.c.b16 %v263, %v254
  %v327 = vpack.c.b16 %v273, %v264
  %v328 = vpack.c.b16 %v274, %v265
  %v329 = vpack.c.b16 %v275, %v266
  %v330 = vpack.c.b16 %v276, %v267
  %v331 = vpack.c.b16 %v277, %v268
  %v332 = vpack.c.b16 %v278, %v269
  %v333 = vpack.c.b16 %v279, %v270
  %v334 = vpack.c.b16 %v280, %v271
  %v335 = vpack.c.b16 %v281, %v272
  %v336 = vpack.c.b16 %v291, %v282
  %v337 = vpack.c.b16 %v292, %v283
  %v338 = vpack.c.b16 %v293, %v284
  %v339 = vpack.c.b16 %v294, %v285
  %v340 = vpack.c.b16 %v295, %v286
  %v341 = vpack.c.b16 %v296, %v287
  %v342 = vpack.c.b16 %v297, %v288
  %v343 = vpack.c.b16 %v298, %v289
  %v344 = vpack.c.b16 %v299, %v290
  %v345 = vpack.c.b16 %v309, %v300
  %v346 = vpack.c.b16 %v310, %v301
  %v347 = vpack.c.b16 %v311, %v302
  %v348 = vpack.c.b16 %v312, %v303
  %v349 = vpack.c.b16 %v313, %v304
  %v350 = vpack.c.b16 %v314, %v305
  %v351 = vpack.c.b16 %v315, %v306
  %v352 = vpack.c.b16 %v316, %v307
  %v353 = vpack.c.b16 %v317, %v308
  %v534 = vunpack.c.l.b16 %v55
  %v535 = vunpack.c.l.b16 %v56
  %v536 = vunpack.c.l.b16 %v57
  %v537 = vunpack.c.l.b16 %v58
  %v538 = vunpack.c.l.b16 %v59
  %v539 = vunpack.c.l.b16 %v60
  %v540 = vunpack.c.l.b16 %v61
  %v541 = vunpack.c.l.b16 %v62
  %v542 = vunpack.c.l.b16 %v63
  %v543 = vunpack.c.l.b16 %v64
  %v544 = vunpack.c.l.b16 %v65
  %v545 = vunpack.c.l.b16 %v66
  %v546 = vunpack.c.l.b16 %v67
  %v547 = vunpack.c.l.b16 %v68
  %v548 = vunpack.c.l.b16 %v69
  %v549 = vunpack.c.l.b16 %v70
  %v550 = vunpack.c.l.b16 %v71
  %v551 = vunpack.c.l.b16 %v72
  %v552 = vunpack.c.l.b16 %v73
  %v553 = vunpack.c.l.b16 %v74
  %v554 = vunpack.c.l.b16 %v75
  %v555 = vunpack.c.l.b16 %v76
  %v556 = vunpack.c.l.b16 %v77
  %v557 = vunpack.c.l.b16 %v78
  %v558 = vunpack.c.l.b16 %v79
  %v559 = vunpack.c.l.b16 %v80
  %v560 = vunpack.c.l.b16 %v81
  %v561 = vunpack.c.l.b16 %v82
  %v562 = vunpack.c.l.b16 %v83
  %v563 = vunpack.c.l.b16 %v84
  %v564 = vunpack.c.l.b16 %v85
  %v565 = vunpack.c.l.b16 %v86
  %v566 = vunpack.c.l.b16 %v87
  %v567 = vunpack.c.l.b16 %v88
  %v568 = vunpack.c.l.b16 %v89
  %v569 = vunpack.c.l.b16 %v90
  %v570 = vunpack.c.l.b16 %v91
  %v571 = vunpack.c.l.b16 %v92
  %v572 = vunpack.c.l.b16 %v93
  %v573 = vunpack.c.l.b16 %v94
  %v574 = vunpack.c.l.b16 %v95
  %v575 = vunpack.c.l.b16 %v96
  %v576 = vunpack.c.l.b16 %v97
  %v577 = vunpack.c.l.b16 %v98
  %v578 = vunpack.c.l.b16 %v99
  %v579 = vunpack.c.l.b16 %v100
  %v580 = vunpack.c.l.b16 %v101
  %v581 = vunpack.c.l.b16 %v102
  %v582 = vunpack.c.l.b16 %v103
  %v583 = vunpack.c.l.b16 %v104
  %v584 = vunpack.c.l.b16 %v105
  %v585 = vunpack.c.l.b16 %v106
  %v586 = vunpack.c.l.b16 %v107
  %v587 = vunpack.c.l.b16 %v108
  %v588 = vunpack.c.l.b16 %v109
  %v589 = vunpack.c.l.b16 %v110
  %v590 = vunpack.c.l.b16 %v111
  %v591 = vunpack.c.l.b16 %v112
  %v592 = vunpack.c.l.b16 %v113
  %v593 = vunpack.c.l.b16 %v114
  %v594 = vunpack.c.l.b16 %v115
  %v595 = vunpack.c.l.b16 %v116
  %v596 = vunpack.c.l.b16 %v117
  %v597 = vunpack.c.l.b16 %v118
  %v598 = vunpack.c.l.b16 %v119
  %v599 = vunpack.c.l.b16 %v120
  %v600 = vunpack.c.l.b16 %v121
  %v601 = vunpack.c.l.b16 %v122
  %v602 = vunpack.c.l.b16 %v123
  %v603 = vunpack.c.l.b16 %v124
  %v604 = vunpack.c.l.b16 %v125
  %v605 = vunpack.c.l.b16 %v126
  %v606 = vunpack.c.l.b16 %v127
  %v607 = vunpack.c.l.b16 %v128
  %v608 = vunpack.c.l.b16 %v129
  %v609 = vunpack.c.l.b16 %v130
  %v610 = vunpack.c.l.b16 %v131
  %v611 = vunpack.c.l.b16 %v132
  %v612 = vunpack.c.l.b16 %v133
  %v613 = vunpack.c.l.b16 %v134
  %v614 = vunpack.c.l.b16 %v135
  %v615 = vunpack.c.l.b16 %v136
  %v616 = vunpack.c.l.b16 %v137
  %v617 = vunpack.c.l.b16 %v138
  %v618 = vunpack.c.l.b16 %v139
  %v619 = vunpack.c.l.b16 %v140
  %v620 = vunpack.c.l.b16 %v141
  %v621 = vunpack.c.l.b16 %v142
  %v622 = vunpack.c.l.b16 %v143
  %v623 = vunpack.c.l.b16 %v144
  %v624 = vunpack.c.l.b16 %v145
  %v625 = vunpack.c.l.b16 %v146
  %v626 = vunpack.c.l.b16 %v147
  %v627 = vunpack.c.l.b16 %v148
  %v628 = vunpack.c.l.b16 %v149
  %v629 = vunpack.c.l.b16 %v150
  %v630 = vunpack.c.l.b16 %v151
  %v631 = vunpack.c.l.b16 %v152
  %v632 = vunpack.c.l.b16 %v153
  %v633 = vunpack.c.l.b16 %v154
  %v634 = vunpack.c.l.b16 %v155
  %v635 = vunpack.c.l.b16 %v156
  %v636 = vunpack.c.l.b16 %v157
  %v637 = vunpack.c.l.b16 %v158
  %v638 = vunpack.c.l.b16 %v159
  %v639 = vunpack.c.l.b16 %v160
  %v640 = vunpack.c.l.b16 %v161
  %v641 = vunpack.c.l.b16 %v162
  %v642 = vunpack.c.l.b16 %v163
  %v643 = vunpack.c.l.b16 %v164
  %v644 = vunpack.c.l.b16 %v165
  %v645 = vunpack.c.l.b16 %v166
  %v646 = vunpack.c.l.b16 %v167
  %v647 = vunpack.c.l.b16 %v168
  %v648 = vunpack.c.l.b16 %v169
  %v649 = vunpack.c.l.b16 %v170
  %v650 = vunpack.c.l.b16 %v171
  %v651 = vunpack.c.l.b16 %v172
  %v652 = vunpack.c.l.b16 %v173
  %v653 = vunpack.c.l.b16 %v174
  %v654 = vunpack.c.l.b16 %v175
  %v655 = vunpack.c.l.b16 %v176
  %v656 = vunpack.c.l.b16 %v177
  %v657 = vunpack.c.l.b16 %v178
  %v658 = vunpack.c.l.b16 %v179
  %v659 = vunpack.c.l.b16 %v180
  %v660 = vunpack.c.l.b16 %v181
  %v661 = vunpack.c.l.b16 %v182
  %v662 = vunpack.c.l.b16 %v183
  %v663 = vunpack.c.l.b16 %v184
  %v664 = vunpack.c.l.b16 %v185
  %v665 = vunpack.c.l.b16 %v186
  %v666 = vunpack.c.l.b16 %v187
  %v667 = vunpack.c.l.b16 %v188
  %v668 = vunpack.c.l.b16 %v189
  %v669 = vunpack.c.l.b16 %v190
  %v670 = vunpack.c.l.b16 %v191
  %v671 = vunpack.c.l.b16 %v192
  %v672 = vunpack.c.l.b16 %v193
  %v673 = vunpack.c.l.b16 %v194
  %v674 = vunpack.c.l.b16 %v195
  %v675 = vunpack.c.l.b16 %v196
  %v676 = vunpack.c.l.b16 %v197
  %v677 = vunpack.c.l.b16 %v198
  %v678 = vpack.c.b16 %v535, %v534
  %v679 = vpack.c.b16 %v537, %v536
  %v680 = vpack.c.b16 %v539, %v538
  %v681 = vpack.c.b16 %v541, %v540
  %v682 = vpack.c.b16 %v543, %v542
  %v683 = vpack.c.b16 %v545, %v544
  %v684 = vpack.c.b16 %v547, %v546
  %v685 = vpack.c.b16 %v549, %v548
  %v686 = vpack.c.b16 %v551, %v550
  %v687 = vpack.c.b16 %v553, %v552
  %v688 = vpack.c.b16 %v555, %v554
  %v689 = vpack.c.b16 %v557, %v556
  %v690 = vpack.c.b16 %v559, %v558
  %v691 = vpack.c.b16 %v561, %v560
  %v692 = vpack.c.b16 %v563, %v562
  %v693 = vpack.c.b16 %v565, %v564
  %v694 = vpack.c.b16 %v567, %v566
  %v695 = vpack.c.b16 %v569, %v568
  %v696 = vpack.c.b16 %v571, %v570
  %v697 = vpack.c.b16 %v573, %v572
  %v698 = vpack.c.b16 %v575, %v574
  %v699 = vpack.c.b16 %v577, %v576
  %v700 = vpack.c.b16 %v579, %v578
  %v701 = vpack.c.b16 %v581, %v580
  %v702 = vpack.c.b16 %v583, %v582
  %v703 = vpack.c.b16 %v585, %v584
  %v704 = vpack.c.b16 %v587, %v586
  %v705 = vpack.c.b16 %v589, %v588
  %v706 = vpack.c.b16 %v591, %v590
  %v707 = vpack.c.b16 %v593, %v592
  %v708 = vpack.c.b16 %v595, %v594
  %v709 = vpack.c.b16 %v597, %v596
  %v710 = vpack.c.b16 %v599, %v598
  %v711 = vpack.c.b16 %v601, %v600
  %v712 = vpack.c.b16 %v603, %v602
  %v713 = vpack.c.b16 %v605, %v604
  %v714 = vpack.c.b16 %v607, %v606
  %v715 = vpack.c.b16 %v609, %v608
  %v716 = vpack.c.b16 %v611, %v610
  %v717 = vpack.c.b16 %v613, %v612
  %v718 = vpack.c.b16 %v615, %v614
  %v719 = vpack.c.b16 %v617, %v616
  %v720 = vpack.c.b16 %v619, %v618
  %v721 = vpack.c.b16 %v621, %v620
  %v722 = vpack.c.b16 %v623, %v622
  %v723 = vpack.c.b16 %v625, %v624
  %v724 = vpack.c.b16 %v627, %v626
  %v725 = vpack.c.b16 %v629, %v628
  %v726 = vpack.c.b16 %v631, %v630
  %v727 = vpack.c.b16 %v633, %v632
  %v728 = vpack.c.b16 %v635, %v634
  %v729 = vpack.c.b16 %v637, %v636
  %v730 = vpack.c.b16 %v639, %v638
  %v731 = vpack.c.b16 %v641, %v640
  %v732 = vpack.c.b16 %v643, %v642
  %v733 = vpack.c.b16 %v645, %v644
  %v734 = vpack.c.b16 %v647, %v646
  %v735 = vpack.c.b16 %v649, %v648
  %v736 = vpack.c.b16 %v651, %v650
  %v737 = vpack.c.b16 %v653, %v652
  %v738 = vpack.c.b16 %v655, %v654
  %v739 = vpack.c.b16 %v657, %v656
  %v740 = vpack.c.b16 %v659, %v658
  %v741 = vpack.c.b16 %v661, %v660
  %v742 = vpack.c.b16 %v663, %v662
  %v743 = vpack.c.b16 %v665, %v664
  %v744 = vpack.c.b16 %v667, %v666
  %v745 = vpack.c.b16 %v669, %v668
  %v746 = vpack.c.b16 %v671, %v670
  %v747 = vpack.c.b16 %v673, %v672
  %v748 = vpack.c.b16 %v675, %v674
  %v749 = vpack.c.b16 %v677, %v676
  %822 = vmatprep.subr.bf16.mxu0 0
  %823 = vmatpush1.bf16.msra.mxu0 %v678
  %824 = vmatprep.subr.bf16.mxu0 0
  %825 = vmatpush1.bf16.msra.mxu0 %v679
  %826 = vmatprep.subr.bf16.mxu0 0
  %827 = vmatpush1.bf16.msra.mxu0 %v680
  %828 = vmatprep.subr.bf16.mxu0 0
  %829 = vmatpush1.bf16.msra.mxu0 %v681
  %830 = vmatprep.subr.bf16.mxu0 0
  %831 = vmatpush1.bf16.msra.mxu0 %v682
  %832 = vmatprep.subr.bf16.mxu0 0
  %833 = vmatpush1.bf16.msra.mxu0 %v683
  %834 = vmatprep.subr.bf16.mxu0 0
  %835 = vmatpush1.bf16.msra.mxu0 %v684
  %836 = vmatprep.subr.bf16.mxu0 0
  %837 = vmatpush1.bf16.msra.mxu0 %v685
  %838 = vmatprep.subr.bf16.mxu0 0
  %839 = vmatpush1.bf16.msra.mxu0 %v686
  %840 = vmatprep.subr.bf16.mxu0 0
  %841 = vmatpush1.bf16.msra.mxu0 %v687
  %842 = vmatprep.subr.bf16.mxu0 0
  %843 = vmatpush1.bf16.msra.mxu0 %v688
  %844 = vmatprep.subr.bf16.mxu0 0
  %845 = vmatpush1.bf16.msra.mxu0 %v689
  %846 = vmatprep.subr.bf16.mxu0 0
  %847 = vmatpush1.bf16.msra.mxu0 %v690
  %848 = vmatprep.subr.bf16.mxu0 0
  %849 = vmatpush1.bf16.msra.mxu0 %v691
  %850 = vmatprep.subr.bf16.mxu0 0
  %851 = vmatpush1.bf16.msra.mxu0 %v692
  %852 = vmatprep.subr.bf16.mxu0 0
  %853 = vmatpush1.bf16.msra.mxu0 %v693
  %854 = vmatprep.mubr.bf16.mxu0 %v319
  %855 = vmatmul.mubr.bf16.gmra.mrb[0].mxu0 %v318
  %v856 = vpop.f32.mrb[0].mxu0
  %v857 = vadd.f32 %v204, %v856
  %v858 = vpop.f32.mrb[0].mxu0
  %v859 = vpop.f32.mrb[0].mxu0
  %v860 = vadd.f32 %v204, %v859
  %v861 = vpop.f32.mrb[0].mxu0
  %862 = vmatprep.mubr.bf16.mxu0 %v328
  %863 = vmatmul.mubr.bf16.gmra.mrb[0].mxu0 %v327
  %v864 = vpop.f32.mrb[0].mxu0
  %v865 = vadd.f32 %v204, %v864
  %v866 = vpop.f32.mrb[0].mxu0
  %v867 = vpop.f32.mrb[0].mxu0
  %v868 = vadd.f32 %v204, %v867
  %v869 = vpop.f32.mrb[0].mxu0
  %870 = vmatprep.mubr.bf16.mxu0 %v337
  %871 = vmatmul.mubr.bf16.gmra.mrb[0].mxu0 %v336
  %v872 = vpop.f32.mrb[0].mxu0
  %v873 = vadd.f32 %v204, %v872
  %v874 = vpop.f32.mrb[0].mxu0
  %v875 = vpop.f32.mrb[0].mxu0
  %v876 = vadd.f32 %v204, %v875
  %v877 = vpop.f32.mrb[0].mxu0
  %878 = vmatprep.mubr.bf16.mxu0 %v346
  %879 = vmatmul.mubr.bf16.gmra.mrb[0].mxu0 %v345
  %v880 = vpop.f32.mrb[0].mxu0
  %v881 = vadd.f32 %v204, %v880
  %v882 = vpop.f32.mrb[0].mxu0
  %v883 = vpop.f32.mrb[0].mxu0
  %v884 = vadd.f32 %v204, %v883
  %v885 = vpop.f32.mrb[0].mxu0
  %886 = vdwg.mxu0
  %887 = vmatprep.subr.bf16.mxu0 0
  %888 = vmatpush1.bf16.msra.mxu0 %v694
  %889 = vmatprep.subr.bf16.mxu0 0
  %890 = vmatpush1.bf16.msra.mxu0 %v695
  %891 = vmatprep.subr.bf16.mxu0 0
  %892 = vmatpush1.bf16.msra.mxu0 %v696
  %893 = vmatprep.subr.bf16.mxu0 0
  %894 = vmatpush1.bf16.msra.mxu0 %v697
  %895 = vmatprep.subr.bf16.mxu0 0
  %896 = vmatpush1.bf16.msra.mxu0 %v698
  %897 = vmatprep.subr.bf16.mxu0 0
  %898 = vmatpush1.bf16.msra.mxu0 %v699
  %899 = vmatprep.subr.bf16.mxu0 0
  %900 = vmatpush1.bf16.msra.mxu0 %v700
  %901 = vmatprep.subr.bf16.mxu0 0
  %902 = vmatpush1.bf16.msra.mxu0 %v701
  %903 = vmatprep.subr.bf16.mxu0 0
  %904 = vmatpush1.bf16.msra.mxu0 %v702
  %905 = vmatprep.subr.bf16.mxu0 0
  %906 = vmatpush1.bf16.msra.mxu0 %v703
  %907 = vmatprep.subr.bf16.mxu0 0
  %908 = vmatpush1.bf16.msra.mxu0 %v704
  %909 = vmatprep.subr.bf16.mxu0 0
  %910 = vmatpush1.bf16.msra.mxu0 %v705
  %911 = vmatprep.subr.bf16.mxu0 0
  %912 = vmatpush1.bf16.msra.mxu0 %v706
  %913 = vmatprep.subr.bf16.mxu0 0
  %914 = vmatpush1.bf16.msra.mxu0 %v707
  %915 = vmatprep.subr.bf16.mxu0 0
  %916 = vmatpush1.bf16.msra.mxu0 %v708
  %917 = vmatprep.subr.bf16.mxu0 0
  %918 = vmatpush1.bf16.msra.mxu0 %v709
  %919 = vmatprep.mubr.bf16.mxu0 %v321
  %920 = vmatmul.mubr.bf16.gmra.mrb[0].mxu0 %v320
  %v921 = vpop.f32.mrb[0].mxu0
  %v922 = vadd.f32 %v857, %v921
  %v923 = vpop.f32.mrb[0].mxu0
  %v924 = vpop.f32.mrb[0].mxu0
  %v925 = vadd.f32 %v860, %v924
  %v926 = vpop.f32.mrb[0].mxu0
  %927 = vmatprep.mubr.bf16.mxu0 %v330
  %928 = vmatmul.mubr.bf16.gmra.mrb[0].mxu0 %v329
  %v929 = vpop.f32.mrb[0].mxu0
  %v930 = vadd.f32 %v865, %v929
  %v931 = vpop.f32.mrb[0].mxu0
  %v932 = vpop.f32.mrb[0].mxu0
  %v933 = vadd.f32 %v868, %v932
  %v934 = vpop.f32.mrb[0].mxu0
  %935 = vmatprep.mubr.bf16.mxu0 %v339
  %936 = vmatmul.mubr.bf16.gmra.mrb[0].mxu0 %v338
  %v937 = vpop.f32.mrb[0].mxu0
  %v938 = vadd.f32 %v873, %v937
  %v939 = vpop.f32.mrb[0].mxu0
  %v940 = vpop.f32.mrb[0].mxu0
  %v941 = vadd.f32 %v876, %v940
  %v942 = vpop.f32.mrb[0].mxu0
  %943 = vmatprep.mubr.bf16.mxu0 %v348
  %944 = vmatmul.mubr.bf16.gmra.mrb[0].mxu0 %v347
  %v945 = vpop.f32.mrb[0].mxu0
  %v946 = vadd.f32 %v881, %v945
  %v947 = vpop.f32.mrb[0].mxu0
  %v948 = vpop.f32.mrb[0].mxu0
  %v949 = vadd.f32 %v884, %v948
  %v950 = vpop.f32.mrb[0].mxu0
  %951 = vdwg.mxu0
  %952 = vmatprep.subr.bf16.mxu0 0
  %953 = vmatpush1.bf16.msra.mxu0 %v710
  %954 = vmatprep.subr.bf16.mxu0 0
  %955 = vmatpush1.bf16.msra.mxu0 %v711
  %956 = vmatprep.subr.bf16.mxu0 0
  %957 = vmatpush1.bf16.msra.mxu0 %v712
  %958 = vmatprep.subr.bf16.mxu0 0
  %959 = vmatpush1.bf16.msra.mxu0 %v713
  %960 = vmatprep.subr.bf16.mxu0 0
  %961 = vmatpush1.bf16.msra.mxu0 %v714
  %962 = vmatprep.subr.bf16.mxu0 0
  %963 = vmatpush1.bf16.msra.mxu0 %v715
  %964 = vmatprep.subr.bf16.mxu0 0
  %965 = vmatpush1.bf16.msra.mxu0 %v716
  %966 = vmatprep.subr.bf16.mxu0 0
  %967 = vmatpush1.bf16.msra.mxu0 %v717
  %968 = vmatprep.subr.bf16.mxu0 0
  %969 = vmatpush1.bf16.msra.mxu0 %v718
  %970 = vmatprep.subr.bf16.mxu0 0
  %971 = vmatpush1.bf16.msra.mxu0 %v719
  %972 = vmatprep.subr.bf16.mxu0 0
  %973 = vmatpush1.bf16.msra.mxu0 %v720
  %974 = vmatprep.subr.bf16.mxu0 0
  %975 = vmatpush1.bf16.msra.mxu0 %v721
  %976 = vmatprep.subr.bf16.mxu0 0
  %977 = vmatpush1.bf16.msra.mxu0 %v722
  %978 = vmatprep.subr.bf16.mxu0 0
  %979 = vmatpush1.bf16.msra.mxu0 %v723
  %980 = vmatprep.subr.bf16.mxu0 0
  %981 = vmatpush1.bf16.msra.mxu0 %v724
  %982 = vmatprep.subr.bf16.mxu0 0
  %983 = vmatpush1.bf16.msra.mxu0 %v725
  %984 = vmatprep.mubr.bf16.mxu0 %v323
  %985 = vmatmul.mubr.bf16.gmra.mrb[0].mxu0 %v322
  %v986 = vpop.f32.mrb[0].mxu0
  %v987 = vadd.f32 %v922, %v986
  %v988 = vpop.f32.mrb[0].mxu0
  %v989 = vpop.f32.mrb[0].mxu0
  %v990 = vadd.f32 %v925, %v989
  %v991 = vpop.f32.mrb[0].mxu0
  %992 = vmatprep.mubr.bf16.mxu0 %v332
  %993 = vmatmul.mubr.bf16.gmra.mrb[0].mxu0 %v331
  %v994 = vpop.f32.mrb[0].mxu0
  %v995 = vadd.f32 %v930, %v994
  %v996 = vpop.f32.mrb[0].mxu0
  %v997 = vpop.f32.mrb[0].mxu0
  %v998 = vadd.f32 %v933, %v997
  %v999 = vpop.f32.mrb[0].mxu0
  %1000 = vmatprep.mubr.bf16.mxu0 %v341
  %1001 = vmatmul.mubr.bf16.gmra.mrb[0].mxu0 %v340
  %v1002 = vpop.f32.mrb[0].mxu0
  %v1003 = vadd.f32 %v938, %v1002
  %v1004 = vpop.f32.mrb[0].mxu0
  %v1005 = vpop.f32.mrb[0].mxu0
  %v1006 = vadd.f32 %v941, %v1005
  %v1007 = vpop.f32.mrb[0].mxu0
  %1008 = vmatprep.mubr.bf16.mxu0 %v350
  %1009 = vmatmul.mubr.bf16.gmra.mrb[0].mxu0 %v349
  %v1010 = vpop.f32.mrb[0].mxu0
  %v1011 = vadd.f32 %v946, %v1010
  %v1012 = vpop.f32.mrb[0].mxu0
  %v1013 = vpop.f32.mrb[0].mxu0
  %v1014 = vadd.f32 %v949, %v1013
  %v1015 = vpop.f32.mrb[0].mxu0
  %1016 = vdwg.mxu0
  %1017 = vmatprep.subr.bf16.mxu0 0
  %1018 = vmatpush1.bf16.msra.mxu0 %v726
  %1019 = vmatprep.subr.bf16.mxu0 0
  %1020 = vmatpush1.bf16.msra.mxu0 %v727
  %1021 = vmatprep.subr.bf16.mxu0 0
  %1022 = vmatpush1.bf16.msra.mxu0 %v728
  %1023 = vmatprep.subr.bf16.mxu0 0
  %1024 = vmatpush1.bf16.msra.mxu0 %v729
  %1025 = vmatprep.subr.bf16.mxu0 0
  %1026 = vmatpush1.bf16.msra.mxu0 %v730
  %1027 = vmatprep.subr.bf16.mxu0 0
  %1028 = vmatpush1.bf16.msra.mxu0 %v731
  %1029 = vmatprep.subr.bf16.mxu0 0
  %1030 = vmatpush1.bf16.msra.mxu0 %v732
  %1031 = vmatprep.subr.bf16.mxu0 0
  %1032 = vmatpush1.bf16.msra.mxu0 %v733
  %1033 = vmatprep.subr.bf16.mxu0 0
  %1034 = vmatpush1.bf16.msra.mxu0 %v734
  %1035 = vmatprep.subr.bf16.mxu0 0
  %1036 = vmatpush1.bf16.msra.mxu0 %v735
  %1037 = vmatprep.subr.bf16.mxu0 0
  %1038 = vmatpush1.bf16.msra.mxu0 %v736
  %1039 = vmatprep.subr.bf16.mxu0 0
  %1040 = vmatpush1.bf16.msra.mxu0 %v737
  %1041 = vmatprep.subr.bf16.mxu0 0
  %1042 = vmatpush1.bf16.msra.mxu0 %v738
  %1043 = vmatprep.subr.bf16.mxu0 0
  %1044 = vmatpush1.bf16.msra.mxu0 %v739
  %1045 = vmatprep.subr.bf16.mxu0 0
  %1046 = vmatpush1.bf16.msra.mxu0 %v740
  %1047 = vmatprep.subr.bf16.mxu0 0
  %1048 = vmatpush1.bf16.msra.mxu0 %v741
  %1049 = vmatprep.mubr.bf16.mxu0 %v325
  %1050 = vmatmul.mubr.bf16.gmra.mrb[0].mxu0 %v324
  %v1051 = vpop.f32.mrb[0].mxu0
  %v1052 = vadd.f32 %v987, %v1051
  %v1053 = vpop.f32.mrb[0].mxu0
  %v1054 = vpop.f32.mrb[0].mxu0
  %v1055 = vadd.f32 %v990, %v1054
  %v1056 = vpop.f32.mrb[0].mxu0
  %1057 = vmatprep.mubr.bf16.mxu0 %v334
  %1058 = vmatmul.mubr.bf16.gmra.mrb[0].mxu0 %v333
  %v1059 = vpop.f32.mrb[0].mxu0
  %v1060 = vadd.f32 %v995, %v1059
  %v1061 = vpop.f32.mrb[0].mxu0
  %v1062 = vpop.f32.mrb[0].mxu0
  %v1063 = vadd.f32 %v998, %v1062
  %v1064 = vpop.f32.mrb[0].mxu0
  %1065 = vmatprep.mubr.bf16.mxu0 %v343
  %1066 = vmatmul.mubr.bf16.gmra.mrb[0].mxu0 %v342
  %v1067 = vpop.f32.mrb[0].mxu0
  %v1068 = vadd.f32 %v1003, %v1067
  %v1069 = vpop.f32.mrb[0].mxu0
  %v1070 = vpop.f32.mrb[0].mxu0
  %v1071 = vadd.f32 %v1006, %v1070
  %v1072 = vpop.f32.mrb[0].mxu0
  %1073 = vmatprep.mubr.bf16.mxu0 %v352
  %1074 = vmatmul.mubr.bf16.gmra.mrb[0].mxu0 %v351
  %v1075 = vpop.f32.mrb[0].mxu0
  %v1076 = vadd.f32 %v1011, %v1075
  %v1077 = vpop.f32.mrb[0].mxu0
  %v1078 = vpop.f32.mrb[0].mxu0
  %v1079 = vadd.f32 %v1014, %v1078
  %v1080 = vpop.f32.mrb[0].mxu0
  %1081 = vdwg.mxu0
  %1082 = vmatprep.subr.bf16.mxu0 0
  %1083 = vmatpush1.bf16.msra.mxu0 %v742
  %1084 = vmatprep.subr.bf16.mxu0 0
  %1085 = vmatpush1.bf16.msra.mxu0 %v743
  %1086 = vmatprep.subr.bf16.mxu0 0
  %1087 = vmatpush1.bf16.msra.mxu0 %v744
  %1088 = vmatprep.subr.bf16.mxu0 0
  %1089 = vmatpush1.bf16.msra.mxu0 %v745
  %1090 = vmatprep.subr.bf16.mxu0 0
  %1091 = vmatpush1.bf16.msra.mxu0 %v746
  %1092 = vmatprep.subr.bf16.mxu0 0
  %1093 = vmatpush1.bf16.msra.mxu0 %v747
  %1094 = vmatprep.subr.bf16.mxu0 0
  %1095 = vmatpush1.bf16.msra.mxu0 %v748
  %1096 = vmatprep.subr.bf16.mxu0 0
  %1097 = vmatpush1.bf16.msra.mxu0 %v749
  %1098 = vmatprep.subr.bf16.mxu0 0
  %1099 = vmatpush1.bf16.msra.mxu0 0
  %1100 = vmatprep.subr.bf16.mxu0 0
  %1101 = vmatpush1.bf16.msra.mxu0 0
  %1102 = vmatprep.subr.bf16.mxu0 0
  %1103 = vmatpush1.bf16.msra.mxu0 0
  %1104 = vmatprep.subr.bf16.mxu0 0
  %1105 = vmatpush1.bf16.msra.mxu0 0
  %1106 = vmatprep.subr.bf16.mxu0 0
  %1107 = vmatpush1.bf16.msra.mxu0 0
  %1108 = vmatprep.subr.bf16.mxu0 0
  %1109 = vmatpush1.bf16.msra.mxu0 0
  %1110 = vmatprep.subr.bf16.mxu0 0
  %1111 = vmatpush1.bf16.msra.mxu0 0
  %1112 = vmatprep.subr.bf16.mxu0 0
  %1113 = vmatpush1.bf16.msra.mxu0 0
  %1114 = vmatprep.mubr.bf16.mxu0 0
  %1115 = vmatmul.mubr.bf16.gmra.mrb[0].mxu0 %v326
  %v1116 = vpop.f32.mrb[0].mxu0
  %v1117 = vadd.f32 %v1052, %v1116
  %v1118 = vpop.f32.mrb[0].mxu0
  %v1119 = vpop.f32.mrb[0].mxu0
  %v1120 = vadd.f32 %v1055, %v1119
  %v1121 = vpop.f32.mrb[0].mxu0
  %1122 = vmatprep.mubr.bf16.mxu0 0
  %1123 = vmatmul.mubr.bf16.gmra.mrb[0].mxu0 %v335
  %v1124 = vpop.f32.mrb[0].mxu0
  %v1125 = vadd.f32 %v1060, %v1124
  %v1126 = vpop.f32.mrb[0].mxu0
  %v1127 = vpop.f32.mrb[0].mxu0
  %v1128 = vadd.f32 %v1063, %v1127
  %v1129 = vpop.f32.mrb[0].mxu0
  %1130 = vmatprep.mubr.bf16.mxu0 0
  %1131 = vmatmul.mubr.bf16.gmra.mrb[0].mxu0 %v344
  %v1132 = vpop.f32.mrb[0].mxu0
  %v1133 = vadd.f32 %v1068, %v1132
  %v1134 = vpop.f32.mrb[0].mxu0
  %v1135 = vpop.f32.mrb[0].mxu0
  %v1136 = vadd.f32 %v1071, %v1135
  %v1137 = vpop.f32.mrb[0].mxu0
  %1138 = vmatprep.mubr.bf16.mxu0 0
  %1139 = vmatmul.mubr.bf16.gmra.mrb[0].mxu0 %v353
  %v1140 = vpop.f32.mrb[0].mxu0
  %v1141 = vadd.f32 %v1076, %v1140
  %v1142 = vpop.f32.mrb[0].mxu0
  %v1143 = vpop.f32.mrb[0].mxu0
  %v1144 = vadd.f32 %v1079, %v1143
  %v1145 = vpop.f32.mrb[0].mxu0
  %1146 = vdwg.mxu0
  %vm1147 = vcmp.ge.f32.partialorder %v1117, 0.0
  %vm1148 = vcmp.ge.f32.partialorder %v1120, 0.0
  %vm1149 = vcmp.ge.f32.partialorder %v1125, 0.0
  %vm1150 = vcmp.ge.f32.partialorder %v1128, 0.0
  %vm1151 = vcmp.ge.f32.partialorder %v1133, 0.0
  %vm1152 = vcmp.ge.f32.partialorder %v1136, 0.0
  %vm1153 = vcmp.ge.f32.partialorder %v1141, 0.0
  %vm1154 = vcmp.ge.f32.partialorder %v1144, 0.0
  %v1155 = vmul.f32 %v1117, 0.2
  %v1156 = vmul.f32 %v1120, 0.2
  %v1157 = vmul.f32 %v1125, 0.2
  %v1158 = vmul.f32 %v1128, 0.2
  %v1159 = vmul.f32 %v1133, 0.2
  %v1160 = vmul.f32 %v1136, 0.2
  %v1161 = vmul.f32 %v1141, 0.2
  %v1162 = vmul.f32 %v1144, 0.2
  %v1163 = vsel %vm1147, %v1117, %v1155
  %v1164 = vsel %vm1148, %v1120, %v1156
  %v1165 = vsel %vm1149, %v1125, %v1157
  %v1166 = vsel %vm1150, %v1128, %v1158
  %v1167 = vsel %vm1151, %v1133, %v1159
  %v1168 = vsel %vm1152, %v1136, %v1160
  %v1169 = vsel %vm1153, %v1141, %v1161
  %v1170 = vsel %vm1154, %v1144, %v1162
  %v1171 = vpack.c.bf16 %v1164, %v1163
  %v1172 = vpack.c.bf16 %v1166, %v1165
  %v1173 = vpack.c.bf16 %v1168, %v1167
  %v1174 = vpack.c.bf16 %v1170, %v1169
  %v1179 = vunpack.c.l.b16 %v1171
  %v1180 = vunpack.c.h.b16 %v1171
  %v1181 = vunpack.c.l.b16 %v1172
  %v1182 = vunpack.c.h.b16 %v1172
  %v1183 = vunpack.c.l.b16 %v1173
  %v1184 = vunpack.c.h.b16 %v1173
  %v1185 = vunpack.c.l.b16 %v1174
  %v1186 = vunpack.c.h.b16 %v1174
  %v1187 = vpack.c.b16 %v1179, %v1179
  %v1188 = vpack.c.b16 %v1180, %v1180
  %v1189 = vpack.c.b16 %v1181, %v1181
  %v1190 = vpack.c.b16 %v1182, %v1182
  %v1191 = vpack.c.b16 %v1183, %v1183
  %v1192 = vpack.c.b16 %v1184, %v1184
  %v1193 = vpack.c.b16 %v1185, %v1185
  %v1194 = vpack.c.b16 %v1186, %v1186
  %1203 = vst [vmem:[%s3] sm:$0xf] %v1187
  %1204 = vst [vmem:[%s3 + $0x4] sm:$0xf] %v1188
  %1205 = vst [vmem:[%s3 + $0x8] sm:$0xf] %v1189
  %1206 = vst [vmem:[%s3 + $0xc] sm:$0xf] %v1190
  %1207 = vst [vmem:[%s3 + $0x10] sm:$0xf] %v1191
  %1208 = vst [vmem:[%s3 + $0x14] sm:$0xf] %v1192
  %1209 = vst [vmem:[%s3 + $0x18] sm:$0xf] %v1193
  %1210 = vst [vmem:[%s3 + $0x1c] sm:$0xf] %v1194
  // Predicated region
  $region14: #{adversarial_loss_forward.13} parent=0 // pred_check
    _
  $region15: #{adversarial_loss_forward.13} parent=0 // pred_check_branch
    %1212 = sbr.rel (0) target = $region17
  $region16: #{adversarial_loss_forward.13} parent=0 // pred_region
    _
  $region17: #{adversarial_loss_forward.13} parent=0 // pred_fallthru
    _
  // Predicated region
  $region18: #{adversarial_loss_forward.13} parent=0 // pred_check
    _
  $region19: #{adversarial_loss_forward.13} parent=0 // pred_check_branch
    %1214 = sbr.rel (0) target = $region21
  $region20: #{adversarial_loss_forward.13} parent=0 // pred_region
    _
  $region21: #{adversarial_loss_forward.13} parent=0 // pred_fallthru
    _

// kernel: adversarial_loss_forward.15
$region0: #{adversarial_loss_forward.15}
  #allocation0 [shape = 'u32[]', space=smem, size = 0x4, offset = 0x4, fixed_abs, tag = 'smem constant byte address 0x4 - core index']
  #allocation1 [shape = 'u32[144,128]{1,0:T(1,128)}', space=vmem, size = 0x12000, scoped, tag = 'internal scratch']
  %s0 = inlined_call_operand.vmem [shape: bf16[16,1152], index: 0, kind: input, shape index: {}]
  %s1 = inlined_call_operand.vmem [shape: bf16[1152,128], index: 1, kind: input, shape index: {}]
  %s2 = inlined_call_operand.vmem [shape: f32[1,128], index: 2, kind: input, shape index: {}]
  %s3 = inlined_call_operand.vmem [shape: bf16[16,128], index: 3, kind: output, shape index: {}]
  %s4 = sld [smem:[#allocation0]]
  $region22: #{adversarial_loss_forward.15} parent=0
    _
  %s6 = ssub.s32 1, %s4
  %s7 = scalar_select 0, %s6, %s4
  // Predicated region
  $region2: #{adversarial_loss_forward.15} parent=0 // pred_check
    _
  $region3: #{adversarial_loss_forward.15} parent=0 // pred_check_branch
    %9 = sbr.rel (0) target = $region5
  $region4: #{adversarial_loss_forward.15} parent=0 // pred_region
    _
  $region5: #{adversarial_loss_forward.15} parent=0 // pred_fallthru
    _
  // Predicated region
  $region6: #{adversarial_loss_forward.15} parent=0 // pred_check
    _
  $region7: #{adversarial_loss_forward.15} parent=0 // pred_check_branch
    %11 = sbr.rel (0) target = $region9
  $region8: #{adversarial_loss_forward.15} parent=0 // pred_region
    _
  $region9: #{adversarial_loss_forward.15} parent=0 // pred_fallthru
    _
  // Predicated region
  $region10: #{adversarial_loss_forward.15} parent=0 // pred_check
    _
  $region11: #{adversarial_loss_forward.15} parent=0 // pred_check_branch
    %13 = sbr.rel (0) target = $region13
  $region12: #{adversarial_loss_forward.15} parent=0 // pred_region
    _
  $region13: #{adversarial_loss_forward.15} parent=0 // pred_fallthru
    _
  %v15 = vld [vmem:[%s0] sm:$0xff]
  %v16 = vld [vmem:[%s0 + $0x8] sm:$0xff]
  %v17 = vld [vmem:[%s0 + $0x10] sm:$0xff]
  %v18 = vld [vmem:[%s0 + $0x18] sm:$0xff]
  %v19 = vld [vmem:[%s0 + $0x20] sm:$0xf]
  %v20 = vld [vmem:[%s0 + $0x24] sm:$0xff]
  %v21 = vld [vmem:[%s0 + $0x2c] sm:$0xff]
  %v22 = vld [vmem:[%s0 + $0x34] sm:$0xff]
  %v23 = vld [vmem:[%s0 + $0x3c] sm:$0xff]
  %v24 = vld [vmem:[%s0 + $0x44] sm:$0xf]
  %v25 = vld [vmem:[%s1] sm:$0xf]
  %v26 = vld [vmem:[%s1 + $0x4] sm:$0xf]
  %v27 = vld [vmem:[%s1 + $0x8] sm:$0xf]
  %v28 = vld [vmem:[%s1 + $0xc] sm:$0xf]
  %v29 = vld [vmem:[%s1 + $0x10] sm:$0xf]
  %v30 = vld [vmem:[%s1 + $0x14] sm:$0xf]
  %v31 = vld [vmem:[%s1 + $0x18] sm:$0xf]
  %v32 = vld [vmem:[%s1 + $0x1c] sm:$0xf]
  %v33 = vld [vmem:[%s1 + $0x20] sm:$0xf]
  %v34 = vld [vmem:[%s1 + $0x24] sm:$0xf]
  %v35 = vld [vmem:[%s1 + $0x28] sm:$0xf]
  %v36 = vld [vmem:[%s1 + $0x2c] sm:$0xf]
  %v37 = vld [vmem:[%s1 + $0x30] sm:$0xf]
  %v38 = vld [vmem:[%s1 + $0x34] sm:$0xf]
  %v39 = vld [vmem:[%s1 + $0x38] sm:$0xf]
  %v40 = vld [vmem:[%s1 + $0x3c] sm:$0xf]
  %v41 = vld [vmem:[%s1 + $0x40] sm:$0xf]
  %v42 = vld [vmem:[%s1 + $0x44] sm:$0xf]
  %v43 = vld [vmem:[%s1 + $0x48] sm:$0xf]
  %v44 = vld [vmem:[%s1 + $0x4c] sm:$0xf]
  %v45 = vld [vmem:[%s1 + $0x50] sm:$0xf]
  %v46 = vld [vmem:[%s1 + $0x54] sm:$0xf]
  %v47 = vld [vmem:[%s1 + $0x58] sm:$0xf]
  %v48 = vld [vmem:[%s1 + $0x5c] sm:$0xf]
  %v49 = vld [vmem:[%s1 + $0x60] sm:$0xf]
  %v50 = vld [vmem:[%s1 + $0x64] sm:$0xf]
  %v51 = vld [vmem:[%s1 + $0x68] sm:$0xf]
  %v52 = vld [vmem:[%s1 + $0x6c] sm:$0xf]
  %v53 = vld [vmem:[%s1 + $0x70] sm:$0xf]
  %v54 = vld [vmem:[%s1 + $0x74] sm:$0xf]
  %v55 = vld [vmem:[%s1 + $0x78] sm:$0xf]
  %v56 = vld [vmem:[%s1 + $0x7c] sm:$0xf]
  %v57 = vld [vmem:[%s1 + $0x80] sm:$0xf]
  %v58 = vld [vmem:[%s1 + $0x84] sm:$0xf]
  %v59 = vld [vmem:[%s1 + $0x88] sm:$0xf]
  %v60 = vld [vmem:[%s1 + $0x8c] sm:$0xf]
  %v61 = vld [vmem:[%s1 + $0x90] sm:$0xf]
  %v62 = vld [vmem:[%s1 + $0x94] sm:$0xf]
  %v63 = vld [vmem:[%s1 + $0x98] sm:$0xf]
  %v64 = vld [vmem:[%s1 + $0x9c] sm:$0xf]
  %v65 = vld [vmem:[%s1 + $0xa0] sm:$0xf]
  %v66 = vld [vmem:[%s1 + $0xa4] sm:$0xf]
  %v67 = vld [vmem:[%s1 + $0xa8] sm:$0xf]
  %v68 = vld [vmem:[%s1 + $0xac] sm:$0xf]
  %v69 = vld [vmem:[%s1 + $0xb0] sm:$0xf]
  %v70 = vld [vmem:[%s1 + $0xb4] sm:$0xf]
  %v71 = vld [vmem:[%s1 + $0xb8] sm:$0xf]
  %v72 = vld [vmem:[%s1 + $0xbc] sm:$0xf]
  %v73 = vld [vmem:[%s1 + $0xc0] sm:$0xf]
  %v74 = vld [vmem:[%s1 + $0xc4] sm:$0xf]
  %v75 = vld [vmem:[%s1 + $0xc8] sm:$0xf]
  %v76 = vld [vmem:[%s1 + $0xcc] sm:$0xf]
  %v77 = vld [vmem:[%s1 + $0xd0] sm:$0xf]
  %v78 = vld [vmem:[%s1 + $0xd4] sm:$0xf]
  %v79 = vld [vmem:[%s1 + $0xd8] sm:$0xf]
  %v80 = vld [vmem:[%s1 + $0xdc] sm:$0xf]
  %v81 = vld [vmem:[%s1 + $0xe0] sm:$0xf]
  %v82 = vld [vmem:[%s1 + $0xe4] sm:$0xf]
  %v83 = vld [vmem:[%s1 + $0xe8] sm:$0xf]
  %v84 = vld [vmem:[%s1 + $0xec] sm:$0xf]
  %v85 = vld [vmem:[%s1 + $0xf0] sm:$0xf]
  %v86 = vld [vmem:[%s1 + $0xf4] sm:$0xf]
  %v87 = vld [vmem:[%s1 + $0xf8] sm:$0xf]
  %v88 = vld [vmem:[%s1 + $0xfc] sm:$0xf]
  %v89 = vld [vmem:[%s1 + $0x100] sm:$0xf]
  %v90 = vld [vmem:[%s1 + $0x104] sm:$0xf]
  %v91 = vld [vmem:[%s1 + $0x108] sm:$0xf]
  %v92 = vld [vmem:[%s1 + $0x10c] sm:$0xf]
  %v93 = vld [vmem:[%s1 + $0x110] sm:$0xf]
  %v94 = vld [vmem:[%s1 + $0x114] sm:$0xf]
  %v95 = vld [vmem:[%s1 + $0x118] sm:$0xf]
  %v96 = vld [vmem:[%s1 + $0x11c] sm:$0xf]
  %v97 = vld [vmem:[%s1 + $0x120] sm:$0xf]
  %v98 = vld [vmem:[%s1 + $0x124] sm:$0xf]
  %v99 = vld [vmem:[%s1 + $0x128] sm:$0xf]
  %v100 = vld [vmem:[%s1 + $0x12c] sm:$0xf]
  %v101 = vld [vmem:[%s1 + $0x130] sm:$0xf]
  %v102 = vld [vmem:[%s1 + $0x134] sm:$0xf]
  %v103 = vld [vmem:[%s1 + $0x138] sm:$0xf]
  %v104 = vld [vmem:[%s1 + $0x13c] sm:$0xf]
  %v105 = vld [vmem:[%s1 + $0x140] sm:$0xf]
  %v106 = vld [vmem:[%s1 + $0x144] sm:$0xf]
  %v107 = vld [vmem:[%s1 + $0x148] sm:$0xf]
  %v108 = vld [vmem:[%s1 + $0x14c] sm:$0xf]
  %v109 = vld [vmem:[%s1 + $0x150] sm:$0xf]
  %v110 = vld [vmem:[%s1 + $0x154] sm:$0xf]
  %v111 = vld [vmem:[%s1 + $0x158] sm:$0xf]
  %v112 = vld [vmem:[%s1 + $0x15c] sm:$0xf]
  %v113 = vld [vmem:[%s1 + $0x160] sm:$0xf]
  %v114 = vld [vmem:[%s1 + $0x164] sm:$0xf]
  %v115 = vld [vmem:[%s1 + $0x168] sm:$0xf]
  %v116 = vld [vmem:[%s1 + $0x16c] sm:$0xf]
  %v117 = vld [vmem:[%s1 + $0x170] sm:$0xf]
  %v118 = vld [vmem:[%s1 + $0x174] sm:$0xf]
  %v119 = vld [vmem:[%s1 + $0x178] sm:$0xf]
  %v120 = vld [vmem:[%s1 + $0x17c] sm:$0xf]
  %v121 = vld [vmem:[%s1 + $0x180] sm:$0xf]
  %v122 = vld [vmem:[%s1 + $0x184] sm:$0xf]
  %v123 = vld [vmem:[%s1 + $0x188] sm:$0xf]
  %v124 = vld [vmem:[%s1 + $0x18c] sm:$0xf]
  %v125 = vld [vmem:[%s1 + $0x190] sm:$0xf]
  %v126 = vld [vmem:[%s1 + $0x194] sm:$0xf]
  %v127 = vld [vmem:[%s1 + $0x198] sm:$0xf]
  %v128 = vld [vmem:[%s1 + $0x19c] sm:$0xf]
  %v129 = vld [vmem:[%s1 + $0x1a0] sm:$0xf]
  %v130 = vld [vmem:[%s1 + $0x1a4] sm:$0xf]
  %v131 = vld [vmem:[%s1 + $0x1a8] sm:$0xf]
  %v132 = vld [vmem:[%s1 + $0x1ac] sm:$0xf]
  %v133 = vld [vmem:[%s1 + $0x1b0] sm:$0xf]
  %v134 = vld [vmem:[%s1 + $0x1b4] sm:$0xf]
  %v135 = vld [vmem:[%s1 + $0x1b8] sm:$0xf]
  %v136 = vld [vmem:[%s1 + $0x1bc] sm:$0xf]
  %v137 = vld [vmem:[%s1 + $0x1c0] sm:$0xf]
  %v138 = vld [vmem:[%s1 + $0x1c4] sm:$0xf]
  %v139 = vld [vmem:[%s1 + $0x1c8] sm:$0xf]
  %v140 = vld [vmem:[%s1 + $0x1cc] sm:$0xf]
  %v141 = vld [vmem:[%s1 + $0x1d0] sm:$0xf]
  %v142 = vld [vmem:[%s1 + $0x1d4] sm:$0xf]
  %v143 = vld [vmem:[%s1 + $0x1d8] sm:$0xf]
  %v144 = vld [vmem:[%s1 + $0x1dc] sm:$0xf]
  %v145 = vld [vmem:[%s1 + $0x1e0] sm:$0xf]
  %v146 = vld [vmem:[%s1 + $0x1e4] sm:$0xf]
  %v147 = vld [vmem:[%s1 + $0x1e8] sm:$0xf]
  %v148 = vld [vmem:[%s1 + $0x1ec] sm:$0xf]
  %v149 = vld [vmem:[%s1 + $0x1f0] sm:$0xf]
  %v150 = vld [vmem:[%s1 + $0x1f4] sm:$0xf]
  %v151 = vld [vmem:[%s1 + $0x1f8] sm:$0xf]
  %v152 = vld [vmem:[%s1 + $0x1fc] sm:$0xf]
  %v153 = vld [vmem:[%s1 + $0x200] sm:$0xf]
  %v154 = vld [vmem:[%s1 + $0x204] sm:$0xf]
  %v155 = vld [vmem:[%s1 + $0x208] sm:$0xf]
  %v156 = vld [vmem:[%s1 + $0x20c] sm:$0xf]
  %v157 = vld [vmem:[%s1 + $0x210] sm:$0xf]
  %v158 = vld [vmem:[%s1 + $0x214] sm:$0xf]
  %v159 = vld [vmem:[%s1 + $0x218] sm:$0xf]
  %v160 = vld [vmem:[%s1 + $0x21c] sm:$0xf]
  %v161 = vld [vmem:[%s1 + $0x220] sm:$0xf]
  %v162 = vld [vmem:[%s1 + $0x224] sm:$0xf]
  %v163 = vld [vmem:[%s1 + $0x228] sm:$0xf]
  %v164 = vld [vmem:[%s1 + $0x22c] sm:$0xf]
  %v165 = vld [vmem:[%s1 + $0x230] sm:$0xf]
  %v166 = vld [vmem:[%s1 + $0x234] sm:$0xf]
  %v167 = vld [vmem:[%s1 + $0x238] sm:$0xf]
  %v168 = vld [vmem:[%s1 + $0x23c] sm:$0xf]
  %v169 = vld [vmem:[%s2] sm:$0x1]
  %v171 = vlaneseq
  %v172 = vshrl.u32 %v171, 7
  %v173 = vsub.s32 0, %v172
  %v174 = vrot.slane %v169, %v173
  %v186 = vunpack.c.l.b16 %v15
  %v187 = vunpack.c.h.b16 %v15
  %v188 = vunpack.c.l.b16 %v16
  %v189 = vunpack.c.h.b16 %v16
  %v190 = vunpack.c.l.b16 %v17
  %v191 = vunpack.c.h.b16 %v17
  %v192 = vunpack.c.l.b16 %v18
  %v193 = vunpack.c.h.b16 %v18
  %v194 = vunpack.c.l.b16 %v19
  %v195 = vunpack.c.l.b16 %v20
  %v196 = vunpack.c.h.b16 %v20
  %v197 = vunpack.c.l.b16 %v21
  %v198 = vunpack.c.h.b16 %v21
  %v199 = vunpack.c.l.b16 %v22
  %v200 = vunpack.c.h.b16 %v22
  %v201 = vunpack.c.l.b16 %v23
  %v202 = vunpack.c.h.b16 %v23
  %v203 = vunpack.c.l.b16 %v24
  %v204 = vpack.c.b16 %v195, %v186
  %v205 = vpack.c.b16 %v196, %v187
  %v206 = vpack.c.b16 %v197, %v188
  %v207 = vpack.c.b16 %v198, %v189
  %v208 = vpack.c.b16 %v199, %v190
  %v209 = vpack.c.b16 %v200, %v191
  %v210 = vpack.c.b16 %v201, %v192
  %v211 = vpack.c.b16 %v202, %v193
  %v212 = vpack.c.b16 %v203, %v194
  %v366 = vunpack.c.l.b16 %v25
  %v367 = vunpack.c.l.b16 %v26
  %v368 = vunpack.c.l.b16 %v27
  %v369 = vunpack.c.l.b16 %v28
  %v370 = vunpack.c.l.b16 %v29
  %v371 = vunpack.c.l.b16 %v30
  %v372 = vunpack.c.l.b16 %v31
  %v373 = vunpack.c.l.b16 %v32
  %v374 = vunpack.c.l.b16 %v33
  %v375 = vunpack.c.l.b16 %v34
  %v376 = vunpack.c.l.b16 %v35
  %v377 = vunpack.c.l.b16 %v36
  %v378 = vunpack.c.l.b16 %v37
  %v379 = vunpack.c.l.b16 %v38
  %v380 = vunpack.c.l.b16 %v39
  %v381 = vunpack.c.l.b16 %v40
  %v382 = vunpack.c.l.b16 %v41
  %v383 = vunpack.c.l.b16 %v42
  %v384 = vunpack.c.l.b16 %v43
  %v385 = vunpack.c.l.b16 %v44
  %v386 = vunpack.c.l.b16 %v45
  %v387 = vunpack.c.l.b16 %v46
  %v388 = vunpack.c.l.b16 %v47
  %v389 = vunpack.c.l.b16 %v48
  %v390 = vunpack.c.l.b16 %v49
  %v391 = vunpack.c.l.b16 %v50
  %v392 = vunpack.c.l.b16 %v51
  %v393 = vunpack.c.l.b16 %v52
  %v394 = vunpack.c.l.b16 %v53
  %v395 = vunpack.c.l.b16 %v54
  %v396 = vunpack.c.l.b16 %v55
  %v397 = vunpack.c.l.b16 %v56
  %v398 = vunpack.c.l.b16 %v57
  %v399 = vunpack.c.l.b16 %v58
  %v400 = vunpack.c.l.b16 %v59
  %v401 = vunpack.c.l.b16 %v60
  %v402 = vunpack.c.l.b16 %v61
  %v403 = vunpack.c.l.b16 %v62
  %v404 = vunpack.c.l.b16 %v63
  %v405 = vunpack.c.l.b16 %v64
  %v406 = vunpack.c.l.b16 %v65
  %v407 = vunpack.c.l.b16 %v66
  %v408 = vunpack.c.l.b16 %v67
  %v409 = vunpack.c.l.b16 %v68
  %v410 = vunpack.c.l.b16 %v69
  %v411 = vunpack.c.l.b16 %v70
  %v412 = vunpack.c.l.b16 %v71
  %v413 = vunpack.c.l.b16 %v72
  %v414 = vunpack.c.l.b16 %v73
  %v415 = vunpack.c.l.b16 %v74
  %v416 = vunpack.c.l.b16 %v75
  %v417 = vunpack.c.l.b16 %v76
  %v418 = vunpack.c.l.b16 %v77
  %v419 = vunpack.c.l.b16 %v78
  %v420 = vunpack.c.l.b16 %v79
  %v421 = vunpack.c.l.b16 %v80
  %v422 = vunpack.c.l.b16 %v81
  %v423 = vunpack.c.l.b16 %v82
  %v424 = vunpack.c.l.b16 %v83
  %v425 = vunpack.c.l.b16 %v84
  %v426 = vunpack.c.l.b16 %v85
  %v427 = vunpack.c.l.b16 %v86
  %v428 = vunpack.c.l.b16 %v87
  %v429 = vunpack.c.l.b16 %v88
  %v430 = vunpack.c.l.b16 %v89
  %v431 = vunpack.c.l.b16 %v90
  %v432 = vunpack.c.l.b16 %v91
  %v433 = vunpack.c.l.b16 %v92
  %v434 = vunpack.c.l.b16 %v93
  %v435 = vunpack.c.l.b16 %v94
  %v436 = vunpack.c.l.b16 %v95
  %v437 = vunpack.c.l.b16 %v96
  %v438 = vunpack.c.l.b16 %v97
  %v439 = vunpack.c.l.b16 %v98
  %v440 = vunpack.c.l.b16 %v99
  %v441 = vunpack.c.l.b16 %v100
  %v442 = vunpack.c.l.b16 %v101
  %v443 = vunpack.c.l.b16 %v102
  %v444 = vunpack.c.l.b16 %v103
  %v445 = vunpack.c.l.b16 %v104
  %v446 = vunpack.c.l.b16 %v105
  %v447 = vunpack.c.l.b16 %v106
  %v448 = vunpack.c.l.b16 %v107
  %v449 = vunpack.c.l.b16 %v108
  %v450 = vunpack.c.l.b16 %v109
  %v451 = vunpack.c.l.b16 %v110
  %v452 = vunpack.c.l.b16 %v111
  %v453 = vunpack.c.l.b16 %v112
  %v454 = vunpack.c.l.b16 %v113
  %v455 = vunpack.c.l.b16 %v114
  %v456 = vunpack.c.l.b16 %v115
  %v457 = vunpack.c.l.b16 %v116
  %v458 = vunpack.c.l.b16 %v117
  %v459 = vunpack.c.l.b16 %v118
  %v460 = vunpack.c.l.b16 %v119
  %v461 = vunpack.c.l.b16 %v120
  %v462 = vunpack.c.l.b16 %v121
  %v463 = vunpack.c.l.b16 %v122
  %v464 = vunpack.c.l.b16 %v123
  %v465 = vunpack.c.l.b16 %v124
  %v466 = vunpack.c.l.b16 %v125
  %v467 = vunpack.c.l.b16 %v126
  %v468 = vunpack.c.l.b16 %v127
  %v469 = vunpack.c.l.b16 %v128
  %v470 = vunpack.c.l.b16 %v129
  %v471 = vunpack.c.l.b16 %v130
  %v472 = vunpack.c.l.b16 %v131
  %v473 = vunpack.c.l.b16 %v132
  %v474 = vunpack.c.l.b16 %v133
  %v475 = vunpack.c.l.b16 %v134
  %v476 = vunpack.c.l.b16 %v135
  %v477 = vunpack.c.l.b16 %v136
  %v478 = vunpack.c.l.b16 %v137
  %v479 = vunpack.c.l.b16 %v138
  %v480 = vunpack.c.l.b16 %v139
  %v481 = vunpack.c.l.b16 %v140
  %v482 = vunpack.c.l.b16 %v141
  %v483 = vunpack.c.l.b16 %v142
  %v484 = vunpack.c.l.b16 %v143
  %v485 = vunpack.c.l.b16 %v144
  %v486 = vunpack.c.l.b16 %v145
  %v487 = vunpack.c.l.b16 %v146
  %v488 = vunpack.c.l.b16 %v147
  %v489 = vunpack.c.l.b16 %v148
  %v490 = vunpack.c.l.b16 %v149
  %v491 = vunpack.c.l.b16 %v150
  %v492 = vunpack.c.l.b16 %v151
  %v493 = vunpack.c.l.b16 %v152
  %v494 = vunpack.c.l.b16 %v153
  %v495 = vunpack.c.l.b16 %v154
  %v496 = vunpack.c.l.b16 %v155
  %v497 = vunpack.c.l.b16 %v156
  %v498 = vunpack.c.l.b16 %v157
  %v499 = vunpack.c.l.b16 %v158
  %v500 = vunpack.c.l.b16 %v159
  %v501 = vunpack.c.l.b16 %v160
  %v502 = vunpack.c.l.b16 %v161
  %v503 = vunpack.c.l.b16 %v162
  %v504 = vunpack.c.l.b16 %v163
  %v505 = vunpack.c.l.b16 %v164
  %v506 = vunpack.c.l.b16 %v165
  %v507 = vunpack.c.l.b16 %v166
  %v508 = vunpack.c.l.b16 %v167
  %v509 = vunpack.c.l.b16 %v168
  %v510 = vpack.c.b16 %v367, %v366
  %v511 = vpack.c.b16 %v369, %v368
  %v512 = vpack.c.b16 %v371, %v370
  %v513 = vpack.c.b16 %v373, %v372
  %v514 = vpack.c.b16 %v375, %v374
  %v515 = vpack.c.b16 %v377, %v376
  %v516 = vpack.c.b16 %v379, %v378
  %v517 = vpack.c.b16 %v381, %v380
  %v518 = vpack.c.b16 %v383, %v382
  %v519 = vpack.c.b16 %v385, %v384
  %v520 = vpack.c.b16 %v387, %v386
  %v521 = vpack.c.b16 %v389, %v388
  %v522 = vpack.c.b16 %v391, %v390
  %v523 = vpack.c.b16 %v393, %v392
  %v524 = vpack.c.b16 %v395, %v394
  %v525 = vpack.c.b16 %v397, %v396
  %v526 = vpack.c.b16 %v399, %v398
  %v527 = vpack.c.b16 %v401, %v400
  %v528 = vpack.c.b16 %v403, %v402
  %v529 = vpack.c.b16 %v405, %v404
  %v530 = vpack.c.b16 %v407, %v406
  %v531 = vpack.c.b16 %v409, %v408
  %v532 = vpack.c.b16 %v411, %v410
  %v533 = vpack.c.b16 %v413, %v412
  %v534 = vpack.c.b16 %v415, %v414
  %v535 = vpack.c.b16 %v417, %v416
  %v536 = vpack.c.b16 %v419, %v418
  %v537 = vpack.c.b16 %v421, %v420
  %v538 = vpack.c.b16 %v423, %v422
  %v539 = vpack.c.b16 %v425, %v424
  %v540 = vpack.c.b16 %v427, %v426
  %v541 = vpack.c.b16 %v429, %v428
  %v542 = vpack.c.b16 %v431, %v430
  %v543 = vpack.c.b16 %v433, %v432
  %v544 = vpack.c.b16 %v435, %v434
  %v545 = vpack.c.b16 %v437, %v436
  %v546 = vpack.c.b16 %v439, %v438
  %v547 = vpack.c.b16 %v441, %v440
  %v548 = vpack.c.b16 %v443, %v442
  %v549 = vpack.c.b16 %v445, %v444
  %v550 = vpack.c.b16 %v447, %v446
  %v551 = vpack.c.b16 %v449, %v448
  %v552 = vpack.c.b16 %v451, %v450
  %v553 = vpack.c.b16 %v453, %v452
  %v554 = vpack.c.b16 %v455, %v454
  %v555 = vpack.c.b16 %v457, %v456
  %v556 = vpack.c.b16 %v459, %v458
  %v557 = vpack.c.b16 %v461, %v460
  %v558 = vpack.c.b16 %v463, %v462
  %v559 = vpack.c.b16 %v465, %v464
  %v560 = vpack.c.b16 %v467, %v466
  %v561 = vpack.c.b16 %v469, %v468
  %v562 = vpack.c.b16 %v471, %v470
  %v563 = vpack.c.b16 %v473, %v472
  %v564 = vpack.c.b16 %v475, %v474
  %v565 = vpack.c.b16 %v477, %v476
  %v566 = vpack.c.b16 %v479, %v478
  %v567 = vpack.c.b16 %v481, %v480
  %v568 = vpack.c.b16 %v483, %v482
  %v569 = vpack.c.b16 %v485, %v484
  %v570 = vpack.c.b16 %v487, %v486
  %v571 = vpack.c.b16 %v489, %v488
  %v572 = vpack.c.b16 %v491, %v490
  %v573 = vpack.c.b16 %v493, %v492
  %v574 = vpack.c.b16 %v495, %v494
  %v575 = vpack.c.b16 %v497, %v496
  %v576 = vpack.c.b16 %v499, %v498
  %v577 = vpack.c.b16 %v501, %v500
  %v578 = vpack.c.b16 %v503, %v502
  %v579 = vpack.c.b16 %v505, %v504
  %v580 = vpack.c.b16 %v507, %v506
  %v581 = vpack.c.b16 %v509, %v508
  %654 = vmatprep.subr.bf16.mxu0 0
  %655 = vmatpush1.bf16.msra.mxu0 %v510
  %656 = vmatprep.subr.bf16.mxu0 0
  %657 = vmatpush1.bf16.msra.mxu0 %v511
  %658 = vmatprep.subr.bf16.mxu0 0
  %659 = vmatpush1.bf16.msra.mxu0 %v512
  %660 = vmatprep.subr.bf16.mxu0 0
  %661 = vmatpush1.bf16.msra.mxu0 %v513
  %662 = vmatprep.subr.bf16.mxu0 0
  %663 = vmatpush1.bf16.msra.mxu0 %v514
  %664 = vmatprep.subr.bf16.mxu0 0
  %665 = vmatpush1.bf16.msra.mxu0 %v515
  %666 = vmatprep.subr.bf16.mxu0 0
  %667 = vmatpush1.bf16.msra.mxu0 %v516
  %668 = vmatprep.subr.bf16.mxu0 0
  %669 = vmatpush1.bf16.msra.mxu0 %v517
  %670 = vmatprep.subr.bf16.mxu0 0
  %671 = vmatpush1.bf16.msra.mxu0 %v518
  %672 = vmatprep.subr.bf16.mxu0 0
  %673 = vmatpush1.bf16.msra.mxu0 %v519
  %674 = vmatprep.subr.bf16.mxu0 0
  %675 = vmatpush1.bf16.msra.mxu0 %v520
  %676 = vmatprep.subr.bf16.mxu0 0
  %677 = vmatpush1.bf16.msra.mxu0 %v521
  %678 = vmatprep.subr.bf16.mxu0 0
  %679 = vmatpush1.bf16.msra.mxu0 %v522
  %680 = vmatprep.subr.bf16.mxu0 0
  %681 = vmatpush1.bf16.msra.mxu0 %v523
  %682 = vmatprep.subr.bf16.mxu0 0
  %683 = vmatpush1.bf16.msra.mxu0 %v524
  %684 = vmatprep.subr.bf16.mxu0 0
  %685 = vmatpush1.bf16.msra.mxu0 %v525
  %686 = vmatprep.mubr.bf16.mxu0 %v205
  %687 = vmatmul.mubr.bf16.gmra.mrb[0].mxu0 %v204
  %v688 = vpop.f32.mrb[0].mxu0
  %v689 = vadd.f32 %v174, %v688
  %v690 = vpop.f32.mrb[0].mxu0
  %v691 = vpop.f32.mrb[0].mxu0
  %v692 = vadd.f32 %v174, %v691
  %v693 = vpop.f32.mrb[0].mxu0
  %694 = vdwg.mxu0
  %695 = vmatprep.subr.bf16.mxu0 0
  %696 = vmatpush1.bf16.msra.mxu0 %v526
  %697 = vmatprep.subr.bf16.mxu0 0
  %698 = vmatpush1.bf16.msra.mxu0 %v527
  %699 = vmatprep.subr.bf16.mxu0 0
  %700 = vmatpush1.bf16.msra.mxu0 %v528
  %701 = vmatprep.subr.bf16.mxu0 0
  %702 = vmatpush1.bf16.msra.mxu0 %v529
  %703 = vmatprep.subr.bf16.mxu0 0
  %704 = vmatpush1.bf16.msra.mxu0 %v530
  %705 = vmatprep.subr.bf16.mxu0 0
  %706 = vmatpush1.bf16.msra.mxu0 %v531
  %707 = vmatprep.subr.bf16.mxu0 0
  %708 = vmatpush1.bf16.msra.mxu0 %v532
  %709 = vmatprep.subr.bf16.mxu0 0
  %710 = vmatpush1.bf16.msra.mxu0 %v533
  %711 = vmatprep.subr.bf16.mxu0 0
  %712 = vmatpush1.bf16.msra.mxu0 %v534
  %713 = vmatprep.subr.bf16.mxu0 0
  %714 = vmatpush1.bf16.msra.mxu0 %v535
  %715 = vmatprep.subr.bf16.mxu0 0
  %716 = vmatpush1.bf16.msra.mxu0 %v536
  %717 = vmatprep.subr.bf16.mxu0 0
  %718 = vmatpush1.bf16.msra.mxu0 %v537
  %719 = vmatprep.subr.bf16.mxu0 0
  %720 = vmatpush1.bf16.msra.mxu0 %v538
  %721 = vmatprep.subr.bf16.mxu0 0
  %722 = vmatpush1.bf16.msra.mxu0 %v539
  %723 = vmatprep.subr.bf16.mxu0 0
  %724 = vmatpush1.bf16.msra.mxu0 %v540
  %725 = vmatprep.subr.bf16.mxu0 0
  %726 = vmatpush1.bf16.msra.mxu0 %v541
  %727 = vmatprep.mubr.bf16.mxu0 %v207
  %728 = vmatmul.mubr.bf16.gmra.mrb[0].mxu0 %v206
  %v729 = vpop.f32.mrb[0].mxu0
  %v730 = vadd.f32 %v689, %v729
  %v731 = vpop.f32.mrb[0].mxu0
  %v732 = vpop.f32.mrb[0].mxu0
  %v733 = vadd.f32 %v692, %v732
  %v734 = vpop.f32.mrb[0].mxu0
  %735 = vdwg.mxu0
  %736 = vmatprep.subr.bf16.mxu0 0
  %737 = vmatpush1.bf16.msra.mxu0 %v542
  %738 = vmatprep.subr.bf16.mxu0 0
  %739 = vmatpush1.bf16.msra.mxu0 %v543
  %740 = vmatprep.subr.bf16.mxu0 0
  %741 = vmatpush1.bf16.msra.mxu0 %v544
  %742 = vmatprep.subr.bf16.mxu0 0
  %743 = vmatpush1.bf16.msra.mxu0 %v545
  %744 = vmatprep.subr.bf16.mxu0 0
  %745 = vmatpush1.bf16.msra.mxu0 %v546
  %746 = vmatprep.subr.bf16.mxu0 0
  %747 = vmatpush1.bf16.msra.mxu0 %v547
  %748 = vmatprep.subr.bf16.mxu0 0
  %749 = vmatpush1.bf16.msra.mxu0 %v548
  %750 = vmatprep.subr.bf16.mxu0 0
  %751 = vmatpush1.bf16.msra.mxu0 %v549
  %752 = vmatprep.subr.bf16.mxu0 0
  %753 = vmatpush1.bf16.msra.mxu0 %v550
  %754 = vmatprep.subr.bf16.mxu0 0
  %755 = vmatpush1.bf16.msra.mxu0 %v551
  %756 = vmatprep.subr.bf16.mxu0 0
  %757 = vmatpush1.bf16.msra.mxu0 %v552
  %758 = vmatprep.subr.bf16.mxu0 0
  %759 = vmatpush1.bf16.msra.mxu0 %v553
  %760 = vmatprep.subr.bf16.mxu0 0
  %761 = vmatpush1.bf16.msra.mxu0 %v554
  %762 = vmatprep.subr.bf16.mxu0 0
  %763 = vmatpush1.bf16.msra.mxu0 %v555
  %764 = vmatprep.subr.bf16.mxu0 0
  %765 = vmatpush1.bf16.msra.mxu0 %v556
  %766 = vmatprep.subr.bf16.mxu0 0
  %767 = vmatpush1.bf16.msra.mxu0 %v557
  %768 = vmatprep.mubr.bf16.mxu0 %v209
  %769 = vmatmul.mubr.bf16.gmra.mrb[0].mxu0 %v208
  %v770 = vpop.f32.mrb[0].mxu0
  %v771 = vadd.f32 %v730, %v770
  %v772 = vpop.f32.mrb[0].mxu0
  %v773 = vpop.f32.mrb[0].mxu0
  %v774 = vadd.f32 %v733, %v773
  %v775 = vpop.f32.mrb[0].mxu0
  %776 = vdwg.mxu0
  %777 = vmatprep.subr.bf16.mxu0 0
  %778 = vmatpush1.bf16.msra.mxu0 %v558
  %779 = vmatprep.subr.bf16.mxu0 0
  %780 = vmatpush1.bf16.msra.mxu0 %v559
  %781 = vmatprep.subr.bf16.mxu0 0
  %782 = vmatpush1.bf16.msra.mxu0 %v560
  %783 = vmatprep.subr.bf16.mxu0 0
  %784 = vmatpush1.bf16.msra.mxu0 %v561
  %785 = vmatprep.subr.bf16.mxu0 0
  %786 = vmatpush1.bf16.msra.mxu0 %v562
  %787 = vmatprep.subr.bf16.mxu0 0
  %788 = vmatpush1.bf16.msra.mxu0 %v563
  %789 = vmatprep.subr.bf16.mxu0 0
  %790 = vmatpush1.bf16.msra.mxu0 %v564
  %791 = vmatprep.subr.bf16.mxu0 0
  %792 = vmatpush1.bf16.msra.mxu0 %v565
  %793 = vmatprep.subr.bf16.mxu0 0
  %794 = vmatpush1.bf16.msra.mxu0 %v566
  %795 = vmatprep.subr.bf16.mxu0 0
  %796 = vmatpush1.bf16.msra.mxu0 %v567
  %797 = vmatprep.subr.bf16.mxu0 0
  %798 = vmatpush1.bf16.msra.mxu0 %v568
  %799 = vmatprep.subr.bf16.mxu0 0
  %800 = vmatpush1.bf16.msra.mxu0 %v569
  %801 = vmatprep.subr.bf16.mxu0 0
  %802 = vmatpush1.bf16.msra.mxu0 %v570
  %803 = vmatprep.subr.bf16.mxu0 0
  %804 = vmatpush1.bf16.msra.mxu0 %v571
  %805 = vmatprep.subr.bf16.mxu0 0
  %806 = vmatpush1.bf16.msra.mxu0 %v572
  %807 = vmatprep.subr.bf16.mxu0 0
  %808 = vmatpush1.bf16.msra.mxu0 %v573
  %809 = vmatprep.mubr.bf16.mxu0 %v211
  %810 = vmatmul.mubr.bf16.gmra.mrb[0].mxu0 %v210
  %v811 = vpop.f32.mrb[0].mxu0
  %v812 = vadd.f32 %v771, %v811
  %v813 = vpop.f32.mrb[0].mxu0
  %v814 = vpop.f32.mrb[0].mxu0
  %v815 = vadd.f32 %v774, %v814
  %v816 = vpop.f32.mrb[0].mxu0
  %817 = vdwg.mxu0
  %818 = vmatprep.subr.bf16.mxu0 0
  %819 = vmatpush1.bf16.msra.mxu0 %v574
  %820 = vmatprep.subr.bf16.mxu0 0
  %821 = vmatpush1.bf16.msra.mxu0 %v575
  %822 = vmatprep.subr.bf16.mxu0 0
  %823 = vmatpush1.bf16.msra.mxu0 %v576
  %824 = vmatprep.subr.bf16.mxu0 0
  %825 = vmatpush1.bf16.msra.mxu0 %v577
  %826 = vmatprep.subr.bf16.mxu0 0
  %827 = vmatpush1.bf16.msra.mxu0 %v578
  %828 = vmatprep.subr.bf16.mxu0 0
  %829 = vmatpush1.bf16.msra.mxu0 %v579
  %830 = vmatprep.subr.bf16.mxu0 0
  %831 = vmatpush1.bf16.msra.mxu0 %v580
  %832 = vmatprep.subr.bf16.mxu0 0
  %833 = vmatpush1.bf16.msra.mxu0 %v581
  %834 = vmatprep.subr.bf16.mxu0 0
  %835 = vmatpush1.bf16.msra.mxu0 0
  %836 = vmatprep.subr.bf16.mxu0 0
  %837 = vmatpush1.bf16.msra.mxu0 0
  %838 = vmatprep.subr.bf16.mxu0 0
  %839 = vmatpush1.bf16.msra.mxu0 0
  %840 = vmatprep.subr.bf16.mxu0 0
  %841 = vmatpush1.bf16.msra.mxu0 0
  %842 = vmatprep.subr.bf16.mxu0 0
  %843 = vmatpush1.bf16.msra.mxu0 0
  %844 = vmatprep.subr.bf16.mxu0 0
  %845 = vmatpush1.bf16.msra.mxu0 0
  %846 = vmatprep.subr.bf16.mxu0 0
  %847 = vmatpush1.bf16.msra.mxu0 0
  %848 = vmatprep.subr.bf16.mxu0 0
  %849 = vmatpush1.bf16.msra.mxu0 0
  %850 = vmatprep.mubr.bf16.mxu0 0
  %851 = vmatmul.mubr.bf16.gmra.mrb[0].mxu0 %v212
  %v852 = vpop.f32.mrb[0].mxu0
  %v853 = vadd.f32 %v812, %v852
  %v854 = vpop.f32.mrb[0].mxu0
  %v855 = vpop.f32.mrb[0].mxu0
  %v856 = vadd.f32 %v815, %v855
  %v857 = vpop.f32.mrb[0].mxu0
  %858 = vdwg.mxu0
  %vm859 = vcmp.ge.f32.partialorder %v853, 0.0
  %vm860 = vcmp.ge.f32.partialorder %v856, 0.0
  %v861 = vmul.f32 %v853, 0.2
  %v862 = vmul.f32 %v856, 0.2
  %v863 = vsel %vm859, %v853, %v861
  %v864 = vsel %vm860, %v856, %v862
  %v865 = vpack.c.bf16 %v864, %v863
  %v867 = vunpack.c.l.b16 %v865
  %v868 = vunpack.c.h.b16 %v865
  %v869 = vpack.c.b16 %v867, %v867
  %v870 = vpack.c.b16 %v868, %v868
  %873 = vst [vmem:[%s3] sm:$0xf] %v869
  %874 = vst [vmem:[%s3 + $0x4] sm:$0xf] %v870
  // Predicated region
  $region14: #{adversarial_loss_forward.15} parent=0 // pred_check
    _
  $region15: #{adversarial_loss_forward.15} parent=0 // pred_check_branch
    %876 = sbr.rel (0) target = $region17
  $region16: #{adversarial_loss_forward.15} parent=0 // pred_region
    _
  $region17: #{adversarial_loss_forward.15} parent=0 // pred_fallthru
    _
  // Predicated region
  $region18: #{adversarial_loss_forward.15} parent=0 // pred_check
    _
  $region19: #{adversarial_loss_forward.15} parent=0 // pred_check_branch
    %878 = sbr.rel (0) target = $region21
  $region20: #{adversarial_loss_forward.15} parent=0 // pred_region
    _
  $region21: #{adversarial_loss_forward.15} parent=0 // pred_fallthru
    _

// kernel: adversarial_loss_forward.17
$region0: #{adversarial_loss_forward.17}
  #allocation0 [shape = 'u32[]', space=smem, size = 0x4, offset = 0x4, fixed_abs, tag = 'smem constant byte address 0x4 - core index']
  #allocation1 [shape = 'u32[144,128]{1,0:T(1,128)}', space=vmem, size = 0x12000, scoped, tag = 'internal scratch']
  #allocation2 [shape = 'f32[1,1]{1,0:T(1,128)S(1)}', space=vmem, size = 0x200, scoped, tag = 'scoped memory for adversarial_loss_forward.17']
  %s0 = inlined_call_operand.vmem [shape: bf16[4,256], index: 0, kind: input, shape index: {}]
  %s1 = inlined_call_operand.vmem [shape: f32[1,256], index: 1, kind: input, shape index: {}]
  %s2 = inlined_call_operand.<no memory space> [shape: f32[1,1], index: 2, kind: input, shape index: {}]
  %s3 = inlined_call_operand.hbm [shape: f32[1,1], index: 3, kind: output, shape index: {0}]
  %s4 = inlined_call_operand.hbm [shape: f32[1,1], index: 4, kind: output, shape index: {1}]
  %5 = xla_tuple %s3, %s4
  %s6 = sld [smem:[#allocation0]]
  $region30: #{adversarial_loss_forward.17} parent=0
    _
  %s8 = ssub.s32 1, %s6
  %s9 = scalar_select 0, %s8, %s6
  %v10 = vstv %s2
  %11 = vst [vmem:[#allocation2] sm:$0x1] %v10
  $region1: #{adversarial_loss_forward.17} parent=0
    #allocation3 [shape = 'u8[512]{0}', space=vmem, size = 0x400, scoped, tag = 'output window, operand 0, single buffered']
    #allocation4 [shape = 's32[1]{0}', space=sflag, size = 0x4, scoped, tag = 'scoped memory for adversarial_loss_forward.17']
    #allocation5 [shape = 'u8[512]{0}', space=vmem, size = 0x400, scoped, tag = 'output window, operand 1, single buffered']
    #allocation6 [shape = 's32[1]{0}', space=sflag, size = 0x4, scoped, tag = 'scoped memory for adversarial_loss_forward.17']
    %12 = vsyncpa [#allocation4], 0
    %13 = vsyncpa [#allocation6], 0
    // Predicated region
    $region2: #{adversarial_loss_forward.17} parent=1 // pred_check
      _
    $region3: #{adversarial_loss_forward.17} parent=1 // pred_check_branch
      %15 = sbr.rel (0) target = $region5
    $region4: #{adversarial_loss_forward.17} parent=1 // pred_region
      _
    $region5: #{adversarial_loss_forward.17} parent=1 // pred_fallthru
      _
    // Predicated region
    $region6: #{adversarial_loss_forward.17} parent=1 // pred_check
      _
    $region7: #{adversarial_loss_forward.17} parent=1 // pred_check_branch
      %17 = sbr.rel (0) target = $region9
    $region8: #{adversarial_loss_forward.17} parent=1 // pred_region
      _
    $region9: #{adversarial_loss_forward.17} parent=1 // pred_fallthru
      _
    // Predicated region
    $region10: #{adversarial_loss_forward.17} parent=1 // pred_check
      _
    $region11: #{adversarial_loss_forward.17} parent=1 // pred_check_branch
      %19 = sbr.rel (0) target = $region13
    $region12: #{adversarial_loss_forward.17} parent=1 // pred_region
      _
    $region13: #{adversarial_loss_forward.17} parent=1 // pred_fallthru
      _
    %v20 = vld [vmem:[%s0] sm:$0xf]
    %v21 = vunpack.c.l.bf16 %v20
    %v22 = vld [vmem:[%s1] sm:$0x3]
    %v24 = vcombine.high %v21, %v21
    %vm26 = vcmask 1041408
    %v27 = vsel %vm26, %v21, 0.0
    %v28 = vrot.slane %v27, 4
    %v29 = vadd.f32 %v27, %v28
    %v30 = vrot.slane %v29, 2
    %v31 = vadd.f32 %v29, %v30
    %v32 = vrot.slane %v31, 1
    %v33 = vadd.f32 %v31, %v32
    %v34 = vsel %vm26, %v24, 0.0
    %v35 = vrot.slane %v34, 4
    %v36 = vadd.f32 %v34, %v35
    %v37 = vrot.slane %v36, 2
    %v38 = vadd.f32 %v36, %v37
    %v39 = vrot.slane %v38, 1
    %v40 = vadd.f32 %v38, %v39
    %v41 = vrcp.pop 2.0
    %v42 = vmul.f32 %v33, %v41
    %v43 = vmul.f32 %v40, %v41
    %v44 = vrot.slane %v21, 2
    %v45 = vrot.slane %v24, 2
    %v48 = vsel %vm26, %v44, 0.0
    %v49 = vrot.slane %v48, 4
    %v50 = vadd.f32 %v48, %v49
    %v51 = vrot.slane %v50, 2
    %v52 = vadd.f32 %v50, %v51
    %v53 = vrot.slane %v52, 1
    %v54 = vadd.f32 %v52, %v53
    %v55 = vsel %vm26, %v45, 0.0
    %v56 = vrot.slane %v55, 4
    %v57 = vadd.f32 %v55, %v56
    %v58 = vrot.slane %v57, 2
    %v59 = vadd.f32 %v57, %v58
    %v60 = vrot.slane %v59, 1
    %v61 = vadd.f32 %v59, %v60
    %v62 = vmul.f32 %v54, %v41
    %v63 = vmul.f32 %v61, %v41
    %v65 = vlaneseq
    %v66 = vshrl.u32 %v65, 7
    %v67 = vsub.s32 0, %v66
    %v68 = vrot.slane %v22, %v67
    %v69 = vlaneseq
    %v70 = vshrl.u32 %v69, 7
    %v71 = vsub.s32 1, %v70
    %v72 = vrot.slane %v22, %v71
    %v75 = vmul.f32 %v42, %v68
    %v76 = vmul.f32 %v43, %v72
    %vm77 = vcmask 1040384
    %v78 = vsel %vm77, %v75, 0.0
    %v79 = vsel %vm77, %v76, 0.0
    %v80 = vadd.f32 %v78, %v79
    %81 = vadd.xlane.f32.xlu0 %v80
    %v82 = vpop.xlane.xlu0 %81
    %v83 = vld [vmem:[#allocation2] sm:$0x1]
    %v84 = vadd.f32 %v82, %v83
    %v85 = vmul.f32 %v62, %v68
    %v86 = vmul.f32 %v63, %v72
    %v87 = vsel %vm77, %v85, 0.0
    %v88 = vsel %vm77, %v86, 0.0
    %v89 = vadd.f32 %v87, %v88
    %90 = vadd.xlane.f32.xlu0 %v89
    %v91 = vpop.xlane.xlu0 %90
    %v92 = vadd.f32 %v91, %v83
    %v93 = vsub.f32 0.0, %v84
    %vm94 = vcmask 0
    %95 = vst.msk [vmem:[#allocation3] sm:$0x1] %vm94, %v93
    %v96 = vsub.f32 %v84, %v92
    %97 = vst.msk [vmem:[#allocation5] sm:$0x1] %vm94, %v96
    // Predicated region
    $region14: #{adversarial_loss_forward.17} parent=1 // pred_check
      _
    $region15: #{adversarial_loss_forward.17} parent=1 // pred_check_branch
      %99 = sbr.rel (0) target = $region17
    $region16: #{adversarial_loss_forward.17} parent=1 // pred_region
      %s101 = ssub.s32 16, 16
      %102 = vsyncadd [#allocation4], %s101
      %s104 = sshll.u32 [#allocation3], 4
      %s105 = int_to_ptr.vmem [resolvable:$true] %s104
      %107 = dma.vmem_to_hbm [thread:$0]  %s105, 16, %s3, [#allocation4]
    $region17: #{adversarial_loss_forward.17} parent=1 // pred_fallthru
      _
    // Predicated region
    $region18: #{adversarial_loss_forward.17} parent=1 // pred_check
      _
    $region19: #{adversarial_loss_forward.17} parent=1 // pred_check_branch
      %109 = sbr.rel (0) target = $region21
    $region20: #{adversarial_loss_forward.17} parent=1 // pred_region
      %s111 = ssub.s32 16, 16
      %112 = vsyncadd [#allocation6], %s111
      %s114 = sshll.u32 [#allocation5], 4
      %s115 = int_to_ptr.vmem [resolvable:$true] %s114
      %117 = dma.vmem_to_hbm [thread:$0]  %s115, 16, %s4, [#allocation6]
    $region21: #{adversarial_loss_forward.17} parent=1 // pred_fallthru
      _
    // Predicated region
    $region22: #{adversarial_loss_forward.17} parent=1 // pred_check
      _
    $region23: #{adversarial_loss_forward.17} parent=1 // pred_check_branch
      %119 = sbr.rel (0) target = $region25
    $region24: #{adversarial_loss_forward.17} parent=1 // pred_region
      %120 = dma.done [#allocation4], 16
    $region25: #{adversarial_loss_forward.17} parent=1 // pred_fallthru
      _
    // Predicated region
    $region26: #{adversarial_loss_forward.17} parent=1 // pred_check
      _
    $region27: #{adversarial_loss_forward.17} parent=1 // pred_check_branch
      %122 = sbr.rel (0) target = $region29
    $region28: #{adversarial_loss_forward.17} parent=1 // pred_region
      %123 = dma.done [#allocation6], 16
    $region29: #{adversarial_loss_forward.17} parent=1 // pred_fallthru
      _
    %124 = vsyncpa [#allocation4], 1
    %125 = vsyncpa [#allocation6], 1

// kernel: adversarial_loss_forward.16
$region0: #{adversarial_loss_forward.16}
  #allocation0 [shape = 'u32[]', space=smem, size = 0x4, offset = 0x4, fixed_abs, tag = 'smem constant byte address 0x4 - core index']
  #allocation1 [shape = 'u32[144,128]{1,0:T(1,128)}', space=vmem, size = 0x12000, scoped, tag = 'internal scratch']
  %s0 = inlined_call_operand.vmem [shape: bf16[4,512], index: 0, kind: input, shape index: {}]
  %s1 = inlined_call_operand.vmem [shape: bf16[512,256], index: 1, kind: input, shape index: {}]
  %s2 = inlined_call_operand.vmem [shape: f32[1,256], index: 2, kind: input, shape index: {}]
  %s3 = inlined_call_operand.vmem [shape: bf16[4,256], index: 3, kind: output, shape index: {}]
  %s4 = sld [smem:[#allocation0]]
  $region22: #{adversarial_loss_forward.16} parent=0
    _
  %s6 = ssub.s32 1, %s4
  %s7 = scalar_select 0, %s6, %s4
  // Predicated region
  $region2: #{adversarial_loss_forward.16} parent=0 // pred_check
    _
  $region3: #{adversarial_loss_forward.16} parent=0 // pred_check_branch
    %9 = sbr.rel (0) target = $region5
  $region4: #{adversarial_loss_forward.16} parent=0 // pred_region
    _
  $region5: #{adversarial_loss_forward.16} parent=0 // pred_fallthru
    _
  // Predicated region
  $region6: #{adversarial_loss_forward.16} parent=0 // pred_check
    _
  $region7: #{adversarial_loss_forward.16} parent=0 // pred_check_branch
    %11 = sbr.rel (0) target = $region9
  $region8: #{adversarial_loss_forward.16} parent=0 // pred_region
    _
  $region9: #{adversarial_loss_forward.16} parent=0 // pred_fallthru
    _
  // Predicated region
  $region10: #{adversarial_loss_forward.16} parent=0 // pred_check
    _
  $region11: #{adversarial_loss_forward.16} parent=0 // pred_check_branch
    %13 = sbr.rel (0) target = $region13
  $region12: #{adversarial_loss_forward.16} parent=0 // pred_region
    _
  $region13: #{adversarial_loss_forward.16} parent=0 // pred_fallthru
    _
  %v14 = vld [vmem:[%s0] sm:$0xff]
  %v15 = vld [vmem:[%s1] sm:$0xff]
  %v16 = vld [vmem:[%s1 + $0x8] sm:$0xff]
  %v17 = vld [vmem:[%s1 + $0x10] sm:$0xff]
  %v18 = vld [vmem:[%s1 + $0x18] sm:$0xff]
  %v19 = vld [vmem:[%s1 + $0x20] sm:$0xff]
  %v20 = vld [vmem:[%s1 + $0x28] sm:$0xff]
  %v21 = vld [vmem:[%s1 + $0x30] sm:$0xff]
  %v22 = vld [vmem:[%s1 + $0x38] sm:$0xff]
  %v23 = vld [vmem:[%s1 + $0x40] sm:$0xff]
  %v24 = vld [vmem:[%s1 + $0x48] sm:$0xff]
  %v25 = vld [vmem:[%s1 + $0x50] sm:$0xff]
  %v26 = vld [vmem:[%s1 + $0x58] sm:$0xff]
  %v27 = vld [vmem:[%s1 + $0x60] sm:$0xff]
  %v28 = vld [vmem:[%s1 + $0x68] sm:$0xff]
  %v29 = vld [vmem:[%s1 + $0x70] sm:$0xff]
  %v30 = vld [vmem:[%s1 + $0x78] sm:$0xff]
  %v31 = vld [vmem:[%s1 + $0x80] sm:$0xff]
  %v32 = vld [vmem:[%s1 + $0x88] sm:$0xff]
  %v33 = vld [vmem:[%s1 + $0x90] sm:$0xff]
  %v34 = vld [vmem:[%s1 + $0x98] sm:$0xff]
  %v35 = vld [vmem:[%s1 + $0xa0] sm:$0xff]
  %v36 = vld [vmem:[%s1 + $0xa8] sm:$0xff]
  %v37 = vld [vmem:[%s1 + $0xb0] sm:$0xff]
  %v38 = vld [vmem:[%s1 + $0xb8] sm:$0xff]
  %v39 = vld [vmem:[%s1 + $0xc0] sm:$0xff]
  %v40 = vld [vmem:[%s1 + $0xc8] sm:$0xff]
  %v41 = vld [vmem:[%s1 + $0xd0] sm:$0xff]
  %v42 = vld [vmem:[%s1 + $0xd8] sm:$0xff]
  %v43 = vld [vmem:[%s1 + $0xe0] sm:$0xff]
  %v44 = vld [vmem:[%s1 + $0xe8] sm:$0xff]
  %v45 = vld [vmem:[%s1 + $0xf0] sm:$0xff]
  %v46 = vld [vmem:[%s1 + $0xf8] sm:$0xff]
  %v47 = vld [vmem:[%s1 + $0x100] sm:$0xff]
  %v48 = vld [vmem:[%s1 + $0x108] sm:$0xff]
  %v49 = vld [vmem:[%s1 + $0x110] sm:$0xff]
  %v50 = vld [vmem:[%s1 + $0x118] sm:$0xff]
  %v51 = vld [vmem:[%s1 + $0x120] sm:$0xff]
  %v52 = vld [vmem:[%s1 + $0x128] sm:$0xff]
  %v53 = vld [vmem:[%s1 + $0x130] sm:$0xff]
  %v54 = vld [vmem:[%s1 + $0x138] sm:$0xff]
  %v55 = vld [vmem:[%s1 + $0x140] sm:$0xff]
  %v56 = vld [vmem:[%s1 + $0x148] sm:$0xff]
  %v57 = vld [vmem:[%s1 + $0x150] sm:$0xff]
  %v58 = vld [vmem:[%s1 + $0x158] sm:$0xff]
  %v59 = vld [vmem:[%s1 + $0x160] sm:$0xff]
  %v60 = vld [vmem:[%s1 + $0x168] sm:$0xff]
  %v61 = vld [vmem:[%s1 + $0x170] sm:$0xff]
  %v62 = vld [vmem:[%s1 + $0x178] sm:$0xff]
  %v63 = vld [vmem:[%s1 + $0x180] sm:$0xff]
  %v64 = vld [vmem:[%s1 + $0x188] sm:$0xff]
  %v65 = vld [vmem:[%s1 + $0x190] sm:$0xff]
  %v66 = vld [vmem:[%s1 + $0x198] sm:$0xff]
  %v67 = vld [vmem:[%s1 + $0x1a0] sm:$0xff]
  %v68 = vld [vmem:[%s1 + $0x1a8] sm:$0xff]
  %v69 = vld [vmem:[%s1 + $0x1b0] sm:$0xff]
  %v70 = vld [vmem:[%s1 + $0x1b8] sm:$0xff]
  %v71 = vld [vmem:[%s1 + $0x1c0] sm:$0xff]
  %v72 = vld [vmem:[%s1 + $0x1c8] sm:$0xff]
  %v73 = vld [vmem:[%s1 + $0x1d0] sm:$0xff]
  %v74 = vld [vmem:[%s1 + $0x1d8] sm:$0xff]
  %v75 = vld [vmem:[%s1 + $0x1e0] sm:$0xff]
  %v76 = vld [vmem:[%s1 + $0x1e8] sm:$0xff]
  %v77 = vld [vmem:[%s1 + $0x1f0] sm:$0xff]
  %v78 = vld [vmem:[%s1 + $0x1f8] sm:$0xff]
  %v79 = vld [vmem:[%s2] sm:$0x3]
  %v81 = vlaneseq
  %v82 = vshrl.u32 %v81, 7
  %v83 = vsub.s32 0, %v82
  %v84 = vrot.slane %v79, %v83
  %v85 = vlaneseq
  %v86 = vshrl.u32 %v85, 7
  %v87 = vsub.s32 1, %v86
  %v88 = vrot.slane %v79, %v87
  %v92 = vcombine.high %v14, %v14
  %v94 = vunpack.c.l.s4 1983009808
  %v95 = vunpack.c.0.s8 %v94
  %v96 = vlaneseq
  %v97 = vshrl.u32 %v96, 7
  %v98 = vsub.s32 %v95, %v97
  %v99 = vrot.slane %v14, %v98
  %v101 = vunpack.c.l.s4 1983009808
  %v102 = vunpack.c.0.s8 %v101
  %v103 = vlaneseq
  %v104 = vshrl.u32 %v103, 7
  %v105 = vsub.s32 %v102, %v104
  %v106 = vrot.slane %v92, %v105
  %v107 = vcombine.high %v99, %v99
  %v108 = vcombine.high %v106, %v106
  %v177 = vunpack.c.l.b16 %v15
  %v178 = vunpack.c.h.b16 %v15
  %v179 = vunpack.c.l.b16 %v16
  %v180 = vunpack.c.h.b16 %v16
  %v181 = vunpack.c.l.b16 %v17
  %v182 = vunpack.c.h.b16 %v17
  %v183 = vunpack.c.l.b16 %v18
  %v184 = vunpack.c.h.b16 %v18
  %v185 = vunpack.c.l.b16 %v19
  %v186 = vunpack.c.h.b16 %v19
  %v187 = vunpack.c.l.b16 %v20
  %v188 = vunpack.c.h.b16 %v20
  %v189 = vunpack.c.l.b16 %v21
  %v190 = vunpack.c.h.b16 %v21
  %v191 = vunpack.c.l.b16 %v22
  %v192 = vunpack.c.h.b16 %v22
  %v193 = vunpack.c.l.b16 %v23
  %v194 = vunpack.c.h.b16 %v23
  %v195 = vunpack.c.l.b16 %v24
  %v196 = vunpack.c.h.b16 %v24
  %v197 = vunpack.c.l.b16 %v25
  %v198 = vunpack.c.h.b16 %v25
  %v199 = vunpack.c.l.b16 %v26
  %v200 = vunpack.c.h.b16 %v26
  %v201 = vunpack.c.l.b16 %v27
  %v202 = vunpack.c.h.b16 %v27
  %v203 = vunpack.c.l.b16 %v28
  %v204 = vunpack.c.h.b16 %v28
  %v205 = vunpack.c.l.b16 %v29
  %v206 = vunpack.c.h.b16 %v29
  %v207 = vunpack.c.l.b16 %v30
  %v208 = vunpack.c.h.b16 %v30
  %v209 = vunpack.c.l.b16 %v31
  %v210 = vunpack.c.h.b16 %v31
  %v211 = vunpack.c.l.b16 %v32
  %v212 = vunpack.c.h.b16 %v32
  %v213 = vunpack.c.l.b16 %v33
  %v214 = vunpack.c.h.b16 %v33
  %v215 = vunpack.c.l.b16 %v34
  %v216 = vunpack.c.h.b16 %v34
  %v217 = vunpack.c.l.b16 %v35
  %v218 = vunpack.c.h.b16 %v35
  %v219 = vunpack.c.l.b16 %v36
  %v220 = vunpack.c.h.b16 %v36
  %v221 = vunpack.c.l.b16 %v37
  %v222 = vunpack.c.h.b16 %v37
  %v223 = vunpack.c.l.b16 %v38
  %v224 = vunpack.c.h.b16 %v38
  %v225 = vunpack.c.l.b16 %v39
  %v226 = vunpack.c.h.b16 %v39
  %v227 = vunpack.c.l.b16 %v40
  %v228 = vunpack.c.h.b16 %v40
  %v229 = vunpack.c.l.b16 %v41
  %v230 = vunpack.c.h.b16 %v41
  %v231 = vunpack.c.l.b16 %v42
  %v232 = vunpack.c.h.b16 %v42
  %v233 = vunpack.c.l.b16 %v43
  %v234 = vunpack.c.h.b16 %v43
  %v235 = vunpack.c.l.b16 %v44
  %v236 = vunpack.c.h.b16 %v44
  %v237 = vunpack.c.l.b16 %v45
  %v238 = vunpack.c.h.b16 %v45
  %v239 = vunpack.c.l.b16 %v46
  %v240 = vunpack.c.h.b16 %v46
  %v241 = vunpack.c.l.b16 %v47
  %v242 = vunpack.c.h.b16 %v47
  %v243 = vunpack.c.l.b16 %v48
  %v244 = vunpack.c.h.b16 %v48
  %v245 = vunpack.c.l.b16 %v49
  %v246 = vunpack.c.h.b16 %v49
  %v247 = vunpack.c.l.b16 %v50
  %v248 = vunpack.c.h.b16 %v50
  %v249 = vunpack.c.l.b16 %v51
  %v250 = vunpack.c.h.b16 %v51
  %v251 = vunpack.c.l.b16 %v52
  %v252 = vunpack.c.h.b16 %v52
  %v253 = vunpack.c.l.b16 %v53
  %v254 = vunpack.c.h.b16 %v53
  %v255 = vunpack.c.l.b16 %v54
  %v256 = vunpack.c.h.b16 %v54
  %v257 = vunpack.c.l.b16 %v55
  %v258 = vunpack.c.h.b16 %v55
  %v259 = vunpack.c.l.b16 %v56
  %v260 = vunpack.c.h.b16 %v56
  %v261 = vunpack.c.l.b16 %v57
  %v262 = vunpack.c.h.b16 %v57
  %v263 = vunpack.c.l.b16 %v58
  %v264 = vunpack.c.h.b16 %v58
  %v265 = vunpack.c.l.b16 %v59
  %v266 = vunpack.c.h.b16 %v59
  %v267 = vunpack.c.l.b16 %v60
  %v268 = vunpack.c.h.b16 %v60
  %v269 = vunpack.c.l.b16 %v61
  %v270 = vunpack.c.h.b16 %v61
  %v271 = vunpack.c.l.b16 %v62
  %v272 = vunpack.c.h.b16 %v62
  %v273 = vunpack.c.l.b16 %v63
  %v274 = vunpack.c.h.b16 %v63
  %v275 = vunpack.c.l.b16 %v64
  %v276 = vunpack.c.h.b16 %v64
  %v277 = vunpack.c.l.b16 %v65
  %v278 = vunpack.c.h.b16 %v65
  %v279 = vunpack.c.l.b16 %v66
  %v280 = vunpack.c.h.b16 %v66
  %v281 = vunpack.c.l.b16 %v67
  %v282 = vunpack.c.h.b16 %v67
  %v283 = vunpack.c.l.b16 %v68
  %v284 = vunpack.c.h.b16 %v68
  %v285 = vunpack.c.l.b16 %v69
  %v286 = vunpack.c.h.b16 %v69
  %v287 = vunpack.c.l.b16 %v70
  %v288 = vunpack.c.h.b16 %v70
  %v289 = vunpack.c.l.b16 %v71
  %v290 = vunpack.c.h.b16 %v71
  %v291 = vunpack.c.l.b16 %v72
  %v292 = vunpack.c.h.b16 %v72
  %v293 = vunpack.c.l.b16 %v73
  %v294 = vunpack.c.h.b16 %v73
  %v295 = vunpack.c.l.b16 %v74
  %v296 = vunpack.c.h.b16 %v74
  %v297 = vunpack.c.l.b16 %v75
  %v298 = vunpack.c.h.b16 %v75
  %v299 = vunpack.c.l.b16 %v76
  %v300 = vunpack.c.h.b16 %v76
  %v301 = vunpack.c.l.b16 %v77
  %v302 = vunpack.c.h.b16 %v77
  %v303 = vunpack.c.l.b16 %v78
  %v304 = vunpack.c.h.b16 %v78
  %v305 = vpack.c.b16 %v179, %v177
  %v306 = vpack.c.b16 %v180, %v178
  %v307 = vpack.c.b16 %v183, %v181
  %v308 = vpack.c.b16 %v184, %v182
  %v309 = vpack.c.b16 %v187, %v185
  %v310 = vpack.c.b16 %v188, %v186
  %v311 = vpack.c.b16 %v191, %v189
  %v312 = vpack.c.b16 %v192, %v190
  %v313 = vpack.c.b16 %v195, %v193
  %v314 = vpack.c.b16 %v196, %v194
  %v315 = vpack.c.b16 %v199, %v197
  %v316 = vpack.c.b16 %v200, %v198
  %v317 = vpack.c.b16 %v203, %v201
  %v318 = vpack.c.b16 %v204, %v202
  %v319 = vpack.c.b16 %v207, %v205
  %v320 = vpack.c.b16 %v208, %v206
  %v321 = vpack.c.b16 %v211, %v209
  %v322 = vpack.c.b16 %v212, %v210
  %v323 = vpack.c.b16 %v215, %v213
  %v324 = vpack.c.b16 %v216, %v214
  %v325 = vpack.c.b16 %v219, %v217
  %v326 = vpack.c.b16 %v220, %v218
  %v327 = vpack.c.b16 %v223, %v221
  %v328 = vpack.c.b16 %v224, %v222
  %v329 = vpack.c.b16 %v227, %v225
  %v330 = vpack.c.b16 %v228, %v226
  %v331 = vpack.c.b16 %v231, %v229
  %v332 = vpack.c.b16 %v232, %v230
  %v333 = vpack.c.b16 %v235, %v233
  %v334 = vpack.c.b16 %v236, %v234
  %v335 = vpack.c.b16 %v239, %v237
  %v336 = vpack.c.b16 %v240, %v238
  %v337 = vpack.c.b16 %v243, %v241
  %v338 = vpack.c.b16 %v244, %v242
  %v339 = vpack.c.b16 %v247, %v245
  %v340 = vpack.c.b16 %v248, %v246
  %v341 = vpack.c.b16 %v251, %v249
  %v342 = vpack.c.b16 %v252, %v250
  %v343 = vpack.c.b16 %v255, %v253
  %v344 = vpack.c.b16 %v256, %v254
  %v345 = vpack.c.b16 %v259, %v257
  %v346 = vpack.c.b16 %v260, %v258
  %v347 = vpack.c.b16 %v263, %v261
  %v348 = vpack.c.b16 %v264, %v262
  %v349 = vpack.c.b16 %v267, %v265
  %v350 = vpack.c.b16 %v268, %v266
  %v351 = vpack.c.b16 %v271, %v269
  %v352 = vpack.c.b16 %v272, %v270
  %v353 = vpack.c.b16 %v275, %v273
  %v354 = vpack.c.b16 %v276, %v274
  %v355 = vpack.c.b16 %v279, %v277
  %v356 = vpack.c.b16 %v280, %v278
  %v357 = vpack.c.b16 %v283, %v281
  %v358 = vpack.c.b16 %v284, %v282
  %v359 = vpack.c.b16 %v287, %v285
  %v360 = vpack.c.b16 %v288, %v286
  %v361 = vpack.c.b16 %v291, %v289
  %v362 = vpack.c.b16 %v292, %v290
  %v363 = vpack.c.b16 %v295, %v293
  %v364 = vpack.c.b16 %v296, %v294
  %v365 = vpack.c.b16 %v299, %v297
  %v366 = vpack.c.b16 %v300, %v298
  %v367 = vpack.c.b16 %v303, %v301
  %v368 = vpack.c.b16 %v304, %v302
  %433 = vmatprep.subr.bf16.mxu0 %v306
  %434 = vmatpush1.bf16.msra.mxu0 %v305
  %435 = vmatprep.subr.bf16.mxu0 %v308
  %436 = vmatpush1.bf16.msra.mxu0 %v307
  %437 = vmatprep.subr.bf16.mxu0 %v310
  %438 = vmatpush1.bf16.msra.mxu0 %v309
  %439 = vmatprep.subr.bf16.mxu0 %v312
  %440 = vmatpush1.bf16.msra.mxu0 %v311
  %441 = vmatprep.subr.bf16.mxu0 %v314
  %442 = vmatpush1.bf16.msra.mxu0 %v313
  %443 = vmatprep.subr.bf16.mxu0 %v316
  %444 = vmatpush1.bf16.msra.mxu0 %v315
  %445 = vmatprep.subr.bf16.mxu0 %v318
  %446 = vmatpush1.bf16.msra.mxu0 %v317
  %447 = vmatprep.subr.bf16.mxu0 %v320
  %448 = vmatpush1.bf16.msra.mxu0 %v319
  %449 = vmatprep.subr.bf16.mxu0 %v322
  %450 = vmatpush1.bf16.msra.mxu0 %v321
  %451 = vmatprep.subr.bf16.mxu0 %v324
  %452 = vmatpush1.bf16.msra.mxu0 %v323
  %453 = vmatprep.subr.bf16.mxu0 %v326
  %454 = vmatpush1.bf16.msra.mxu0 %v325
  %455 = vmatprep.subr.bf16.mxu0 %v328
  %456 = vmatpush1.bf16.msra.mxu0 %v327
  %457 = vmatprep.subr.bf16.mxu0 %v330
  %458 = vmatpush1.bf16.msra.mxu0 %v329
  %459 = vmatprep.subr.bf16.mxu0 %v332
  %460 = vmatpush1.bf16.msra.mxu0 %v331
  %461 = vmatprep.subr.bf16.mxu0 %v334
  %462 = vmatpush1.bf16.msra.mxu0 %v333
  %463 = vmatprep.subr.bf16.mxu0 %v336
  %464 = vmatpush1.bf16.msra.mxu0 %v335
  %465 = vmatprep.mubr.bf16.mxu0 %v107
  %466 = vmatmul.mubr.bf16.gmra.mrb[0].mxu0 %v99
  %v467 = vpop.f32.mrb[0].mxu0
  %v468 = vadd.f32 %v84, %v467
  %v469 = vpop.f32.mrb[0].mxu0
  %v470 = vadd.f32 %v88, %v469
  %v471 = vpop.f32.mrb[0].mxu0
  %v472 = vpop.f32.mrb[0].mxu0
  %473 = vdwg.mxu0
  %474 = vmatprep.subr.bf16.mxu0 %v338
  %475 = vmatpush1.bf16.msra.mxu0 %v337
  %476 = vmatprep.subr.bf16.mxu0 %v340
  %477 = vmatpush1.bf16.msra.mxu0 %v339
  %478 = vmatprep.subr.bf16.mxu0 %v342
  %479 = vmatpush1.bf16.msra.mxu0 %v341
  %480 = vmatprep.subr.bf16.mxu0 %v344
  %481 = vmatpush1.bf16.msra.mxu0 %v343
  %482 = vmatprep.subr.bf16.mxu0 %v346
  %483 = vmatpush1.bf16.msra.mxu0 %v345
  %484 = vmatprep.subr.bf16.mxu0 %v348
  %485 = vmatpush1.bf16.msra.mxu0 %v347
  %486 = vmatprep.subr.bf16.mxu0 %v350
  %487 = vmatpush1.bf16.msra.mxu0 %v349
  %488 = vmatprep.subr.bf16.mxu0 %v352
  %489 = vmatpush1.bf16.msra.mxu0 %v351
  %490 = vmatprep.subr.bf16.mxu0 %v354
  %491 = vmatpush1.bf16.msra.mxu0 %v353
  %492 = vmatprep.subr.bf16.mxu0 %v356
  %493 = vmatpush1.bf16.msra.mxu0 %v355
  %494 = vmatprep.subr.bf16.mxu0 %v358
  %495 = vmatpush1.bf16.msra.mxu0 %v357
  %496 = vmatprep.subr.bf16.mxu0 %v360
  %497 = vmatpush1.bf16.msra.mxu0 %v359
  %498 = vmatprep.subr.bf16.mxu0 %v362
  %499 = vmatpush1.bf16.msra.mxu0 %v361
  %500 = vmatprep.subr.bf16.mxu0 %v364
  %501 = vmatpush1.bf16.msra.mxu0 %v363
  %502 = vmatprep.subr.bf16.mxu0 %v366
  %503 = vmatpush1.bf16.msra.mxu0 %v365
  %504 = vmatprep.subr.bf16.mxu0 %v368
  %505 = vmatpush1.bf16.msra.mxu0 %v367
  %506 = vmatprep.mubr.bf16.mxu0 %v108
  %507 = vmatmul.mubr.bf16.gmra.mrb[0].mxu0 %v106
  %v508 = vpop.f32.mrb[0].mxu0
  %v509 = vadd.f32 %v468, %v508
  %v510 = vpop.f32.mrb[0].mxu0
  %v511 = vadd.f32 %v470, %v510
  %v512 = vpop.f32.mrb[0].mxu0
  %v513 = vpop.f32.mrb[0].mxu0
  %514 = vdwg.mxu0
  %vm515 = vcmp.ge.f32.partialorder %v509, 0.0
  %vm516 = vcmp.ge.f32.partialorder %v511, 0.0
  %v517 = vmul.f32 %v509, 0.2
  %v518 = vmul.f32 %v511, 0.2
  %v519 = vsel %vm515, %v509, %v517
  %v520 = vsel %vm516, %v511, %v518
  %v521 = vpack.c.bf16 %v519, %v519
  %v522 = vpack.c.bf16 %v520, %v520
  %v525 = vcombine.low %v521, %v522
  %v527 = vunpack.c.l.s4 1983009808
  %v528 = vunpack.c.0.s8 %v527
  %v529 = vlaneseq
  %v530 = vshrl.u32 %v529, 7
  %v531 = vsub.s32 %v528, %v530
  %v532 = vrot.slane %v525, %v531
  %534 = vst [vmem:[%s3] sm:$0xf] %v532
  // Predicated region
  $region14: #{adversarial_loss_forward.16} parent=0 // pred_check
    _
  $region15: #{adversarial_loss_forward.16} parent=0 // pred_check_branch
    %536 = sbr.rel (0) target = $region17
  $region16: #{adversarial_loss_forward.16} parent=0 // pred_region
    _
  $region17: #{adversarial_loss_forward.16} parent=0 // pred_fallthru
    _
  // Predicated region
  $region18: #{adversarial_loss_forward.16} parent=0 // pred_check
    _
  $region19: #{adversarial_loss_forward.16} parent=0 // pred_check_branch
    %538 = sbr.rel (0) target = $region21
  $region20: #{adversarial_loss_forward.16} parent=0 // pred_region
    _
  $region21: #{adversarial_loss_forward.16} parent=0 // pred_fallthru
    _

</llo_original>
